<compile_context>
chip_gen: v5e
topology: v5e:2x2
jax: 0.10.0
libtpu: 0.0.40
codegen_flags: <defaults>
</compile_context>

<pallas_src>
import functools
from math import ceil, log2

import jax
import jax.numpy as jnp
from jax.experimental import pallas as pl
from jax.experimental.pallas import tpu as pltpu


def _round_up(x, m):
    return (x + m - 1) // m * m


# ----------------------------------------------------------------------------
# Fused VGG block kernel (one batch element per grid step):
#   conv1(3x3,s1,'same')+ReLU -> conv2(3x3,s2,valid)+ReLU -> MaxPool2d(2,2)
# Flat row layout q = h*Wp + w (Wp = W+2), channels last; all intermediates
# stay in VMEM scratch.
# ----------------------------------------------------------------------------
def _vgg_block_kernel(x_ref, w1_ref, b1_ref, w2_ref, b2_ref, o_ref,
                      y1_ref, y2_ref, *, H, W, Wp):
    """
    x_ref : (1, (H+3)*Wp, Cin) f32  zero-padded input ('same' halo + spare row)
    w1_ref: (9*Cin, F)   bf16       conv1 weights, row order (kh, kw, cin)
    b1_ref: (1, F)       f32
    w2_ref: (9*F, 2F)    bf16       conv2 weights, row order (kh, kw, cin)
    b2_ref: (1, 2F)      f32
    o_ref : (1, H3*W3, 2F) f32      compact pooled output (valid columns only)
    y1_ref: VMEM (>= H*Wp, F)  f32  conv1+ReLU activation (flat, stride Wp)
    y2_ref: VMEM (>= M2,  2F)  f32  conv2+ReLU activation (flat, stride Wp)
    """
    H2, W2 = (H - 3) // 2 + 1, (W - 3) // 2 + 1
    H3, W3 = H2 // 2, W2 // 2
    L1 = H * Wp
    # conv2 only computes the rows the 2x2 pool will actually read.
    M2 = (2 * H3 - 1) * Wp + 2 * W3

    # ---- conv1: 3x3, stride 1, 'same' + ReLU: ONE matmul, ONE store ---------
    lhs1 = jnp.concatenate(
        [x_ref[0, pl.ds(kh * Wp + kw, L1), :]
         for kh in range(3) for kw in range(3)],
        axis=-1).astype(jnp.bfloat16)                       # (L1, 9*Cin)
    y1 = jnp.dot(lhs1, w1_ref[...], preferred_element_type=jnp.float32)
    y1_ref[pl.ds(0, L1), :] = jnp.maximum(y1 + b1_ref[...], 0.0)

    # ---- conv2: 3x3, stride 2, valid + ReLU: ONE matmul, ONE store ----------
    # Output flat row r = h2*Wp + w2 reads y1 rows 2*r + kh*Wp + kw (stride 2).
    lhs2 = jnp.concatenate(
        [y1_ref[pl.ds(kh * Wp + kw, M2, 2), :]
         for kh in range(3) for kw in range(3)],
        axis=-1).astype(jnp.bfloat16)                       # (M2, 9*F)
    y2 = jnp.dot(lhs2, w2_ref[...], preferred_element_type=jnp.float32)
    y2_ref[pl.ds(0, M2), :] = jnp.maximum(y2 + b2_ref[...], 0.0)

    # ---- maxpool 2x2, stride 2: compact per-row store (no junk columns) -----
    for h3 in range(H3):
        base = 2 * h3 * Wp
        m = y2_ref[pl.ds(base, W3, 2), :]
        m = jnp.maximum(m, y2_ref[pl.ds(base + 1, W3, 2), :])
        m = jnp.maximum(m, y2_ref[pl.ds(base + Wp, W3, 2), :])
        m = jnp.maximum(m, y2_ref[pl.ds(base + Wp + 1, W3, 2), :])
        o_ref[0, pl.ds(h3 * W3, W3), :] = m


def vgg_block(x, w1, b1, w2, b2):
    """x: (N, H, W, Cin) f32 -> (N, H3, W3, 2F) f32 via one fused Pallas kernel."""
    N, H, W, Cin = x.shape
    F = w1.shape[1]
    F2 = 2 * F
    Wp = W + 2
    H2, W2 = (H - 3) // 2 + 1, (W - 3) // 2 + 1
    H3, W3 = H2 // 2, W2 // 2
    L1 = H * Wp
    M2 = (2 * H3 - 1) * Wp + 2 * W3

    # 1-pixel 'same' halo plus one spare zero row so every shifted flat-row tap
    # view stays in bounds; flatten (h, w) into one row axis with stride Wp.
    xp = jnp.pad(x, ((0, 0), (1, 2), (1, 1), (0, 0))).reshape(N, (H + 3) * Wp, Cin)

    flops = 2 * N * 9 * (L1 * Cin * F + M2 * F * F2)
    bytes_accessed = (4 * N * ((H + 3) * Wp * Cin + H3 * W3 * F2)
                      + 2 * 9 * (Cin * F + F * F2) + 4 * (F + F2))

    out = pl.pallas_call(
        functools.partial(_vgg_block_kernel, H=H, W=W, Wp=Wp),
        out_shape=jax.ShapeDtypeStruct((N, H3 * W3, F2), jnp.float32),
        grid=(N,),
        in_specs=[
            pl.BlockSpec((1, (H + 3) * Wp, Cin), lambda n: (n, 0, 0)),
            pl.BlockSpec((9 * Cin, F), lambda n: (0, 0)),
            pl.BlockSpec((1, F), lambda n: (0, 0)),
            pl.BlockSpec((9 * F, F2), lambda n: (0, 0)),
            pl.BlockSpec((1, F2), lambda n: (0, 0)),
        ],
        out_specs=pl.BlockSpec((1, H3 * W3, F2), lambda n: (n, 0, 0)),
        scratch_shapes=[
            pltpu.VMEM((_round_up(L1 + 8, 8), F), jnp.float32),
            pltpu.VMEM((_round_up(M2 + 8, 8), F2), jnp.float32),
        ],
        compiler_params=pltpu.CompilerParams(
            dimension_semantics=("parallel",),
            vmem_limit_bytes=32 * 1024 * 1024,
        ),
        cost_estimate=pl.CostEstimate(
            flops=flops, transcendentals=0, bytes_accessed=bytes_accessed),
    )(xp, w1, b1, w2, b2)
    return out.reshape(N, H3, W3, F2)


# ----------------------------------------------------------------------------
# Fused classifier: fc1 + ReLU + fc2 in ONE pallas_call.
# Weights/biases are pre-padded (multiples of 128) and pre-cast at init.
# ----------------------------------------------------------------------------
def _classifier_kernel(x_ref, w1_ref, b1_ref, w2_ref, b2_ref, o_ref):
    h = jnp.dot(x_ref[...], w1_ref[...], preferred_element_type=jnp.float32)
    h = jnp.maximum(h + b1_ref[...], 0.0)
    o = jnp.dot(h.astype(jnp.bfloat16), w2_ref[...],
                preferred_element_type=jnp.float32)
    o_ref[...] = o + b2_ref[...]


def classifier(x, w1p, b1p, w2p, b2p, out_dim):
    """x:(M,K) f32 -> logits (M,out_dim) f32.  bf16 MXU operands, f32 accum."""
    M, K = x.shape
    Kp, N1p = w1p.shape
    _, N2p = w2p.shape
    tm = min(_round_up(max(M, 1), 16), 256)     # multiple of 16: bf16 sublane pack
    Mp = _round_up(M, tm)

    # Only the (tiny) activation is padded/cast per forward call.
    xp = jnp.zeros((Mp, Kp), jnp.bfloat16).at[:M, :K].set(x.astype(jnp.bfloat16))

    out = pl.pallas_call(
        _classifier_kernel,
        out_shape=jax.ShapeDtypeStruct((Mp, N2p), jnp.float32),
        grid=(Mp // tm,),
        in_specs=[
            pl.BlockSpec((tm, Kp), lambda i: (i, 0)),
            pl.BlockSpec((Kp, N1p), lambda i: (0, 0)),
            pl.BlockSpec((1, N1p), lambda i: (0, 0)),
            pl.BlockSpec((N1p, N2p), lambda i: (0, 0)),
            pl.BlockSpec((1, N2p), lambda i: (0, 0)),
        ],
        out_specs=pl.BlockSpec((tm, N2p), lambda i: (i, 0)),
        compiler_params=pltpu.CompilerParams(
            dimension_semantics=("parallel",),
            vmem_limit_bytes=32 * 1024 * 1024,
        ),
        cost_estimate=pl.CostEstimate(
            flops=2 * Mp * (Kp * N1p + N1p * N2p),
            transcendentals=0,
            bytes_accessed=2 * (Mp * Kp + Kp * N1p + N1p * N2p)
                           + 4 * (N1p + N2p + Mp * N2p)),
    )(xp, w1p, b1p, w2p, b2p)
    return out[:M, :out_dim]


# ----------------------------------------------------------------------------
# Parameter construction (deterministic, matches my_vgg.__init__ shapes)
# ----------------------------------------------------------------------------
def _last_fc_units(num_classes, last_layer_min_units=32):
    lg = int(ceil(log2(num_classes)))
    return max(last_layer_min_units, 4 * 2 ** lg)


def _block_out_spatial(s):
    s = (s - 3) // 2 + 1          # conv2: k=3, stride=2, pad=0
    return s // 2                 # maxpool 2x2, stride 2


def init_my_vgg_params(key, input_shape, num_classes,
                       num_layers=6, initial_num_filters=32):
    h, w, c = input_shape
    assert num_layers in (4, 6, 8)
    n_blocks = {4: 1, 6: 2, 8: 3}[num_layers]
    output_shape = num_classes if num_classes > 2 else 1
    fc_units = _last_fc_units(num_classes)

    keys = iter(jax.random.split(key, 4 * n_blocks + 4))
    blocks = []
    cin, cf = c, initial_num_filters
    hh, ww = h, w
    for _ in range(n_blocks):
        # Conv weights stored directly as (9*Cin, Cout) with row order
        # (kh, kw, cin) -- matches the in-kernel tap concatenation -- and
        # pre-cast to bf16 once (hoisted out of the forward pass).
        w1 = (0.05 * jax.random.normal(next(keys), (9 * cin, cf), jnp.float32)
              ).astype(jnp.bfloat16)
        b1 = 0.01 * jax.random.normal(next(keys), (1, cf), jnp.float32)
        w2 = (0.05 * jax.random.normal(next(keys), (9 * cf, 2 * cf), jnp.float32)
              ).astype(jnp.bfloat16)
        b2 = 0.01 * jax.random.normal(next(keys), (1, 2 * cf), jnp.float32)
        blocks.append(dict(w1=w1, b1=b1, w2=w2, b2=b2))
        cin = 2 * cf          # block output channels
        cf = cin              # next block: first_output = previous out channels
        hh, ww = _block_out_spatial(hh), _block_out_spatial(ww)

    k1 = hh * ww * cin                       # classifier input features
    k1p = _round_up(k1, 128)
    n1p = _round_up(fc_units, 128)
    n2p = _round_up(output_shape, 128)

    # fc1 rows are in NHWC-flatten order (h, w, c): a fixed row permutation of
    # PyTorch's NCHW nn.Flatten order, so no activation transpose is needed.
    # fc weights/biases are pre-padded to lane-dense multiples of 128 and the
    # bf16 cast is done once here, not per forward.
    fc1_w = 0.05 * jax.random.normal(next(keys), (k1, fc_units), jnp.float32)
    fc1_b = 0.01 * jax.random.normal(next(keys), (fc_units,), jnp.float32)
    fc2_w = 0.05 * jax.random.normal(next(keys), (fc_units, output_shape), jnp.float32)
    fc2_b = 0.01 * jax.random.normal(next(keys), (output_shape,), jnp.float32)

    params = dict(
        blocks=blocks,
        fc1_w=jnp.zeros((k1p, n1p), jnp.bfloat16)
              .at[:k1, :fc_units].set(fc1_w.astype(jnp.bfloat16)),
        fc1_b=jnp.zeros((1, n1p), jnp.float32).at[0, :fc_units].set(fc1_b),
        fc2_w=jnp.zeros((n1p, n2p), jnp.bfloat16)
              .at[:fc_units, :output_shape].set(fc2_w.astype(jnp.bfloat16)),
        fc2_b=jnp.zeros((1, n2p), jnp.float32).at[0, :output_shape].set(fc2_b),
    )
    dims = dict(out_dim=output_shape)        # static python ints (bound via partial)
    return params, dims


# ----------------------------------------------------------------------------
# Forward pass (logits=True)
# ----------------------------------------------------------------------------
def my_vgg_forward(params, x_nchw, *, dims):
    x = jnp.transpose(x_nchw, (0, 2, 3, 1))                 # NCHW -> NHWC once
    for blk in params["blocks"]:
        x = vgg_block(x, blk["w1"], blk["b1"], blk["w2"], blk["b2"])
    n = x.shape[0]
    x = x.reshape(n, -1)                                    # NHWC flatten
    return classifier(x, params["fc1_w"], params["fc1_b"],
                      params["fc2_w"], params["fc2_b"], dims["out_dim"])
    # TODO(synk): logits=False branch (Softmax/Sigmoid head) not implemented.


# ----------------------------------------------------------------------------
if __name__ == "__main__":
    key = jax.random.PRNGKey(0)
    k_params, k_x = jax.random.split(key)

    # small config: input_shape=(32, 32, 3), num_classes=10, num_layers=6,
    # initial_num_filters=4  (conv channels 3->4->8 then 8->8->16, final 1x1x16)
    NUM_CLASSES = 10
    params, dims = init_my_vgg_params(k_params, input_shape=(32, 32, 3),
                                      num_classes=NUM_CLASSES,
                                      num_layers=6, initial_num_filters=4)

    x = jax.random.normal(k_x, (2, 3, 32, 32), jnp.float32)  # NCHW, like torch

    fwd = jax.jit(functools.partial(my_vgg_forward, dims=dims))
    out = jax.block_until_ready(fwd(params, x))

    assert out.shape == (2, NUM_CLASSES), out.shape
    assert out.dtype == jnp.float32
    assert bool(jnp.all(jnp.isfinite(out)))
    print("KERNEL_OK")
</pallas_src>

<mosaic_0001>
module attributes {stable_mosaic.version = 11 : i64} {
  func.func @_vgg_block_kernel(%arg0: i32, %arg1: memref<1x1190x3xf32, #tpu.memory_space<vmem>>, %arg2: memref<27x4xbf16, #tpu.memory_space<vmem>>, %arg3: memref<1x4xf32, #tpu.memory_space<vmem>>, %arg4: memref<36x8xbf16, #tpu.memory_space<vmem>>, %arg5: memref<1x8xf32, #tpu.memory_space<vmem>>, %arg6: memref<1x49x8xf32, #tpu.memory_space<vmem>>, %arg7: memref<1096x4xf32, #tpu.memory_space<vmem>>, %arg8: memref<464x8xf32, #tpu.memory_space<vmem>>) attributes {dimension_semantics = [#tpu.dimension_semantics<parallel>], iteration_bounds = array<i64: 2>, scalar_prefetch = 0 : i64, scratch_operands = 2 : i64, tpu.core_type = #tpu.core_type<tc>, window_params = [{transform_indices = @transform_0, window_bounds = array<i64: 1, 1190, 3>}, {pipeline_mode = #tpu.pipeline_mode<synchronous>, transform_indices = @transform_1, window_bounds = array<i64: 27, 4>}, {pipeline_mode = #tpu.pipeline_mode<synchronous>, transform_indices = @transform_2, window_bounds = array<i64: 1, 4>}, {pipeline_mode = #tpu.pipeline_mode<synchronous>, transform_indices = @transform_3, window_bounds = array<i64: 36, 8>}, {pipeline_mode = #tpu.pipeline_mode<synchronous>, transform_indices = @transform_4, window_bounds = array<i64: 1, 8>}, {transform_indices = @transform_5, window_bounds = array<i64: 1, 49, 8>}]} {
    %c0 = arith.constant 0 : index
    %c0_0 = arith.constant 0 : index
    %c0_1 = arith.constant 0 : index
    %0 = vector.load %arg1[%c0, %c0_0, %c0_1] : memref<1x1190x3xf32, #tpu.memory_space<vmem>>, vector<1x1088x3xf32>
    %1 = vector.shape_cast %0 : vector<1x1088x3xf32> to vector<1088x3xf32>
    %c0_2 = arith.constant 0 : index
    %c1 = arith.constant 1 : index
    %c0_3 = arith.constant 0 : index
    %2 = vector.load %arg1[%c0_2, %c1, %c0_3] : memref<1x1190x3xf32, #tpu.memory_space<vmem>>, vector<1x1088x3xf32>
    %3 = vector.shape_cast %2 : vector<1x1088x3xf32> to vector<1088x3xf32>
    %c0_4 = arith.constant 0 : index
    %c2 = arith.constant 2 : index
    %c0_5 = arith.constant 0 : index
    %4 = vector.load %arg1[%c0_4, %c2, %c0_5] : memref<1x1190x3xf32, #tpu.memory_space<vmem>>, vector<1x1088x3xf32>
    %5 = vector.shape_cast %4 : vector<1x1088x3xf32> to vector<1088x3xf32>
    %c0_6 = arith.constant 0 : index
    %c34 = arith.constant 34 : index
    %c0_7 = arith.constant 0 : index
    %6 = vector.load %arg1[%c0_6, %c34, %c0_7] : memref<1x1190x3xf32, #tpu.memory_space<vmem>>, vector<1x1088x3xf32>
    %7 = vector.shape_cast %6 : vector<1x1088x3xf32> to vector<1088x3xf32>
    %c0_8 = arith.constant 0 : index
    %c35 = arith.constant 35 : index
    %c0_9 = arith.constant 0 : index
    %8 = vector.load %arg1[%c0_8, %c35, %c0_9] : memref<1x1190x3xf32, #tpu.memory_space<vmem>>, vector<1x1088x3xf32>
    %9 = vector.shape_cast %8 : vector<1x1088x3xf32> to vector<1088x3xf32>
    %c0_10 = arith.constant 0 : index
    %c36 = arith.constant 36 : index
    %c0_11 = arith.constant 0 : index
    %10 = vector.load %arg1[%c0_10, %c36, %c0_11] : memref<1x1190x3xf32, #tpu.memory_space<vmem>>, vector<1x1088x3xf32>
    %11 = vector.shape_cast %10 : vector<1x1088x3xf32> to vector<1088x3xf32>
    %c0_12 = arith.constant 0 : index
    %c68 = arith.constant 68 : index
    %c0_13 = arith.constant 0 : index
    %12 = vector.load %arg1[%c0_12, %c68, %c0_13] : memref<1x1190x3xf32, #tpu.memory_space<vmem>>, vector<1x1088x3xf32>
    %13 = vector.shape_cast %12 : vector<1x1088x3xf32> to vector<1088x3xf32>
    %c0_14 = arith.constant 0 : index
    %c69 = arith.constant 69 : index
    %c0_15 = arith.constant 0 : index
    %14 = vector.load %arg1[%c0_14, %c69, %c0_15] : memref<1x1190x3xf32, #tpu.memory_space<vmem>>, vector<1x1088x3xf32>
    %15 = vector.shape_cast %14 : vector<1x1088x3xf32> to vector<1088x3xf32>
    %c0_16 = arith.constant 0 : index
    %c70 = arith.constant 70 : index
    %c0_17 = arith.constant 0 : index
    %16 = vector.load %arg1[%c0_16, %c70, %c0_17] : memref<1x1190x3xf32, #tpu.memory_space<vmem>>, vector<1x1088x3xf32>
    %17 = vector.shape_cast %16 : vector<1x1088x3xf32> to vector<1088x3xf32>
    %18 = tpu.concatenate %1, %3, %5, %7, %9, %11, %13, %15, %17 in 1 : vector<1088x3xf32>, vector<1088x3xf32>, vector<1088x3xf32>, vector<1088x3xf32>, vector<1088x3xf32>, vector<1088x3xf32>, vector<1088x3xf32>, vector<1088x3xf32>, vector<1088x3xf32> -> vector<1088x27xf32>
    %19 = arith.truncf %18 : vector<1088x27xf32> to vector<1088x27xbf16>
    %c0_18 = arith.constant 0 : index
    %c0_19 = arith.constant 0 : index
    %20 = vector.load %arg2[%c0_18, %c0_19] : memref<27x4xbf16, #tpu.memory_space<vmem>>, vector<27x4xbf16>
    %cst = arith.constant dense<0.000000e+00> : vector<1088x4xf32>
    %21 = tpu.matmul %19, %20, %cst {dimension_numbers = #tpu.dot_dimension_numbers<[1], [0], [0], [1], [0, 0, 1, 1], [], []>} : vector<1088x27xbf16>, vector<27x4xbf16>, vector<1088x4xf32> -> vector<1088x4xf32>
    %c0_20 = arith.constant 0 : index
    %c0_21 = arith.constant 0 : index
    %22 = vector.load %arg3[%c0_20, %c0_21] : memref<1x4xf32, #tpu.memory_space<vmem>>, vector<1x4xf32>
    %23 = vector.broadcast %22 : vector<1x4xf32> to vector<1088x4xf32>
    %24 = arith.addf %21, %23 : vector<1088x4xf32>
    %cst_22 = arith.constant 0.000000e+00 : f32
    %25 = vector.broadcast %cst_22 : f32 to vector<1088x4xf32>
    %26 = arith.maximumf %24, %25 : vector<1088x4xf32>
    %c0_23 = arith.constant 0 : index
    %c0_24 = arith.constant 0 : index
    %27 = vector.load %arg7[%c0_23, %c0_24] : memref<1096x4xf32, #tpu.memory_space<vmem>>, vector<1088x4xf32>
    tpu.vector_store %arg7[%c0_23, %c0_24], %26 {strides = array<i32>} : memref<1096x4xf32, #tpu.memory_space<vmem>>, vector<1088x4xf32>,
    %c0_25 = arith.constant 0 : index
    %c0_26 = arith.constant 0 : index
    %28 = tpu.strided_load %arg7[%c0_25, %c0_26] {strides = array<i32: 2, 1>} : memref<1096x4xf32, #tpu.memory_space<vmem>>, vector<456x4xf32>
    %c1_27 = arith.constant 1 : index
    %c0_28 = arith.constant 0 : index
    %29 = tpu.strided_load %arg7[%c1_27, %c0_28] {strides = array<i32: 2, 1>} : memref<1096x4xf32, #tpu.memory_space<vmem>>, vector<456x4xf32>
    %c2_29 = arith.constant 2 : index
    %c0_30 = arith.constant 0 : index
    %30 = tpu.strided_load %arg7[%c2_29, %c0_30] {strides = array<i32: 2, 1>} : memref<1096x4xf32, #tpu.memory_space<vmem>>, vector<456x4xf32>
    %c34_31 = arith.constant 34 : index
    %c0_32 = arith.constant 0 : index
    %31 = tpu.strided_load %arg7[%c34_31, %c0_32] {strides = array<i32: 2, 1>} : memref<1096x4xf32, #tpu.memory_space<vmem>>, vector<456x4xf32>
    %c35_33 = arith.constant 35 : index
    %c0_34 = arith.constant 0 : index
    %32 = tpu.strided_load %arg7[%c35_33, %c0_34] {strides = array<i32: 2, 1>} : memref<1096x4xf32, #tpu.memory_space<vmem>>, vector<456x4xf32>
    %c36_35 = arith.constant 36 : index
    %c0_36 = arith.constant 0 : index
    %33 = tpu.strided_load %arg7[%c36_35, %c0_36] {strides = array<i32: 2, 1>} : memref<1096x4xf32, #tpu.memory_space<vmem>>, vector<456x4xf32>
    %c68_37 = arith.constant 68 : index
    %c0_38 = arith.constant 0 : index
    %34 = tpu.strided_load %arg7[%c68_37, %c0_38] {strides = array<i32: 2, 1>} : memref<1096x4xf32, #tpu.memory_space<vmem>>, vector<456x4xf32>
    %c69_39 = arith.constant 69 : index
    %c0_40 = arith.constant 0 : index
    %35 = tpu.strided_load %arg7[%c69_39, %c0_40] {strides = array<i32: 2, 1>} : memref<1096x4xf32, #tpu.memory_space<vmem>>, vector<456x4xf32>
    %c70_41 = arith.constant 70 : index
    %c0_42 = arith.constant 0 : index
    %36 = tpu.strided_load %arg7[%c70_41, %c0_42] {strides = array<i32: 2, 1>} : memref<1096x4xf32, #tpu.memory_space<vmem>>, vector<456x4xf32>
    %37 = tpu.concatenate %28, %29, %30, %31, %32, %33, %34, %35, %36 in 1 : vector<456x4xf32>, vector<456x4xf32>, vector<456x4xf32>, vector<456x4xf32>, vector<456x4xf32>, vector<456x4xf32>, vector<456x4xf32>, vector<456x4xf32>, vector<456x4xf32> -> vector<456x36xf32>
    %38 = arith.truncf %37 : vector<456x36xf32> to vector<456x36xbf16>
    %c0_43 = arith.constant 0 : index
    %c0_44 = arith.constant 0 : index
    %39 = vector.load %arg4[%c0_43, %c0_44] : memref<36x8xbf16, #tpu.memory_space<vmem>>, vector<36x8xbf16>
    %cst_45 = arith.constant dense<0.000000e+00> : vector<456x8xf32>
    %40 = tpu.matmul %38, %39, %cst_45 {dimension_numbers = #tpu.dot_dimension_numbers<[1], [0], [0], [1], [0, 0, 1, 1], [], []>} : vector<456x36xbf16>, vector<36x8xbf16>, vector<456x8xf32> -> vector<456x8xf32>
    %c0_46 = arith.constant 0 : index
    %c0_47 = arith.constant 0 : index
    %41 = vector.load %arg5[%c0_46, %c0_47] : memref<1x8xf32, #tpu.memory_space<vmem>>, vector<1x8xf32>
    %42 = vector.broadcast %41 : vector<1x8xf32> to vector<456x8xf32>
    %43 = arith.addf %40, %42 : vector<456x8xf32>
    %cst_48 = arith.constant 0.000000e+00 : f32
    %44 = vector.broadcast %cst_48 : f32 to vector<456x8xf32>
    %45 = arith.maximumf %43, %44 : vector<456x8xf32>
    %c0_49 = arith.constant 0 : index
    %c0_50 = arith.constant 0 : index
    %46 = vector.load %arg8[%c0_49, %c0_50] : memref<464x8xf32, #tpu.memory_space<vmem>>, vector<456x8xf32>
    tpu.vector_store %arg8[%c0_49, %c0_50], %45 {strides = array<i32>} : memref<464x8xf32, #tpu.memory_space<vmem>>, vector<456x8xf32>,
    %c0_51 = arith.constant 0 : index
    %c0_52 = arith.constant 0 : index
    %47 = tpu.strided_load %arg8[%c0_51, %c0_52] {strides = array<i32: 2, 1>} : memref<464x8xf32, #tpu.memory_space<vmem>>, vector<7x8xf32>
    %c1_53 = arith.constant 1 : index
    %c0_54 = arith.constant 0 : index
    %48 = tpu.strided_load %arg8[%c1_53, %c0_54] {strides = array<i32: 2, 1>} : memref<464x8xf32, #tpu.memory_space<vmem>>, vector<7x8xf32>
    %49 = arith.maximumf %47, %48 : vector<7x8xf32>
    %c34_55 = arith.constant 34 : index
    %c0_56 = arith.constant 0 : index
    %50 = tpu.strided_load %arg8[%c34_55, %c0_56] {strides = array<i32: 2, 1>} : memref<464x8xf32, #tpu.memory_space<vmem>>, vector<7x8xf32>
    %51 = arith.maximumf %49, %50 : vector<7x8xf32>
    %c35_57 = arith.constant 35 : index
    %c0_58 = arith.constant 0 : index
    %52 = tpu.strided_load %arg8[%c35_57, %c0_58] {strides = array<i32: 2, 1>} : memref<464x8xf32, #tpu.memory_space<vmem>>, vector<7x8xf32>
    %53 = arith.maximumf %51, %52 : vector<7x8xf32>
    %c0_59 = arith.constant 0 : index
    %c0_60 = arith.constant 0 : index
    %c0_61 = arith.constant 0 : index
    %54 = vector.load %arg6[%c0_59, %c0_60, %c0_61] : memref<1x49x8xf32, #tpu.memory_space<vmem>>, vector<1x7x8xf32>
    %55 = vector.shape_cast %54 : vector<1x7x8xf32> to vector<7x8xf32>
    %56 = vector.shape_cast %53 : vector<7x8xf32> to vector<1x7x8xf32>
    tpu.vector_store %arg6[%c0_59, %c0_60, %c0_61], %56 {strides = array<i32>} : memref<1x49x8xf32, #tpu.memory_space<vmem>>, vector<1x7x8xf32>,
    %c68_62 = arith.constant 68 : index
    %c0_63 = arith.constant 0 : index
    %57 = tpu.strided_load %arg8[%c68_62, %c0_63] {strides = array<i32: 2, 1>} : memref<464x8xf32, #tpu.memory_space<vmem>>, vector<7x8xf32>
    %c69_64 = arith.constant 69 : index
    %c0_65 = arith.constant 0 : index
    %58 = tpu.strided_load %arg8[%c69_64, %c0_65] {strides = array<i32: 2, 1>} : memref<464x8xf32, #tpu.memory_space<vmem>>, vector<7x8xf32>
    %59 = arith.maximumf %57, %58 : vector<7x8xf32>
    %c102 = arith.constant 102 : index
    %c0_66 = arith.constant 0 : index
    %60 = tpu.strided_load %arg8[%c102, %c0_66] {strides = array<i32: 2, 1>} : memref<464x8xf32, #tpu.memory_space<vmem>>, vector<7x8xf32>
    %61 = arith.maximumf %59, %60 : vector<7x8xf32>
    %c103 = arith.constant 103 : index
    %c0_67 = arith.constant 0 : index
    %62 = tpu.strided_load %arg8[%c103, %c0_67] {strides = array<i32: 2, 1>} : memref<464x8xf32, #tpu.memory_space<vmem>>, vector<7x8xf32>
    %63 = arith.maximumf %61, %62 : vector<7x8xf32>
    %c0_68 = arith.constant 0 : index
    %c7 = arith.constant 7 : index
    %c0_69 = arith.constant 0 : index
    %64 = vector.load %arg6[%c0_68, %c7, %c0_69] : memref<1x49x8xf32, #tpu.memory_space<vmem>>, vector<1x7x8xf32>
    %65 = vector.shape_cast %64 : vector<1x7x8xf32> to vector<7x8xf32>
    %66 = vector.shape_cast %63 : vector<7x8xf32> to vector<1x7x8xf32>
    tpu.vector_store %arg6[%c0_68, %c7, %c0_69], %66 {strides = array<i32>} : memref<1x49x8xf32, #tpu.memory_space<vmem>>, vector<1x7x8xf32>,
    %c136 = arith.constant 136 : index
    %c0_70 = arith.constant 0 : index
    %67 = tpu.strided_load %arg8[%c136, %c0_70] {strides = array<i32: 2, 1>} : memref<464x8xf32, #tpu.memory_space<vmem>>, vector<7x8xf32>
    %c137 = arith.constant 137 : index
    %c0_71 = arith.constant 0 : index
    %68 = tpu.strided_load %arg8[%c137, %c0_71] {strides = array<i32: 2, 1>} : memref<464x8xf32, #tpu.memory_space<vmem>>, vector<7x8xf32>
    %69 = arith.maximumf %67, %68 : vector<7x8xf32>
    %c170 = arith.constant 170 : index
    %c0_72 = arith.constant 0 : index
    %70 = tpu.strided_load %arg8[%c170, %c0_72] {strides = array<i32: 2, 1>} : memref<464x8xf32, #tpu.memory_space<vmem>>, vector<7x8xf32>
    %71 = arith.maximumf %69, %70 : vector<7x8xf32>
    %c171 = arith.constant 171 : index
    %c0_73 = arith.constant 0 : index
    %72 = tpu.strided_load %arg8[%c171, %c0_73] {strides = array<i32: 2, 1>} : memref<464x8xf32, #tpu.memory_space<vmem>>, vector<7x8xf32>
    %73 = arith.maximumf %71, %72 : vector<7x8xf32>
    %c0_74 = arith.constant 0 : index
    %c14 = arith.constant 14 : index
    %c0_75 = arith.constant 0 : index
    %74 = vector.load %arg6[%c0_74, %c14, %c0_75] : memref<1x49x8xf32, #tpu.memory_space<vmem>>, vector<1x7x8xf32>
    %75 = vector.shape_cast %74 : vector<1x7x8xf32> to vector<7x8xf32>
    %76 = vector.shape_cast %73 : vector<7x8xf32> to vector<1x7x8xf32>
    tpu.vector_store %arg6[%c0_74, %c14, %c0_75], %76 {strides = array<i32>} : memref<1x49x8xf32, #tpu.memory_space<vmem>>, vector<1x7x8xf32>,
    %c204 = arith.constant 204 : index
    %c0_76 = arith.constant 0 : index
    %77 = tpu.strided_load %arg8[%c204, %c0_76] {strides = array<i32: 2, 1>} : memref<464x8xf32, #tpu.memory_space<vmem>>, vector<7x8xf32>
    %c205 = arith.constant 205 : index
    %c0_77 = arith.constant 0 : index
    %78 = tpu.strided_load %arg8[%c205, %c0_77] {strides = array<i32: 2, 1>} : memref<464x8xf32, #tpu.memory_space<vmem>>, vector<7x8xf32>
    %79 = arith.maximumf %77, %78 : vector<7x8xf32>
    %c238 = arith.constant 238 : index
    %c0_78 = arith.constant 0 : index
    %80 = tpu.strided_load %arg8[%c238, %c0_78] {strides = array<i32: 2, 1>} : memref<464x8xf32, #tpu.memory_space<vmem>>, vector<7x8xf32>
    %81 = arith.maximumf %79, %80 : vector<7x8xf32>
    %c239 = arith.constant 239 : index
    %c0_79 = arith.constant 0 : index
    %82 = tpu.strided_load %arg8[%c239, %c0_79] {strides = array<i32: 2, 1>} : memref<464x8xf32, #tpu.memory_space<vmem>>, vector<7x8xf32>
    %83 = arith.maximumf %81, %82 : vector<7x8xf32>
    %c0_80 = arith.constant 0 : index
    %c21 = arith.constant 21 : index
    %c0_81 = arith.constant 0 : index
    %84 = vector.load %arg6[%c0_80, %c21, %c0_81] : memref<1x49x8xf32, #tpu.memory_space<vmem>>, vector<1x7x8xf32>
    %85 = vector.shape_cast %84 : vector<1x7x8xf32> to vector<7x8xf32>
    %86 = vector.shape_cast %83 : vector<7x8xf32> to vector<1x7x8xf32>
    tpu.vector_store %arg6[%c0_80, %c21, %c0_81], %86 {strides = array<i32>} : memref<1x49x8xf32, #tpu.memory_space<vmem>>, vector<1x7x8xf32>,
    %c272 = arith.constant 272 : index
    %c0_82 = arith.constant 0 : index
    %87 = tpu.strided_load %arg8[%c272, %c0_82] {strides = array<i32: 2, 1>} : memref<464x8xf32, #tpu.memory_space<vmem>>, vector<7x8xf32>
    %c273 = arith.constant 273 : index
    %c0_83 = arith.constant 0 : index
    %88 = tpu.strided_load %arg8[%c273, %c0_83] {strides = array<i32: 2, 1>} : memref<464x8xf32, #tpu.memory_space<vmem>>, vector<7x8xf32>
    %89 = arith.maximumf %87, %88 : vector<7x8xf32>
    %c306 = arith.constant 306 : index
    %c0_84 = arith.constant 0 : index
    %90 = tpu.strided_load %arg8[%c306, %c0_84] {strides = array<i32: 2, 1>} : memref<464x8xf32, #tpu.memory_space<vmem>>, vector<7x8xf32>
    %91 = arith.maximumf %89, %90 : vector<7x8xf32>
    %c307 = arith.constant 307 : index
    %c0_85 = arith.constant 0 : index
    %92 = tpu.strided_load %arg8[%c307, %c0_85] {strides = array<i32: 2, 1>} : memref<464x8xf32, #tpu.memory_space<vmem>>, vector<7x8xf32>
    %93 = arith.maximumf %91, %92 : vector<7x8xf32>
    %c0_86 = arith.constant 0 : index
    %c28 = arith.constant 28 : index
    %c0_87 = arith.constant 0 : index
    %94 = vector.load %arg6[%c0_86, %c28, %c0_87] : memref<1x49x8xf32, #tpu.memory_space<vmem>>, vector<1x7x8xf32>
    %95 = vector.shape_cast %94 : vector<1x7x8xf32> to vector<7x8xf32>
    %96 = vector.shape_cast %93 : vector<7x8xf32> to vector<1x7x8xf32>
    tpu.vector_store %arg6[%c0_86, %c28, %c0_87], %96 {strides = array<i32>} : memref<1x49x8xf32, #tpu.memory_space<vmem>>, vector<1x7x8xf32>,
    %c340 = arith.constant 340 : index
    %c0_88 = arith.constant 0 : index
    %97 = tpu.strided_load %arg8[%c340, %c0_88] {strides = array<i32: 2, 1>} : memref<464x8xf32, #tpu.memory_space<vmem>>, vector<7x8xf32>
    %c341 = arith.constant 341 : index
    %c0_89 = arith.constant 0 : index
    %98 = tpu.strided_load %arg8[%c341, %c0_89] {strides = array<i32: 2, 1>} : memref<464x8xf32, #tpu.memory_space<vmem>>, vector<7x8xf32>
    %99 = arith.maximumf %97, %98 : vector<7x8xf32>
    %c374 = arith.constant 374 : index
    %c0_90 = arith.constant 0 : index
    %100 = tpu.strided_load %arg8[%c374, %c0_90] {strides = array<i32: 2, 1>} : memref<464x8xf32, #tpu.memory_space<vmem>>, vector<7x8xf32>
    %101 = arith.maximumf %99, %100 : vector<7x8xf32>
    %c375 = arith.constant 375 : index
    %c0_91 = arith.constant 0 : index
    %102 = tpu.strided_load %arg8[%c375, %c0_91] {strides = array<i32: 2, 1>} : memref<464x8xf32, #tpu.memory_space<vmem>>, vector<7x8xf32>
    %103 = arith.maximumf %101, %102 : vector<7x8xf32>
    %c0_92 = arith.constant 0 : index
    %c35_93 = arith.constant 35 : index
    %c0_94 = arith.constant 0 : index
    %104 = vector.load %arg6[%c0_92, %c35_93, %c0_94] : memref<1x49x8xf32, #tpu.memory_space<vmem>>, vector<1x7x8xf32>
    %105 = vector.shape_cast %104 : vector<1x7x8xf32> to vector<7x8xf32>
    %106 = vector.shape_cast %103 : vector<7x8xf32> to vector<1x7x8xf32>
    tpu.vector_store %arg6[%c0_92, %c35_93, %c0_94], %106 {strides = array<i32>} : memref<1x49x8xf32, #tpu.memory_space<vmem>>, vector<1x7x8xf32>,
    %c408 = arith.constant 408 : index
    %c0_95 = arith.constant 0 : index
    %107 = tpu.strided_load %arg8[%c408, %c0_95] {strides = array<i32: 2, 1>} : memref<464x8xf32, #tpu.memory_space<vmem>>, vector<7x8xf32>
    %c409 = arith.constant 409 : index
    %c0_96 = arith.constant 0 : index
    %108 = tpu.strided_load %arg8[%c409, %c0_96] {strides = array<i32: 2, 1>} : memref<464x8xf32, #tpu.memory_space<vmem>>, vector<7x8xf32>
    %109 = arith.maximumf %107, %108 : vector<7x8xf32>
    %c442 = arith.constant 442 : index
    %c0_97 = arith.constant 0 : index
    %110 = tpu.strided_load %arg8[%c442, %c0_97] {strides = array<i32: 2, 1>} : memref<464x8xf32, #tpu.memory_space<vmem>>, vector<7x8xf32>
    %111 = arith.maximumf %109, %110 : vector<7x8xf32>
    %c443 = arith.constant 443 : index
    %c0_98 = arith.constant 0 : index
    %112 = tpu.strided_load %arg8[%c443, %c0_98] {strides = array<i32: 2, 1>} : memref<464x8xf32, #tpu.memory_space<vmem>>, vector<7x8xf32>
    %113 = arith.maximumf %111, %112 : vector<7x8xf32>
    %c0_99 = arith.constant 0 : index
    %c42 = arith.constant 42 : index
    %c0_100 = arith.constant 0 : index
    %114 = vector.load %arg6[%c0_99, %c42, %c0_100] : memref<1x49x8xf32, #tpu.memory_space<vmem>>, vector<1x7x8xf32>
    %115 = vector.shape_cast %114 : vector<1x7x8xf32> to vector<7x8xf32>
    %116 = vector.shape_cast %113 : vector<7x8xf32> to vector<1x7x8xf32>
    tpu.vector_store %arg6[%c0_99, %c42, %c0_100], %116 {strides = array<i32>} : memref<1x49x8xf32, #tpu.memory_space<vmem>>, vector<1x7x8xf32>,
    return
  }
  func.func @transform_0(%arg0: i32) -> (i32, i32, i32) {
    %c0_i32 = arith.constant 0 : i32
    %c0_i32_0 = arith.constant 0 : i32
    %c0_i32_1 = arith.constant 0 : i32
    return %arg0, %c0_i32, %c0_i32_0 : i32, i32, i32
  }
  func.func @transform_1(%arg0: i32) -> (i32, i32) {
    %c0_i32 = arith.constant 0 : i32
    %c0_i32_0 = arith.constant 0 : i32
    %c0_i32_1 = arith.constant 0 : i32
    return %c0_i32, %c0_i32_0 : i32, i32
  }
  func.func @transform_2(%arg0: i32) -> (i32, i32) {
    %c0_i32 = arith.constant 0 : i32
    %c0_i32_0 = arith.constant 0 : i32
    %c0_i32_1 = arith.constant 0 : i32
    return %c0_i32, %c0_i32_0 : i32, i32
  }
  func.func @transform_3(%arg0: i32) -> (i32, i32) {
    %c0_i32 = arith.constant 0 : i32
    %c0_i32_0 = arith.constant 0 : i32
    %c0_i32_1 = arith.constant 0 : i32
    return %c0_i32, %c0_i32_0 : i32, i32
  }
  func.func @transform_4(%arg0: i32) -> (i32, i32) {
    %c0_i32 = arith.constant 0 : i32
    %c0_i32_0 = arith.constant 0 : i32
    %c0_i32_1 = arith.constant 0 : i32
    return %c0_i32, %c0_i32_0 : i32, i32
  }
  func.func @transform_5(%arg0: i32) -> (i32, i32, i32) {
    %c0_i32 = arith.constant 0 : i32
    %c0_i32_0 = arith.constant 0 : i32
    %c0_i32_1 = arith.constant 0 : i32
    return %arg0, %c0_i32, %c0_i32_0 : i32, i32, i32
  }
}

module attributes {stable_mosaic.version = 11 : i64} {
  func.func @_vgg_block_kernel(%arg0: i32, %arg1: memref<1x90x8xf32, #tpu.memory_space<vmem>>, %arg2: memref<72x8xbf16, #tpu.memory_space<vmem>>, %arg3: memref<1x8xf32, #tpu.memory_space<vmem>>, %arg4: memref<72x16xbf16, #tpu.memory_space<vmem>>, %arg5: memref<1x16xf32, #tpu.memory_space<vmem>>, %arg6: memref<1x1x16xf32, #tpu.memory_space<vmem>>, %arg7: memref<72x8xf32, #tpu.memory_space<vmem>>, %arg8: memref<24x16xf32, #tpu.memory_space<vmem>>) attributes {dimension_semantics = [#tpu.dimension_semantics<parallel>], iteration_bounds = array<i64: 2>, scalar_prefetch = 0 : i64, scratch_operands = 2 : i64, tpu.core_type = #tpu.core_type<tc>, window_params = [{transform_indices = @transform_0, window_bounds = array<i64: 1, 90, 8>}, {pipeline_mode = #tpu.pipeline_mode<synchronous>, transform_indices = @transform_1, window_bounds = array<i64: 72, 8>}, {pipeline_mode = #tpu.pipeline_mode<synchronous>, transform_indices = @transform_2, window_bounds = array<i64: 1, 8>}, {pipeline_mode = #tpu.pipeline_mode<synchronous>, transform_indices = @transform_3, window_bounds = array<i64: 72, 16>}, {pipeline_mode = #tpu.pipeline_mode<synchronous>, transform_indices = @transform_4, window_bounds = array<i64: 1, 16>}, {transform_indices = @transform_5, window_bounds = array<i64: 1, 1, 16>}]} {
    %c0 = arith.constant 0 : index
    %c0_0 = arith.constant 0 : index
    %c0_1 = arith.constant 0 : index
    %0 = vector.load %arg1[%c0, %c0_0, %c0_1] : memref<1x90x8xf32, #tpu.memory_space<vmem>>, vector<1x63x8xf32>
    %1 = vector.shape_cast %0 : vector<1x63x8xf32> to vector<63x8xf32>
    %c0_2 = arith.constant 0 : index
    %c1 = arith.constant 1 : index
    %c0_3 = arith.constant 0 : index
    %2 = vector.load %arg1[%c0_2, %c1, %c0_3] : memref<1x90x8xf32, #tpu.memory_space<vmem>>, vector<1x63x8xf32>
    %3 = vector.shape_cast %2 : vector<1x63x8xf32> to vector<63x8xf32>
    %c0_4 = arith.constant 0 : index
    %c2 = arith.constant 2 : index
    %c0_5 = arith.constant 0 : index
    %4 = vector.load %arg1[%c0_4, %c2, %c0_5] : memref<1x90x8xf32, #tpu.memory_space<vmem>>, vector<1x63x8xf32>
    %5 = vector.shape_cast %4 : vector<1x63x8xf32> to vector<63x8xf32>
    %c0_6 = arith.constant 0 : index
    %c9 = arith.constant 9 : index
    %c0_7 = arith.constant 0 : index
    %6 = vector.load %arg1[%c0_6, %c9, %c0_7] : memref<1x90x8xf32, #tpu.memory_space<vmem>>, vector<1x63x8xf32>
    %7 = vector.shape_cast %6 : vector<1x63x8xf32> to vector<63x8xf32>
    %c0_8 = arith.constant 0 : index
    %c10 = arith.constant 10 : index
    %c0_9 = arith.constant 0 : index
    %8 = vector.load %arg1[%c0_8, %c10, %c0_9] : memref<1x90x8xf32, #tpu.memory_space<vmem>>, vector<1x63x8xf32>
    %9 = vector.shape_cast %8 : vector<1x63x8xf32> to vector<63x8xf32>
    %c0_10 = arith.constant 0 : index
    %c11 = arith.constant 11 : index
    %c0_11 = arith.constant 0 : index
    %10 = vector.load %arg1[%c0_10, %c11, %c0_11] : memref<1x90x8xf32, #tpu.memory_space<vmem>>, vector<1x63x8xf32>
    %11 = vector.shape_cast %10 : vector<1x63x8xf32> to vector<63x8xf32>
    %c0_12 = arith.constant 0 : index
    %c18 = arith.constant 18 : index
    %c0_13 = arith.constant 0 : index
    %12 = vector.load %arg1[%c0_12, %c18, %c0_13] : memref<1x90x8xf32, #tpu.memory_space<vmem>>, vector<1x63x8xf32>
    %13 = vector.shape_cast %12 : vector<1x63x8xf32> to vector<63x8xf32>
    %c0_14 = arith.constant 0 : index
    %c19 = arith.constant 19 : index
    %c0_15 = arith.constant 0 : index
    %14 = vector.load %arg1[%c0_14, %c19, %c0_15] : memref<1x90x8xf32, #tpu.memory_space<vmem>>, vector<1x63x8xf32>
    %15 = vector.shape_cast %14 : vector<1x63x8xf32> to vector<63x8xf32>
    %c0_16 = arith.constant 0 : index
    %c20 = arith.constant 20 : index
    %c0_17 = arith.constant 0 : index
    %16 = vector.load %arg1[%c0_16, %c20, %c0_17] : memref<1x90x8xf32, #tpu.memory_space<vmem>>, vector<1x63x8xf32>
    %17 = vector.shape_cast %16 : vector<1x63x8xf32> to vector<63x8xf32>
    %18 = tpu.concatenate %1, %3, %5, %7, %9, %11, %13, %15, %17 in 1 : vector<63x8xf32>, vector<63x8xf32>, vector<63x8xf32>, vector<63x8xf32>, vector<63x8xf32>, vector<63x8xf32>, vector<63x8xf32>, vector<63x8xf32>, vector<63x8xf32> -> vector<63x72xf32>
    %19 = arith.truncf %18 : vector<63x72xf32> to vector<63x72xbf16>
    %c0_18 = arith.constant 0 : index
    %c0_19 = arith.constant 0 : index
    %20 = vector.load %arg2[%c0_18, %c0_19] : memref<72x8xbf16, #tpu.memory_space<vmem>>, vector<72x8xbf16>
    %cst = arith.constant dense<0.000000e+00> : vector<63x8xf32>
    %21 = tpu.matmul %19, %20, %cst {dimension_numbers = #tpu.dot_dimension_numbers<[1], [0], [0], [1], [0, 0, 1, 1], [], []>} : vector<63x72xbf16>, vector<72x8xbf16>, vector<63x8xf32> -> vector<63x8xf32>
    %c0_20 = arith.constant 0 : index
    %c0_21 = arith.constant 0 : index
    %22 = vector.load %arg3[%c0_20, %c0_21] : memref<1x8xf32, #tpu.memory_space<vmem>>, vector<1x8xf32>
    %23 = vector.broadcast %22 : vector<1x8xf32> to vector<63x8xf32>
    %24 = arith.addf %21, %23 : vector<63x8xf32>
    %cst_22 = arith.constant 0.000000e+00 : f32
    %25 = vector.broadcast %cst_22 : f32 to vector<63x8xf32>
    %26 = arith.maximumf %24, %25 : vector<63x8xf32>
    %c0_23 = arith.constant 0 : index
    %c0_24 = arith.constant 0 : index
    %27 = vector.load %arg7[%c0_23, %c0_24] : memref<72x8xf32, #tpu.memory_space<vmem>>, vector<63x8xf32>
    tpu.vector_store %arg7[%c0_23, %c0_24], %26 {strides = array<i32>} : memref<72x8xf32, #tpu.memory_space<vmem>>, vector<63x8xf32>,
    %c0_25 = arith.constant 0 : index
    %c0_26 = arith.constant 0 : index
    %28 = tpu.strided_load %arg7[%c0_25, %c0_26] {strides = array<i32: 2, 1>} : memref<72x8xf32, #tpu.memory_space<vmem>>, vector<11x8xf32>
    %c1_27 = arith.constant 1 : index
    %c0_28 = arith.constant 0 : index
    %29 = tpu.strided_load %arg7[%c1_27, %c0_28] {strides = array<i32: 2, 1>} : memref<72x8xf32, #tpu.memory_space<vmem>>, vector<11x8xf32>
    %c2_29 = arith.constant 2 : index
    %c0_30 = arith.constant 0 : index
    %30 = tpu.strided_load %arg7[%c2_29, %c0_30] {strides = array<i32: 2, 1>} : memref<72x8xf32, #tpu.memory_space<vmem>>, vector<11x8xf32>
    %c9_31 = arith.constant 9 : index
    %c0_32 = arith.constant 0 : index
    %31 = tpu.strided_load %arg7[%c9_31, %c0_32] {strides = array<i32: 2, 1>} : memref<72x8xf32, #tpu.memory_space<vmem>>, vector<11x8xf32>
    %c10_33 = arith.constant 10 : index
    %c0_34 = arith.constant 0 : index
    %32 = tpu.strided_load %arg7[%c10_33, %c0_34] {strides = array<i32: 2, 1>} : memref<72x8xf32, #tpu.memory_space<vmem>>, vector<11x8xf32>
    %c11_35 = arith.constant 11 : index
    %c0_36 = arith.constant 0 : index
    %33 = tpu.strided_load %arg7[%c11_35, %c0_36] {strides = array<i32: 2, 1>} : memref<72x8xf32, #tpu.memory_space<vmem>>, vector<11x8xf32>
    %c18_37 = arith.constant 18 : index
    %c0_38 = arith.constant 0 : index
    %34 = tpu.strided_load %arg7[%c18_37, %c0_38] {strides = array<i32: 2, 1>} : memref<72x8xf32, #tpu.memory_space<vmem>>, vector<11x8xf32>
    %c19_39 = arith.constant 19 : index
    %c0_40 = arith.constant 0 : index
    %35 = tpu.strided_load %arg7[%c19_39, %c0_40] {strides = array<i32: 2, 1>} : memref<72x8xf32, #tpu.memory_space<vmem>>, vector<11x8xf32>
    %c20_41 = arith.constant 20 : index
    %c0_42 = arith.constant 0 : index
    %36 = tpu.strided_load %arg7[%c20_41, %c0_42] {strides = array<i32: 2, 1>} : memref<72x8xf32, #tpu.memory_space<vmem>>, vector<11x8xf32>
    %37 = tpu.concatenate %28, %29, %30, %31, %32, %33, %34, %35, %36 in 1 : vector<11x8xf32>, vector<11x8xf32>, vector<11x8xf32>, vector<11x8xf32>, vector<11x8xf32>, vector<11x8xf32>, vector<11x8xf32>, vector<11x8xf32>, vector<11x8xf32> -> vector<11x72xf32>
    %38 = arith.truncf %37 : vector<11x72xf32> to vector<11x72xbf16>
    %c0_43 = arith.constant 0 : index
    %c0_44 = arith.constant 0 : index
    %39 = vector.load %arg4[%c0_43, %c0_44] : memref<72x16xbf16, #tpu.memory_space<vmem>>, vector<72x16xbf16>
    %cst_45 = arith.constant dense<0.000000e+00> : vector<11x16xf32>
    %40 = tpu.matmul %38, %39, %cst_45 {dimension_numbers = #tpu.dot_dimension_numbers<[1], [0], [0], [1], [0, 0, 1, 1], [], []>} : vector<11x72xbf16>, vector<72x16xbf16>, vector<11x16xf32> -> vector<11x16xf32>
    %c0_46 = arith.constant 0 : index
    %c0_47 = arith.constant 0 : index
    %41 = vector.load %arg5[%c0_46, %c0_47] : memref<1x16xf32, #tpu.memory_space<vmem>>, vector<1x16xf32>
    %42 = vector.broadcast %41 : vector<1x16xf32> to vector<11x16xf32>
    %43 = arith.addf %40, %42 : vector<11x16xf32>
    %cst_48 = arith.constant 0.000000e+00 : f32
    %44 = vector.broadcast %cst_48 : f32 to vector<11x16xf32>
    %45 = arith.maximumf %43, %44 : vector<11x16xf32>
    %c0_49 = arith.constant 0 : index
    %c0_50 = arith.constant 0 : index
    %46 = vector.load %arg8[%c0_49, %c0_50] : memref<24x16xf32, #tpu.memory_space<vmem>>, vector<11x16xf32>
    tpu.vector_store %arg8[%c0_49, %c0_50], %45 {strides = array<i32>} : memref<24x16xf32, #tpu.memory_space<vmem>>, vector<11x16xf32>,
    %c0_51 = arith.constant 0 : index
    %c0_52 = arith.constant 0 : index
    %47 = tpu.strided_load %arg8[%c0_51, %c0_52] {strides = array<i32: 2, 1>} : memref<24x16xf32, #tpu.memory_space<vmem>>, vector<1x16xf32>
    %c1_53 = arith.constant 1 : index
    %c0_54 = arith.constant 0 : index
    %48 = tpu.strided_load %arg8[%c1_53, %c0_54] {strides = array<i32: 2, 1>} : memref<24x16xf32, #tpu.memory_space<vmem>>, vector<1x16xf32>
    %49 = arith.maximumf %47, %48 : vector<1x16xf32>
    %c9_55 = arith.constant 9 : index
    %c0_56 = arith.constant 0 : index
    %50 = tpu.strided_load %arg8[%c9_55, %c0_56] {strides = array<i32: 2, 1>} : memref<24x16xf32, #tpu.memory_space<vmem>>, vector<1x16xf32>
    %51 = arith.maximumf %49, %50 : vector<1x16xf32>
    %c10_57 = arith.constant 10 : index
    %c0_58 = arith.constant 0 : index
    %52 = tpu.strided_load %arg8[%c10_57, %c0_58] {strides = array<i32: 2, 1>} : memref<24x16xf32, #tpu.memory_space<vmem>>, vector<1x16xf32>
    %53 = arith.maximumf %51, %52 : vector<1x16xf32>
    %c0_59 = arith.constant 0 : index
    %c0_60 = arith.constant 0 : index
    %c0_61 = arith.constant 0 : index
    %54 = vector.load %arg6[%c0_59, %c0_60, %c0_61] : memref<1x1x16xf32, #tpu.memory_space<vmem>>, vector<1x1x16xf32>
    %55 = vector.shape_cast %54 : vector<1x1x16xf32> to vector<1x16xf32>
    %56 = vector.shape_cast %53 : vector<1x16xf32> to vector<1x1x16xf32>
    tpu.vector_store %arg6[%c0_59, %c0_60, %c0_61], %56 {strides = array<i32>} : memref<1x1x16xf32, #tpu.memory_space<vmem>>, vector<1x1x16xf32>,
    return
  }
  func.func @transform_0(%arg0: i32) -> (i32, i32, i32) {
    %c0_i32 = arith.constant 0 : i32
    %c0_i32_0 = arith.constant 0 : i32
    %c0_i32_1 = arith.constant 0 : i32
    return %arg0, %c0_i32, %c0_i32_0 : i32, i32, i32
  }
  func.func @transform_1(%arg0: i32) -> (i32, i32) {
    %c0_i32 = arith.constant 0 : i32
    %c0_i32_0 = arith.constant 0 : i32
    %c0_i32_1 = arith.constant 0 : i32
    return %c0_i32, %c0_i32_0 : i32, i32
  }
  func.func @transform_2(%arg0: i32) -> (i32, i32) {
    %c0_i32 = arith.constant 0 : i32
    %c0_i32_0 = arith.constant 0 : i32
    %c0_i32_1 = arith.constant 0 : i32
    return %c0_i32, %c0_i32_0 : i32, i32
  }
  func.func @transform_3(%arg0: i32) -> (i32, i32) {
    %c0_i32 = arith.constant 0 : i32
    %c0_i32_0 = arith.constant 0 : i32
    %c0_i32_1 = arith.constant 0 : i32
    return %c0_i32, %c0_i32_0 : i32, i32
  }
  func.func @transform_4(%arg0: i32) -> (i32, i32) {
    %c0_i32 = arith.constant 0 : i32
    %c0_i32_0 = arith.constant 0 : i32
    %c0_i32_1 = arith.constant 0 : i32
    return %c0_i32, %c0_i32_0 : i32, i32
  }
  func.func @transform_5(%arg0: i32) -> (i32, i32, i32) {
    %c0_i32 = arith.constant 0 : i32
    %c0_i32_0 = arith.constant 0 : i32
    %c0_i32_1 = arith.constant 0 : i32
    return %arg0, %c0_i32, %c0_i32_0 : i32, i32, i32
  }
}

module attributes {stable_mosaic.version = 11 : i64} {
  func.func @_classifier_kernel(%arg0: i32, %arg1: memref<16x128xbf16, #tpu.memory_space<vmem>>, %arg2: memref<128x128xbf16, #tpu.memory_space<vmem>>, %arg3: memref<1x128xf32, #tpu.memory_space<vmem>>, %arg4: memref<128x128xbf16, #tpu.memory_space<vmem>>, %arg5: memref<1x128xf32, #tpu.memory_space<vmem>>, %arg6: memref<16x128xf32, #tpu.memory_space<vmem>>) attributes {dimension_semantics = [#tpu.dimension_semantics<parallel>], iteration_bounds = array<i64: 1>, scalar_prefetch = 0 : i64, scratch_operands = 0 : i64, tpu.core_type = #tpu.core_type<tc>, window_params = [{transform_indices = @transform_0, window_bounds = array<i64: 16, 128>}, {pipeline_mode = #tpu.pipeline_mode<synchronous>, transform_indices = @transform_1, window_bounds = array<i64: 128, 128>}, {pipeline_mode = #tpu.pipeline_mode<synchronous>, transform_indices = @transform_2, window_bounds = array<i64: 1, 128>}, {pipeline_mode = #tpu.pipeline_mode<synchronous>, transform_indices = @transform_3, window_bounds = array<i64: 128, 128>}, {pipeline_mode = #tpu.pipeline_mode<synchronous>, transform_indices = @transform_4, window_bounds = array<i64: 1, 128>}, {transform_indices = @transform_5, window_bounds = array<i64: 16, 128>}]} {
    %c0 = arith.constant 0 : index
    %c0_0 = arith.constant 0 : index
    %0 = vector.load %arg1[%c0, %c0_0] : memref<16x128xbf16, #tpu.memory_space<vmem>>, vector<16x128xbf16>
    %c0_1 = arith.constant 0 : index
    %c0_2 = arith.constant 0 : index
    %1 = vector.load %arg2[%c0_1, %c0_2] : memref<128x128xbf16, #tpu.memory_space<vmem>>, vector<128x128xbf16>
    %cst = arith.constant dense<0.000000e+00> : vector<16x128xf32>
    %2 = tpu.matmul %0, %1, %cst {dimension_numbers = #tpu.dot_dimension_numbers<[1], [0], [0], [1], [0, 0, 1, 1], [], []>} : vector<16x128xbf16>, vector<128x128xbf16>, vector<16x128xf32> -> vector<16x128xf32>
    %c0_3 = arith.constant 0 : index
    %c0_4 = arith.constant 0 : index
    %3 = vector.load %arg3[%c0_3, %c0_4] : memref<1x128xf32, #tpu.memory_space<vmem>>, vector<1x128xf32>
    %4 = vector.broadcast %3 : vector<1x128xf32> to vector<16x128xf32>
    %5 = arith.addf %2, %4 : vector<16x128xf32>
    %cst_5 = arith.constant 0.000000e+00 : f32
    %6 = vector.broadcast %cst_5 : f32 to vector<16x128xf32>
    %7 = arith.maximumf %5, %6 : vector<16x128xf32>
    %8 = arith.truncf %7 : vector<16x128xf32> to vector<16x128xbf16>
    %c0_6 = arith.constant 0 : index
    %c0_7 = arith.constant 0 : index
    %9 = vector.load %arg4[%c0_6, %c0_7] : memref<128x128xbf16, #tpu.memory_space<vmem>>, vector<128x128xbf16>
    %cst_8 = arith.constant dense<0.000000e+00> : vector<16x128xf32>
    %10 = tpu.matmul %8, %9, %cst_8 {dimension_numbers = #tpu.dot_dimension_numbers<[1], [0], [0], [1], [0, 0, 1, 1], [], []>} : vector<16x128xbf16>, vector<128x128xbf16>, vector<16x128xf32> -> vector<16x128xf32>
    %c0_9 = arith.constant 0 : index
    %c0_10 = arith.constant 0 : index
    %11 = vector.load %arg5[%c0_9, %c0_10] : memref<1x128xf32, #tpu.memory_space<vmem>>, vector<1x128xf32>
    %12 = vector.broadcast %11 : vector<1x128xf32> to vector<16x128xf32>
    %13 = arith.addf %10, %12 : vector<16x128xf32>
    %c0_11 = arith.constant 0 : index
    %c0_12 = arith.constant 0 : index
    %14 = vector.load %arg6[%c0_11, %c0_12] : memref<16x128xf32, #tpu.memory_space<vmem>>, vector<16x128xf32>
    tpu.vector_store %arg6[%c0_11, %c0_12], %13 {strides = array<i32>} : memref<16x128xf32, #tpu.memory_space<vmem>>, vector<16x128xf32>,
    return
  }
  func.func @transform_0(%arg0: i32) -> (i32, i32) {
    %c0_i32 = arith.constant 0 : i32
    %c0_i32_0 = arith.constant 0 : i32
    return %arg0, %c0_i32 : i32, i32
  }
  func.func @transform_1(%arg0: i32) -> (i32, i32) {
    %c0_i32 = arith.constant 0 : i32
    %c0_i32_0 = arith.constant 0 : i32
    %c0_i32_1 = arith.constant 0 : i32
    return %c0_i32, %c0_i32_0 : i32, i32
  }
  func.func @transform_2(%arg0: i32) -> (i32, i32) {
    %c0_i32 = arith.constant 0 : i32
    %c0_i32_0 = arith.constant 0 : i32
    %c0_i32_1 = arith.constant 0 : i32
    return %c0_i32, %c0_i32_0 : i32, i32
  }
  func.func @transform_3(%arg0: i32) -> (i32, i32) {
    %c0_i32 = arith.constant 0 : i32
    %c0_i32_0 = arith.constant 0 : i32
    %c0_i32_1 = arith.constant 0 : i32
    return %c0_i32, %c0_i32_0 : i32, i32
  }
  func.func @transform_4(%arg0: i32) -> (i32, i32) {
    %c0_i32 = arith.constant 0 : i32
    %c0_i32_0 = arith.constant 0 : i32
    %c0_i32_1 = arith.constant 0 : i32
    return %c0_i32, %c0_i32_0 : i32, i32
  }
  func.func @transform_5(%arg0: i32) -> (i32, i32) {
    %c0_i32 = arith.constant 0 : i32
    %c0_i32_0 = arith.constant 0 : i32
    return %arg0, %c0_i32 : i32, i32
  }
}

</mosaic_0001>

<llo_original>
// kernel: my_vgg_forward.5
$region0: #{my_vgg_forward.5}
  #allocation0 [shape = 'u32[]', space=smem, size = 0x4, offset = 0x4, fixed_abs, tag = 'smem constant byte address 0x4 - core index']
  #allocation1 [shape = 'u32[72,128]{1,0:T(1,128)}', space=vmem, size = 0x9000, scoped, tag = 'internal scratch']
  %s0 = inlined_call_operand.vmem [shape: bf16[16,128], index: 0, kind: input, shape index: {}]
  %s1 = inlined_call_operand.vmem [shape: bf16[128,128], index: 1, kind: input, shape index: {}]
  %s2 = inlined_call_operand.vmem [shape: f32[1,128], index: 2, kind: input, shape index: {}]
  %s3 = inlined_call_operand.vmem [shape: bf16[128,128], index: 3, kind: input, shape index: {}]
  %s4 = inlined_call_operand.vmem [shape: f32[1,128], index: 4, kind: input, shape index: {}]
  %s5 = inlined_call_operand.vmem [shape: f32[16,128], index: 5, kind: output, shape index: {}]
  %s6 = sld [smem:[#allocation0]]
  $region30: #{my_vgg_forward.5} parent=0
    _
  %s8 = ssub.s32 1, %s6
  %s9 = scalar_select 0, %s8, %s6
  // Predicated region
  $region2: #{my_vgg_forward.5} parent=0 // pred_check
    _
  $region3: #{my_vgg_forward.5} parent=0 // pred_check_branch
    %11 = sbr.rel (0) target = $region5
  $region4: #{my_vgg_forward.5} parent=0 // pred_region
    _
  $region5: #{my_vgg_forward.5} parent=0 // pred_fallthru
    _
  // Predicated region
  $region6: #{my_vgg_forward.5} parent=0 // pred_check
    _
  $region7: #{my_vgg_forward.5} parent=0 // pred_check_branch
    %13 = sbr.rel (0) target = $region9
  $region8: #{my_vgg_forward.5} parent=0 // pred_region
    _
  $region9: #{my_vgg_forward.5} parent=0 // pred_fallthru
    _
  // Predicated region
  $region10: #{my_vgg_forward.5} parent=0 // pred_check
    _
  $region11: #{my_vgg_forward.5} parent=0 // pred_check_branch
    %15 = sbr.rel (0) target = $region13
  $region12: #{my_vgg_forward.5} parent=0 // pred_region
    _
  $region13: #{my_vgg_forward.5} parent=0 // pred_fallthru
    _
  // Predicated region
  $region14: #{my_vgg_forward.5} parent=0 // pred_check
    _
  $region15: #{my_vgg_forward.5} parent=0 // pred_check_branch
    %17 = sbr.rel (0) target = $region17
  $region16: #{my_vgg_forward.5} parent=0 // pred_region
    _
  $region17: #{my_vgg_forward.5} parent=0 // pred_fallthru
    _
  // Predicated region
  $region18: #{my_vgg_forward.5} parent=0 // pred_check
    _
  $region19: #{my_vgg_forward.5} parent=0 // pred_check_branch
    %19 = sbr.rel (0) target = $region21
  $region20: #{my_vgg_forward.5} parent=0 // pred_region
    _
  $region21: #{my_vgg_forward.5} parent=0 // pred_fallthru
    _
  %v20 = vld [vmem:[%s0] sm:$0xf]
  %v21 = vld [vmem:[%s0 + $0x4] sm:$0xf]
  %v22 = vld [vmem:[%s1] sm:$0xf]
  %v23 = vld [vmem:[%s1 + $0x4] sm:$0xf]
  %v24 = vld [vmem:[%s1 + $0x8] sm:$0xf]
  %v25 = vld [vmem:[%s1 + $0xc] sm:$0xf]
  %v26 = vld [vmem:[%s1 + $0x10] sm:$0xf]
  %v27 = vld [vmem:[%s1 + $0x14] sm:$0xf]
  %v28 = vld [vmem:[%s1 + $0x18] sm:$0xf]
  %v29 = vld [vmem:[%s1 + $0x1c] sm:$0xf]
  %v30 = vld [vmem:[%s1 + $0x20] sm:$0xf]
  %v31 = vld [vmem:[%s1 + $0x24] sm:$0xf]
  %v32 = vld [vmem:[%s1 + $0x28] sm:$0xf]
  %v33 = vld [vmem:[%s1 + $0x2c] sm:$0xf]
  %v34 = vld [vmem:[%s1 + $0x30] sm:$0xf]
  %v35 = vld [vmem:[%s1 + $0x34] sm:$0xf]
  %v36 = vld [vmem:[%s1 + $0x38] sm:$0xf]
  %v37 = vld [vmem:[%s1 + $0x3c] sm:$0xf]
  %v38 = vld [vmem:[%s2] sm:$0x1]
  %v40 = vperm.slane %v38, 0
  %v44 = vunpack.c.l.b16 %v20
  %v45 = vunpack.c.l.b16 %v21
  %v46 = vpack.c.b16 %v45, %v44
  %v64 = vunpack.c.l.b16 %v22
  %v65 = vunpack.c.l.b16 %v23
  %v66 = vunpack.c.l.b16 %v24
  %v67 = vunpack.c.l.b16 %v25
  %v68 = vunpack.c.l.b16 %v26
  %v69 = vunpack.c.l.b16 %v27
  %v70 = vunpack.c.l.b16 %v28
  %v71 = vunpack.c.l.b16 %v29
  %v72 = vunpack.c.l.b16 %v30
  %v73 = vunpack.c.l.b16 %v31
  %v74 = vunpack.c.l.b16 %v32
  %v75 = vunpack.c.l.b16 %v33
  %v76 = vunpack.c.l.b16 %v34
  %v77 = vunpack.c.l.b16 %v35
  %v78 = vunpack.c.l.b16 %v36
  %v79 = vunpack.c.l.b16 %v37
  %v80 = vpack.c.b16 %v65, %v64
  %v81 = vpack.c.b16 %v67, %v66
  %v82 = vpack.c.b16 %v69, %v68
  %v83 = vpack.c.b16 %v71, %v70
  %v84 = vpack.c.b16 %v73, %v72
  %v85 = vpack.c.b16 %v75, %v74
  %v86 = vpack.c.b16 %v77, %v76
  %v87 = vpack.c.b16 %v79, %v78
  %96 = vmatpush.bf16.msra.mxu0 %v87
  %97 = vmatpush.bf16.msra.mxu0 %v86
  %98 = vmatpush.bf16.msra.mxu0 %v85
  %99 = vmatpush.bf16.msra.mxu0 %v84
  %100 = vmatpush.bf16.msra.mxu0 %v83
  %101 = vmatpush.bf16.msra.mxu0 %v82
  %102 = vmatpush.bf16.msra.mxu0 %v81
  %103 = vmatpush.bf16.msra.mxu0 %v80
  %104 = vmatmul.bf16.gmra.mxu0 %v46
  %v105 = vpop.f32.mrf.mxu0
  %v106 = vadd.f32 %v40, %v105
  %v107 = vpop.f32.mrf.mxu0
  %v108 = vadd.f32 %v40, %v107
  %109 = vdwg.mxu0
  %v110 = vmax.f32 %v106, 0.0
  %v111 = vmax.f32 %v108, 0.0
  %v112 = vpack.c.bf16 %v111, %v110
  %v113 = vld [vmem:[%s3] sm:$0xf]
  %v114 = vld [vmem:[%s3 + $0x4] sm:$0xf]
  %v115 = vld [vmem:[%s3 + $0x8] sm:$0xf]
  %v116 = vld [vmem:[%s3 + $0xc] sm:$0xf]
  %v117 = vld [vmem:[%s3 + $0x10] sm:$0xf]
  %v118 = vld [vmem:[%s3 + $0x14] sm:$0xf]
  %v119 = vld [vmem:[%s3 + $0x18] sm:$0xf]
  %v120 = vld [vmem:[%s3 + $0x1c] sm:$0xf]
  %v121 = vld [vmem:[%s3 + $0x20] sm:$0xf]
  %v122 = vld [vmem:[%s3 + $0x24] sm:$0xf]
  %v123 = vld [vmem:[%s3 + $0x28] sm:$0xf]
  %v124 = vld [vmem:[%s3 + $0x2c] sm:$0xf]
  %v125 = vld [vmem:[%s3 + $0x30] sm:$0xf]
  %v126 = vld [vmem:[%s3 + $0x34] sm:$0xf]
  %v127 = vld [vmem:[%s3 + $0x38] sm:$0xf]
  %v128 = vld [vmem:[%s3 + $0x3c] sm:$0xf]
  %v129 = vld [vmem:[%s4] sm:$0x1]
  %v131 = vperm.slane %v129, 0
  %v149 = vunpack.c.l.b16 %v113
  %v150 = vunpack.c.l.b16 %v114
  %v151 = vunpack.c.l.b16 %v115
  %v152 = vunpack.c.l.b16 %v116
  %v153 = vunpack.c.l.b16 %v117
  %v154 = vunpack.c.l.b16 %v118
  %v155 = vunpack.c.l.b16 %v119
  %v156 = vunpack.c.l.b16 %v120
  %v157 = vunpack.c.l.b16 %v121
  %v158 = vunpack.c.l.b16 %v122
  %v159 = vunpack.c.l.b16 %v123
  %v160 = vunpack.c.l.b16 %v124
  %v161 = vunpack.c.l.b16 %v125
  %v162 = vunpack.c.l.b16 %v126
  %v163 = vunpack.c.l.b16 %v127
  %v164 = vunpack.c.l.b16 %v128
  %v165 = vpack.c.b16 %v150, %v149
  %v166 = vpack.c.b16 %v152, %v151
  %v167 = vpack.c.b16 %v154, %v153
  %v168 = vpack.c.b16 %v156, %v155
  %v169 = vpack.c.b16 %v158, %v157
  %v170 = vpack.c.b16 %v160, %v159
  %v171 = vpack.c.b16 %v162, %v161
  %v172 = vpack.c.b16 %v164, %v163
  %181 = vmatpush.bf16.msra.mxu0 %v172
  %182 = vmatpush.bf16.msra.mxu0 %v171
  %183 = vmatpush.bf16.msra.mxu0 %v170
  %184 = vmatpush.bf16.msra.mxu0 %v169
  %185 = vmatpush.bf16.msra.mxu0 %v168
  %186 = vmatpush.bf16.msra.mxu0 %v167
  %187 = vmatpush.bf16.msra.mxu0 %v166
  %188 = vmatpush.bf16.msra.mxu0 %v165
  %189 = vmatmul.bf16.gmra.mxu0 %v112
  %v190 = vpop.f32.mrf.mxu0
  %v191 = vadd.f32 %v131, %v190
  %v192 = vpop.f32.mrf.mxu0
  %v193 = vadd.f32 %v131, %v192
  %194 = vdwg.mxu0
  %195 = vst [vmem:[%s5] sm:$0xff] %v191
  %196 = vst [vmem:[%s5 + $0x8] sm:$0xff] %v193
  // Predicated region
  $region22: #{my_vgg_forward.5} parent=0 // pred_check
    _
  $region23: #{my_vgg_forward.5} parent=0 // pred_check_branch
    %198 = sbr.rel (0) target = $region25
  $region24: #{my_vgg_forward.5} parent=0 // pred_region
    _
  $region25: #{my_vgg_forward.5} parent=0 // pred_fallthru
    _
  // Predicated region
  $region26: #{my_vgg_forward.5} parent=0 // pred_check
    _
  $region27: #{my_vgg_forward.5} parent=0 // pred_check_branch
    %200 = sbr.rel (0) target = $region29
  $region28: #{my_vgg_forward.5} parent=0 // pred_region
    _
  $region29: #{my_vgg_forward.5} parent=0 // pred_fallthru
    _

// kernel: my_vgg_forward.4
$region0: #{my_vgg_forward.4}
  #allocation0 [shape = 'u32[]', space=smem, size = 0x4, offset = 0x4, fixed_abs, tag = 'smem constant byte address 0x4 - core index']
  #allocation1 [shape = 'u32[72,128]{1,0:T(1,128)}', space=vmem, size = 0x9000, scoped, tag = 'internal scratch']
  #allocation2 [shape = 'f32[72,8]{1,0:T(8,128)}', space=vmem, size = 0x9000, scoped, tag = 'scratch operand']
  #allocation3 [shape = 'f32[24,16]{1,0:T(8,128)}', space=vmem, size = 0x3000, scoped, tag = 'scratch operand']
  %s0 = inlined_call_operand.vmem [shape: f32[2,90,8], index: 0, kind: input, shape index: {}]
  %s1 = inlined_call_operand.vmem [shape: bf16[72,8], index: 1, kind: input, shape index: {}]
  %s2 = inlined_call_operand.vmem [shape: f32[1,8], index: 2, kind: input, shape index: {}]
  %s3 = inlined_call_operand.vmem [shape: bf16[72,16], index: 3, kind: input, shape index: {}]
  %s4 = inlined_call_operand.vmem [shape: f32[1,16], index: 4, kind: input, shape index: {}]
  %s5 = inlined_call_operand.vmem [shape: f32[2,1,16], index: 5, kind: output, shape index: {}]
  %s6 = sld [smem:[#allocation0]]
  $region53: #{my_vgg_forward.4} parent=0
    _
  %s8 = ssub.s32 1, %s6
  %s9 = scalar_select 0, %s8, %s6
  loop: start=0, step=1, limit=4
  $region2: #{my_vgg_forward.4} parent=0 // loop_pre_header
    _
  $region3: #{my_vgg_forward.4} parent=0 // loop_header
    %s11 = sphi 0, %s15
    %p12 = scmp.ge.s32.totalorder %s11, 4
    %s21 = sphi 0, %s23
    %s24 = sphi 0, %s21
    %s25 = sphi 0, %s24
    %s41 = sphi 0, %s25
    %s45 = sphi 0, %s45
    %s47 = sphi 0, %s45
    %s48 = sphi 0, %s47
    %s62 = sphi 0, %s48
    %s66 = sphi 0, %s66
    %s68 = sphi 0, %s66
    %s69 = sphi 0, %s68
    %s83 = sphi 0, %s69
    %s87 = sphi 0, %s87
    %s89 = sphi 0, %s87
    %s90 = sphi 0, %s89
    %s104 = sphi 0, %s90
    %s108 = sphi 0, %s108
    %s110 = sphi 0, %s108
    %s111 = sphi 0, %s110
    %s125 = sphi 0, %s111
    %s131 = sphi 0, %s133
    %s134 = sphi 0, %s131
    %s135 = sphi 0, %s134
    %s151 = sphi 0, %s135
  $region4: #{my_vgg_forward.4} parent=0 // loop_header_branch
    %14 = sbr.rel (%p12) target = $region8
  $region5: #{my_vgg_forward.4} parent=0 // loop_body
    %s16 = ssub.s32 %s11, 1
    %s17 = ssub.s32 %s11, 2
    %s18 = sadd.s32 %s11, 1
    %s19 = ssub.s32 %s11, %s18
    %p20 = scmp.eq.s32.totalorder %s19, 0
    %s22 = sadd.s32 %s21, 1
    %s23 = scalar_select %p20, %s21, %s22
    %p26 = pneg %p20
    %p27 = scmp.eq.s32.totalorder %s11, 1
    %p28 = por %p26, %p27
    %p29 = scmp.ne.s32.totalorder %s21, %s24
    %p30 = scmp.eq.s32.totalorder %s11, 0
    %p31 = por %p29, %p30
    %p32 = scmp.ne.s32.totalorder %s21, %s24
    %p33 = scmp.eq.s32.totalorder %s16, 1
    %p34 = por %p32, %p33
    %p35 = scmp.ne.s32.totalorder %s24, %s25
    %p36 = scmp.eq.s32.totalorder %s16, 0
    %p37 = por %p35, %p36
    %p38 = scmp.ne.s32.totalorder %s24, %s25
    %p39 = scmp.eq.s32.totalorder %s17, 1
    %p40 = por %p38, %p39
    %p42 = scmp.ne.s32.totalorder %s25, %s41
    %p43 = scmp.eq.s32.totalorder %s17, 0
    %p44 = por %p42, %p43
    %s46 = sadd.s32 %s45, 1
    %p49 = scmp.eq.s32.totalorder %s11, 1
    %p50 = scmp.ne.s32.totalorder %s45, %s47
    %p51 = scmp.eq.s32.totalorder %s11, 0
    %p52 = por %p50, %p51
    %p53 = scmp.ne.s32.totalorder %s45, %s47
    %p54 = scmp.eq.s32.totalorder %s16, 1
    %p55 = por %p53, %p54
    %p56 = scmp.ne.s32.totalorder %s47, %s48
    %p57 = scmp.eq.s32.totalorder %s16, 0
    %p58 = por %p56, %p57
    %p59 = scmp.ne.s32.totalorder %s47, %s48
    %p60 = scmp.eq.s32.totalorder %s17, 1
    %p61 = por %p59, %p60
    %p63 = scmp.ne.s32.totalorder %s48, %s62
    %p64 = scmp.eq.s32.totalorder %s17, 0
    %p65 = por %p63, %p64
    %s67 = sadd.s32 %s66, 1
    %p70 = scmp.eq.s32.totalorder %s11, 1
    %p71 = scmp.ne.s32.totalorder %s66, %s68
    %p72 = scmp.eq.s32.totalorder %s11, 0
    %p73 = por %p71, %p72
    %p74 = scmp.ne.s32.totalorder %s66, %s68
    %p75 = scmp.eq.s32.totalorder %s16, 1
    %p76 = por %p74, %p75
    %p77 = scmp.ne.s32.totalorder %s68, %s69
    %p78 = scmp.eq.s32.totalorder %s16, 0
    %p79 = por %p77, %p78
    %p80 = scmp.ne.s32.totalorder %s68, %s69
    %p81 = scmp.eq.s32.totalorder %s17, 1
    %p82 = por %p80, %p81
    %p84 = scmp.ne.s32.totalorder %s69, %s83
    %p85 = scmp.eq.s32.totalorder %s17, 0
    %p86 = por %p84, %p85
    %s88 = sadd.s32 %s87, 1
    %p91 = scmp.eq.s32.totalorder %s11, 1
    %p92 = scmp.ne.s32.totalorder %s87, %s89
    %p93 = scmp.eq.s32.totalorder %s11, 0
    %p94 = por %p92, %p93
    %p95 = scmp.ne.s32.totalorder %s87, %s89
    %p96 = scmp.eq.s32.totalorder %s16, 1
    %p97 = por %p95, %p96
    %p98 = scmp.ne.s32.totalorder %s89, %s90
    %p99 = scmp.eq.s32.totalorder %s16, 0
    %p100 = por %p98, %p99
    %p101 = scmp.ne.s32.totalorder %s89, %s90
    %p102 = scmp.eq.s32.totalorder %s17, 1
    %p103 = por %p101, %p102
    %p105 = scmp.ne.s32.totalorder %s90, %s104
    %p106 = scmp.eq.s32.totalorder %s17, 0
    %p107 = por %p105, %p106
    %s109 = sadd.s32 %s108, 1
    %p112 = scmp.eq.s32.totalorder %s11, 1
    %p113 = scmp.ne.s32.totalorder %s108, %s110
    %p114 = scmp.eq.s32.totalorder %s11, 0
    %p115 = por %p113, %p114
    %p116 = scmp.ne.s32.totalorder %s108, %s110
    %p117 = scmp.eq.s32.totalorder %s16, 1
    %p118 = por %p116, %p117
    %p119 = scmp.ne.s32.totalorder %s110, %s111
    %p120 = scmp.eq.s32.totalorder %s16, 0
    %p121 = por %p119, %p120
    %p122 = scmp.ne.s32.totalorder %s110, %s111
    %p123 = scmp.eq.s32.totalorder %s17, 1
    %p124 = por %p122, %p123
    %p126 = scmp.ne.s32.totalorder %s111, %s125
    %p127 = scmp.eq.s32.totalorder %s17, 0
    %p128 = por %p126, %p127
    %s129 = ssub.s32 %s11, %s18
    %p130 = scmp.eq.s32.totalorder %s129, 0
    %s132 = sadd.s32 %s131, 1
    %s133 = scalar_select %p130, %s131, %s132
    %p136 = pneg %p130
    %p137 = scmp.eq.s32.totalorder %s11, 1
    %p138 = por %p136, %p137
    %p139 = scmp.ne.s32.totalorder %s131, %s134
    %p140 = scmp.eq.s32.totalorder %s11, 0
    %p141 = por %p139, %p140
    %p142 = scmp.ne.s32.totalorder %s131, %s134
    %p143 = scmp.eq.s32.totalorder %s16, 1
    %p144 = por %p142, %p143
    %p145 = scmp.ne.s32.totalorder %s134, %s135
    %p146 = scmp.eq.s32.totalorder %s16, 0
    %p147 = por %p145, %p146
    %p148 = scmp.ne.s32.totalorder %s134, %s135
    %p149 = scmp.eq.s32.totalorder %s17, 1
    %p150 = por %p148, %p149
    %p152 = scmp.ne.s32.totalorder %s135, %s151
    %p153 = scmp.eq.s32.totalorder %s17, 0
    %p154 = por %p152, %p153
    %p155 = scmp.le.s32.totalorder 1, %s11
    %p156 = scmp.lt.s32.totalorder %s11, 3
    %p157 = pnand %p155, %p156
    %p158 = pneg %p157
    // Predicated region
    $region9: #{my_vgg_forward.4} parent=5 // pred_check
      _
    $region10: #{my_vgg_forward.4} parent=5 // pred_check_branch
      %160 = sbr.rel (%p157) target = $region12
    $region11: #{my_vgg_forward.4} parent=5 // pred_region
      %s161 = ssub.s32 %s11, 1
      // Predicated region
      $region13: #{my_vgg_forward.4} parent=11 // pred_check
        %p162 = pneg %p58
      $region14: #{my_vgg_forward.4} parent=11 // pred_check_branch
        %164 = sbr.rel (%p162) target = $region16
      $region15: #{my_vgg_forward.4} parent=11 // pred_region
        _
      $region16: #{my_vgg_forward.4} parent=11 // pred_fallthru
        _
      // Predicated region
      $region17: #{my_vgg_forward.4} parent=11 // pred_check
        %p165 = pneg %p79
      $region18: #{my_vgg_forward.4} parent=11 // pred_check_branch
        %167 = sbr.rel (%p165) target = $region20
      $region19: #{my_vgg_forward.4} parent=11 // pred_region
        _
      $region20: #{my_vgg_forward.4} parent=11 // pred_fallthru
        _
      // Predicated region
      $region21: #{my_vgg_forward.4} parent=11 // pred_check
        %p168 = pneg %p100
      $region22: #{my_vgg_forward.4} parent=11 // pred_check_branch
        %170 = sbr.rel (%p168) target = $region24
      $region23: #{my_vgg_forward.4} parent=11 // pred_region
        _
      $region24: #{my_vgg_forward.4} parent=11 // pred_fallthru
        _
      // Predicated region
      $region25: #{my_vgg_forward.4} parent=11 // pred_check
        %p171 = pneg %p121
      $region26: #{my_vgg_forward.4} parent=11 // pred_check_branch
        %173 = sbr.rel (%p171) target = $region28
      $region27: #{my_vgg_forward.4} parent=11 // pred_region
        _
      $region28: #{my_vgg_forward.4} parent=11 // pred_fallthru
        _
    $region12: #{my_vgg_forward.4} parent=5 // pred_fallthru
      _
    %p174 = scmp.lt.s32.totalorder %s11, 2
    // Predicated region
    $region29: #{my_vgg_forward.4} parent=5 // pred_check
      %p175 = pneg %p174
    $region30: #{my_vgg_forward.4} parent=5 // pred_check_branch
      %177 = sbr.rel (%p175) target = $region32
    $region31: #{my_vgg_forward.4} parent=5 // pred_region
      // Predicated region
      $region33: #{my_vgg_forward.4} parent=31 // pred_check
        %p178 = pneg %p31
      $region34: #{my_vgg_forward.4} parent=31 // pred_check_branch
        %180 = sbr.rel (%p178) target = $region36
      $region35: #{my_vgg_forward.4} parent=31 // pred_region
        %p181 = scmp.lt.s32.totalorder %s11, 1
        %s182 = scalar_select %p181, %s11, 1
        %s183 = smul.addr %s182, 12
        %s184 = smul.addr %s183, 8
        %s185 = scalar_lea.vmem %s0, %s184
      $region36: #{my_vgg_forward.4} parent=31 // pred_fallthru
        _
    $region32: #{my_vgg_forward.4} parent=5 // pred_fallthru
      _
    %p186 = scmp.le.s32.totalorder 1, %s11
    %p187 = scmp.lt.s32.totalorder %s11, 3
    %p188 = pnand %p186, %p187
    %p189 = pneg %p188
    // Predicated region
    $region37: #{my_vgg_forward.4} parent=5 // pred_check
      _
    $region38: #{my_vgg_forward.4} parent=5 // pred_check_branch
      %191 = sbr.rel (%p188) target = $region40
    $region39: #{my_vgg_forward.4} parent=5 // pred_region
      %s192 = ssub.s32 %s11, 1
      %p193 = scmp.lt.s32.totalorder %s16, 1
      %s194 = scalar_select %p193, %s16, 1
      %s195 = smul.addr %s194, 12
      %s196 = smul.addr %s195, 8
      %s197 = scalar_lea.vmem %s0, %s196
      %p198 = pneg %p37
      %p199 = pneg %p34
      %p200 = pneg %p58
      %p201 = pneg %p55
      %p202 = pneg %p79
      %p203 = pneg %p76
      %p204 = pneg %p100
      %p205 = pneg %p97
      %p206 = pneg %p121
      %p207 = pneg %p118
      %p208 = pneg %p147
      %p209 = pneg %p144
      %p210 = scmp.lt.s32.totalorder %s16, 1
      %s211 = scalar_select %p210, %s16, 1
      %s212 = scalar_lea.vmem %s5, %s211
      %p213 = scmp.lt.s32.totalorder %s16, 1
      %s214 = scalar_select %p213, %s16, 1
      %s215 = smul.addr %s214, 12
      %s216 = smul.addr %s215, 8
      %s217 = scalar_lea.vmem %s0, %s216
      %p218 = scmp.lt.s32.totalorder %s16, 1
      %s219 = scalar_select %p218, %s16, 1
      %s220 = scalar_lea.vmem %s5, %s219
      %v222 = vld [vmem:[%s217] sm:$0xff]
      %v223 = vld [vmem:[%s217 + $0x8] sm:$0xff]
      %v224 = vld [vmem:[%s217 + $0x10] sm:$0xff]
      %v225 = vld [vmem:[%s217 + $0x18] sm:$0xff]
      %v226 = vld [vmem:[%s217 + $0x20] sm:$0xff]
      %v227 = vld [vmem:[%s217 + $0x28] sm:$0xff]
      %v228 = vld [vmem:[%s217 + $0x30] sm:$0xff]
      %v229 = vld [vmem:[%s217 + $0x38] sm:$0x7f]
      %v230 = vld [vmem:[%s217 + $0x1] sm:$0xff]
      %v231 = vld [vmem:[%s217 + $0x9] sm:$0xff]
      %v232 = vld [vmem:[%s217 + $0x11] sm:$0xff]
      %v233 = vld [vmem:[%s217 + $0x19] sm:$0xff]
      %v234 = vld [vmem:[%s217 + $0x21] sm:$0xff]
      %v235 = vld [vmem:[%s217 + $0x29] sm:$0xff]
      %v236 = vld [vmem:[%s217 + $0x31] sm:$0xff]
      %v237 = vld [vmem:[%s217 + $0x39] sm:$0x7f]
      %v238 = vld [vmem:[%s217 + $0x2] sm:$0xff]
      %v239 = vld [vmem:[%s217 + $0xa] sm:$0xff]
      %v240 = vld [vmem:[%s217 + $0x12] sm:$0xff]
      %v241 = vld [vmem:[%s217 + $0x1a] sm:$0xff]
      %v242 = vld [vmem:[%s217 + $0x22] sm:$0xff]
      %v243 = vld [vmem:[%s217 + $0x2a] sm:$0xff]
      %v244 = vld [vmem:[%s217 + $0x32] sm:$0xff]
      %v245 = vld [vmem:[%s217 + $0x3a] sm:$0x7f]
      %v246 = vld [vmem:[%s217 + $0x39] sm:$0xff]
      %v247 = vld [vmem:[%s217 + $0x41] sm:$0x7f]
      %v248 = vld [vmem:[%s217 + $0x3a] sm:$0xff]
      %v249 = vld [vmem:[%s217 + $0x42] sm:$0x7f]
      %v250 = vld [vmem:[%s217 + $0xb] sm:$0xff]
      %v251 = vld [vmem:[%s217 + $0x13] sm:$0xff]
      %v252 = vld [vmem:[%s217 + $0x1b] sm:$0xff]
      %v253 = vld [vmem:[%s217 + $0x23] sm:$0xff]
      %v254 = vld [vmem:[%s217 + $0x2b] sm:$0xff]
      %v255 = vld [vmem:[%s217 + $0x33] sm:$0xff]
      %v256 = vld [vmem:[%s217 + $0x3b] sm:$0xff]
      %v257 = vld [vmem:[%s217 + $0x43] sm:$0x7f]
      %v258 = vld [vmem:[%s217 + $0x42] sm:$0xff]
      %v259 = vld [vmem:[%s217 + $0x4a] sm:$0x7f]
      %v260 = vld [vmem:[%s217 + $0x43] sm:$0xff]
      %v261 = vld [vmem:[%s217 + $0x4b] sm:$0x7f]
      %v262 = vld [vmem:[%s217 + $0x14] sm:$0xff]
      %v263 = vld [vmem:[%s217 + $0x1c] sm:$0xff]
      %v264 = vld [vmem:[%s217 + $0x24] sm:$0xff]
      %v265 = vld [vmem:[%s217 + $0x2c] sm:$0xff]
      %v266 = vld [vmem:[%s217 + $0x34] sm:$0xff]
      %v267 = vld [vmem:[%s217 + $0x3c] sm:$0xff]
      %v268 = vld [vmem:[%s217 + $0x44] sm:$0xff]
      %v269 = vld [vmem:[%s217 + $0x4c] sm:$0x7f]
      %278 = vrot.lane.b32.xlu0 %v230, 8
      %v279 = vpop.permute.xlu0 %278
      %280 = vrot.lane.b32.xlu0 %v231, 8
      %v281 = vpop.permute.xlu0 %280
      %282 = vrot.lane.b32.xlu0 %v232, 8
      %v283 = vpop.permute.xlu0 %282
      %284 = vrot.lane.b32.xlu0 %v233, 8
      %v285 = vpop.permute.xlu0 %284
      %286 = vrot.lane.b32.xlu0 %v234, 8
      %v287 = vpop.permute.xlu0 %286
      %288 = vrot.lane.b32.xlu0 %v235, 8
      %v289 = vpop.permute.xlu0 %288
      %290 = vrot.lane.b32.xlu0 %v236, 8
      %v291 = vpop.permute.xlu0 %290
      %292 = vrot.lane.b32.xlu0 %v237, 8
      %v293 = vpop.permute.xlu0 %292
      %310 = vrot.lane.b32.xlu0 %v238, 16
      %v311 = vpop.permute.xlu0 %310
      %312 = vrot.lane.b32.xlu0 %v239, 16
      %v313 = vpop.permute.xlu0 %312
      %314 = vrot.lane.b32.xlu0 %v240, 16
      %v315 = vpop.permute.xlu0 %314
      %316 = vrot.lane.b32.xlu0 %v241, 16
      %v317 = vpop.permute.xlu0 %316
      %318 = vrot.lane.b32.xlu0 %v242, 16
      %v319 = vpop.permute.xlu0 %318
      %320 = vrot.lane.b32.xlu0 %v243, 16
      %v321 = vpop.permute.xlu0 %320
      %322 = vrot.lane.b32.xlu0 %v244, 16
      %v323 = vpop.permute.xlu0 %322
      %324 = vrot.lane.b32.xlu0 %v245, 16
      %v325 = vpop.permute.xlu0 %324
      %336 = vrot.lane.b32.xlu0 %v231, 24
      %v337 = vpop.permute.xlu0 %336
      %338 = vrot.lane.b32.xlu0 %v232, 24
      %v339 = vpop.permute.xlu0 %338
      %340 = vrot.lane.b32.xlu0 %v233, 24
      %v341 = vpop.permute.xlu0 %340
      %342 = vrot.lane.b32.xlu0 %v234, 24
      %v343 = vpop.permute.xlu0 %342
      %344 = vrot.lane.b32.xlu0 %v235, 24
      %v345 = vpop.permute.xlu0 %344
      %346 = vrot.lane.b32.xlu0 %v236, 24
      %v347 = vpop.permute.xlu0 %346
      %348 = vrot.lane.b32.xlu0 %v246, 24
      %v349 = vpop.permute.xlu0 %348
      %350 = vrot.lane.b32.xlu0 %v247, 24
      %v351 = vpop.permute.xlu0 %350
      %362 = vrot.lane.b32.xlu0 %v239, 32
      %v363 = vpop.permute.xlu0 %362
      %364 = vrot.lane.b32.xlu0 %v240, 32
      %v365 = vpop.permute.xlu0 %364
      %366 = vrot.lane.b32.xlu0 %v241, 32
      %v367 = vpop.permute.xlu0 %366
      %368 = vrot.lane.b32.xlu0 %v242, 32
      %v369 = vpop.permute.xlu0 %368
      %370 = vrot.lane.b32.xlu0 %v243, 32
      %v371 = vpop.permute.xlu0 %370
      %372 = vrot.lane.b32.xlu0 %v244, 32
      %v373 = vpop.permute.xlu0 %372
      %374 = vrot.lane.b32.xlu0 %v248, 32
      %v375 = vpop.permute.xlu0 %374
      %376 = vrot.lane.b32.xlu0 %v249, 32
      %v377 = vpop.permute.xlu0 %376
      %394 = vrot.lane.b32.xlu0 %v250, 40
      %v395 = vpop.permute.xlu0 %394
      %396 = vrot.lane.b32.xlu0 %v251, 40
      %v397 = vpop.permute.xlu0 %396
      %398 = vrot.lane.b32.xlu0 %v252, 40
      %v399 = vpop.permute.xlu0 %398
      %400 = vrot.lane.b32.xlu0 %v253, 40
      %v401 = vpop.permute.xlu0 %400
      %402 = vrot.lane.b32.xlu0 %v254, 40
      %v403 = vpop.permute.xlu0 %402
      %404 = vrot.lane.b32.xlu0 %v255, 40
      %v405 = vpop.permute.xlu0 %404
      %406 = vrot.lane.b32.xlu0 %v256, 40
      %v407 = vpop.permute.xlu0 %406
      %408 = vrot.lane.b32.xlu0 %v257, 40
      %v409 = vpop.permute.xlu0 %408
      %420 = vrot.lane.b32.xlu0 %v240, 48
      %v421 = vpop.permute.xlu0 %420
      %422 = vrot.lane.b32.xlu0 %v241, 48
      %v423 = vpop.permute.xlu0 %422
      %424 = vrot.lane.b32.xlu0 %v242, 48
      %v425 = vpop.permute.xlu0 %424
      %426 = vrot.lane.b32.xlu0 %v243, 48
      %v427 = vpop.permute.xlu0 %426
      %428 = vrot.lane.b32.xlu0 %v244, 48
      %v429 = vpop.permute.xlu0 %428
      %430 = vrot.lane.b32.xlu0 %v248, 48
      %v431 = vpop.permute.xlu0 %430
      %432 = vrot.lane.b32.xlu0 %v258, 48
      %v433 = vpop.permute.xlu0 %432
      %434 = vrot.lane.b32.xlu0 %v259, 48
      %v435 = vpop.permute.xlu0 %434
      %446 = vrot.lane.b32.xlu0 %v251, 56
      %v447 = vpop.permute.xlu0 %446
      %448 = vrot.lane.b32.xlu0 %v252, 56
      %v449 = vpop.permute.xlu0 %448
      %450 = vrot.lane.b32.xlu0 %v253, 56
      %v451 = vpop.permute.xlu0 %450
      %452 = vrot.lane.b32.xlu0 %v254, 56
      %v453 = vpop.permute.xlu0 %452
      %454 = vrot.lane.b32.xlu0 %v255, 56
      %v455 = vpop.permute.xlu0 %454
      %456 = vrot.lane.b32.xlu0 %v256, 56
      %v457 = vpop.permute.xlu0 %456
      %458 = vrot.lane.b32.xlu0 %v260, 56
      %v459 = vpop.permute.xlu0 %458
      %460 = vrot.lane.b32.xlu0 %v261, 56
      %v461 = vpop.permute.xlu0 %460
      %478 = vrot.lane.b32.xlu0 %v262, 64
      %v479 = vpop.permute.xlu0 %478
      %480 = vrot.lane.b32.xlu0 %v263, 64
      %v481 = vpop.permute.xlu0 %480
      %482 = vrot.lane.b32.xlu0 %v264, 64
      %v483 = vpop.permute.xlu0 %482
      %484 = vrot.lane.b32.xlu0 %v265, 64
      %v485 = vpop.permute.xlu0 %484
      %486 = vrot.lane.b32.xlu0 %v266, 64
      %v487 = vpop.permute.xlu0 %486
      %488 = vrot.lane.b32.xlu0 %v267, 64
      %v489 = vpop.permute.xlu0 %488
      %490 = vrot.lane.b32.xlu0 %v268, 64
      %v491 = vpop.permute.xlu0 %490
      %492 = vrot.lane.b32.xlu0 %v269, 64
      %v493 = vpop.permute.xlu0 %492
      %vm502 = vcmask 64512
      %v503 = vsel %vm502, %v222, %v279
      %v504 = vsel %vm502, %v223, %v281
      %v505 = vsel %vm502, %v224, %v283
      %v506 = vsel %vm502, %v225, %v285
      %v507 = vsel %vm502, %v226, %v287
      %v508 = vsel %vm502, %v227, %v289
      %v509 = vsel %vm502, %v228, %v291
      %v510 = vsel %vm502, %v229, %v293
      %vm511 = vcmask 130048
      %v512 = vsel %vm511, %v503, %v311
      %v513 = vsel %vm511, %v504, %v313
      %v514 = vsel %vm511, %v505, %v315
      %v515 = vsel %vm511, %v506, %v317
      %v516 = vsel %vm511, %v507, %v319
      %v517 = vsel %vm511, %v508, %v321
      %v518 = vsel %vm511, %v509, %v323
      %v519 = vsel %vm511, %v510, %v325
      %vm520 = vcmask 195584
      %v521 = vsel %vm520, %v512, %v337
      %v522 = vsel %vm520, %v513, %v339
      %v523 = vsel %vm520, %v514, %v341
      %v524 = vsel %vm520, %v515, %v343
      %v525 = vsel %vm520, %v516, %v345
      %v526 = vsel %vm520, %v517, %v347
      %v527 = vsel %vm520, %v518, %v349
      %v528 = vsel %vm520, %v519, %v351
      %vm529 = vcmask 261120
      %v530 = vsel %vm529, %v521, %v363
      %v531 = vsel %vm529, %v522, %v365
      %v532 = vsel %vm529, %v523, %v367
      %v533 = vsel %vm529, %v524, %v369
      %v534 = vsel %vm529, %v525, %v371
      %v535 = vsel %vm529, %v526, %v373
      %v536 = vsel %vm529, %v527, %v375
      %v537 = vsel %vm529, %v528, %v377
      %vm538 = vcmask 326656
      %v539 = vsel %vm538, %v530, %v395
      %v540 = vsel %vm538, %v531, %v397
      %v541 = vsel %vm538, %v532, %v399
      %v542 = vsel %vm538, %v533, %v401
      %v543 = vsel %vm538, %v534, %v403
      %v544 = vsel %vm538, %v535, %v405
      %v545 = vsel %vm538, %v536, %v407
      %v546 = vsel %vm538, %v537, %v409
      %vm547 = vcmask 392192
      %v548 = vsel %vm547, %v539, %v421
      %v549 = vsel %vm547, %v540, %v423
      %v550 = vsel %vm547, %v541, %v425
      %v551 = vsel %vm547, %v542, %v427
      %v552 = vsel %vm547, %v543, %v429
      %v553 = vsel %vm547, %v544, %v431
      %v554 = vsel %vm547, %v545, %v433
      %v555 = vsel %vm547, %v546, %v435
      %vm556 = vcmask 457728
      %v557 = vsel %vm556, %v548, %v447
      %v558 = vsel %vm556, %v549, %v449
      %v559 = vsel %vm556, %v550, %v451
      %v560 = vsel %vm556, %v551, %v453
      %v561 = vsel %vm556, %v552, %v455
      %v562 = vsel %vm556, %v553, %v457
      %v563 = vsel %vm556, %v554, %v459
      %v564 = vsel %vm556, %v555, %v461
      %vm565 = vcmask 523264
      %v566 = vsel %vm565, %v557, %v479
      %v567 = vsel %vm565, %v558, %v481
      %v568 = vsel %vm565, %v559, %v483
      %v569 = vsel %vm565, %v560, %v485
      %v570 = vsel %vm565, %v561, %v487
      %v571 = vsel %vm565, %v562, %v489
      %v572 = vsel %vm565, %v563, %v491
      %v573 = vsel %vm565, %v564, %v493
      %v574 = vpack.c.bf16 %v567, %v566
      %v575 = vpack.c.bf16 %v569, %v568
      %v576 = vpack.c.bf16 %v571, %v570
      %v577 = vpack.c.bf16 %v573, %v572
      %v578 = vld [vmem:[%s1] sm:$0xf]
      %v579 = vld [vmem:[%s1 + $0x4] sm:$0xf]
      %v580 = vld [vmem:[%s1 + $0x8] sm:$0xf]
      %v581 = vld [vmem:[%s1 + $0xc] sm:$0xf]
      %v582 = vld [vmem:[%s1 + $0x10] sm:$0xf]
      %v583 = vld [vmem:[%s1 + $0x14] sm:$0xf]
      %v584 = vld [vmem:[%s1 + $0x18] sm:$0xf]
      %v585 = vld [vmem:[%s1 + $0x1c] sm:$0xf]
      %v586 = vld [vmem:[%s1 + $0x20] sm:$0xf]
      %v587 = vld [vmem:[%s2] sm:$0x1]
      %v589 = vperm.slane %v587, 0
      %v600 = vunpack.c.l.b16 %v578
      %v601 = vunpack.c.l.b16 %v579
      %v602 = vunpack.c.l.b16 %v580
      %v603 = vunpack.c.l.b16 %v581
      %v604 = vunpack.c.l.b16 %v582
      %v605 = vunpack.c.l.b16 %v583
      %v606 = vunpack.c.l.b16 %v584
      %v607 = vunpack.c.l.b16 %v585
      %v608 = vunpack.c.l.b16 %v586
      %v609 = vpack.c.b16 %v601, %v600
      %v610 = vpack.c.b16 %v603, %v602
      %v611 = vpack.c.b16 %v605, %v604
      %v612 = vpack.c.b16 %v607, %v606
      %v613 = vpack.c.b16 %v608, %v608
      %vm618 = vcmask 588800
      %v620 = vsel %vm618, %v574, 0
      %v623 = vsel %vm618, %v575, 0
      %v626 = vsel %vm618, %v576, 0
      %v629 = vsel %vm618, %v577, 0
      %vm631 = vcmask 1043456
      %v633 = vsel %vm631, %v613, 0
      %635 = vmatpush.bf16.msra.mxu0 0
      %636 = vmatpush.bf16.msra.mxu0 0
      %637 = vmatpush.bf16.msra.mxu0 0
      %638 = vmatpush.bf16.msra.mxu0 %v633
      %639 = vmatpush.bf16.msra.mxu0 %v612
      %640 = vmatpush.bf16.msra.mxu0 %v611
      %641 = vmatpush.bf16.msra.mxu0 %v610
      %642 = vmatpush.bf16.msra.mxu0 %v609
      %643 = vmatmul.bf16.gmra.mxu0 %v620
      %v644 = vpop.f32.mrf.mxu0
      %v645 = vadd.f32 %v589, %v644
      %v646 = vpop.f32.mrf.mxu0
      %v647 = vadd.f32 %v589, %v646
      %648 = vmatmul.bf16.gmra.mxu0 %v623
      %v649 = vpop.f32.mrf.mxu0
      %v650 = vadd.f32 %v589, %v649
      %v651 = vpop.f32.mrf.mxu0
      %v652 = vadd.f32 %v589, %v651
      %653 = vmatmul.bf16.gmra.mxu0 %v626
      %v654 = vpop.f32.mrf.mxu0
      %v655 = vadd.f32 %v589, %v654
      %v656 = vpop.f32.mrf.mxu0
      %v657 = vadd.f32 %v589, %v656
      %658 = vmatmul.bf16.gmra.mxu0 %v629
      %v659 = vpop.f32.mrf.mxu0
      %v660 = vadd.f32 %v589, %v659
      %v661 = vpop.f32.mrf.mxu0
      %v662 = vadd.f32 %v589, %v661
      %663 = vdwg.mxu0
      %v664 = vmax.f32 %v645, 0.0
      %v665 = vmax.f32 %v647, 0.0
      %v666 = vmax.f32 %v650, 0.0
      %v667 = vmax.f32 %v652, 0.0
      %v668 = vmax.f32 %v655, 0.0
      %v669 = vmax.f32 %v657, 0.0
      %v670 = vmax.f32 %v660, 0.0
      %v671 = vmax.f32 %v662, 0.0
      %672 = vst.msk [vmem:[#allocation2] sm:$0xff] %vm502, %v664
      %673 = vst.msk [vmem:[#allocation2 + $0x8] sm:$0xff] %vm502, %v665
      %674 = vst.msk [vmem:[#allocation2 + $0x10] sm:$0xff] %vm502, %v666
      %675 = vst.msk [vmem:[#allocation2 + $0x18] sm:$0xff] %vm502, %v667
      %676 = vst.msk [vmem:[#allocation2 + $0x20] sm:$0xff] %vm502, %v668
      %677 = vst.msk [vmem:[#allocation2 + $0x28] sm:$0xff] %vm502, %v669
      %678 = vst.msk [vmem:[#allocation2 + $0x30] sm:$0xff] %vm502, %v670
      %vm679 = vcmask 63488
      %680 = vst.msk [vmem:[#allocation2 + $0x38] sm:$0x7f] %vm679, %v671
      %v681 = vld [vmem:[#allocation2] ss:$2 sm:$0xff]
      %s682 = scalar_lea.vmem [#allocation2], 16
      %v683 = vld [vmem:[%s682] ss:$2 sm:$0x7]
      %s684 = scalar_lea.vmem [#allocation2], 1
      %v685 = vld [vmem:[%s684] ss:$2 sm:$0xff]
      %s686 = scalar_lea.vmem [#allocation2], 17
      %v687 = vld [vmem:[%s686] ss:$2 sm:$0x7]
      %s688 = scalar_lea.vmem [#allocation2], 2
      %v689 = vld [vmem:[%s688] ss:$2 sm:$0xff]
      %s690 = scalar_lea.vmem [#allocation2], 18
      %v691 = vld [vmem:[%s690] ss:$2 sm:$0x7]
      %s692 = scalar_lea.vmem [#allocation2], 9
      %v693 = vld [vmem:[%s692] ss:$2 sm:$0xff]
      %s694 = scalar_lea.vmem [#allocation2], 25
      %v695 = vld [vmem:[%s694] ss:$2 sm:$0x7]
      %s696 = scalar_lea.vmem [#allocation2], 10
      %v697 = vld [vmem:[%s696] ss:$2 sm:$0xff]
      %s698 = scalar_lea.vmem [#allocation2], 26
      %v699 = vld [vmem:[%s698] ss:$2 sm:$0x7]
      %s700 = scalar_lea.vmem [#allocation2], 11
      %v701 = vld [vmem:[%s700] ss:$2 sm:$0xff]
      %s702 = scalar_lea.vmem [#allocation2], 27
      %v703 = vld [vmem:[%s702] ss:$2 sm:$0x7]
      %v704 = vld [vmem:[%s690] ss:$2 sm:$0xff]
      %s705 = scalar_lea.vmem [#allocation2], 34
      %v706 = vld [vmem:[%s705] ss:$2 sm:$0x7]
      %s707 = scalar_lea.vmem [#allocation2], 19
      %v708 = vld [vmem:[%s707] ss:$2 sm:$0xff]
      %s709 = scalar_lea.vmem [#allocation2], 35
      %v710 = vld [vmem:[%s709] ss:$2 sm:$0x7]
      %s711 = scalar_lea.vmem [#allocation2], 20
      %v712 = vld [vmem:[%s711] ss:$2 sm:$0xff]
      %s713 = scalar_lea.vmem [#allocation2], 36
      %v714 = vld [vmem:[%s713] ss:$2 sm:$0x7]
      %717 = vrot.lane.b32.xlu0 %v685, 8
      %v718 = vpop.permute.xlu0 %717
      %719 = vrot.lane.b32.xlu0 %v687, 8
      %v720 = vpop.permute.xlu0 %719
      %725 = vrot.lane.b32.xlu0 %v689, 16
      %v726 = vpop.permute.xlu0 %725
      %727 = vrot.lane.b32.xlu0 %v691, 16
      %v728 = vpop.permute.xlu0 %727
      %733 = vrot.lane.b32.xlu0 %v693, 24
      %v734 = vpop.permute.xlu0 %733
      %735 = vrot.lane.b32.xlu0 %v695, 24
      %v736 = vpop.permute.xlu0 %735
      %741 = vrot.lane.b32.xlu0 %v697, 32
      %v742 = vpop.permute.xlu0 %741
      %743 = vrot.lane.b32.xlu0 %v699, 32
      %v744 = vpop.permute.xlu0 %743
      %749 = vrot.lane.b32.xlu0 %v701, 40
      %v750 = vpop.permute.xlu0 %749
      %751 = vrot.lane.b32.xlu0 %v703, 40
      %v752 = vpop.permute.xlu0 %751
      %757 = vrot.lane.b32.xlu0 %v704, 48
      %v758 = vpop.permute.xlu0 %757
      %759 = vrot.lane.b32.xlu0 %v706, 48
      %v760 = vpop.permute.xlu0 %759
      %765 = vrot.lane.b32.xlu0 %v708, 56
      %v766 = vpop.permute.xlu0 %765
      %767 = vrot.lane.b32.xlu0 %v710, 56
      %v768 = vpop.permute.xlu0 %767
      %773 = vrot.lane.b32.xlu0 %v712, 64
      %v774 = vpop.permute.xlu0 %773
      %775 = vrot.lane.b32.xlu0 %v714, 64
      %v776 = vpop.permute.xlu0 %775
      %v779 = vsel %vm502, %v681, %v718
      %v780 = vsel %vm502, %v683, %v720
      %v781 = vsel %vm511, %v779, %v726
      %v782 = vsel %vm511, %v780, %v728
      %v783 = vsel %vm520, %v781, %v734
      %v784 = vsel %vm520, %v782, %v736
      %v785 = vsel %vm529, %v783, %v742
      %v786 = vsel %vm529, %v784, %v744
      %v787 = vsel %vm538, %v785, %v750
      %v788 = vsel %vm538, %v786, %v752
      %v789 = vsel %vm547, %v787, %v758
      %v790 = vsel %vm547, %v788, %v760
      %v791 = vsel %vm556, %v789, %v766
      %v792 = vsel %vm556, %v790, %v768
      %v793 = vsel %vm565, %v791, %v774
      %v794 = vsel %vm565, %v792, %v776
      %v795 = vpack.c.bf16 %v794, %v793
      %v796 = vld [vmem:[%s3] sm:$0xf]
      %v797 = vld [vmem:[%s3 + $0x4] sm:$0xf]
      %v798 = vld [vmem:[%s3 + $0x8] sm:$0xf]
      %v799 = vld [vmem:[%s3 + $0xc] sm:$0xf]
      %v800 = vld [vmem:[%s3 + $0x10] sm:$0xf]
      %v801 = vld [vmem:[%s3 + $0x14] sm:$0xf]
      %v802 = vld [vmem:[%s3 + $0x18] sm:$0xf]
      %v803 = vld [vmem:[%s3 + $0x1c] sm:$0xf]
      %v804 = vld [vmem:[%s3 + $0x20] sm:$0xf]
      %v805 = vld [vmem:[%s4] sm:$0x1]
      %v807 = vperm.slane %v805, 0
      %v818 = vunpack.c.l.b16 %v796
      %v819 = vunpack.c.l.b16 %v797
      %v820 = vunpack.c.l.b16 %v798
      %v821 = vunpack.c.l.b16 %v799
      %v822 = vunpack.c.l.b16 %v800
      %v823 = vunpack.c.l.b16 %v801
      %v824 = vunpack.c.l.b16 %v802
      %v825 = vunpack.c.l.b16 %v803
      %v826 = vunpack.c.l.b16 %v804
      %v827 = vpack.c.b16 %v819, %v818
      %v828 = vpack.c.b16 %v821, %v820
      %v829 = vpack.c.b16 %v823, %v822
      %v830 = vpack.c.b16 %v825, %v824
      %v831 = vpack.c.b16 %v826, %v826
      %v837 = vsel %vm618, %v795, 0
      %v840 = vsel %vm631, %v831, 0
      %842 = vmatpush.bf16.msra.mxu0 0
      %843 = vmatpush.bf16.msra.mxu0 0
      %844 = vmatpush.bf16.msra.mxu0 0
      %845 = vmatpush.bf16.msra.mxu0 %v840
      %846 = vmatpush.bf16.msra.mxu0 %v830
      %847 = vmatpush.bf16.msra.mxu0 %v829
      %848 = vmatpush.bf16.msra.mxu0 %v828
      %849 = vmatpush.bf16.msra.mxu0 %v827
      %850 = vmatmul.bf16.gmra.mxu0 %v837
      %v851 = vpop.f32.mrf.mxu0
      %v852 = vadd.f32 %v807, %v851
      %v853 = vpop.f32.mrf.mxu0
      %v854 = vadd.f32 %v807, %v853
      %855 = vdwg.mxu0
      %v856 = vmax.f32 %v852, 0.0
      %v857 = vmax.f32 %v854, 0.0
      %858 = vst.msk [vmem:[#allocation3] sm:$0xff] %vm511, %v856
      %vm859 = vcmask 124928
      %860 = vst.msk [vmem:[#allocation3 + $0x8] sm:$0x7] %vm859, %v857
      %v861 = vld [vmem:[#allocation3] ss:$2 sm:$0x1]
      %s862 = scalar_lea.vmem [#allocation3], 1
      %v863 = vld [vmem:[%s862] ss:$2 sm:$0x1]
      %v864 = vmax.f32 %v861, %v863
      %s865 = scalar_lea.vmem [#allocation3], 9
      %v866 = vld [vmem:[%s865] ss:$2 sm:$0x1]
      %v867 = vmax.f32 %v864, %v866
      %s868 = scalar_lea.vmem [#allocation3], 10
      %v869 = vld [vmem:[%s868] ss:$2 sm:$0x1]
      %v870 = vmax.f32 %v867, %v869
      %vm871 = vcmask 122880
      %872 = vst.msk [vmem:[%s220] sm:$0x1] %vm871, %v870
      %p873 = scmp.lt.s32.totalorder %s16, 1
      %s874 = scalar_select %p873, %s16, 1
      %s875 = scalar_lea.vmem %s5, %s874
      // Predicated region
      $region41: #{my_vgg_forward.4} parent=39 // pred_check
        %p876 = pneg %p144
      $region42: #{my_vgg_forward.4} parent=39 // pred_check_branch
        %878 = sbr.rel (%p876) target = $region44
      $region43: #{my_vgg_forward.4} parent=39 // pred_region
        _
      $region44: #{my_vgg_forward.4} parent=39 // pred_fallthru
        _
    $region40: #{my_vgg_forward.4} parent=5 // pred_fallthru
      _
    %p879 = scmp.le.s32.totalorder 2, %s11
    // Predicated region
    $region45: #{my_vgg_forward.4} parent=5 // pred_check
      %p880 = pneg %p879
    $region46: #{my_vgg_forward.4} parent=5 // pred_check_branch
      %882 = sbr.rel (%p880) target = $region48
    $region47: #{my_vgg_forward.4} parent=5 // pred_region
      %s883 = ssub.s32 %s11, 2
      // Predicated region
      $region49: #{my_vgg_forward.4} parent=47 // pred_check
        %p884 = pneg %p150
      $region50: #{my_vgg_forward.4} parent=47 // pred_check_branch
        %886 = sbr.rel (%p884) target = $region52
      $region51: #{my_vgg_forward.4} parent=47 // pred_region
        %p887 = scmp.lt.s32.totalorder %s17, 1
        %s888 = scalar_select %p887, %s17, 1
        %s889 = scalar_lea.vmem %s5, %s888
      $region52: #{my_vgg_forward.4} parent=47 // pred_fallthru
        _
    $region48: #{my_vgg_forward.4} parent=5 // pred_fallthru
      _
  $region6: #{my_vgg_forward.4} parent=0 // loop_footer
    %s15 = sadd.s32 1, %s11
  $region7: #{my_vgg_forward.4} parent=0 // loop_footer_branch
    %10 = sbr.rel target = $region3
  $region8: #{my_vgg_forward.4} parent=0 // loop_exit
    _

// kernel: my_vgg_forward.3
$region0: #{my_vgg_forward.3}
  #allocation0 [shape = 'u32[]', space=smem, size = 0x4, offset = 0x4, fixed_abs, tag = 'smem constant byte address 0x4 - core index']
  #allocation1 [shape = 'u32[72,128]{1,0:T(1,128)}', space=vmem, size = 0x9000, scoped, tag = 'internal scratch']
  #allocation2 [shape = 'f32[1096,4]{1,0:T(8,128)}', space=vmem, size = 0x89000, scoped, tag = 'scratch operand']
  #allocation3 [shape = 'f32[464,8]{1,0:T(8,128)}', space=vmem, size = 0x3a000, scoped, tag = 'scratch operand']
  %s0 = inlined_call_operand.vmem [shape: f32[2,1190,3], index: 0, kind: input, shape index: {}]
  %s1 = inlined_call_operand.vmem [shape: bf16[27,4], index: 1, kind: input, shape index: {}]
  %s2 = inlined_call_operand.vmem [shape: f32[1,4], index: 2, kind: input, shape index: {}]
  %s3 = inlined_call_operand.vmem [shape: bf16[36,8], index: 3, kind: input, shape index: {}]
  %s4 = inlined_call_operand.vmem [shape: f32[1,8], index: 4, kind: input, shape index: {}]
  %s5 = inlined_call_operand.vmem [shape: f32[2,49,8], index: 5, kind: output, shape index: {}]
  %s6 = sld [smem:[#allocation0]]
  $region53: #{my_vgg_forward.3} parent=0
    _
  %s8 = ssub.s32 1, %s6
  %s9 = scalar_select 0, %s8, %s6
  loop: start=0, step=1, limit=4
  $region2: #{my_vgg_forward.3} parent=0 // loop_pre_header
    _
  $region3: #{my_vgg_forward.3} parent=0 // loop_header
    %s11 = sphi 0, %s15
    %p12 = scmp.ge.s32.totalorder %s11, 4
    %s21 = sphi 0, %s23
    %s24 = sphi 0, %s21
    %s25 = sphi 0, %s24
    %s41 = sphi 0, %s25
    %s45 = sphi 0, %s45
    %s47 = sphi 0, %s45
    %s48 = sphi 0, %s47
    %s62 = sphi 0, %s48
    %s66 = sphi 0, %s66
    %s68 = sphi 0, %s66
    %s69 = sphi 0, %s68
    %s83 = sphi 0, %s69
    %s87 = sphi 0, %s87
    %s89 = sphi 0, %s87
    %s90 = sphi 0, %s89
    %s104 = sphi 0, %s90
    %s108 = sphi 0, %s108
    %s110 = sphi 0, %s108
    %s111 = sphi 0, %s110
    %s125 = sphi 0, %s111
    %s131 = sphi 0, %s133
    %s134 = sphi 0, %s131
    %s135 = sphi 0, %s134
    %s151 = sphi 0, %s135
  $region4: #{my_vgg_forward.3} parent=0 // loop_header_branch
    %14 = sbr.rel (%p12) target = $region8
  $region5: #{my_vgg_forward.3} parent=0 // loop_body
    %s16 = ssub.s32 %s11, 1
    %s17 = ssub.s32 %s11, 2
    %s18 = sadd.s32 %s11, 1
    %s19 = ssub.s32 %s11, %s18
    %p20 = scmp.eq.s32.totalorder %s19, 0
    %s22 = sadd.s32 %s21, 1
    %s23 = scalar_select %p20, %s21, %s22
    %p26 = pneg %p20
    %p27 = scmp.eq.s32.totalorder %s11, 1
    %p28 = por %p26, %p27
    %p29 = scmp.ne.s32.totalorder %s21, %s24
    %p30 = scmp.eq.s32.totalorder %s11, 0
    %p31 = por %p29, %p30
    %p32 = scmp.ne.s32.totalorder %s21, %s24
    %p33 = scmp.eq.s32.totalorder %s16, 1
    %p34 = por %p32, %p33
    %p35 = scmp.ne.s32.totalorder %s24, %s25
    %p36 = scmp.eq.s32.totalorder %s16, 0
    %p37 = por %p35, %p36
    %p38 = scmp.ne.s32.totalorder %s24, %s25
    %p39 = scmp.eq.s32.totalorder %s17, 1
    %p40 = por %p38, %p39
    %p42 = scmp.ne.s32.totalorder %s25, %s41
    %p43 = scmp.eq.s32.totalorder %s17, 0
    %p44 = por %p42, %p43
    %s46 = sadd.s32 %s45, 1
    %p49 = scmp.eq.s32.totalorder %s11, 1
    %p50 = scmp.ne.s32.totalorder %s45, %s47
    %p51 = scmp.eq.s32.totalorder %s11, 0
    %p52 = por %p50, %p51
    %p53 = scmp.ne.s32.totalorder %s45, %s47
    %p54 = scmp.eq.s32.totalorder %s16, 1
    %p55 = por %p53, %p54
    %p56 = scmp.ne.s32.totalorder %s47, %s48
    %p57 = scmp.eq.s32.totalorder %s16, 0
    %p58 = por %p56, %p57
    %p59 = scmp.ne.s32.totalorder %s47, %s48
    %p60 = scmp.eq.s32.totalorder %s17, 1
    %p61 = por %p59, %p60
    %p63 = scmp.ne.s32.totalorder %s48, %s62
    %p64 = scmp.eq.s32.totalorder %s17, 0
    %p65 = por %p63, %p64
    %s67 = sadd.s32 %s66, 1
    %p70 = scmp.eq.s32.totalorder %s11, 1
    %p71 = scmp.ne.s32.totalorder %s66, %s68
    %p72 = scmp.eq.s32.totalorder %s11, 0
    %p73 = por %p71, %p72
    %p74 = scmp.ne.s32.totalorder %s66, %s68
    %p75 = scmp.eq.s32.totalorder %s16, 1
    %p76 = por %p74, %p75
    %p77 = scmp.ne.s32.totalorder %s68, %s69
    %p78 = scmp.eq.s32.totalorder %s16, 0
    %p79 = por %p77, %p78
    %p80 = scmp.ne.s32.totalorder %s68, %s69
    %p81 = scmp.eq.s32.totalorder %s17, 1
    %p82 = por %p80, %p81
    %p84 = scmp.ne.s32.totalorder %s69, %s83
    %p85 = scmp.eq.s32.totalorder %s17, 0
    %p86 = por %p84, %p85
    %s88 = sadd.s32 %s87, 1
    %p91 = scmp.eq.s32.totalorder %s11, 1
    %p92 = scmp.ne.s32.totalorder %s87, %s89
    %p93 = scmp.eq.s32.totalorder %s11, 0
    %p94 = por %p92, %p93
    %p95 = scmp.ne.s32.totalorder %s87, %s89
    %p96 = scmp.eq.s32.totalorder %s16, 1
    %p97 = por %p95, %p96
    %p98 = scmp.ne.s32.totalorder %s89, %s90
    %p99 = scmp.eq.s32.totalorder %s16, 0
    %p100 = por %p98, %p99
    %p101 = scmp.ne.s32.totalorder %s89, %s90
    %p102 = scmp.eq.s32.totalorder %s17, 1
    %p103 = por %p101, %p102
    %p105 = scmp.ne.s32.totalorder %s90, %s104
    %p106 = scmp.eq.s32.totalorder %s17, 0
    %p107 = por %p105, %p106
    %s109 = sadd.s32 %s108, 1
    %p112 = scmp.eq.s32.totalorder %s11, 1
    %p113 = scmp.ne.s32.totalorder %s108, %s110
    %p114 = scmp.eq.s32.totalorder %s11, 0
    %p115 = por %p113, %p114
    %p116 = scmp.ne.s32.totalorder %s108, %s110
    %p117 = scmp.eq.s32.totalorder %s16, 1
    %p118 = por %p116, %p117
    %p119 = scmp.ne.s32.totalorder %s110, %s111
    %p120 = scmp.eq.s32.totalorder %s16, 0
    %p121 = por %p119, %p120
    %p122 = scmp.ne.s32.totalorder %s110, %s111
    %p123 = scmp.eq.s32.totalorder %s17, 1
    %p124 = por %p122, %p123
    %p126 = scmp.ne.s32.totalorder %s111, %s125
    %p127 = scmp.eq.s32.totalorder %s17, 0
    %p128 = por %p126, %p127
    %s129 = ssub.s32 %s11, %s18
    %p130 = scmp.eq.s32.totalorder %s129, 0
    %s132 = sadd.s32 %s131, 1
    %s133 = scalar_select %p130, %s131, %s132
    %p136 = pneg %p130
    %p137 = scmp.eq.s32.totalorder %s11, 1
    %p138 = por %p136, %p137
    %p139 = scmp.ne.s32.totalorder %s131, %s134
    %p140 = scmp.eq.s32.totalorder %s11, 0
    %p141 = por %p139, %p140
    %p142 = scmp.ne.s32.totalorder %s131, %s134
    %p143 = scmp.eq.s32.totalorder %s16, 1
    %p144 = por %p142, %p143
    %p145 = scmp.ne.s32.totalorder %s134, %s135
    %p146 = scmp.eq.s32.totalorder %s16, 0
    %p147 = por %p145, %p146
    %p148 = scmp.ne.s32.totalorder %s134, %s135
    %p149 = scmp.eq.s32.totalorder %s17, 1
    %p150 = por %p148, %p149
    %p152 = scmp.ne.s32.totalorder %s135, %s151
    %p153 = scmp.eq.s32.totalorder %s17, 0
    %p154 = por %p152, %p153
    %p155 = scmp.le.s32.totalorder 1, %s11
    %p156 = scmp.lt.s32.totalorder %s11, 3
    %p157 = pnand %p155, %p156
    %p158 = pneg %p157
    // Predicated region
    $region9: #{my_vgg_forward.3} parent=5 // pred_check
      _
    $region10: #{my_vgg_forward.3} parent=5 // pred_check_branch
      %160 = sbr.rel (%p157) target = $region12
    $region11: #{my_vgg_forward.3} parent=5 // pred_region
      %s161 = ssub.s32 %s11, 1
      // Predicated region
      $region13: #{my_vgg_forward.3} parent=11 // pred_check
        %p162 = pneg %p58
      $region14: #{my_vgg_forward.3} parent=11 // pred_check_branch
        %164 = sbr.rel (%p162) target = $region16
      $region15: #{my_vgg_forward.3} parent=11 // pred_region
        _
      $region16: #{my_vgg_forward.3} parent=11 // pred_fallthru
        _
      // Predicated region
      $region17: #{my_vgg_forward.3} parent=11 // pred_check
        %p165 = pneg %p79
      $region18: #{my_vgg_forward.3} parent=11 // pred_check_branch
        %167 = sbr.rel (%p165) target = $region20
      $region19: #{my_vgg_forward.3} parent=11 // pred_region
        _
      $region20: #{my_vgg_forward.3} parent=11 // pred_fallthru
        _
      // Predicated region
      $region21: #{my_vgg_forward.3} parent=11 // pred_check
        %p168 = pneg %p100
      $region22: #{my_vgg_forward.3} parent=11 // pred_check_branch
        %170 = sbr.rel (%p168) target = $region24
      $region23: #{my_vgg_forward.3} parent=11 // pred_region
        _
      $region24: #{my_vgg_forward.3} parent=11 // pred_fallthru
        _
      // Predicated region
      $region25: #{my_vgg_forward.3} parent=11 // pred_check
        %p171 = pneg %p121
      $region26: #{my_vgg_forward.3} parent=11 // pred_check_branch
        %173 = sbr.rel (%p171) target = $region28
      $region27: #{my_vgg_forward.3} parent=11 // pred_region
        _
      $region28: #{my_vgg_forward.3} parent=11 // pred_fallthru
        _
    $region12: #{my_vgg_forward.3} parent=5 // pred_fallthru
      _
    %p174 = scmp.lt.s32.totalorder %s11, 2
    // Predicated region
    $region29: #{my_vgg_forward.3} parent=5 // pred_check
      %p175 = pneg %p174
    $region30: #{my_vgg_forward.3} parent=5 // pred_check_branch
      %177 = sbr.rel (%p175) target = $region32
    $region31: #{my_vgg_forward.3} parent=5 // pred_region
      // Predicated region
      $region33: #{my_vgg_forward.3} parent=31 // pred_check
        %p178 = pneg %p31
      $region34: #{my_vgg_forward.3} parent=31 // pred_check_branch
        %180 = sbr.rel (%p178) target = $region36
      $region35: #{my_vgg_forward.3} parent=31 // pred_region
        %p181 = scmp.lt.s32.totalorder %s11, 1
        %s182 = scalar_select %p181, %s11, 1
        %s183 = smul.addr %s182, 149
        %s184 = smul.addr %s183, 8
        %s185 = scalar_lea.vmem %s0, %s184
      $region36: #{my_vgg_forward.3} parent=31 // pred_fallthru
        _
    $region32: #{my_vgg_forward.3} parent=5 // pred_fallthru
      _
    %p186 = scmp.le.s32.totalorder 1, %s11
    %p187 = scmp.lt.s32.totalorder %s11, 3
    %p188 = pnand %p186, %p187
    %p189 = pneg %p188
    // Predicated region
    $region37: #{my_vgg_forward.3} parent=5 // pred_check
      _
    $region38: #{my_vgg_forward.3} parent=5 // pred_check_branch
      %191 = sbr.rel (%p188) target = $region40
    $region39: #{my_vgg_forward.3} parent=5 // pred_region
      %s192 = ssub.s32 %s11, 1
      %p193 = scmp.lt.s32.totalorder %s16, 1
      %s194 = scalar_select %p193, %s16, 1
      %s195 = smul.addr %s194, 149
      %s196 = smul.addr %s195, 8
      %s197 = scalar_lea.vmem %s0, %s196
      %p198 = pneg %p37
      %p199 = pneg %p34
      %p200 = pneg %p58
      %p201 = pneg %p55
      %p202 = pneg %p79
      %p203 = pneg %p76
      %p204 = pneg %p100
      %p205 = pneg %p97
      %p206 = pneg %p121
      %p207 = pneg %p118
      %p208 = pneg %p147
      %p209 = pneg %p144
      %p210 = scmp.lt.s32.totalorder %s16, 1
      %s211 = scalar_select %p210, %s16, 1
      %s212 = smul.addr %s211, 7
      %s213 = smul.addr %s212, 8
      %s214 = scalar_lea.vmem %s5, %s213
      %p215 = scmp.lt.s32.totalorder %s16, 1
      %s216 = scalar_select %p215, %s16, 1
      %s217 = smul.addr %s216, 149
      %s218 = smul.addr %s217, 8
      %s219 = scalar_lea.vmem %s0, %s218
      %p220 = scmp.lt.s32.totalorder %s16, 1
      %s221 = scalar_select %p220, %s16, 1
      %s222 = smul.addr %s221, 7
      %s223 = smul.addr %s222, 8
      %s224 = scalar_lea.vmem %s5, %s223
      %v226 = vld [vmem:[%s219] sm:$0xff]
      %v227 = vld [vmem:[%s219 + $0x8] sm:$0xff]
      %v228 = vld [vmem:[%s219 + $0x10] sm:$0xff]
      %v229 = vld [vmem:[%s219 + $0x18] sm:$0xff]
      %v230 = vld [vmem:[%s219 + $0x20] sm:$0xff]
      %v231 = vld [vmem:[%s219 + $0x28] sm:$0xff]
      %v232 = vld [vmem:[%s219 + $0x30] sm:$0xff]
      %v233 = vld [vmem:[%s219 + $0x38] sm:$0xff]
      %v234 = vld [vmem:[%s219 + $0x40] sm:$0xff]
      %v235 = vld [vmem:[%s219 + $0x48] sm:$0xff]
      %v236 = vld [vmem:[%s219 + $0x50] sm:$0xff]
      %v237 = vld [vmem:[%s219 + $0x58] sm:$0xff]
      %v238 = vld [vmem:[%s219 + $0x60] sm:$0xff]
      %v239 = vld [vmem:[%s219 + $0x68] sm:$0xff]
      %v240 = vld [vmem:[%s219 + $0x70] sm:$0xff]
      %v241 = vld [vmem:[%s219 + $0x78] sm:$0xff]
      %v242 = vld [vmem:[%s219 + $0x80] sm:$0xff]
      %v243 = vld [vmem:[%s219 + $0x88] sm:$0xff]
      %v244 = vld [vmem:[%s219 + $0x90] sm:$0xff]
      %v245 = vld [vmem:[%s219 + $0x98] sm:$0xff]
      %v246 = vld [vmem:[%s219 + $0xa0] sm:$0xff]
      %v247 = vld [vmem:[%s219 + $0xa8] sm:$0xff]
      %v248 = vld [vmem:[%s219 + $0xb0] sm:$0xff]
      %v249 = vld [vmem:[%s219 + $0xb8] sm:$0xff]
      %v250 = vld [vmem:[%s219 + $0xc0] sm:$0xff]
      %v251 = vld [vmem:[%s219 + $0xc8] sm:$0xff]
      %v252 = vld [vmem:[%s219 + $0xd0] sm:$0xff]
      %v253 = vld [vmem:[%s219 + $0xd8] sm:$0xff]
      %v254 = vld [vmem:[%s219 + $0xe0] sm:$0xff]
      %v255 = vld [vmem:[%s219 + $0xe8] sm:$0xff]
      %v256 = vld [vmem:[%s219 + $0xf0] sm:$0xff]
      %v257 = vld [vmem:[%s219 + $0xf8] sm:$0xff]
      %v258 = vld [vmem:[%s219 + $0x100] sm:$0xff]
      %v259 = vld [vmem:[%s219 + $0x108] sm:$0xff]
      %v260 = vld [vmem:[%s219 + $0x110] sm:$0xff]
      %v261 = vld [vmem:[%s219 + $0x118] sm:$0xff]
      %v262 = vld [vmem:[%s219 + $0x120] sm:$0xff]
      %v263 = vld [vmem:[%s219 + $0x128] sm:$0xff]
      %v264 = vld [vmem:[%s219 + $0x130] sm:$0xff]
      %v265 = vld [vmem:[%s219 + $0x138] sm:$0xff]
      %v266 = vld [vmem:[%s219 + $0x140] sm:$0xff]
      %v267 = vld [vmem:[%s219 + $0x148] sm:$0xff]
      %v268 = vld [vmem:[%s219 + $0x150] sm:$0xff]
      %v269 = vld [vmem:[%s219 + $0x158] sm:$0xff]
      %v270 = vld [vmem:[%s219 + $0x160] sm:$0xff]
      %v271 = vld [vmem:[%s219 + $0x168] sm:$0xff]
      %v272 = vld [vmem:[%s219 + $0x170] sm:$0xff]
      %v273 = vld [vmem:[%s219 + $0x178] sm:$0xff]
      %v274 = vld [vmem:[%s219 + $0x180] sm:$0xff]
      %v275 = vld [vmem:[%s219 + $0x188] sm:$0xff]
      %v276 = vld [vmem:[%s219 + $0x190] sm:$0xff]
      %v277 = vld [vmem:[%s219 + $0x198] sm:$0xff]
      %v278 = vld [vmem:[%s219 + $0x1a0] sm:$0xff]
      %v279 = vld [vmem:[%s219 + $0x1a8] sm:$0xff]
      %v280 = vld [vmem:[%s219 + $0x1b0] sm:$0xff]
      %v281 = vld [vmem:[%s219 + $0x1b8] sm:$0xff]
      %v282 = vld [vmem:[%s219 + $0x1c0] sm:$0xff]
      %v283 = vld [vmem:[%s219 + $0x1c8] sm:$0xff]
      %v284 = vld [vmem:[%s219 + $0x1d0] sm:$0xff]
      %v285 = vld [vmem:[%s219 + $0x1d8] sm:$0xff]
      %v286 = vld [vmem:[%s219 + $0x1e0] sm:$0xff]
      %v287 = vld [vmem:[%s219 + $0x1e8] sm:$0xff]
      %v288 = vld [vmem:[%s219 + $0x1f0] sm:$0xff]
      %v289 = vld [vmem:[%s219 + $0x1f8] sm:$0xff]
      %v290 = vld [vmem:[%s219 + $0x200] sm:$0xff]
      %v291 = vld [vmem:[%s219 + $0x208] sm:$0xff]
      %v292 = vld [vmem:[%s219 + $0x210] sm:$0xff]
      %v293 = vld [vmem:[%s219 + $0x218] sm:$0xff]
      %v294 = vld [vmem:[%s219 + $0x220] sm:$0xff]
      %v295 = vld [vmem:[%s219 + $0x228] sm:$0xff]
      %v296 = vld [vmem:[%s219 + $0x230] sm:$0xff]
      %v297 = vld [vmem:[%s219 + $0x238] sm:$0xff]
      %v298 = vld [vmem:[%s219 + $0x240] sm:$0xff]
      %v299 = vld [vmem:[%s219 + $0x248] sm:$0xff]
      %v300 = vld [vmem:[%s219 + $0x250] sm:$0xff]
      %v301 = vld [vmem:[%s219 + $0x258] sm:$0xff]
      %v302 = vld [vmem:[%s219 + $0x260] sm:$0xff]
      %v303 = vld [vmem:[%s219 + $0x268] sm:$0xff]
      %v304 = vld [vmem:[%s219 + $0x270] sm:$0xff]
      %v305 = vld [vmem:[%s219 + $0x278] sm:$0xff]
      %v306 = vld [vmem:[%s219 + $0x280] sm:$0xff]
      %v307 = vld [vmem:[%s219 + $0x288] sm:$0xff]
      %v308 = vld [vmem:[%s219 + $0x290] sm:$0xff]
      %v309 = vld [vmem:[%s219 + $0x298] sm:$0xff]
      %v310 = vld [vmem:[%s219 + $0x2a0] sm:$0xff]
      %v311 = vld [vmem:[%s219 + $0x2a8] sm:$0xff]
      %v312 = vld [vmem:[%s219 + $0x2b0] sm:$0xff]
      %v313 = vld [vmem:[%s219 + $0x2b8] sm:$0xff]
      %v314 = vld [vmem:[%s219 + $0x2c0] sm:$0xff]
      %v315 = vld [vmem:[%s219 + $0x2c8] sm:$0xff]
      %v316 = vld [vmem:[%s219 + $0x2d0] sm:$0xff]
      %v317 = vld [vmem:[%s219 + $0x2d8] sm:$0xff]
      %v318 = vld [vmem:[%s219 + $0x2e0] sm:$0xff]
      %v319 = vld [vmem:[%s219 + $0x2e8] sm:$0xff]
      %v320 = vld [vmem:[%s219 + $0x2f0] sm:$0xff]
      %v321 = vld [vmem:[%s219 + $0x2f8] sm:$0xff]
      %v322 = vld [vmem:[%s219 + $0x300] sm:$0xff]
      %v323 = vld [vmem:[%s219 + $0x308] sm:$0xff]
      %v324 = vld [vmem:[%s219 + $0x310] sm:$0xff]
      %v325 = vld [vmem:[%s219 + $0x318] sm:$0xff]
      %v326 = vld [vmem:[%s219 + $0x320] sm:$0xff]
      %v327 = vld [vmem:[%s219 + $0x328] sm:$0xff]
      %v328 = vld [vmem:[%s219 + $0x330] sm:$0xff]
      %v329 = vld [vmem:[%s219 + $0x338] sm:$0xff]
      %v330 = vld [vmem:[%s219 + $0x340] sm:$0xff]
      %v331 = vld [vmem:[%s219 + $0x348] sm:$0xff]
      %v332 = vld [vmem:[%s219 + $0x350] sm:$0xff]
      %v333 = vld [vmem:[%s219 + $0x358] sm:$0xff]
      %v334 = vld [vmem:[%s219 + $0x360] sm:$0xff]
      %v335 = vld [vmem:[%s219 + $0x368] sm:$0xff]
      %v336 = vld [vmem:[%s219 + $0x370] sm:$0xff]
      %v337 = vld [vmem:[%s219 + $0x378] sm:$0xff]
      %v338 = vld [vmem:[%s219 + $0x380] sm:$0xff]
      %v339 = vld [vmem:[%s219 + $0x388] sm:$0xff]
      %v340 = vld [vmem:[%s219 + $0x390] sm:$0xff]
      %v341 = vld [vmem:[%s219 + $0x398] sm:$0xff]
      %v342 = vld [vmem:[%s219 + $0x3a0] sm:$0xff]
      %v343 = vld [vmem:[%s219 + $0x3a8] sm:$0xff]
      %v344 = vld [vmem:[%s219 + $0x3b0] sm:$0xff]
      %v345 = vld [vmem:[%s219 + $0x3b8] sm:$0xff]
      %v346 = vld [vmem:[%s219 + $0x3c0] sm:$0xff]
      %v347 = vld [vmem:[%s219 + $0x3c8] sm:$0xff]
      %v348 = vld [vmem:[%s219 + $0x3d0] sm:$0xff]
      %v349 = vld [vmem:[%s219 + $0x3d8] sm:$0xff]
      %v350 = vld [vmem:[%s219 + $0x3e0] sm:$0xff]
      %v351 = vld [vmem:[%s219 + $0x3e8] sm:$0xff]
      %v352 = vld [vmem:[%s219 + $0x3f0] sm:$0xff]
      %v353 = vld [vmem:[%s219 + $0x3f8] sm:$0xff]
      %v354 = vld [vmem:[%s219 + $0x400] sm:$0xff]
      %v355 = vld [vmem:[%s219 + $0x408] sm:$0xff]
      %v356 = vld [vmem:[%s219 + $0x410] sm:$0xff]
      %v357 = vld [vmem:[%s219 + $0x418] sm:$0xff]
      %v358 = vld [vmem:[%s219 + $0x420] sm:$0xff]
      %v359 = vld [vmem:[%s219 + $0x428] sm:$0xff]
      %v360 = vld [vmem:[%s219 + $0x430] sm:$0xff]
      %v361 = vld [vmem:[%s219 + $0x438] sm:$0xff]
      %v362 = vld [vmem:[%s219 + $0x1] sm:$0xff]
      %v363 = vld [vmem:[%s219 + $0x9] sm:$0xff]
      %v364 = vld [vmem:[%s219 + $0x11] sm:$0xff]
      %v365 = vld [vmem:[%s219 + $0x19] sm:$0xff]
      %v366 = vld [vmem:[%s219 + $0x21] sm:$0xff]
      %v367 = vld [vmem:[%s219 + $0x29] sm:$0xff]
      %v368 = vld [vmem:[%s219 + $0x31] sm:$0xff]
      %v369 = vld [vmem:[%s219 + $0x39] sm:$0xff]
      %v370 = vld [vmem:[%s219 + $0x41] sm:$0xff]
      %v371 = vld [vmem:[%s219 + $0x49] sm:$0xff]
      %v372 = vld [vmem:[%s219 + $0x51] sm:$0xff]
      %v373 = vld [vmem:[%s219 + $0x59] sm:$0xff]
      %v374 = vld [vmem:[%s219 + $0x61] sm:$0xff]
      %v375 = vld [vmem:[%s219 + $0x69] sm:$0xff]
      %v376 = vld [vmem:[%s219 + $0x71] sm:$0xff]
      %v377 = vld [vmem:[%s219 + $0x79] sm:$0xff]
      %v378 = vld [vmem:[%s219 + $0x81] sm:$0xff]
      %v379 = vld [vmem:[%s219 + $0x89] sm:$0xff]
      %v380 = vld [vmem:[%s219 + $0x91] sm:$0xff]
      %v381 = vld [vmem:[%s219 + $0x99] sm:$0xff]
      %v382 = vld [vmem:[%s219 + $0xa1] sm:$0xff]
      %v383 = vld [vmem:[%s219 + $0xa9] sm:$0xff]
      %v384 = vld [vmem:[%s219 + $0xb1] sm:$0xff]
      %v385 = vld [vmem:[%s219 + $0xb9] sm:$0xff]
      %v386 = vld [vmem:[%s219 + $0xc1] sm:$0xff]
      %v387 = vld [vmem:[%s219 + $0xc9] sm:$0xff]
      %v388 = vld [vmem:[%s219 + $0xd1] sm:$0xff]
      %v389 = vld [vmem:[%s219 + $0xd9] sm:$0xff]
      %v390 = vld [vmem:[%s219 + $0xe1] sm:$0xff]
      %v391 = vld [vmem:[%s219 + $0xe9] sm:$0xff]
      %v392 = vld [vmem:[%s219 + $0xf1] sm:$0xff]
      %v393 = vld [vmem:[%s219 + $0xf9] sm:$0xff]
      %v394 = vld [vmem:[%s219 + $0x101] sm:$0xff]
      %v395 = vld [vmem:[%s219 + $0x109] sm:$0xff]
      %v396 = vld [vmem:[%s219 + $0x111] sm:$0xff]
      %v397 = vld [vmem:[%s219 + $0x119] sm:$0xff]
      %v398 = vld [vmem:[%s219 + $0x121] sm:$0xff]
      %v399 = vld [vmem:[%s219 + $0x129] sm:$0xff]
      %v400 = vld [vmem:[%s219 + $0x131] sm:$0xff]
      %v401 = vld [vmem:[%s219 + $0x139] sm:$0xff]
      %v402 = vld [vmem:[%s219 + $0x141] sm:$0xff]
      %v403 = vld [vmem:[%s219 + $0x149] sm:$0xff]
      %v404 = vld [vmem:[%s219 + $0x151] sm:$0xff]
      %v405 = vld [vmem:[%s219 + $0x159] sm:$0xff]
      %v406 = vld [vmem:[%s219 + $0x161] sm:$0xff]
      %v407 = vld [vmem:[%s219 + $0x169] sm:$0xff]
      %v408 = vld [vmem:[%s219 + $0x171] sm:$0xff]
      %v409 = vld [vmem:[%s219 + $0x179] sm:$0xff]
      %v410 = vld [vmem:[%s219 + $0x181] sm:$0xff]
      %v411 = vld [vmem:[%s219 + $0x189] sm:$0xff]
      %v412 = vld [vmem:[%s219 + $0x191] sm:$0xff]
      %v413 = vld [vmem:[%s219 + $0x199] sm:$0xff]
      %v414 = vld [vmem:[%s219 + $0x1a1] sm:$0xff]
      %v415 = vld [vmem:[%s219 + $0x1a9] sm:$0xff]
      %v416 = vld [vmem:[%s219 + $0x1b1] sm:$0xff]
      %v417 = vld [vmem:[%s219 + $0x1b9] sm:$0xff]
      %v418 = vld [vmem:[%s219 + $0x1c1] sm:$0xff]
      %v419 = vld [vmem:[%s219 + $0x1c9] sm:$0xff]
      %v420 = vld [vmem:[%s219 + $0x1d1] sm:$0xff]
      %v421 = vld [vmem:[%s219 + $0x1d9] sm:$0xff]
      %v422 = vld [vmem:[%s219 + $0x1e1] sm:$0xff]
      %v423 = vld [vmem:[%s219 + $0x1e9] sm:$0xff]
      %v424 = vld [vmem:[%s219 + $0x1f1] sm:$0xff]
      %v425 = vld [vmem:[%s219 + $0x1f9] sm:$0xff]
      %v426 = vld [vmem:[%s219 + $0x201] sm:$0xff]
      %v427 = vld [vmem:[%s219 + $0x209] sm:$0xff]
      %v428 = vld [vmem:[%s219 + $0x211] sm:$0xff]
      %v429 = vld [vmem:[%s219 + $0x219] sm:$0xff]
      %v430 = vld [vmem:[%s219 + $0x221] sm:$0xff]
      %v431 = vld [vmem:[%s219 + $0x229] sm:$0xff]
      %v432 = vld [vmem:[%s219 + $0x231] sm:$0xff]
      %v433 = vld [vmem:[%s219 + $0x239] sm:$0xff]
      %v434 = vld [vmem:[%s219 + $0x241] sm:$0xff]
      %v435 = vld [vmem:[%s219 + $0x249] sm:$0xff]
      %v436 = vld [vmem:[%s219 + $0x251] sm:$0xff]
      %v437 = vld [vmem:[%s219 + $0x259] sm:$0xff]
      %v438 = vld [vmem:[%s219 + $0x261] sm:$0xff]
      %v439 = vld [vmem:[%s219 + $0x269] sm:$0xff]
      %v440 = vld [vmem:[%s219 + $0x271] sm:$0xff]
      %v441 = vld [vmem:[%s219 + $0x279] sm:$0xff]
      %v442 = vld [vmem:[%s219 + $0x281] sm:$0xff]
      %v443 = vld [vmem:[%s219 + $0x289] sm:$0xff]
      %v444 = vld [vmem:[%s219 + $0x291] sm:$0xff]
      %v445 = vld [vmem:[%s219 + $0x299] sm:$0xff]
      %v446 = vld [vmem:[%s219 + $0x2a1] sm:$0xff]
      %v447 = vld [vmem:[%s219 + $0x2a9] sm:$0xff]
      %v448 = vld [vmem:[%s219 + $0x2b1] sm:$0xff]
      %v449 = vld [vmem:[%s219 + $0x2b9] sm:$0xff]
      %v450 = vld [vmem:[%s219 + $0x2c1] sm:$0xff]
      %v451 = vld [vmem:[%s219 + $0x2c9] sm:$0xff]
      %v452 = vld [vmem:[%s219 + $0x2d1] sm:$0xff]
      %v453 = vld [vmem:[%s219 + $0x2d9] sm:$0xff]
      %v454 = vld [vmem:[%s219 + $0x2e1] sm:$0xff]
      %v455 = vld [vmem:[%s219 + $0x2e9] sm:$0xff]
      %v456 = vld [vmem:[%s219 + $0x2f1] sm:$0xff]
      %v457 = vld [vmem:[%s219 + $0x2f9] sm:$0xff]
      %v458 = vld [vmem:[%s219 + $0x301] sm:$0xff]
      %v459 = vld [vmem:[%s219 + $0x309] sm:$0xff]
      %v460 = vld [vmem:[%s219 + $0x311] sm:$0xff]
      %v461 = vld [vmem:[%s219 + $0x319] sm:$0xff]
      %v462 = vld [vmem:[%s219 + $0x321] sm:$0xff]
      %v463 = vld [vmem:[%s219 + $0x329] sm:$0xff]
      %v464 = vld [vmem:[%s219 + $0x331] sm:$0xff]
      %v465 = vld [vmem:[%s219 + $0x339] sm:$0xff]
      %v466 = vld [vmem:[%s219 + $0x341] sm:$0xff]
      %v467 = vld [vmem:[%s219 + $0x349] sm:$0xff]
      %v468 = vld [vmem:[%s219 + $0x351] sm:$0xff]
      %v469 = vld [vmem:[%s219 + $0x359] sm:$0xff]
      %v470 = vld [vmem:[%s219 + $0x361] sm:$0xff]
      %v471 = vld [vmem:[%s219 + $0x369] sm:$0xff]
      %v472 = vld [vmem:[%s219 + $0x371] sm:$0xff]
      %v473 = vld [vmem:[%s219 + $0x379] sm:$0xff]
      %v474 = vld [vmem:[%s219 + $0x381] sm:$0xff]
      %v475 = vld [vmem:[%s219 + $0x389] sm:$0xff]
      %v476 = vld [vmem:[%s219 + $0x391] sm:$0xff]
      %v477 = vld [vmem:[%s219 + $0x399] sm:$0xff]
      %v478 = vld [vmem:[%s219 + $0x3a1] sm:$0xff]
      %v479 = vld [vmem:[%s219 + $0x3a9] sm:$0xff]
      %v480 = vld [vmem:[%s219 + $0x3b1] sm:$0xff]
      %v481 = vld [vmem:[%s219 + $0x3b9] sm:$0xff]
      %v482 = vld [vmem:[%s219 + $0x3c1] sm:$0xff]
      %v483 = vld [vmem:[%s219 + $0x3c9] sm:$0xff]
      %v484 = vld [vmem:[%s219 + $0x3d1] sm:$0xff]
      %v485 = vld [vmem:[%s219 + $0x3d9] sm:$0xff]
      %v486 = vld [vmem:[%s219 + $0x3e1] sm:$0xff]
      %v487 = vld [vmem:[%s219 + $0x3e9] sm:$0xff]
      %v488 = vld [vmem:[%s219 + $0x3f1] sm:$0xff]
      %v489 = vld [vmem:[%s219 + $0x3f9] sm:$0xff]
      %v490 = vld [vmem:[%s219 + $0x401] sm:$0xff]
      %v491 = vld [vmem:[%s219 + $0x409] sm:$0xff]
      %v492 = vld [vmem:[%s219 + $0x411] sm:$0xff]
      %v493 = vld [vmem:[%s219 + $0x419] sm:$0xff]
      %v494 = vld [vmem:[%s219 + $0x421] sm:$0xff]
      %v495 = vld [vmem:[%s219 + $0x429] sm:$0xff]
      %v496 = vld [vmem:[%s219 + $0x431] sm:$0xff]
      %v497 = vld [vmem:[%s219 + $0x439] sm:$0xff]
      %v498 = vld [vmem:[%s219 + $0x2] sm:$0xff]
      %v499 = vld [vmem:[%s219 + $0xa] sm:$0xff]
      %v500 = vld [vmem:[%s219 + $0x12] sm:$0xff]
      %v501 = vld [vmem:[%s219 + $0x1a] sm:$0xff]
      %v502 = vld [vmem:[%s219 + $0x22] sm:$0xff]
      %v503 = vld [vmem:[%s219 + $0x2a] sm:$0xff]
      %v504 = vld [vmem:[%s219 + $0x32] sm:$0xff]
      %v505 = vld [vmem:[%s219 + $0x3a] sm:$0xff]
      %v506 = vld [vmem:[%s219 + $0x42] sm:$0xff]
      %v507 = vld [vmem:[%s219 + $0x4a] sm:$0xff]
      %v508 = vld [vmem:[%s219 + $0x52] sm:$0xff]
      %v509 = vld [vmem:[%s219 + $0x5a] sm:$0xff]
      %v510 = vld [vmem:[%s219 + $0x62] sm:$0xff]
      %v511 = vld [vmem:[%s219 + $0x6a] sm:$0xff]
      %v512 = vld [vmem:[%s219 + $0x72] sm:$0xff]
      %v513 = vld [vmem:[%s219 + $0x7a] sm:$0xff]
      %v514 = vld [vmem:[%s219 + $0x82] sm:$0xff]
      %v515 = vld [vmem:[%s219 + $0x8a] sm:$0xff]
      %v516 = vld [vmem:[%s219 + $0x92] sm:$0xff]
      %v517 = vld [vmem:[%s219 + $0x9a] sm:$0xff]
      %v518 = vld [vmem:[%s219 + $0xa2] sm:$0xff]
      %v519 = vld [vmem:[%s219 + $0xaa] sm:$0xff]
      %v520 = vld [vmem:[%s219 + $0xb2] sm:$0xff]
      %v521 = vld [vmem:[%s219 + $0xba] sm:$0xff]
      %v522 = vld [vmem:[%s219 + $0xc2] sm:$0xff]
      %v523 = vld [vmem:[%s219 + $0xca] sm:$0xff]
      %v524 = vld [vmem:[%s219 + $0xd2] sm:$0xff]
      %v525 = vld [vmem:[%s219 + $0xda] sm:$0xff]
      %v526 = vld [vmem:[%s219 + $0xe2] sm:$0xff]
      %v527 = vld [vmem:[%s219 + $0xea] sm:$0xff]
      %v528 = vld [vmem:[%s219 + $0xf2] sm:$0xff]
      %v529 = vld [vmem:[%s219 + $0xfa] sm:$0xff]
      %v530 = vld [vmem:[%s219 + $0x102] sm:$0xff]
      %v531 = vld [vmem:[%s219 + $0x10a] sm:$0xff]
      %v532 = vld [vmem:[%s219 + $0x112] sm:$0xff]
      %v533 = vld [vmem:[%s219 + $0x11a] sm:$0xff]
      %v534 = vld [vmem:[%s219 + $0x122] sm:$0xff]
      %v535 = vld [vmem:[%s219 + $0x12a] sm:$0xff]
      %v536 = vld [vmem:[%s219 + $0x132] sm:$0xff]
      %v537 = vld [vmem:[%s219 + $0x13a] sm:$0xff]
      %v538 = vld [vmem:[%s219 + $0x142] sm:$0xff]
      %v539 = vld [vmem:[%s219 + $0x14a] sm:$0xff]
      %v540 = vld [vmem:[%s219 + $0x152] sm:$0xff]
      %v541 = vld [vmem:[%s219 + $0x15a] sm:$0xff]
      %v542 = vld [vmem:[%s219 + $0x162] sm:$0xff]
      %v543 = vld [vmem:[%s219 + $0x16a] sm:$0xff]
      %v544 = vld [vmem:[%s219 + $0x172] sm:$0xff]
      %v545 = vld [vmem:[%s219 + $0x17a] sm:$0xff]
      %v546 = vld [vmem:[%s219 + $0x182] sm:$0xff]
      %v547 = vld [vmem:[%s219 + $0x18a] sm:$0xff]
      %v548 = vld [vmem:[%s219 + $0x192] sm:$0xff]
      %v549 = vld [vmem:[%s219 + $0x19a] sm:$0xff]
      %v550 = vld [vmem:[%s219 + $0x1a2] sm:$0xff]
      %v551 = vld [vmem:[%s219 + $0x1aa] sm:$0xff]
      %v552 = vld [vmem:[%s219 + $0x1b2] sm:$0xff]
      %v553 = vld [vmem:[%s219 + $0x1ba] sm:$0xff]
      %v554 = vld [vmem:[%s219 + $0x1c2] sm:$0xff]
      %v555 = vld [vmem:[%s219 + $0x1ca] sm:$0xff]
      %v556 = vld [vmem:[%s219 + $0x1d2] sm:$0xff]
      %v557 = vld [vmem:[%s219 + $0x1da] sm:$0xff]
      %v558 = vld [vmem:[%s219 + $0x1e2] sm:$0xff]
      %v559 = vld [vmem:[%s219 + $0x1ea] sm:$0xff]
      %v560 = vld [vmem:[%s219 + $0x1f2] sm:$0xff]
      %v561 = vld [vmem:[%s219 + $0x1fa] sm:$0xff]
      %v562 = vld [vmem:[%s219 + $0x202] sm:$0xff]
      %v563 = vld [vmem:[%s219 + $0x20a] sm:$0xff]
      %v564 = vld [vmem:[%s219 + $0x212] sm:$0xff]
      %v565 = vld [vmem:[%s219 + $0x21a] sm:$0xff]
      %v566 = vld [vmem:[%s219 + $0x222] sm:$0xff]
      %v567 = vld [vmem:[%s219 + $0x22a] sm:$0xff]
      %v568 = vld [vmem:[%s219 + $0x232] sm:$0xff]
      %v569 = vld [vmem:[%s219 + $0x23a] sm:$0xff]
      %v570 = vld [vmem:[%s219 + $0x242] sm:$0xff]
      %v571 = vld [vmem:[%s219 + $0x24a] sm:$0xff]
      %v572 = vld [vmem:[%s219 + $0x252] sm:$0xff]
      %v573 = vld [vmem:[%s219 + $0x25a] sm:$0xff]
      %v574 = vld [vmem:[%s219 + $0x262] sm:$0xff]
      %v575 = vld [vmem:[%s219 + $0x26a] sm:$0xff]
      %v576 = vld [vmem:[%s219 + $0x272] sm:$0xff]
      %v577 = vld [vmem:[%s219 + $0x27a] sm:$0xff]
      %v578 = vld [vmem:[%s219 + $0x282] sm:$0xff]
      %v579 = vld [vmem:[%s219 + $0x28a] sm:$0xff]
      %v580 = vld [vmem:[%s219 + $0x292] sm:$0xff]
      %v581 = vld [vmem:[%s219 + $0x29a] sm:$0xff]
      %v582 = vld [vmem:[%s219 + $0x2a2] sm:$0xff]
      %v583 = vld [vmem:[%s219 + $0x2aa] sm:$0xff]
      %v584 = vld [vmem:[%s219 + $0x2b2] sm:$0xff]
      %v585 = vld [vmem:[%s219 + $0x2ba] sm:$0xff]
      %v586 = vld [vmem:[%s219 + $0x2c2] sm:$0xff]
      %v587 = vld [vmem:[%s219 + $0x2ca] sm:$0xff]
      %v588 = vld [vmem:[%s219 + $0x2d2] sm:$0xff]
      %v589 = vld [vmem:[%s219 + $0x2da] sm:$0xff]
      %v590 = vld [vmem:[%s219 + $0x2e2] sm:$0xff]
      %v591 = vld [vmem:[%s219 + $0x2ea] sm:$0xff]
      %v592 = vld [vmem:[%s219 + $0x2f2] sm:$0xff]
      %v593 = vld [vmem:[%s219 + $0x2fa] sm:$0xff]
      %v594 = vld [vmem:[%s219 + $0x302] sm:$0xff]
      %v595 = vld [vmem:[%s219 + $0x30a] sm:$0xff]
      %v596 = vld [vmem:[%s219 + $0x312] sm:$0xff]
      %v597 = vld [vmem:[%s219 + $0x31a] sm:$0xff]
      %v598 = vld [vmem:[%s219 + $0x322] sm:$0xff]
      %v599 = vld [vmem:[%s219 + $0x32a] sm:$0xff]
      %v600 = vld [vmem:[%s219 + $0x332] sm:$0xff]
      %v601 = vld [vmem:[%s219 + $0x33a] sm:$0xff]
      %v602 = vld [vmem:[%s219 + $0x342] sm:$0xff]
      %v603 = vld [vmem:[%s219 + $0x34a] sm:$0xff]
      %v604 = vld [vmem:[%s219 + $0x352] sm:$0xff]
      %v605 = vld [vmem:[%s219 + $0x35a] sm:$0xff]
      %v606 = vld [vmem:[%s219 + $0x362] sm:$0xff]
      %v607 = vld [vmem:[%s219 + $0x36a] sm:$0xff]
      %v608 = vld [vmem:[%s219 + $0x372] sm:$0xff]
      %v609 = vld [vmem:[%s219 + $0x37a] sm:$0xff]
      %v610 = vld [vmem:[%s219 + $0x382] sm:$0xff]
      %v611 = vld [vmem:[%s219 + $0x38a] sm:$0xff]
      %v612 = vld [vmem:[%s219 + $0x392] sm:$0xff]
      %v613 = vld [vmem:[%s219 + $0x39a] sm:$0xff]
      %v614 = vld [vmem:[%s219 + $0x3a2] sm:$0xff]
      %v615 = vld [vmem:[%s219 + $0x3aa] sm:$0xff]
      %v616 = vld [vmem:[%s219 + $0x3b2] sm:$0xff]
      %v617 = vld [vmem:[%s219 + $0x3ba] sm:$0xff]
      %v618 = vld [vmem:[%s219 + $0x3c2] sm:$0xff]
      %v619 = vld [vmem:[%s219 + $0x3ca] sm:$0xff]
      %v620 = vld [vmem:[%s219 + $0x3d2] sm:$0xff]
      %v621 = vld [vmem:[%s219 + $0x3da] sm:$0xff]
      %v622 = vld [vmem:[%s219 + $0x3e2] sm:$0xff]
      %v623 = vld [vmem:[%s219 + $0x3ea] sm:$0xff]
      %v624 = vld [vmem:[%s219 + $0x3f2] sm:$0xff]
      %v625 = vld [vmem:[%s219 + $0x3fa] sm:$0xff]
      %v626 = vld [vmem:[%s219 + $0x402] sm:$0xff]
      %v627 = vld [vmem:[%s219 + $0x40a] sm:$0xff]
      %v628 = vld [vmem:[%s219 + $0x412] sm:$0xff]
      %v629 = vld [vmem:[%s219 + $0x41a] sm:$0xff]
      %v630 = vld [vmem:[%s219 + $0x422] sm:$0xff]
      %v631 = vld [vmem:[%s219 + $0x42a] sm:$0xff]
      %v632 = vld [vmem:[%s219 + $0x432] sm:$0xff]
      %v633 = vld [vmem:[%s219 + $0x43a] sm:$0xff]
      %v634 = vld [vmem:[%s219 + $0x442] sm:$0xff]
      %v635 = vld [vmem:[%s219 + $0x44a] sm:$0xff]
      %v636 = vld [vmem:[%s219 + $0x452] sm:$0xff]
      %v637 = vld [vmem:[%s219 + $0x45a] sm:$0xff]
      %v638 = vld [vmem:[%s219 + $0x23] sm:$0xff]
      %v639 = vld [vmem:[%s219 + $0x2b] sm:$0xff]
      %v640 = vld [vmem:[%s219 + $0x33] sm:$0xff]
      %v641 = vld [vmem:[%s219 + $0x3b] sm:$0xff]
      %v642 = vld [vmem:[%s219 + $0x43] sm:$0xff]
      %v643 = vld [vmem:[%s219 + $0x4b] sm:$0xff]
      %v644 = vld [vmem:[%s219 + $0x53] sm:$0xff]
      %v645 = vld [vmem:[%s219 + $0x5b] sm:$0xff]
      %v646 = vld [vmem:[%s219 + $0x63] sm:$0xff]
      %v647 = vld [vmem:[%s219 + $0x6b] sm:$0xff]
      %v648 = vld [vmem:[%s219 + $0x73] sm:$0xff]
      %v649 = vld [vmem:[%s219 + $0x7b] sm:$0xff]
      %v650 = vld [vmem:[%s219 + $0x83] sm:$0xff]
      %v651 = vld [vmem:[%s219 + $0x8b] sm:$0xff]
      %v652 = vld [vmem:[%s219 + $0x93] sm:$0xff]
      %v653 = vld [vmem:[%s219 + $0x9b] sm:$0xff]
      %v654 = vld [vmem:[%s219 + $0xa3] sm:$0xff]
      %v655 = vld [vmem:[%s219 + $0xab] sm:$0xff]
      %v656 = vld [vmem:[%s219 + $0xb3] sm:$0xff]
      %v657 = vld [vmem:[%s219 + $0xbb] sm:$0xff]
      %v658 = vld [vmem:[%s219 + $0xc3] sm:$0xff]
      %v659 = vld [vmem:[%s219 + $0xcb] sm:$0xff]
      %v660 = vld [vmem:[%s219 + $0xd3] sm:$0xff]
      %v661 = vld [vmem:[%s219 + $0xdb] sm:$0xff]
      %v662 = vld [vmem:[%s219 + $0xe3] sm:$0xff]
      %v663 = vld [vmem:[%s219 + $0xeb] sm:$0xff]
      %v664 = vld [vmem:[%s219 + $0xf3] sm:$0xff]
      %v665 = vld [vmem:[%s219 + $0xfb] sm:$0xff]
      %v666 = vld [vmem:[%s219 + $0x103] sm:$0xff]
      %v667 = vld [vmem:[%s219 + $0x10b] sm:$0xff]
      %v668 = vld [vmem:[%s219 + $0x113] sm:$0xff]
      %v669 = vld [vmem:[%s219 + $0x11b] sm:$0xff]
      %v670 = vld [vmem:[%s219 + $0x123] sm:$0xff]
      %v671 = vld [vmem:[%s219 + $0x12b] sm:$0xff]
      %v672 = vld [vmem:[%s219 + $0x133] sm:$0xff]
      %v673 = vld [vmem:[%s219 + $0x13b] sm:$0xff]
      %v674 = vld [vmem:[%s219 + $0x143] sm:$0xff]
      %v675 = vld [vmem:[%s219 + $0x14b] sm:$0xff]
      %v676 = vld [vmem:[%s219 + $0x153] sm:$0xff]
      %v677 = vld [vmem:[%s219 + $0x15b] sm:$0xff]
      %v678 = vld [vmem:[%s219 + $0x163] sm:$0xff]
      %v679 = vld [vmem:[%s219 + $0x16b] sm:$0xff]
      %v680 = vld [vmem:[%s219 + $0x173] sm:$0xff]
      %v681 = vld [vmem:[%s219 + $0x17b] sm:$0xff]
      %v682 = vld [vmem:[%s219 + $0x183] sm:$0xff]
      %v683 = vld [vmem:[%s219 + $0x18b] sm:$0xff]
      %v684 = vld [vmem:[%s219 + $0x193] sm:$0xff]
      %v685 = vld [vmem:[%s219 + $0x19b] sm:$0xff]
      %v686 = vld [vmem:[%s219 + $0x1a3] sm:$0xff]
      %v687 = vld [vmem:[%s219 + $0x1ab] sm:$0xff]
      %v688 = vld [vmem:[%s219 + $0x1b3] sm:$0xff]
      %v689 = vld [vmem:[%s219 + $0x1bb] sm:$0xff]
      %v690 = vld [vmem:[%s219 + $0x1c3] sm:$0xff]
      %v691 = vld [vmem:[%s219 + $0x1cb] sm:$0xff]
      %v692 = vld [vmem:[%s219 + $0x1d3] sm:$0xff]
      %v693 = vld [vmem:[%s219 + $0x1db] sm:$0xff]
      %v694 = vld [vmem:[%s219 + $0x1e3] sm:$0xff]
      %v695 = vld [vmem:[%s219 + $0x1eb] sm:$0xff]
      %v696 = vld [vmem:[%s219 + $0x1f3] sm:$0xff]
      %v697 = vld [vmem:[%s219 + $0x1fb] sm:$0xff]
      %v698 = vld [vmem:[%s219 + $0x203] sm:$0xff]
      %v699 = vld [vmem:[%s219 + $0x20b] sm:$0xff]
      %v700 = vld [vmem:[%s219 + $0x213] sm:$0xff]
      %v701 = vld [vmem:[%s219 + $0x21b] sm:$0xff]
      %v702 = vld [vmem:[%s219 + $0x223] sm:$0xff]
      %v703 = vld [vmem:[%s219 + $0x22b] sm:$0xff]
      %v704 = vld [vmem:[%s219 + $0x233] sm:$0xff]
      %v705 = vld [vmem:[%s219 + $0x23b] sm:$0xff]
      %v706 = vld [vmem:[%s219 + $0x243] sm:$0xff]
      %v707 = vld [vmem:[%s219 + $0x24b] sm:$0xff]
      %v708 = vld [vmem:[%s219 + $0x253] sm:$0xff]
      %v709 = vld [vmem:[%s219 + $0x25b] sm:$0xff]
      %v710 = vld [vmem:[%s219 + $0x263] sm:$0xff]
      %v711 = vld [vmem:[%s219 + $0x26b] sm:$0xff]
      %v712 = vld [vmem:[%s219 + $0x273] sm:$0xff]
      %v713 = vld [vmem:[%s219 + $0x27b] sm:$0xff]
      %v714 = vld [vmem:[%s219 + $0x283] sm:$0xff]
      %v715 = vld [vmem:[%s219 + $0x28b] sm:$0xff]
      %v716 = vld [vmem:[%s219 + $0x293] sm:$0xff]
      %v717 = vld [vmem:[%s219 + $0x29b] sm:$0xff]
      %v718 = vld [vmem:[%s219 + $0x2a3] sm:$0xff]
      %v719 = vld [vmem:[%s219 + $0x2ab] sm:$0xff]
      %v720 = vld [vmem:[%s219 + $0x2b3] sm:$0xff]
      %v721 = vld [vmem:[%s219 + $0x2bb] sm:$0xff]
      %v722 = vld [vmem:[%s219 + $0x2c3] sm:$0xff]
      %v723 = vld [vmem:[%s219 + $0x2cb] sm:$0xff]
      %v724 = vld [vmem:[%s219 + $0x2d3] sm:$0xff]
      %v725 = vld [vmem:[%s219 + $0x2db] sm:$0xff]
      %v726 = vld [vmem:[%s219 + $0x2e3] sm:$0xff]
      %v727 = vld [vmem:[%s219 + $0x2eb] sm:$0xff]
      %v728 = vld [vmem:[%s219 + $0x2f3] sm:$0xff]
      %v729 = vld [vmem:[%s219 + $0x2fb] sm:$0xff]
      %v730 = vld [vmem:[%s219 + $0x303] sm:$0xff]
      %v731 = vld [vmem:[%s219 + $0x30b] sm:$0xff]
      %v732 = vld [vmem:[%s219 + $0x313] sm:$0xff]
      %v733 = vld [vmem:[%s219 + $0x31b] sm:$0xff]
      %v734 = vld [vmem:[%s219 + $0x323] sm:$0xff]
      %v735 = vld [vmem:[%s219 + $0x32b] sm:$0xff]
      %v736 = vld [vmem:[%s219 + $0x333] sm:$0xff]
      %v737 = vld [vmem:[%s219 + $0x33b] sm:$0xff]
      %v738 = vld [vmem:[%s219 + $0x343] sm:$0xff]
      %v739 = vld [vmem:[%s219 + $0x34b] sm:$0xff]
      %v740 = vld [vmem:[%s219 + $0x353] sm:$0xff]
      %v741 = vld [vmem:[%s219 + $0x35b] sm:$0xff]
      %v742 = vld [vmem:[%s219 + $0x363] sm:$0xff]
      %v743 = vld [vmem:[%s219 + $0x36b] sm:$0xff]
      %v744 = vld [vmem:[%s219 + $0x373] sm:$0xff]
      %v745 = vld [vmem:[%s219 + $0x37b] sm:$0xff]
      %v746 = vld [vmem:[%s219 + $0x383] sm:$0xff]
      %v747 = vld [vmem:[%s219 + $0x38b] sm:$0xff]
      %v748 = vld [vmem:[%s219 + $0x393] sm:$0xff]
      %v749 = vld [vmem:[%s219 + $0x39b] sm:$0xff]
      %v750 = vld [vmem:[%s219 + $0x3a3] sm:$0xff]
      %v751 = vld [vmem:[%s219 + $0x3ab] sm:$0xff]
      %v752 = vld [vmem:[%s219 + $0x3b3] sm:$0xff]
      %v753 = vld [vmem:[%s219 + $0x3bb] sm:$0xff]
      %v754 = vld [vmem:[%s219 + $0x3c3] sm:$0xff]
      %v755 = vld [vmem:[%s219 + $0x3cb] sm:$0xff]
      %v756 = vld [vmem:[%s219 + $0x3d3] sm:$0xff]
      %v757 = vld [vmem:[%s219 + $0x3db] sm:$0xff]
      %v758 = vld [vmem:[%s219 + $0x3e3] sm:$0xff]
      %v759 = vld [vmem:[%s219 + $0x3eb] sm:$0xff]
      %v760 = vld [vmem:[%s219 + $0x3f3] sm:$0xff]
      %v761 = vld [vmem:[%s219 + $0x3fb] sm:$0xff]
      %v762 = vld [vmem:[%s219 + $0x403] sm:$0xff]
      %v763 = vld [vmem:[%s219 + $0x40b] sm:$0xff]
      %v764 = vld [vmem:[%s219 + $0x413] sm:$0xff]
      %v765 = vld [vmem:[%s219 + $0x41b] sm:$0xff]
      %v766 = vld [vmem:[%s219 + $0x423] sm:$0xff]
      %v767 = vld [vmem:[%s219 + $0x42b] sm:$0xff]
      %v768 = vld [vmem:[%s219 + $0x433] sm:$0xff]
      %v769 = vld [vmem:[%s219 + $0x43b] sm:$0xff]
      %v770 = vld [vmem:[%s219 + $0x443] sm:$0xff]
      %v771 = vld [vmem:[%s219 + $0x44b] sm:$0xff]
      %v772 = vld [vmem:[%s219 + $0x453] sm:$0xff]
      %v773 = vld [vmem:[%s219 + $0x45b] sm:$0xff]
      %v774 = vld [vmem:[%s219 + $0x24] sm:$0xff]
      %v775 = vld [vmem:[%s219 + $0x2c] sm:$0xff]
      %v776 = vld [vmem:[%s219 + $0x34] sm:$0xff]
      %v777 = vld [vmem:[%s219 + $0x3c] sm:$0xff]
      %v778 = vld [vmem:[%s219 + $0x44] sm:$0xff]
      %v779 = vld [vmem:[%s219 + $0x4c] sm:$0xff]
      %v780 = vld [vmem:[%s219 + $0x54] sm:$0xff]
      %v781 = vld [vmem:[%s219 + $0x5c] sm:$0xff]
      %v782 = vld [vmem:[%s219 + $0x64] sm:$0xff]
      %v783 = vld [vmem:[%s219 + $0x6c] sm:$0xff]
      %v784 = vld [vmem:[%s219 + $0x74] sm:$0xff]
      %v785 = vld [vmem:[%s219 + $0x7c] sm:$0xff]
      %v786 = vld [vmem:[%s219 + $0x84] sm:$0xff]
      %v787 = vld [vmem:[%s219 + $0x8c] sm:$0xff]
      %v788 = vld [vmem:[%s219 + $0x94] sm:$0xff]
      %v789 = vld [vmem:[%s219 + $0x9c] sm:$0xff]
      %v790 = vld [vmem:[%s219 + $0xa4] sm:$0xff]
      %v791 = vld [vmem:[%s219 + $0xac] sm:$0xff]
      %v792 = vld [vmem:[%s219 + $0xb4] sm:$0xff]
      %v793 = vld [vmem:[%s219 + $0xbc] sm:$0xff]
      %v794 = vld [vmem:[%s219 + $0xc4] sm:$0xff]
      %v795 = vld [vmem:[%s219 + $0xcc] sm:$0xff]
      %v796 = vld [vmem:[%s219 + $0xd4] sm:$0xff]
      %v797 = vld [vmem:[%s219 + $0xdc] sm:$0xff]
      %v798 = vld [vmem:[%s219 + $0xe4] sm:$0xff]
      %v799 = vld [vmem:[%s219 + $0xec] sm:$0xff]
      %v800 = vld [vmem:[%s219 + $0xf4] sm:$0xff]
      %v801 = vld [vmem:[%s219 + $0xfc] sm:$0xff]
      %v802 = vld [vmem:[%s219 + $0x104] sm:$0xff]
      %v803 = vld [vmem:[%s219 + $0x10c] sm:$0xff]
      %v804 = vld [vmem:[%s219 + $0x114] sm:$0xff]
      %v805 = vld [vmem:[%s219 + $0x11c] sm:$0xff]
      %v806 = vld [vmem:[%s219 + $0x124] sm:$0xff]
      %v807 = vld [vmem:[%s219 + $0x12c] sm:$0xff]
      %v808 = vld [vmem:[%s219 + $0x134] sm:$0xff]
      %v809 = vld [vmem:[%s219 + $0x13c] sm:$0xff]
      %v810 = vld [vmem:[%s219 + $0x144] sm:$0xff]
      %v811 = vld [vmem:[%s219 + $0x14c] sm:$0xff]
      %v812 = vld [vmem:[%s219 + $0x154] sm:$0xff]
      %v813 = vld [vmem:[%s219 + $0x15c] sm:$0xff]
      %v814 = vld [vmem:[%s219 + $0x164] sm:$0xff]
      %v815 = vld [vmem:[%s219 + $0x16c] sm:$0xff]
      %v816 = vld [vmem:[%s219 + $0x174] sm:$0xff]
      %v817 = vld [vmem:[%s219 + $0x17c] sm:$0xff]
      %v818 = vld [vmem:[%s219 + $0x184] sm:$0xff]
      %v819 = vld [vmem:[%s219 + $0x18c] sm:$0xff]
      %v820 = vld [vmem:[%s219 + $0x194] sm:$0xff]
      %v821 = vld [vmem:[%s219 + $0x19c] sm:$0xff]
      %v822 = vld [vmem:[%s219 + $0x1a4] sm:$0xff]
      %v823 = vld [vmem:[%s219 + $0x1ac] sm:$0xff]
      %v824 = vld [vmem:[%s219 + $0x1b4] sm:$0xff]
      %v825 = vld [vmem:[%s219 + $0x1bc] sm:$0xff]
      %v826 = vld [vmem:[%s219 + $0x1c4] sm:$0xff]
      %v827 = vld [vmem:[%s219 + $0x1cc] sm:$0xff]
      %v828 = vld [vmem:[%s219 + $0x1d4] sm:$0xff]
      %v829 = vld [vmem:[%s219 + $0x1dc] sm:$0xff]
      %v830 = vld [vmem:[%s219 + $0x1e4] sm:$0xff]
      %v831 = vld [vmem:[%s219 + $0x1ec] sm:$0xff]
      %v832 = vld [vmem:[%s219 + $0x1f4] sm:$0xff]
      %v833 = vld [vmem:[%s219 + $0x1fc] sm:$0xff]
      %v834 = vld [vmem:[%s219 + $0x204] sm:$0xff]
      %v835 = vld [vmem:[%s219 + $0x20c] sm:$0xff]
      %v836 = vld [vmem:[%s219 + $0x214] sm:$0xff]
      %v837 = vld [vmem:[%s219 + $0x21c] sm:$0xff]
      %v838 = vld [vmem:[%s219 + $0x224] sm:$0xff]
      %v839 = vld [vmem:[%s219 + $0x22c] sm:$0xff]
      %v840 = vld [vmem:[%s219 + $0x234] sm:$0xff]
      %v841 = vld [vmem:[%s219 + $0x23c] sm:$0xff]
      %v842 = vld [vmem:[%s219 + $0x244] sm:$0xff]
      %v843 = vld [vmem:[%s219 + $0x24c] sm:$0xff]
      %v844 = vld [vmem:[%s219 + $0x254] sm:$0xff]
      %v845 = vld [vmem:[%s219 + $0x25c] sm:$0xff]
      %v846 = vld [vmem:[%s219 + $0x264] sm:$0xff]
      %v847 = vld [vmem:[%s219 + $0x26c] sm:$0xff]
      %v848 = vld [vmem:[%s219 + $0x274] sm:$0xff]
      %v849 = vld [vmem:[%s219 + $0x27c] sm:$0xff]
      %v850 = vld [vmem:[%s219 + $0x284] sm:$0xff]
      %v851 = vld [vmem:[%s219 + $0x28c] sm:$0xff]
      %v852 = vld [vmem:[%s219 + $0x294] sm:$0xff]
      %v853 = vld [vmem:[%s219 + $0x29c] sm:$0xff]
      %v854 = vld [vmem:[%s219 + $0x2a4] sm:$0xff]
      %v855 = vld [vmem:[%s219 + $0x2ac] sm:$0xff]
      %v856 = vld [vmem:[%s219 + $0x2b4] sm:$0xff]
      %v857 = vld [vmem:[%s219 + $0x2bc] sm:$0xff]
      %v858 = vld [vmem:[%s219 + $0x2c4] sm:$0xff]
      %v859 = vld [vmem:[%s219 + $0x2cc] sm:$0xff]
      %v860 = vld [vmem:[%s219 + $0x2d4] sm:$0xff]
      %v861 = vld [vmem:[%s219 + $0x2dc] sm:$0xff]
      %v862 = vld [vmem:[%s219 + $0x2e4] sm:$0xff]
      %v863 = vld [vmem:[%s219 + $0x2ec] sm:$0xff]
      %v864 = vld [vmem:[%s219 + $0x2f4] sm:$0xff]
      %v865 = vld [vmem:[%s219 + $0x2fc] sm:$0xff]
      %v866 = vld [vmem:[%s219 + $0x304] sm:$0xff]
      %v867 = vld [vmem:[%s219 + $0x30c] sm:$0xff]
      %v868 = vld [vmem:[%s219 + $0x314] sm:$0xff]
      %v869 = vld [vmem:[%s219 + $0x31c] sm:$0xff]
      %v870 = vld [vmem:[%s219 + $0x324] sm:$0xff]
      %v871 = vld [vmem:[%s219 + $0x32c] sm:$0xff]
      %v872 = vld [vmem:[%s219 + $0x334] sm:$0xff]
      %v873 = vld [vmem:[%s219 + $0x33c] sm:$0xff]
      %v874 = vld [vmem:[%s219 + $0x344] sm:$0xff]
      %v875 = vld [vmem:[%s219 + $0x34c] sm:$0xff]
      %v876 = vld [vmem:[%s219 + $0x354] sm:$0xff]
      %v877 = vld [vmem:[%s219 + $0x35c] sm:$0xff]
      %v878 = vld [vmem:[%s219 + $0x364] sm:$0xff]
      %v879 = vld [vmem:[%s219 + $0x36c] sm:$0xff]
      %v880 = vld [vmem:[%s219 + $0x374] sm:$0xff]
      %v881 = vld [vmem:[%s219 + $0x37c] sm:$0xff]
      %v882 = vld [vmem:[%s219 + $0x384] sm:$0xff]
      %v883 = vld [vmem:[%s219 + $0x38c] sm:$0xff]
      %v884 = vld [vmem:[%s219 + $0x394] sm:$0xff]
      %v885 = vld [vmem:[%s219 + $0x39c] sm:$0xff]
      %v886 = vld [vmem:[%s219 + $0x3a4] sm:$0xff]
      %v887 = vld [vmem:[%s219 + $0x3ac] sm:$0xff]
      %v888 = vld [vmem:[%s219 + $0x3b4] sm:$0xff]
      %v889 = vld [vmem:[%s219 + $0x3bc] sm:$0xff]
      %v890 = vld [vmem:[%s219 + $0x3c4] sm:$0xff]
      %v891 = vld [vmem:[%s219 + $0x3cc] sm:$0xff]
      %v892 = vld [vmem:[%s219 + $0x3d4] sm:$0xff]
      %v893 = vld [vmem:[%s219 + $0x3dc] sm:$0xff]
      %v894 = vld [vmem:[%s219 + $0x3e4] sm:$0xff]
      %v895 = vld [vmem:[%s219 + $0x3ec] sm:$0xff]
      %v896 = vld [vmem:[%s219 + $0x3f4] sm:$0xff]
      %v897 = vld [vmem:[%s219 + $0x3fc] sm:$0xff]
      %v898 = vld [vmem:[%s219 + $0x404] sm:$0xff]
      %v899 = vld [vmem:[%s219 + $0x40c] sm:$0xff]
      %v900 = vld [vmem:[%s219 + $0x414] sm:$0xff]
      %v901 = vld [vmem:[%s219 + $0x41c] sm:$0xff]
      %v902 = vld [vmem:[%s219 + $0x424] sm:$0xff]
      %v903 = vld [vmem:[%s219 + $0x42c] sm:$0xff]
      %v904 = vld [vmem:[%s219 + $0x434] sm:$0xff]
      %v905 = vld [vmem:[%s219 + $0x43c] sm:$0xff]
      %v906 = vld [vmem:[%s219 + $0x444] sm:$0xff]
      %v907 = vld [vmem:[%s219 + $0x44c] sm:$0xff]
      %v908 = vld [vmem:[%s219 + $0x454] sm:$0xff]
      %v909 = vld [vmem:[%s219 + $0x45c] sm:$0xff]
      %v910 = vld [vmem:[%s219 + $0x464] sm:$0xff]
      %v911 = vld [vmem:[%s219 + $0x46c] sm:$0xff]
      %v912 = vld [vmem:[%s219 + $0x474] sm:$0xff]
      %v913 = vld [vmem:[%s219 + $0x47c] sm:$0xff]
      %v914 = vld [vmem:[%s219 + $0x45] sm:$0xff]
      %v915 = vld [vmem:[%s219 + $0x4d] sm:$0xff]
      %v916 = vld [vmem:[%s219 + $0x55] sm:$0xff]
      %v917 = vld [vmem:[%s219 + $0x5d] sm:$0xff]
      %v918 = vld [vmem:[%s219 + $0x65] sm:$0xff]
      %v919 = vld [vmem:[%s219 + $0x6d] sm:$0xff]
      %v920 = vld [vmem:[%s219 + $0x75] sm:$0xff]
      %v921 = vld [vmem:[%s219 + $0x7d] sm:$0xff]
      %v922 = vld [vmem:[%s219 + $0x85] sm:$0xff]
      %v923 = vld [vmem:[%s219 + $0x8d] sm:$0xff]
      %v924 = vld [vmem:[%s219 + $0x95] sm:$0xff]
      %v925 = vld [vmem:[%s219 + $0x9d] sm:$0xff]
      %v926 = vld [vmem:[%s219 + $0xa5] sm:$0xff]
      %v927 = vld [vmem:[%s219 + $0xad] sm:$0xff]
      %v928 = vld [vmem:[%s219 + $0xb5] sm:$0xff]
      %v929 = vld [vmem:[%s219 + $0xbd] sm:$0xff]
      %v930 = vld [vmem:[%s219 + $0xc5] sm:$0xff]
      %v931 = vld [vmem:[%s219 + $0xcd] sm:$0xff]
      %v932 = vld [vmem:[%s219 + $0xd5] sm:$0xff]
      %v933 = vld [vmem:[%s219 + $0xdd] sm:$0xff]
      %v934 = vld [vmem:[%s219 + $0xe5] sm:$0xff]
      %v935 = vld [vmem:[%s219 + $0xed] sm:$0xff]
      %v936 = vld [vmem:[%s219 + $0xf5] sm:$0xff]
      %v937 = vld [vmem:[%s219 + $0xfd] sm:$0xff]
      %v938 = vld [vmem:[%s219 + $0x105] sm:$0xff]
      %v939 = vld [vmem:[%s219 + $0x10d] sm:$0xff]
      %v940 = vld [vmem:[%s219 + $0x115] sm:$0xff]
      %v941 = vld [vmem:[%s219 + $0x11d] sm:$0xff]
      %v942 = vld [vmem:[%s219 + $0x125] sm:$0xff]
      %v943 = vld [vmem:[%s219 + $0x12d] sm:$0xff]
      %v944 = vld [vmem:[%s219 + $0x135] sm:$0xff]
      %v945 = vld [vmem:[%s219 + $0x13d] sm:$0xff]
      %v946 = vld [vmem:[%s219 + $0x145] sm:$0xff]
      %v947 = vld [vmem:[%s219 + $0x14d] sm:$0xff]
      %v948 = vld [vmem:[%s219 + $0x155] sm:$0xff]
      %v949 = vld [vmem:[%s219 + $0x15d] sm:$0xff]
      %v950 = vld [vmem:[%s219 + $0x165] sm:$0xff]
      %v951 = vld [vmem:[%s219 + $0x16d] sm:$0xff]
      %v952 = vld [vmem:[%s219 + $0x175] sm:$0xff]
      %v953 = vld [vmem:[%s219 + $0x17d] sm:$0xff]
      %v954 = vld [vmem:[%s219 + $0x185] sm:$0xff]
      %v955 = vld [vmem:[%s219 + $0x18d] sm:$0xff]
      %v956 = vld [vmem:[%s219 + $0x195] sm:$0xff]
      %v957 = vld [vmem:[%s219 + $0x19d] sm:$0xff]
      %v958 = vld [vmem:[%s219 + $0x1a5] sm:$0xff]
      %v959 = vld [vmem:[%s219 + $0x1ad] sm:$0xff]
      %v960 = vld [vmem:[%s219 + $0x1b5] sm:$0xff]
      %v961 = vld [vmem:[%s219 + $0x1bd] sm:$0xff]
      %v962 = vld [vmem:[%s219 + $0x1c5] sm:$0xff]
      %v963 = vld [vmem:[%s219 + $0x1cd] sm:$0xff]
      %v964 = vld [vmem:[%s219 + $0x1d5] sm:$0xff]
      %v965 = vld [vmem:[%s219 + $0x1dd] sm:$0xff]
      %v966 = vld [vmem:[%s219 + $0x1e5] sm:$0xff]
      %v967 = vld [vmem:[%s219 + $0x1ed] sm:$0xff]
      %v968 = vld [vmem:[%s219 + $0x1f5] sm:$0xff]
      %v969 = vld [vmem:[%s219 + $0x1fd] sm:$0xff]
      %v970 = vld [vmem:[%s219 + $0x205] sm:$0xff]
      %v971 = vld [vmem:[%s219 + $0x20d] sm:$0xff]
      %v972 = vld [vmem:[%s219 + $0x215] sm:$0xff]
      %v973 = vld [vmem:[%s219 + $0x21d] sm:$0xff]
      %v974 = vld [vmem:[%s219 + $0x225] sm:$0xff]
      %v975 = vld [vmem:[%s219 + $0x22d] sm:$0xff]
      %v976 = vld [vmem:[%s219 + $0x235] sm:$0xff]
      %v977 = vld [vmem:[%s219 + $0x23d] sm:$0xff]
      %v978 = vld [vmem:[%s219 + $0x245] sm:$0xff]
      %v979 = vld [vmem:[%s219 + $0x24d] sm:$0xff]
      %v980 = vld [vmem:[%s219 + $0x255] sm:$0xff]
      %v981 = vld [vmem:[%s219 + $0x25d] sm:$0xff]
      %v982 = vld [vmem:[%s219 + $0x265] sm:$0xff]
      %v983 = vld [vmem:[%s219 + $0x26d] sm:$0xff]
      %v984 = vld [vmem:[%s219 + $0x275] sm:$0xff]
      %v985 = vld [vmem:[%s219 + $0x27d] sm:$0xff]
      %v986 = vld [vmem:[%s219 + $0x285] sm:$0xff]
      %v987 = vld [vmem:[%s219 + $0x28d] sm:$0xff]
      %v988 = vld [vmem:[%s219 + $0x295] sm:$0xff]
      %v989 = vld [vmem:[%s219 + $0x29d] sm:$0xff]
      %v990 = vld [vmem:[%s219 + $0x2a5] sm:$0xff]
      %v991 = vld [vmem:[%s219 + $0x2ad] sm:$0xff]
      %v992 = vld [vmem:[%s219 + $0x2b5] sm:$0xff]
      %v993 = vld [vmem:[%s219 + $0x2bd] sm:$0xff]
      %v994 = vld [vmem:[%s219 + $0x2c5] sm:$0xff]
      %v995 = vld [vmem:[%s219 + $0x2cd] sm:$0xff]
      %v996 = vld [vmem:[%s219 + $0x2d5] sm:$0xff]
      %v997 = vld [vmem:[%s219 + $0x2dd] sm:$0xff]
      %v998 = vld [vmem:[%s219 + $0x2e5] sm:$0xff]
      %v999 = vld [vmem:[%s219 + $0x2ed] sm:$0xff]
      %v1000 = vld [vmem:[%s219 + $0x2f5] sm:$0xff]
      %v1001 = vld [vmem:[%s219 + $0x2fd] sm:$0xff]
      %v1002 = vld [vmem:[%s219 + $0x305] sm:$0xff]
      %v1003 = vld [vmem:[%s219 + $0x30d] sm:$0xff]
      %v1004 = vld [vmem:[%s219 + $0x315] sm:$0xff]
      %v1005 = vld [vmem:[%s219 + $0x31d] sm:$0xff]
      %v1006 = vld [vmem:[%s219 + $0x325] sm:$0xff]
      %v1007 = vld [vmem:[%s219 + $0x32d] sm:$0xff]
      %v1008 = vld [vmem:[%s219 + $0x335] sm:$0xff]
      %v1009 = vld [vmem:[%s219 + $0x33d] sm:$0xff]
      %v1010 = vld [vmem:[%s219 + $0x345] sm:$0xff]
      %v1011 = vld [vmem:[%s219 + $0x34d] sm:$0xff]
      %v1012 = vld [vmem:[%s219 + $0x355] sm:$0xff]
      %v1013 = vld [vmem:[%s219 + $0x35d] sm:$0xff]
      %v1014 = vld [vmem:[%s219 + $0x365] sm:$0xff]
      %v1015 = vld [vmem:[%s219 + $0x36d] sm:$0xff]
      %v1016 = vld [vmem:[%s219 + $0x375] sm:$0xff]
      %v1017 = vld [vmem:[%s219 + $0x37d] sm:$0xff]
      %v1018 = vld [vmem:[%s219 + $0x385] sm:$0xff]
      %v1019 = vld [vmem:[%s219 + $0x38d] sm:$0xff]
      %v1020 = vld [vmem:[%s219 + $0x395] sm:$0xff]
      %v1021 = vld [vmem:[%s219 + $0x39d] sm:$0xff]
      %v1022 = vld [vmem:[%s219 + $0x3a5] sm:$0xff]
      %v1023 = vld [vmem:[%s219 + $0x3ad] sm:$0xff]
      %v1024 = vld [vmem:[%s219 + $0x3b5] sm:$0xff]
      %v1025 = vld [vmem:[%s219 + $0x3bd] sm:$0xff]
      %v1026 = vld [vmem:[%s219 + $0x3c5] sm:$0xff]
      %v1027 = vld [vmem:[%s219 + $0x3cd] sm:$0xff]
      %v1028 = vld [vmem:[%s219 + $0x3d5] sm:$0xff]
      %v1029 = vld [vmem:[%s219 + $0x3dd] sm:$0xff]
      %v1030 = vld [vmem:[%s219 + $0x3e5] sm:$0xff]
      %v1031 = vld [vmem:[%s219 + $0x3ed] sm:$0xff]
      %v1032 = vld [vmem:[%s219 + $0x3f5] sm:$0xff]
      %v1033 = vld [vmem:[%s219 + $0x3fd] sm:$0xff]
      %v1034 = vld [vmem:[%s219 + $0x405] sm:$0xff]
      %v1035 = vld [vmem:[%s219 + $0x40d] sm:$0xff]
      %v1036 = vld [vmem:[%s219 + $0x415] sm:$0xff]
      %v1037 = vld [vmem:[%s219 + $0x41d] sm:$0xff]
      %v1038 = vld [vmem:[%s219 + $0x425] sm:$0xff]
      %v1039 = vld [vmem:[%s219 + $0x42d] sm:$0xff]
      %v1040 = vld [vmem:[%s219 + $0x435] sm:$0xff]
      %v1041 = vld [vmem:[%s219 + $0x43d] sm:$0xff]
      %v1042 = vld [vmem:[%s219 + $0x445] sm:$0xff]
      %v1043 = vld [vmem:[%s219 + $0x44d] sm:$0xff]
      %v1044 = vld [vmem:[%s219 + $0x455] sm:$0xff]
      %v1045 = vld [vmem:[%s219 + $0x45d] sm:$0xff]
      %v1046 = vld [vmem:[%s219 + $0x465] sm:$0xff]
      %v1047 = vld [vmem:[%s219 + $0x46d] sm:$0xff]
      %v1048 = vld [vmem:[%s219 + $0x475] sm:$0xff]
      %v1049 = vld [vmem:[%s219 + $0x47d] sm:$0xff]
      %v1050 = vld [vmem:[%s219 + $0x46] sm:$0xff]
      %v1051 = vld [vmem:[%s219 + $0x4e] sm:$0xff]
      %v1052 = vld [vmem:[%s219 + $0x56] sm:$0xff]
      %v1053 = vld [vmem:[%s219 + $0x5e] sm:$0xff]
      %v1054 = vld [vmem:[%s219 + $0x66] sm:$0xff]
      %v1055 = vld [vmem:[%s219 + $0x6e] sm:$0xff]
      %v1056 = vld [vmem:[%s219 + $0x76] sm:$0xff]
      %v1057 = vld [vmem:[%s219 + $0x7e] sm:$0xff]
      %v1058 = vld [vmem:[%s219 + $0x86] sm:$0xff]
      %v1059 = vld [vmem:[%s219 + $0x8e] sm:$0xff]
      %v1060 = vld [vmem:[%s219 + $0x96] sm:$0xff]
      %v1061 = vld [vmem:[%s219 + $0x9e] sm:$0xff]
      %v1062 = vld [vmem:[%s219 + $0xa6] sm:$0xff]
      %v1063 = vld [vmem:[%s219 + $0xae] sm:$0xff]
      %v1064 = vld [vmem:[%s219 + $0xb6] sm:$0xff]
      %v1065 = vld [vmem:[%s219 + $0xbe] sm:$0xff]
      %v1066 = vld [vmem:[%s219 + $0xc6] sm:$0xff]
      %v1067 = vld [vmem:[%s219 + $0xce] sm:$0xff]
      %v1068 = vld [vmem:[%s219 + $0xd6] sm:$0xff]
      %v1069 = vld [vmem:[%s219 + $0xde] sm:$0xff]
      %v1070 = vld [vmem:[%s219 + $0xe6] sm:$0xff]
      %v1071 = vld [vmem:[%s219 + $0xee] sm:$0xff]
      %v1072 = vld [vmem:[%s219 + $0xf6] sm:$0xff]
      %v1073 = vld [vmem:[%s219 + $0xfe] sm:$0xff]
      %v1074 = vld [vmem:[%s219 + $0x106] sm:$0xff]
      %v1075 = vld [vmem:[%s219 + $0x10e] sm:$0xff]
      %v1076 = vld [vmem:[%s219 + $0x116] sm:$0xff]
      %v1077 = vld [vmem:[%s219 + $0x11e] sm:$0xff]
      %v1078 = vld [vmem:[%s219 + $0x126] sm:$0xff]
      %v1079 = vld [vmem:[%s219 + $0x12e] sm:$0xff]
      %v1080 = vld [vmem:[%s219 + $0x136] sm:$0xff]
      %v1081 = vld [vmem:[%s219 + $0x13e] sm:$0xff]
      %v1082 = vld [vmem:[%s219 + $0x146] sm:$0xff]
      %v1083 = vld [vmem:[%s219 + $0x14e] sm:$0xff]
      %v1084 = vld [vmem:[%s219 + $0x156] sm:$0xff]
      %v1085 = vld [vmem:[%s219 + $0x15e] sm:$0xff]
      %v1086 = vld [vmem:[%s219 + $0x166] sm:$0xff]
      %v1087 = vld [vmem:[%s219 + $0x16e] sm:$0xff]
      %v1088 = vld [vmem:[%s219 + $0x176] sm:$0xff]
      %v1089 = vld [vmem:[%s219 + $0x17e] sm:$0xff]
      %v1090 = vld [vmem:[%s219 + $0x186] sm:$0xff]
      %v1091 = vld [vmem:[%s219 + $0x18e] sm:$0xff]
      %v1092 = vld [vmem:[%s219 + $0x196] sm:$0xff]
      %v1093 = vld [vmem:[%s219 + $0x19e] sm:$0xff]
      %v1094 = vld [vmem:[%s219 + $0x1a6] sm:$0xff]
      %v1095 = vld [vmem:[%s219 + $0x1ae] sm:$0xff]
      %v1096 = vld [vmem:[%s219 + $0x1b6] sm:$0xff]
      %v1097 = vld [vmem:[%s219 + $0x1be] sm:$0xff]
      %v1098 = vld [vmem:[%s219 + $0x1c6] sm:$0xff]
      %v1099 = vld [vmem:[%s219 + $0x1ce] sm:$0xff]
      %v1100 = vld [vmem:[%s219 + $0x1d6] sm:$0xff]
      %v1101 = vld [vmem:[%s219 + $0x1de] sm:$0xff]
      %v1102 = vld [vmem:[%s219 + $0x1e6] sm:$0xff]
      %v1103 = vld [vmem:[%s219 + $0x1ee] sm:$0xff]
      %v1104 = vld [vmem:[%s219 + $0x1f6] sm:$0xff]
      %v1105 = vld [vmem:[%s219 + $0x1fe] sm:$0xff]
      %v1106 = vld [vmem:[%s219 + $0x206] sm:$0xff]
      %v1107 = vld [vmem:[%s219 + $0x20e] sm:$0xff]
      %v1108 = vld [vmem:[%s219 + $0x216] sm:$0xff]
      %v1109 = vld [vmem:[%s219 + $0x21e] sm:$0xff]
      %v1110 = vld [vmem:[%s219 + $0x226] sm:$0xff]
      %v1111 = vld [vmem:[%s219 + $0x22e] sm:$0xff]
      %v1112 = vld [vmem:[%s219 + $0x236] sm:$0xff]
      %v1113 = vld [vmem:[%s219 + $0x23e] sm:$0xff]
      %v1114 = vld [vmem:[%s219 + $0x246] sm:$0xff]
      %v1115 = vld [vmem:[%s219 + $0x24e] sm:$0xff]
      %v1116 = vld [vmem:[%s219 + $0x256] sm:$0xff]
      %v1117 = vld [vmem:[%s219 + $0x25e] sm:$0xff]
      %v1118 = vld [vmem:[%s219 + $0x266] sm:$0xff]
      %v1119 = vld [vmem:[%s219 + $0x26e] sm:$0xff]
      %v1120 = vld [vmem:[%s219 + $0x276] sm:$0xff]
      %v1121 = vld [vmem:[%s219 + $0x27e] sm:$0xff]
      %v1122 = vld [vmem:[%s219 + $0x286] sm:$0xff]
      %v1123 = vld [vmem:[%s219 + $0x28e] sm:$0xff]
      %v1124 = vld [vmem:[%s219 + $0x296] sm:$0xff]
      %v1125 = vld [vmem:[%s219 + $0x29e] sm:$0xff]
      %v1126 = vld [vmem:[%s219 + $0x2a6] sm:$0xff]
      %v1127 = vld [vmem:[%s219 + $0x2ae] sm:$0xff]
      %v1128 = vld [vmem:[%s219 + $0x2b6] sm:$0xff]
      %v1129 = vld [vmem:[%s219 + $0x2be] sm:$0xff]
      %v1130 = vld [vmem:[%s219 + $0x2c6] sm:$0xff]
      %v1131 = vld [vmem:[%s219 + $0x2ce] sm:$0xff]
      %v1132 = vld [vmem:[%s219 + $0x2d6] sm:$0xff]
      %v1133 = vld [vmem:[%s219 + $0x2de] sm:$0xff]
      %v1134 = vld [vmem:[%s219 + $0x2e6] sm:$0xff]
      %v1135 = vld [vmem:[%s219 + $0x2ee] sm:$0xff]
      %v1136 = vld [vmem:[%s219 + $0x2f6] sm:$0xff]
      %v1137 = vld [vmem:[%s219 + $0x2fe] sm:$0xff]
      %v1138 = vld [vmem:[%s219 + $0x306] sm:$0xff]
      %v1139 = vld [vmem:[%s219 + $0x30e] sm:$0xff]
      %v1140 = vld [vmem:[%s219 + $0x316] sm:$0xff]
      %v1141 = vld [vmem:[%s219 + $0x31e] sm:$0xff]
      %v1142 = vld [vmem:[%s219 + $0x326] sm:$0xff]
      %v1143 = vld [vmem:[%s219 + $0x32e] sm:$0xff]
      %v1144 = vld [vmem:[%s219 + $0x336] sm:$0xff]
      %v1145 = vld [vmem:[%s219 + $0x33e] sm:$0xff]
      %v1146 = vld [vmem:[%s219 + $0x346] sm:$0xff]
      %v1147 = vld [vmem:[%s219 + $0x34e] sm:$0xff]
      %v1148 = vld [vmem:[%s219 + $0x356] sm:$0xff]
      %v1149 = vld [vmem:[%s219 + $0x35e] sm:$0xff]
      %v1150 = vld [vmem:[%s219 + $0x366] sm:$0xff]
      %v1151 = vld [vmem:[%s219 + $0x36e] sm:$0xff]
      %v1152 = vld [vmem:[%s219 + $0x376] sm:$0xff]
      %v1153 = vld [vmem:[%s219 + $0x37e] sm:$0xff]
      %v1154 = vld [vmem:[%s219 + $0x386] sm:$0xff]
      %v1155 = vld [vmem:[%s219 + $0x38e] sm:$0xff]
      %v1156 = vld [vmem:[%s219 + $0x396] sm:$0xff]
      %v1157 = vld [vmem:[%s219 + $0x39e] sm:$0xff]
      %v1158 = vld [vmem:[%s219 + $0x3a6] sm:$0xff]
      %v1159 = vld [vmem:[%s219 + $0x3ae] sm:$0xff]
      %v1160 = vld [vmem:[%s219 + $0x3b6] sm:$0xff]
      %v1161 = vld [vmem:[%s219 + $0x3be] sm:$0xff]
      %v1162 = vld [vmem:[%s219 + $0x3c6] sm:$0xff]
      %v1163 = vld [vmem:[%s219 + $0x3ce] sm:$0xff]
      %v1164 = vld [vmem:[%s219 + $0x3d6] sm:$0xff]
      %v1165 = vld [vmem:[%s219 + $0x3de] sm:$0xff]
      %v1166 = vld [vmem:[%s219 + $0x3e6] sm:$0xff]
      %v1167 = vld [vmem:[%s219 + $0x3ee] sm:$0xff]
      %v1168 = vld [vmem:[%s219 + $0x3f6] sm:$0xff]
      %v1169 = vld [vmem:[%s219 + $0x3fe] sm:$0xff]
      %v1170 = vld [vmem:[%s219 + $0x406] sm:$0xff]
      %v1171 = vld [vmem:[%s219 + $0x40e] sm:$0xff]
      %v1172 = vld [vmem:[%s219 + $0x416] sm:$0xff]
      %v1173 = vld [vmem:[%s219 + $0x41e] sm:$0xff]
      %v1174 = vld [vmem:[%s219 + $0x426] sm:$0xff]
      %v1175 = vld [vmem:[%s219 + $0x42e] sm:$0xff]
      %v1176 = vld [vmem:[%s219 + $0x436] sm:$0xff]
      %v1177 = vld [vmem:[%s219 + $0x43e] sm:$0xff]
      %v1178 = vld [vmem:[%s219 + $0x446] sm:$0xff]
      %v1179 = vld [vmem:[%s219 + $0x44e] sm:$0xff]
      %v1180 = vld [vmem:[%s219 + $0x456] sm:$0xff]
      %v1181 = vld [vmem:[%s219 + $0x45e] sm:$0xff]
      %v1182 = vld [vmem:[%s219 + $0x466] sm:$0xff]
      %v1183 = vld [vmem:[%s219 + $0x46e] sm:$0xff]
      %v1184 = vld [vmem:[%s219 + $0x476] sm:$0xff]
      %v1185 = vld [vmem:[%s219 + $0x47e] sm:$0xff]
      %1322 = vrot.lane.b32.xlu0 %v362, 3
      %v1323 = vpop.permute.xlu0 %1322
      %1324 = vrot.lane.b32.xlu0 %v363, 3
      %v1325 = vpop.permute.xlu0 %1324
      %1326 = vrot.lane.b32.xlu0 %v364, 3
      %v1327 = vpop.permute.xlu0 %1326
      %1328 = vrot.lane.b32.xlu0 %v365, 3
      %v1329 = vpop.permute.xlu0 %1328
      %1330 = vrot.lane.b32.xlu0 %v366, 3
      %v1331 = vpop.permute.xlu0 %1330
      %1332 = vrot.lane.b32.xlu0 %v367, 3
      %v1333 = vpop.permute.xlu0 %1332
      %1334 = vrot.lane.b32.xlu0 %v368, 3
      %v1335 = vpop.permute.xlu0 %1334
      %1336 = vrot.lane.b32.xlu0 %v369, 3
      %v1337 = vpop.permute.xlu0 %1336
      %1338 = vrot.lane.b32.xlu0 %v370, 3
      %v1339 = vpop.permute.xlu0 %1338
      %1340 = vrot.lane.b32.xlu0 %v371, 3
      %v1341 = vpop.permute.xlu0 %1340
      %1342 = vrot.lane.b32.xlu0 %v372, 3
      %v1343 = vpop.permute.xlu0 %1342
      %1344 = vrot.lane.b32.xlu0 %v373, 3
      %v1345 = vpop.permute.xlu0 %1344
      %1346 = vrot.lane.b32.xlu0 %v374, 3
      %v1347 = vpop.permute.xlu0 %1346
      %1348 = vrot.lane.b32.xlu0 %v375, 3
      %v1349 = vpop.permute.xlu0 %1348
      %1350 = vrot.lane.b32.xlu0 %v376, 3
      %v1351 = vpop.permute.xlu0 %1350
      %1352 = vrot.lane.b32.xlu0 %v377, 3
      %v1353 = vpop.permute.xlu0 %1352
      %1354 = vrot.lane.b32.xlu0 %v378, 3
      %v1355 = vpop.permute.xlu0 %1354
      %1356 = vrot.lane.b32.xlu0 %v379, 3
      %v1357 = vpop.permute.xlu0 %1356
      %1358 = vrot.lane.b32.xlu0 %v380, 3
      %v1359 = vpop.permute.xlu0 %1358
      %1360 = vrot.lane.b32.xlu0 %v381, 3
      %v1361 = vpop.permute.xlu0 %1360
      %1362 = vrot.lane.b32.xlu0 %v382, 3
      %v1363 = vpop.permute.xlu0 %1362
      %1364 = vrot.lane.b32.xlu0 %v383, 3
      %v1365 = vpop.permute.xlu0 %1364
      %1366 = vrot.lane.b32.xlu0 %v384, 3
      %v1367 = vpop.permute.xlu0 %1366
      %1368 = vrot.lane.b32.xlu0 %v385, 3
      %v1369 = vpop.permute.xlu0 %1368
      %1370 = vrot.lane.b32.xlu0 %v386, 3
      %v1371 = vpop.permute.xlu0 %1370
      %1372 = vrot.lane.b32.xlu0 %v387, 3
      %v1373 = vpop.permute.xlu0 %1372
      %1374 = vrot.lane.b32.xlu0 %v388, 3
      %v1375 = vpop.permute.xlu0 %1374
      %1376 = vrot.lane.b32.xlu0 %v389, 3
      %v1377 = vpop.permute.xlu0 %1376
      %1378 = vrot.lane.b32.xlu0 %v390, 3
      %v1379 = vpop.permute.xlu0 %1378
      %1380 = vrot.lane.b32.xlu0 %v391, 3
      %v1381 = vpop.permute.xlu0 %1380
      %1382 = vrot.lane.b32.xlu0 %v392, 3
      %v1383 = vpop.permute.xlu0 %1382
      %1384 = vrot.lane.b32.xlu0 %v393, 3
      %v1385 = vpop.permute.xlu0 %1384
      %1386 = vrot.lane.b32.xlu0 %v394, 3
      %v1387 = vpop.permute.xlu0 %1386
      %1388 = vrot.lane.b32.xlu0 %v395, 3
      %v1389 = vpop.permute.xlu0 %1388
      %1390 = vrot.lane.b32.xlu0 %v396, 3
      %v1391 = vpop.permute.xlu0 %1390
      %1392 = vrot.lane.b32.xlu0 %v397, 3
      %v1393 = vpop.permute.xlu0 %1392
      %1394 = vrot.lane.b32.xlu0 %v398, 3
      %v1395 = vpop.permute.xlu0 %1394
      %1396 = vrot.lane.b32.xlu0 %v399, 3
      %v1397 = vpop.permute.xlu0 %1396
      %1398 = vrot.lane.b32.xlu0 %v400, 3
      %v1399 = vpop.permute.xlu0 %1398
      %1400 = vrot.lane.b32.xlu0 %v401, 3
      %v1401 = vpop.permute.xlu0 %1400
      %1402 = vrot.lane.b32.xlu0 %v402, 3
      %v1403 = vpop.permute.xlu0 %1402
      %1404 = vrot.lane.b32.xlu0 %v403, 3
      %v1405 = vpop.permute.xlu0 %1404
      %1406 = vrot.lane.b32.xlu0 %v404, 3
      %v1407 = vpop.permute.xlu0 %1406
      %1408 = vrot.lane.b32.xlu0 %v405, 3
      %v1409 = vpop.permute.xlu0 %1408
      %1410 = vrot.lane.b32.xlu0 %v406, 3
      %v1411 = vpop.permute.xlu0 %1410
      %1412 = vrot.lane.b32.xlu0 %v407, 3
      %v1413 = vpop.permute.xlu0 %1412
      %1414 = vrot.lane.b32.xlu0 %v408, 3
      %v1415 = vpop.permute.xlu0 %1414
      %1416 = vrot.lane.b32.xlu0 %v409, 3
      %v1417 = vpop.permute.xlu0 %1416
      %1418 = vrot.lane.b32.xlu0 %v410, 3
      %v1419 = vpop.permute.xlu0 %1418
      %1420 = vrot.lane.b32.xlu0 %v411, 3
      %v1421 = vpop.permute.xlu0 %1420
      %1422 = vrot.lane.b32.xlu0 %v412, 3
      %v1423 = vpop.permute.xlu0 %1422
      %1424 = vrot.lane.b32.xlu0 %v413, 3
      %v1425 = vpop.permute.xlu0 %1424
      %1426 = vrot.lane.b32.xlu0 %v414, 3
      %v1427 = vpop.permute.xlu0 %1426
      %1428 = vrot.lane.b32.xlu0 %v415, 3
      %v1429 = vpop.permute.xlu0 %1428
      %1430 = vrot.lane.b32.xlu0 %v416, 3
      %v1431 = vpop.permute.xlu0 %1430
      %1432 = vrot.lane.b32.xlu0 %v417, 3
      %v1433 = vpop.permute.xlu0 %1432
      %1434 = vrot.lane.b32.xlu0 %v418, 3
      %v1435 = vpop.permute.xlu0 %1434
      %1436 = vrot.lane.b32.xlu0 %v419, 3
      %v1437 = vpop.permute.xlu0 %1436
      %1438 = vrot.lane.b32.xlu0 %v420, 3
      %v1439 = vpop.permute.xlu0 %1438
      %1440 = vrot.lane.b32.xlu0 %v421, 3
      %v1441 = vpop.permute.xlu0 %1440
      %1442 = vrot.lane.b32.xlu0 %v422, 3
      %v1443 = vpop.permute.xlu0 %1442
      %1444 = vrot.lane.b32.xlu0 %v423, 3
      %v1445 = vpop.permute.xlu0 %1444
      %1446 = vrot.lane.b32.xlu0 %v424, 3
      %v1447 = vpop.permute.xlu0 %1446
      %1448 = vrot.lane.b32.xlu0 %v425, 3
      %v1449 = vpop.permute.xlu0 %1448
      %1450 = vrot.lane.b32.xlu0 %v426, 3
      %v1451 = vpop.permute.xlu0 %1450
      %1452 = vrot.lane.b32.xlu0 %v427, 3
      %v1453 = vpop.permute.xlu0 %1452
      %1454 = vrot.lane.b32.xlu0 %v428, 3
      %v1455 = vpop.permute.xlu0 %1454
      %1456 = vrot.lane.b32.xlu0 %v429, 3
      %v1457 = vpop.permute.xlu0 %1456
      %1458 = vrot.lane.b32.xlu0 %v430, 3
      %v1459 = vpop.permute.xlu0 %1458
      %1460 = vrot.lane.b32.xlu0 %v431, 3
      %v1461 = vpop.permute.xlu0 %1460
      %1462 = vrot.lane.b32.xlu0 %v432, 3
      %v1463 = vpop.permute.xlu0 %1462
      %1464 = vrot.lane.b32.xlu0 %v433, 3
      %v1465 = vpop.permute.xlu0 %1464
      %1466 = vrot.lane.b32.xlu0 %v434, 3
      %v1467 = vpop.permute.xlu0 %1466
      %1468 = vrot.lane.b32.xlu0 %v435, 3
      %v1469 = vpop.permute.xlu0 %1468
      %1470 = vrot.lane.b32.xlu0 %v436, 3
      %v1471 = vpop.permute.xlu0 %1470
      %1472 = vrot.lane.b32.xlu0 %v437, 3
      %v1473 = vpop.permute.xlu0 %1472
      %1474 = vrot.lane.b32.xlu0 %v438, 3
      %v1475 = vpop.permute.xlu0 %1474
      %1476 = vrot.lane.b32.xlu0 %v439, 3
      %v1477 = vpop.permute.xlu0 %1476
      %1478 = vrot.lane.b32.xlu0 %v440, 3
      %v1479 = vpop.permute.xlu0 %1478
      %1480 = vrot.lane.b32.xlu0 %v441, 3
      %v1481 = vpop.permute.xlu0 %1480
      %1482 = vrot.lane.b32.xlu0 %v442, 3
      %v1483 = vpop.permute.xlu0 %1482
      %1484 = vrot.lane.b32.xlu0 %v443, 3
      %v1485 = vpop.permute.xlu0 %1484
      %1486 = vrot.lane.b32.xlu0 %v444, 3
      %v1487 = vpop.permute.xlu0 %1486
      %1488 = vrot.lane.b32.xlu0 %v445, 3
      %v1489 = vpop.permute.xlu0 %1488
      %1490 = vrot.lane.b32.xlu0 %v446, 3
      %v1491 = vpop.permute.xlu0 %1490
      %1492 = vrot.lane.b32.xlu0 %v447, 3
      %v1493 = vpop.permute.xlu0 %1492
      %1494 = vrot.lane.b32.xlu0 %v448, 3
      %v1495 = vpop.permute.xlu0 %1494
      %1496 = vrot.lane.b32.xlu0 %v449, 3
      %v1497 = vpop.permute.xlu0 %1496
      %1498 = vrot.lane.b32.xlu0 %v450, 3
      %v1499 = vpop.permute.xlu0 %1498
      %1500 = vrot.lane.b32.xlu0 %v451, 3
      %v1501 = vpop.permute.xlu0 %1500
      %1502 = vrot.lane.b32.xlu0 %v452, 3
      %v1503 = vpop.permute.xlu0 %1502
      %1504 = vrot.lane.b32.xlu0 %v453, 3
      %v1505 = vpop.permute.xlu0 %1504
      %1506 = vrot.lane.b32.xlu0 %v454, 3
      %v1507 = vpop.permute.xlu0 %1506
      %1508 = vrot.lane.b32.xlu0 %v455, 3
      %v1509 = vpop.permute.xlu0 %1508
      %1510 = vrot.lane.b32.xlu0 %v456, 3
      %v1511 = vpop.permute.xlu0 %1510
      %1512 = vrot.lane.b32.xlu0 %v457, 3
      %v1513 = vpop.permute.xlu0 %1512
      %1514 = vrot.lane.b32.xlu0 %v458, 3
      %v1515 = vpop.permute.xlu0 %1514
      %1516 = vrot.lane.b32.xlu0 %v459, 3
      %v1517 = vpop.permute.xlu0 %1516
      %1518 = vrot.lane.b32.xlu0 %v460, 3
      %v1519 = vpop.permute.xlu0 %1518
      %1520 = vrot.lane.b32.xlu0 %v461, 3
      %v1521 = vpop.permute.xlu0 %1520
      %1522 = vrot.lane.b32.xlu0 %v462, 3
      %v1523 = vpop.permute.xlu0 %1522
      %1524 = vrot.lane.b32.xlu0 %v463, 3
      %v1525 = vpop.permute.xlu0 %1524
      %1526 = vrot.lane.b32.xlu0 %v464, 3
      %v1527 = vpop.permute.xlu0 %1526
      %1528 = vrot.lane.b32.xlu0 %v465, 3
      %v1529 = vpop.permute.xlu0 %1528
      %1530 = vrot.lane.b32.xlu0 %v466, 3
      %v1531 = vpop.permute.xlu0 %1530
      %1532 = vrot.lane.b32.xlu0 %v467, 3
      %v1533 = vpop.permute.xlu0 %1532
      %1534 = vrot.lane.b32.xlu0 %v468, 3
      %v1535 = vpop.permute.xlu0 %1534
      %1536 = vrot.lane.b32.xlu0 %v469, 3
      %v1537 = vpop.permute.xlu0 %1536
      %1538 = vrot.lane.b32.xlu0 %v470, 3
      %v1539 = vpop.permute.xlu0 %1538
      %1540 = vrot.lane.b32.xlu0 %v471, 3
      %v1541 = vpop.permute.xlu0 %1540
      %1542 = vrot.lane.b32.xlu0 %v472, 3
      %v1543 = vpop.permute.xlu0 %1542
      %1544 = vrot.lane.b32.xlu0 %v473, 3
      %v1545 = vpop.permute.xlu0 %1544
      %1546 = vrot.lane.b32.xlu0 %v474, 3
      %v1547 = vpop.permute.xlu0 %1546
      %1548 = vrot.lane.b32.xlu0 %v475, 3
      %v1549 = vpop.permute.xlu0 %1548
      %1550 = vrot.lane.b32.xlu0 %v476, 3
      %v1551 = vpop.permute.xlu0 %1550
      %1552 = vrot.lane.b32.xlu0 %v477, 3
      %v1553 = vpop.permute.xlu0 %1552
      %1554 = vrot.lane.b32.xlu0 %v478, 3
      %v1555 = vpop.permute.xlu0 %1554
      %1556 = vrot.lane.b32.xlu0 %v479, 3
      %v1557 = vpop.permute.xlu0 %1556
      %1558 = vrot.lane.b32.xlu0 %v480, 3
      %v1559 = vpop.permute.xlu0 %1558
      %1560 = vrot.lane.b32.xlu0 %v481, 3
      %v1561 = vpop.permute.xlu0 %1560
      %1562 = vrot.lane.b32.xlu0 %v482, 3
      %v1563 = vpop.permute.xlu0 %1562
      %1564 = vrot.lane.b32.xlu0 %v483, 3
      %v1565 = vpop.permute.xlu0 %1564
      %1566 = vrot.lane.b32.xlu0 %v484, 3
      %v1567 = vpop.permute.xlu0 %1566
      %1568 = vrot.lane.b32.xlu0 %v485, 3
      %v1569 = vpop.permute.xlu0 %1568
      %1570 = vrot.lane.b32.xlu0 %v486, 3
      %v1571 = vpop.permute.xlu0 %1570
      %1572 = vrot.lane.b32.xlu0 %v487, 3
      %v1573 = vpop.permute.xlu0 %1572
      %1574 = vrot.lane.b32.xlu0 %v488, 3
      %v1575 = vpop.permute.xlu0 %1574
      %1576 = vrot.lane.b32.xlu0 %v489, 3
      %v1577 = vpop.permute.xlu0 %1576
      %1578 = vrot.lane.b32.xlu0 %v490, 3
      %v1579 = vpop.permute.xlu0 %1578
      %1580 = vrot.lane.b32.xlu0 %v491, 3
      %v1581 = vpop.permute.xlu0 %1580
      %1582 = vrot.lane.b32.xlu0 %v492, 3
      %v1583 = vpop.permute.xlu0 %1582
      %1584 = vrot.lane.b32.xlu0 %v493, 3
      %v1585 = vpop.permute.xlu0 %1584
      %1586 = vrot.lane.b32.xlu0 %v494, 3
      %v1587 = vpop.permute.xlu0 %1586
      %1588 = vrot.lane.b32.xlu0 %v495, 3
      %v1589 = vpop.permute.xlu0 %1588
      %1590 = vrot.lane.b32.xlu0 %v496, 3
      %v1591 = vpop.permute.xlu0 %1590
      %1592 = vrot.lane.b32.xlu0 %v497, 3
      %v1593 = vpop.permute.xlu0 %1592
      %1866 = vrot.lane.b32.xlu0 %v498, 6
      %v1867 = vpop.permute.xlu0 %1866
      %1868 = vrot.lane.b32.xlu0 %v499, 6
      %v1869 = vpop.permute.xlu0 %1868
      %1870 = vrot.lane.b32.xlu0 %v500, 6
      %v1871 = vpop.permute.xlu0 %1870
      %1872 = vrot.lane.b32.xlu0 %v501, 6
      %v1873 = vpop.permute.xlu0 %1872
      %1874 = vrot.lane.b32.xlu0 %v502, 6
      %v1875 = vpop.permute.xlu0 %1874
      %1876 = vrot.lane.b32.xlu0 %v503, 6
      %v1877 = vpop.permute.xlu0 %1876
      %1878 = vrot.lane.b32.xlu0 %v504, 6
      %v1879 = vpop.permute.xlu0 %1878
      %1880 = vrot.lane.b32.xlu0 %v505, 6
      %v1881 = vpop.permute.xlu0 %1880
      %1882 = vrot.lane.b32.xlu0 %v506, 6
      %v1883 = vpop.permute.xlu0 %1882
      %1884 = vrot.lane.b32.xlu0 %v507, 6
      %v1885 = vpop.permute.xlu0 %1884
      %1886 = vrot.lane.b32.xlu0 %v508, 6
      %v1887 = vpop.permute.xlu0 %1886
      %1888 = vrot.lane.b32.xlu0 %v509, 6
      %v1889 = vpop.permute.xlu0 %1888
      %1890 = vrot.lane.b32.xlu0 %v510, 6
      %v1891 = vpop.permute.xlu0 %1890
      %1892 = vrot.lane.b32.xlu0 %v511, 6
      %v1893 = vpop.permute.xlu0 %1892
      %1894 = vrot.lane.b32.xlu0 %v512, 6
      %v1895 = vpop.permute.xlu0 %1894
      %1896 = vrot.lane.b32.xlu0 %v513, 6
      %v1897 = vpop.permute.xlu0 %1896
      %1898 = vrot.lane.b32.xlu0 %v514, 6
      %v1899 = vpop.permute.xlu0 %1898
      %1900 = vrot.lane.b32.xlu0 %v515, 6
      %v1901 = vpop.permute.xlu0 %1900
      %1902 = vrot.lane.b32.xlu0 %v516, 6
      %v1903 = vpop.permute.xlu0 %1902
      %1904 = vrot.lane.b32.xlu0 %v517, 6
      %v1905 = vpop.permute.xlu0 %1904
      %1906 = vrot.lane.b32.xlu0 %v518, 6
      %v1907 = vpop.permute.xlu0 %1906
      %1908 = vrot.lane.b32.xlu0 %v519, 6
      %v1909 = vpop.permute.xlu0 %1908
      %1910 = vrot.lane.b32.xlu0 %v520, 6
      %v1911 = vpop.permute.xlu0 %1910
      %1912 = vrot.lane.b32.xlu0 %v521, 6
      %v1913 = vpop.permute.xlu0 %1912
      %1914 = vrot.lane.b32.xlu0 %v522, 6
      %v1915 = vpop.permute.xlu0 %1914
      %1916 = vrot.lane.b32.xlu0 %v523, 6
      %v1917 = vpop.permute.xlu0 %1916
      %1918 = vrot.lane.b32.xlu0 %v524, 6
      %v1919 = vpop.permute.xlu0 %1918
      %1920 = vrot.lane.b32.xlu0 %v525, 6
      %v1921 = vpop.permute.xlu0 %1920
      %1922 = vrot.lane.b32.xlu0 %v526, 6
      %v1923 = vpop.permute.xlu0 %1922
      %1924 = vrot.lane.b32.xlu0 %v527, 6
      %v1925 = vpop.permute.xlu0 %1924
      %1926 = vrot.lane.b32.xlu0 %v528, 6
      %v1927 = vpop.permute.xlu0 %1926
      %1928 = vrot.lane.b32.xlu0 %v529, 6
      %v1929 = vpop.permute.xlu0 %1928
      %1930 = vrot.lane.b32.xlu0 %v530, 6
      %v1931 = vpop.permute.xlu0 %1930
      %1932 = vrot.lane.b32.xlu0 %v531, 6
      %v1933 = vpop.permute.xlu0 %1932
      %1934 = vrot.lane.b32.xlu0 %v532, 6
      %v1935 = vpop.permute.xlu0 %1934
      %1936 = vrot.lane.b32.xlu0 %v533, 6
      %v1937 = vpop.permute.xlu0 %1936
      %1938 = vrot.lane.b32.xlu0 %v534, 6
      %v1939 = vpop.permute.xlu0 %1938
      %1940 = vrot.lane.b32.xlu0 %v535, 6
      %v1941 = vpop.permute.xlu0 %1940
      %1942 = vrot.lane.b32.xlu0 %v536, 6
      %v1943 = vpop.permute.xlu0 %1942
      %1944 = vrot.lane.b32.xlu0 %v537, 6
      %v1945 = vpop.permute.xlu0 %1944
      %1946 = vrot.lane.b32.xlu0 %v538, 6
      %v1947 = vpop.permute.xlu0 %1946
      %1948 = vrot.lane.b32.xlu0 %v539, 6
      %v1949 = vpop.permute.xlu0 %1948
      %1950 = vrot.lane.b32.xlu0 %v540, 6
      %v1951 = vpop.permute.xlu0 %1950
      %1952 = vrot.lane.b32.xlu0 %v541, 6
      %v1953 = vpop.permute.xlu0 %1952
      %1954 = vrot.lane.b32.xlu0 %v542, 6
      %v1955 = vpop.permute.xlu0 %1954
      %1956 = vrot.lane.b32.xlu0 %v543, 6
      %v1957 = vpop.permute.xlu0 %1956
      %1958 = vrot.lane.b32.xlu0 %v544, 6
      %v1959 = vpop.permute.xlu0 %1958
      %1960 = vrot.lane.b32.xlu0 %v545, 6
      %v1961 = vpop.permute.xlu0 %1960
      %1962 = vrot.lane.b32.xlu0 %v546, 6
      %v1963 = vpop.permute.xlu0 %1962
      %1964 = vrot.lane.b32.xlu0 %v547, 6
      %v1965 = vpop.permute.xlu0 %1964
      %1966 = vrot.lane.b32.xlu0 %v548, 6
      %v1967 = vpop.permute.xlu0 %1966
      %1968 = vrot.lane.b32.xlu0 %v549, 6
      %v1969 = vpop.permute.xlu0 %1968
      %1970 = vrot.lane.b32.xlu0 %v550, 6
      %v1971 = vpop.permute.xlu0 %1970
      %1972 = vrot.lane.b32.xlu0 %v551, 6
      %v1973 = vpop.permute.xlu0 %1972
      %1974 = vrot.lane.b32.xlu0 %v552, 6
      %v1975 = vpop.permute.xlu0 %1974
      %1976 = vrot.lane.b32.xlu0 %v553, 6
      %v1977 = vpop.permute.xlu0 %1976
      %1978 = vrot.lane.b32.xlu0 %v554, 6
      %v1979 = vpop.permute.xlu0 %1978
      %1980 = vrot.lane.b32.xlu0 %v555, 6
      %v1981 = vpop.permute.xlu0 %1980
      %1982 = vrot.lane.b32.xlu0 %v556, 6
      %v1983 = vpop.permute.xlu0 %1982
      %1984 = vrot.lane.b32.xlu0 %v557, 6
      %v1985 = vpop.permute.xlu0 %1984
      %1986 = vrot.lane.b32.xlu0 %v558, 6
      %v1987 = vpop.permute.xlu0 %1986
      %1988 = vrot.lane.b32.xlu0 %v559, 6
      %v1989 = vpop.permute.xlu0 %1988
      %1990 = vrot.lane.b32.xlu0 %v560, 6
      %v1991 = vpop.permute.xlu0 %1990
      %1992 = vrot.lane.b32.xlu0 %v561, 6
      %v1993 = vpop.permute.xlu0 %1992
      %1994 = vrot.lane.b32.xlu0 %v562, 6
      %v1995 = vpop.permute.xlu0 %1994
      %1996 = vrot.lane.b32.xlu0 %v563, 6
      %v1997 = vpop.permute.xlu0 %1996
      %1998 = vrot.lane.b32.xlu0 %v564, 6
      %v1999 = vpop.permute.xlu0 %1998
      %2000 = vrot.lane.b32.xlu0 %v565, 6
      %v2001 = vpop.permute.xlu0 %2000
      %2002 = vrot.lane.b32.xlu0 %v566, 6
      %v2003 = vpop.permute.xlu0 %2002
      %2004 = vrot.lane.b32.xlu0 %v567, 6
      %v2005 = vpop.permute.xlu0 %2004
      %2006 = vrot.lane.b32.xlu0 %v568, 6
      %v2007 = vpop.permute.xlu0 %2006
      %2008 = vrot.lane.b32.xlu0 %v569, 6
      %v2009 = vpop.permute.xlu0 %2008
      %2010 = vrot.lane.b32.xlu0 %v570, 6
      %v2011 = vpop.permute.xlu0 %2010
      %2012 = vrot.lane.b32.xlu0 %v571, 6
      %v2013 = vpop.permute.xlu0 %2012
      %2014 = vrot.lane.b32.xlu0 %v572, 6
      %v2015 = vpop.permute.xlu0 %2014
      %2016 = vrot.lane.b32.xlu0 %v573, 6
      %v2017 = vpop.permute.xlu0 %2016
      %2018 = vrot.lane.b32.xlu0 %v574, 6
      %v2019 = vpop.permute.xlu0 %2018
      %2020 = vrot.lane.b32.xlu0 %v575, 6
      %v2021 = vpop.permute.xlu0 %2020
      %2022 = vrot.lane.b32.xlu0 %v576, 6
      %v2023 = vpop.permute.xlu0 %2022
      %2024 = vrot.lane.b32.xlu0 %v577, 6
      %v2025 = vpop.permute.xlu0 %2024
      %2026 = vrot.lane.b32.xlu0 %v578, 6
      %v2027 = vpop.permute.xlu0 %2026
      %2028 = vrot.lane.b32.xlu0 %v579, 6
      %v2029 = vpop.permute.xlu0 %2028
      %2030 = vrot.lane.b32.xlu0 %v580, 6
      %v2031 = vpop.permute.xlu0 %2030
      %2032 = vrot.lane.b32.xlu0 %v581, 6
      %v2033 = vpop.permute.xlu0 %2032
      %2034 = vrot.lane.b32.xlu0 %v582, 6
      %v2035 = vpop.permute.xlu0 %2034
      %2036 = vrot.lane.b32.xlu0 %v583, 6
      %v2037 = vpop.permute.xlu0 %2036
      %2038 = vrot.lane.b32.xlu0 %v584, 6
      %v2039 = vpop.permute.xlu0 %2038
      %2040 = vrot.lane.b32.xlu0 %v585, 6
      %v2041 = vpop.permute.xlu0 %2040
      %2042 = vrot.lane.b32.xlu0 %v586, 6
      %v2043 = vpop.permute.xlu0 %2042
      %2044 = vrot.lane.b32.xlu0 %v587, 6
      %v2045 = vpop.permute.xlu0 %2044
      %2046 = vrot.lane.b32.xlu0 %v588, 6
      %v2047 = vpop.permute.xlu0 %2046
      %2048 = vrot.lane.b32.xlu0 %v589, 6
      %v2049 = vpop.permute.xlu0 %2048
      %2050 = vrot.lane.b32.xlu0 %v590, 6
      %v2051 = vpop.permute.xlu0 %2050
      %2052 = vrot.lane.b32.xlu0 %v591, 6
      %v2053 = vpop.permute.xlu0 %2052
      %2054 = vrot.lane.b32.xlu0 %v592, 6
      %v2055 = vpop.permute.xlu0 %2054
      %2056 = vrot.lane.b32.xlu0 %v593, 6
      %v2057 = vpop.permute.xlu0 %2056
      %2058 = vrot.lane.b32.xlu0 %v594, 6
      %v2059 = vpop.permute.xlu0 %2058
      %2060 = vrot.lane.b32.xlu0 %v595, 6
      %v2061 = vpop.permute.xlu0 %2060
      %2062 = vrot.lane.b32.xlu0 %v596, 6
      %v2063 = vpop.permute.xlu0 %2062
      %2064 = vrot.lane.b32.xlu0 %v597, 6
      %v2065 = vpop.permute.xlu0 %2064
      %2066 = vrot.lane.b32.xlu0 %v598, 6
      %v2067 = vpop.permute.xlu0 %2066
      %2068 = vrot.lane.b32.xlu0 %v599, 6
      %v2069 = vpop.permute.xlu0 %2068
      %2070 = vrot.lane.b32.xlu0 %v600, 6
      %v2071 = vpop.permute.xlu0 %2070
      %2072 = vrot.lane.b32.xlu0 %v601, 6
      %v2073 = vpop.permute.xlu0 %2072
      %2074 = vrot.lane.b32.xlu0 %v602, 6
      %v2075 = vpop.permute.xlu0 %2074
      %2076 = vrot.lane.b32.xlu0 %v603, 6
      %v2077 = vpop.permute.xlu0 %2076
      %2078 = vrot.lane.b32.xlu0 %v604, 6
      %v2079 = vpop.permute.xlu0 %2078
      %2080 = vrot.lane.b32.xlu0 %v605, 6
      %v2081 = vpop.permute.xlu0 %2080
      %2082 = vrot.lane.b32.xlu0 %v606, 6
      %v2083 = vpop.permute.xlu0 %2082
      %2084 = vrot.lane.b32.xlu0 %v607, 6
      %v2085 = vpop.permute.xlu0 %2084
      %2086 = vrot.lane.b32.xlu0 %v608, 6
      %v2087 = vpop.permute.xlu0 %2086
      %2088 = vrot.lane.b32.xlu0 %v609, 6
      %v2089 = vpop.permute.xlu0 %2088
      %2090 = vrot.lane.b32.xlu0 %v610, 6
      %v2091 = vpop.permute.xlu0 %2090
      %2092 = vrot.lane.b32.xlu0 %v611, 6
      %v2093 = vpop.permute.xlu0 %2092
      %2094 = vrot.lane.b32.xlu0 %v612, 6
      %v2095 = vpop.permute.xlu0 %2094
      %2096 = vrot.lane.b32.xlu0 %v613, 6
      %v2097 = vpop.permute.xlu0 %2096
      %2098 = vrot.lane.b32.xlu0 %v614, 6
      %v2099 = vpop.permute.xlu0 %2098
      %2100 = vrot.lane.b32.xlu0 %v615, 6
      %v2101 = vpop.permute.xlu0 %2100
      %2102 = vrot.lane.b32.xlu0 %v616, 6
      %v2103 = vpop.permute.xlu0 %2102
      %2104 = vrot.lane.b32.xlu0 %v617, 6
      %v2105 = vpop.permute.xlu0 %2104
      %2106 = vrot.lane.b32.xlu0 %v618, 6
      %v2107 = vpop.permute.xlu0 %2106
      %2108 = vrot.lane.b32.xlu0 %v619, 6
      %v2109 = vpop.permute.xlu0 %2108
      %2110 = vrot.lane.b32.xlu0 %v620, 6
      %v2111 = vpop.permute.xlu0 %2110
      %2112 = vrot.lane.b32.xlu0 %v621, 6
      %v2113 = vpop.permute.xlu0 %2112
      %2114 = vrot.lane.b32.xlu0 %v622, 6
      %v2115 = vpop.permute.xlu0 %2114
      %2116 = vrot.lane.b32.xlu0 %v623, 6
      %v2117 = vpop.permute.xlu0 %2116
      %2118 = vrot.lane.b32.xlu0 %v624, 6
      %v2119 = vpop.permute.xlu0 %2118
      %2120 = vrot.lane.b32.xlu0 %v625, 6
      %v2121 = vpop.permute.xlu0 %2120
      %2122 = vrot.lane.b32.xlu0 %v626, 6
      %v2123 = vpop.permute.xlu0 %2122
      %2124 = vrot.lane.b32.xlu0 %v627, 6
      %v2125 = vpop.permute.xlu0 %2124
      %2126 = vrot.lane.b32.xlu0 %v628, 6
      %v2127 = vpop.permute.xlu0 %2126
      %2128 = vrot.lane.b32.xlu0 %v629, 6
      %v2129 = vpop.permute.xlu0 %2128
      %2130 = vrot.lane.b32.xlu0 %v630, 6
      %v2131 = vpop.permute.xlu0 %2130
      %2132 = vrot.lane.b32.xlu0 %v631, 6
      %v2133 = vpop.permute.xlu0 %2132
      %2134 = vrot.lane.b32.xlu0 %v632, 6
      %v2135 = vpop.permute.xlu0 %2134
      %2136 = vrot.lane.b32.xlu0 %v633, 6
      %v2137 = vpop.permute.xlu0 %2136
      %2278 = vrot.lane.b32.xlu0 %v502, 9
      %v2279 = vpop.permute.xlu0 %2278
      %2280 = vrot.lane.b32.xlu0 %v503, 9
      %v2281 = vpop.permute.xlu0 %2280
      %2282 = vrot.lane.b32.xlu0 %v504, 9
      %v2283 = vpop.permute.xlu0 %2282
      %2284 = vrot.lane.b32.xlu0 %v505, 9
      %v2285 = vpop.permute.xlu0 %2284
      %2286 = vrot.lane.b32.xlu0 %v506, 9
      %v2287 = vpop.permute.xlu0 %2286
      %2288 = vrot.lane.b32.xlu0 %v507, 9
      %v2289 = vpop.permute.xlu0 %2288
      %2290 = vrot.lane.b32.xlu0 %v508, 9
      %v2291 = vpop.permute.xlu0 %2290
      %2292 = vrot.lane.b32.xlu0 %v509, 9
      %v2293 = vpop.permute.xlu0 %2292
      %2294 = vrot.lane.b32.xlu0 %v510, 9
      %v2295 = vpop.permute.xlu0 %2294
      %2296 = vrot.lane.b32.xlu0 %v511, 9
      %v2297 = vpop.permute.xlu0 %2296
      %2298 = vrot.lane.b32.xlu0 %v512, 9
      %v2299 = vpop.permute.xlu0 %2298
      %2300 = vrot.lane.b32.xlu0 %v513, 9
      %v2301 = vpop.permute.xlu0 %2300
      %2302 = vrot.lane.b32.xlu0 %v514, 9
      %v2303 = vpop.permute.xlu0 %2302
      %2304 = vrot.lane.b32.xlu0 %v515, 9
      %v2305 = vpop.permute.xlu0 %2304
      %2306 = vrot.lane.b32.xlu0 %v516, 9
      %v2307 = vpop.permute.xlu0 %2306
      %2308 = vrot.lane.b32.xlu0 %v517, 9
      %v2309 = vpop.permute.xlu0 %2308
      %2310 = vrot.lane.b32.xlu0 %v518, 9
      %v2311 = vpop.permute.xlu0 %2310
      %2312 = vrot.lane.b32.xlu0 %v519, 9
      %v2313 = vpop.permute.xlu0 %2312
      %2314 = vrot.lane.b32.xlu0 %v520, 9
      %v2315 = vpop.permute.xlu0 %2314
      %2316 = vrot.lane.b32.xlu0 %v521, 9
      %v2317 = vpop.permute.xlu0 %2316
      %2318 = vrot.lane.b32.xlu0 %v522, 9
      %v2319 = vpop.permute.xlu0 %2318
      %2320 = vrot.lane.b32.xlu0 %v523, 9
      %v2321 = vpop.permute.xlu0 %2320
      %2322 = vrot.lane.b32.xlu0 %v524, 9
      %v2323 = vpop.permute.xlu0 %2322
      %2324 = vrot.lane.b32.xlu0 %v525, 9
      %v2325 = vpop.permute.xlu0 %2324
      %2326 = vrot.lane.b32.xlu0 %v526, 9
      %v2327 = vpop.permute.xlu0 %2326
      %2328 = vrot.lane.b32.xlu0 %v527, 9
      %v2329 = vpop.permute.xlu0 %2328
      %2330 = vrot.lane.b32.xlu0 %v528, 9
      %v2331 = vpop.permute.xlu0 %2330
      %2332 = vrot.lane.b32.xlu0 %v529, 9
      %v2333 = vpop.permute.xlu0 %2332
      %2334 = vrot.lane.b32.xlu0 %v530, 9
      %v2335 = vpop.permute.xlu0 %2334
      %2336 = vrot.lane.b32.xlu0 %v531, 9
      %v2337 = vpop.permute.xlu0 %2336
      %2338 = vrot.lane.b32.xlu0 %v532, 9
      %v2339 = vpop.permute.xlu0 %2338
      %2340 = vrot.lane.b32.xlu0 %v533, 9
      %v2341 = vpop.permute.xlu0 %2340
      %2342 = vrot.lane.b32.xlu0 %v534, 9
      %v2343 = vpop.permute.xlu0 %2342
      %2344 = vrot.lane.b32.xlu0 %v535, 9
      %v2345 = vpop.permute.xlu0 %2344
      %2346 = vrot.lane.b32.xlu0 %v536, 9
      %v2347 = vpop.permute.xlu0 %2346
      %2348 = vrot.lane.b32.xlu0 %v537, 9
      %v2349 = vpop.permute.xlu0 %2348
      %2350 = vrot.lane.b32.xlu0 %v538, 9
      %v2351 = vpop.permute.xlu0 %2350
      %2352 = vrot.lane.b32.xlu0 %v539, 9
      %v2353 = vpop.permute.xlu0 %2352
      %2354 = vrot.lane.b32.xlu0 %v540, 9
      %v2355 = vpop.permute.xlu0 %2354
      %2356 = vrot.lane.b32.xlu0 %v541, 9
      %v2357 = vpop.permute.xlu0 %2356
      %2358 = vrot.lane.b32.xlu0 %v542, 9
      %v2359 = vpop.permute.xlu0 %2358
      %2360 = vrot.lane.b32.xlu0 %v543, 9
      %v2361 = vpop.permute.xlu0 %2360
      %2362 = vrot.lane.b32.xlu0 %v544, 9
      %v2363 = vpop.permute.xlu0 %2362
      %2364 = vrot.lane.b32.xlu0 %v545, 9
      %v2365 = vpop.permute.xlu0 %2364
      %2366 = vrot.lane.b32.xlu0 %v546, 9
      %v2367 = vpop.permute.xlu0 %2366
      %2368 = vrot.lane.b32.xlu0 %v547, 9
      %v2369 = vpop.permute.xlu0 %2368
      %2370 = vrot.lane.b32.xlu0 %v548, 9
      %v2371 = vpop.permute.xlu0 %2370
      %2372 = vrot.lane.b32.xlu0 %v549, 9
      %v2373 = vpop.permute.xlu0 %2372
      %2374 = vrot.lane.b32.xlu0 %v550, 9
      %v2375 = vpop.permute.xlu0 %2374
      %2376 = vrot.lane.b32.xlu0 %v551, 9
      %v2377 = vpop.permute.xlu0 %2376
      %2378 = vrot.lane.b32.xlu0 %v552, 9
      %v2379 = vpop.permute.xlu0 %2378
      %2380 = vrot.lane.b32.xlu0 %v553, 9
      %v2381 = vpop.permute.xlu0 %2380
      %2382 = vrot.lane.b32.xlu0 %v554, 9
      %v2383 = vpop.permute.xlu0 %2382
      %2384 = vrot.lane.b32.xlu0 %v555, 9
      %v2385 = vpop.permute.xlu0 %2384
      %2386 = vrot.lane.b32.xlu0 %v556, 9
      %v2387 = vpop.permute.xlu0 %2386
      %2388 = vrot.lane.b32.xlu0 %v557, 9
      %v2389 = vpop.permute.xlu0 %2388
      %2390 = vrot.lane.b32.xlu0 %v558, 9
      %v2391 = vpop.permute.xlu0 %2390
      %2392 = vrot.lane.b32.xlu0 %v559, 9
      %v2393 = vpop.permute.xlu0 %2392
      %2394 = vrot.lane.b32.xlu0 %v560, 9
      %v2395 = vpop.permute.xlu0 %2394
      %2396 = vrot.lane.b32.xlu0 %v561, 9
      %v2397 = vpop.permute.xlu0 %2396
      %2398 = vrot.lane.b32.xlu0 %v562, 9
      %v2399 = vpop.permute.xlu0 %2398
      %2400 = vrot.lane.b32.xlu0 %v563, 9
      %v2401 = vpop.permute.xlu0 %2400
      %2402 = vrot.lane.b32.xlu0 %v564, 9
      %v2403 = vpop.permute.xlu0 %2402
      %2404 = vrot.lane.b32.xlu0 %v565, 9
      %v2405 = vpop.permute.xlu0 %2404
      %2406 = vrot.lane.b32.xlu0 %v566, 9
      %v2407 = vpop.permute.xlu0 %2406
      %2408 = vrot.lane.b32.xlu0 %v567, 9
      %v2409 = vpop.permute.xlu0 %2408
      %2410 = vrot.lane.b32.xlu0 %v568, 9
      %v2411 = vpop.permute.xlu0 %2410
      %2412 = vrot.lane.b32.xlu0 %v569, 9
      %v2413 = vpop.permute.xlu0 %2412
      %2414 = vrot.lane.b32.xlu0 %v570, 9
      %v2415 = vpop.permute.xlu0 %2414
      %2416 = vrot.lane.b32.xlu0 %v571, 9
      %v2417 = vpop.permute.xlu0 %2416
      %2418 = vrot.lane.b32.xlu0 %v572, 9
      %v2419 = vpop.permute.xlu0 %2418
      %2420 = vrot.lane.b32.xlu0 %v573, 9
      %v2421 = vpop.permute.xlu0 %2420
      %2422 = vrot.lane.b32.xlu0 %v574, 9
      %v2423 = vpop.permute.xlu0 %2422
      %2424 = vrot.lane.b32.xlu0 %v575, 9
      %v2425 = vpop.permute.xlu0 %2424
      %2426 = vrot.lane.b32.xlu0 %v576, 9
      %v2427 = vpop.permute.xlu0 %2426
      %2428 = vrot.lane.b32.xlu0 %v577, 9
      %v2429 = vpop.permute.xlu0 %2428
      %2430 = vrot.lane.b32.xlu0 %v578, 9
      %v2431 = vpop.permute.xlu0 %2430
      %2432 = vrot.lane.b32.xlu0 %v579, 9
      %v2433 = vpop.permute.xlu0 %2432
      %2434 = vrot.lane.b32.xlu0 %v580, 9
      %v2435 = vpop.permute.xlu0 %2434
      %2436 = vrot.lane.b32.xlu0 %v581, 9
      %v2437 = vpop.permute.xlu0 %2436
      %2438 = vrot.lane.b32.xlu0 %v582, 9
      %v2439 = vpop.permute.xlu0 %2438
      %2440 = vrot.lane.b32.xlu0 %v583, 9
      %v2441 = vpop.permute.xlu0 %2440
      %2442 = vrot.lane.b32.xlu0 %v584, 9
      %v2443 = vpop.permute.xlu0 %2442
      %2444 = vrot.lane.b32.xlu0 %v585, 9
      %v2445 = vpop.permute.xlu0 %2444
      %2446 = vrot.lane.b32.xlu0 %v586, 9
      %v2447 = vpop.permute.xlu0 %2446
      %2448 = vrot.lane.b32.xlu0 %v587, 9
      %v2449 = vpop.permute.xlu0 %2448
      %2450 = vrot.lane.b32.xlu0 %v588, 9
      %v2451 = vpop.permute.xlu0 %2450
      %2452 = vrot.lane.b32.xlu0 %v589, 9
      %v2453 = vpop.permute.xlu0 %2452
      %2454 = vrot.lane.b32.xlu0 %v590, 9
      %v2455 = vpop.permute.xlu0 %2454
      %2456 = vrot.lane.b32.xlu0 %v591, 9
      %v2457 = vpop.permute.xlu0 %2456
      %2458 = vrot.lane.b32.xlu0 %v592, 9
      %v2459 = vpop.permute.xlu0 %2458
      %2460 = vrot.lane.b32.xlu0 %v593, 9
      %v2461 = vpop.permute.xlu0 %2460
      %2462 = vrot.lane.b32.xlu0 %v594, 9
      %v2463 = vpop.permute.xlu0 %2462
      %2464 = vrot.lane.b32.xlu0 %v595, 9
      %v2465 = vpop.permute.xlu0 %2464
      %2466 = vrot.lane.b32.xlu0 %v596, 9
      %v2467 = vpop.permute.xlu0 %2466
      %2468 = vrot.lane.b32.xlu0 %v597, 9
      %v2469 = vpop.permute.xlu0 %2468
      %2470 = vrot.lane.b32.xlu0 %v598, 9
      %v2471 = vpop.permute.xlu0 %2470
      %2472 = vrot.lane.b32.xlu0 %v599, 9
      %v2473 = vpop.permute.xlu0 %2472
      %2474 = vrot.lane.b32.xlu0 %v600, 9
      %v2475 = vpop.permute.xlu0 %2474
      %2476 = vrot.lane.b32.xlu0 %v601, 9
      %v2477 = vpop.permute.xlu0 %2476
      %2478 = vrot.lane.b32.xlu0 %v602, 9
      %v2479 = vpop.permute.xlu0 %2478
      %2480 = vrot.lane.b32.xlu0 %v603, 9
      %v2481 = vpop.permute.xlu0 %2480
      %2482 = vrot.lane.b32.xlu0 %v604, 9
      %v2483 = vpop.permute.xlu0 %2482
      %2484 = vrot.lane.b32.xlu0 %v605, 9
      %v2485 = vpop.permute.xlu0 %2484
      %2486 = vrot.lane.b32.xlu0 %v606, 9
      %v2487 = vpop.permute.xlu0 %2486
      %2488 = vrot.lane.b32.xlu0 %v607, 9
      %v2489 = vpop.permute.xlu0 %2488
      %2490 = vrot.lane.b32.xlu0 %v608, 9
      %v2491 = vpop.permute.xlu0 %2490
      %2492 = vrot.lane.b32.xlu0 %v609, 9
      %v2493 = vpop.permute.xlu0 %2492
      %2494 = vrot.lane.b32.xlu0 %v610, 9
      %v2495 = vpop.permute.xlu0 %2494
      %2496 = vrot.lane.b32.xlu0 %v611, 9
      %v2497 = vpop.permute.xlu0 %2496
      %2498 = vrot.lane.b32.xlu0 %v612, 9
      %v2499 = vpop.permute.xlu0 %2498
      %2500 = vrot.lane.b32.xlu0 %v613, 9
      %v2501 = vpop.permute.xlu0 %2500
      %2502 = vrot.lane.b32.xlu0 %v614, 9
      %v2503 = vpop.permute.xlu0 %2502
      %2504 = vrot.lane.b32.xlu0 %v615, 9
      %v2505 = vpop.permute.xlu0 %2504
      %2506 = vrot.lane.b32.xlu0 %v616, 9
      %v2507 = vpop.permute.xlu0 %2506
      %2508 = vrot.lane.b32.xlu0 %v617, 9
      %v2509 = vpop.permute.xlu0 %2508
      %2510 = vrot.lane.b32.xlu0 %v618, 9
      %v2511 = vpop.permute.xlu0 %2510
      %2512 = vrot.lane.b32.xlu0 %v619, 9
      %v2513 = vpop.permute.xlu0 %2512
      %2514 = vrot.lane.b32.xlu0 %v620, 9
      %v2515 = vpop.permute.xlu0 %2514
      %2516 = vrot.lane.b32.xlu0 %v621, 9
      %v2517 = vpop.permute.xlu0 %2516
      %2518 = vrot.lane.b32.xlu0 %v622, 9
      %v2519 = vpop.permute.xlu0 %2518
      %2520 = vrot.lane.b32.xlu0 %v623, 9
      %v2521 = vpop.permute.xlu0 %2520
      %2522 = vrot.lane.b32.xlu0 %v624, 9
      %v2523 = vpop.permute.xlu0 %2522
      %2524 = vrot.lane.b32.xlu0 %v625, 9
      %v2525 = vpop.permute.xlu0 %2524
      %2526 = vrot.lane.b32.xlu0 %v626, 9
      %v2527 = vpop.permute.xlu0 %2526
      %2528 = vrot.lane.b32.xlu0 %v627, 9
      %v2529 = vpop.permute.xlu0 %2528
      %2530 = vrot.lane.b32.xlu0 %v628, 9
      %v2531 = vpop.permute.xlu0 %2530
      %2532 = vrot.lane.b32.xlu0 %v629, 9
      %v2533 = vpop.permute.xlu0 %2532
      %2534 = vrot.lane.b32.xlu0 %v630, 9
      %v2535 = vpop.permute.xlu0 %2534
      %2536 = vrot.lane.b32.xlu0 %v631, 9
      %v2537 = vpop.permute.xlu0 %2536
      %2538 = vrot.lane.b32.xlu0 %v632, 9
      %v2539 = vpop.permute.xlu0 %2538
      %2540 = vrot.lane.b32.xlu0 %v633, 9
      %v2541 = vpop.permute.xlu0 %2540
      %2542 = vrot.lane.b32.xlu0 %v634, 9
      %v2543 = vpop.permute.xlu0 %2542
      %2544 = vrot.lane.b32.xlu0 %v635, 9
      %v2545 = vpop.permute.xlu0 %2544
      %2546 = vrot.lane.b32.xlu0 %v636, 9
      %v2547 = vpop.permute.xlu0 %2546
      %2548 = vrot.lane.b32.xlu0 %v637, 9
      %v2549 = vpop.permute.xlu0 %2548
      %2822 = vrot.lane.b32.xlu0 %v638, 12
      %v2823 = vpop.permute.xlu0 %2822
      %2824 = vrot.lane.b32.xlu0 %v639, 12
      %v2825 = vpop.permute.xlu0 %2824
      %2826 = vrot.lane.b32.xlu0 %v640, 12
      %v2827 = vpop.permute.xlu0 %2826
      %2828 = vrot.lane.b32.xlu0 %v641, 12
      %v2829 = vpop.permute.xlu0 %2828
      %2830 = vrot.lane.b32.xlu0 %v642, 12
      %v2831 = vpop.permute.xlu0 %2830
      %2832 = vrot.lane.b32.xlu0 %v643, 12
      %v2833 = vpop.permute.xlu0 %2832
      %2834 = vrot.lane.b32.xlu0 %v644, 12
      %v2835 = vpop.permute.xlu0 %2834
      %2836 = vrot.lane.b32.xlu0 %v645, 12
      %v2837 = vpop.permute.xlu0 %2836
      %2838 = vrot.lane.b32.xlu0 %v646, 12
      %v2839 = vpop.permute.xlu0 %2838
      %2840 = vrot.lane.b32.xlu0 %v647, 12
      %v2841 = vpop.permute.xlu0 %2840
      %2842 = vrot.lane.b32.xlu0 %v648, 12
      %v2843 = vpop.permute.xlu0 %2842
      %2844 = vrot.lane.b32.xlu0 %v649, 12
      %v2845 = vpop.permute.xlu0 %2844
      %2846 = vrot.lane.b32.xlu0 %v650, 12
      %v2847 = vpop.permute.xlu0 %2846
      %2848 = vrot.lane.b32.xlu0 %v651, 12
      %v2849 = vpop.permute.xlu0 %2848
      %2850 = vrot.lane.b32.xlu0 %v652, 12
      %v2851 = vpop.permute.xlu0 %2850
      %2852 = vrot.lane.b32.xlu0 %v653, 12
      %v2853 = vpop.permute.xlu0 %2852
      %2854 = vrot.lane.b32.xlu0 %v654, 12
      %v2855 = vpop.permute.xlu0 %2854
      %2856 = vrot.lane.b32.xlu0 %v655, 12
      %v2857 = vpop.permute.xlu0 %2856
      %2858 = vrot.lane.b32.xlu0 %v656, 12
      %v2859 = vpop.permute.xlu0 %2858
      %2860 = vrot.lane.b32.xlu0 %v657, 12
      %v2861 = vpop.permute.xlu0 %2860
      %2862 = vrot.lane.b32.xlu0 %v658, 12
      %v2863 = vpop.permute.xlu0 %2862
      %2864 = vrot.lane.b32.xlu0 %v659, 12
      %v2865 = vpop.permute.xlu0 %2864
      %2866 = vrot.lane.b32.xlu0 %v660, 12
      %v2867 = vpop.permute.xlu0 %2866
      %2868 = vrot.lane.b32.xlu0 %v661, 12
      %v2869 = vpop.permute.xlu0 %2868
      %2870 = vrot.lane.b32.xlu0 %v662, 12
      %v2871 = vpop.permute.xlu0 %2870
      %2872 = vrot.lane.b32.xlu0 %v663, 12
      %v2873 = vpop.permute.xlu0 %2872
      %2874 = vrot.lane.b32.xlu0 %v664, 12
      %v2875 = vpop.permute.xlu0 %2874
      %2876 = vrot.lane.b32.xlu0 %v665, 12
      %v2877 = vpop.permute.xlu0 %2876
      %2878 = vrot.lane.b32.xlu0 %v666, 12
      %v2879 = vpop.permute.xlu0 %2878
      %2880 = vrot.lane.b32.xlu0 %v667, 12
      %v2881 = vpop.permute.xlu0 %2880
      %2882 = vrot.lane.b32.xlu0 %v668, 12
      %v2883 = vpop.permute.xlu0 %2882
      %2884 = vrot.lane.b32.xlu0 %v669, 12
      %v2885 = vpop.permute.xlu0 %2884
      %2886 = vrot.lane.b32.xlu0 %v670, 12
      %v2887 = vpop.permute.xlu0 %2886
      %2888 = vrot.lane.b32.xlu0 %v671, 12
      %v2889 = vpop.permute.xlu0 %2888
      %2890 = vrot.lane.b32.xlu0 %v672, 12
      %v2891 = vpop.permute.xlu0 %2890
      %2892 = vrot.lane.b32.xlu0 %v673, 12
      %v2893 = vpop.permute.xlu0 %2892
      %2894 = vrot.lane.b32.xlu0 %v674, 12
      %v2895 = vpop.permute.xlu0 %2894
      %2896 = vrot.lane.b32.xlu0 %v675, 12
      %v2897 = vpop.permute.xlu0 %2896
      %2898 = vrot.lane.b32.xlu0 %v676, 12
      %v2899 = vpop.permute.xlu0 %2898
      %2900 = vrot.lane.b32.xlu0 %v677, 12
      %v2901 = vpop.permute.xlu0 %2900
      %2902 = vrot.lane.b32.xlu0 %v678, 12
      %v2903 = vpop.permute.xlu0 %2902
      %2904 = vrot.lane.b32.xlu0 %v679, 12
      %v2905 = vpop.permute.xlu0 %2904
      %2906 = vrot.lane.b32.xlu0 %v680, 12
      %v2907 = vpop.permute.xlu0 %2906
      %2908 = vrot.lane.b32.xlu0 %v681, 12
      %v2909 = vpop.permute.xlu0 %2908
      %2910 = vrot.lane.b32.xlu0 %v682, 12
      %v2911 = vpop.permute.xlu0 %2910
      %2912 = vrot.lane.b32.xlu0 %v683, 12
      %v2913 = vpop.permute.xlu0 %2912
      %2914 = vrot.lane.b32.xlu0 %v684, 12
      %v2915 = vpop.permute.xlu0 %2914
      %2916 = vrot.lane.b32.xlu0 %v685, 12
      %v2917 = vpop.permute.xlu0 %2916
      %2918 = vrot.lane.b32.xlu0 %v686, 12
      %v2919 = vpop.permute.xlu0 %2918
      %2920 = vrot.lane.b32.xlu0 %v687, 12
      %v2921 = vpop.permute.xlu0 %2920
      %2922 = vrot.lane.b32.xlu0 %v688, 12
      %v2923 = vpop.permute.xlu0 %2922
      %2924 = vrot.lane.b32.xlu0 %v689, 12
      %v2925 = vpop.permute.xlu0 %2924
      %2926 = vrot.lane.b32.xlu0 %v690, 12
      %v2927 = vpop.permute.xlu0 %2926
      %2928 = vrot.lane.b32.xlu0 %v691, 12
      %v2929 = vpop.permute.xlu0 %2928
      %2930 = vrot.lane.b32.xlu0 %v692, 12
      %v2931 = vpop.permute.xlu0 %2930
      %2932 = vrot.lane.b32.xlu0 %v693, 12
      %v2933 = vpop.permute.xlu0 %2932
      %2934 = vrot.lane.b32.xlu0 %v694, 12
      %v2935 = vpop.permute.xlu0 %2934
      %2936 = vrot.lane.b32.xlu0 %v695, 12
      %v2937 = vpop.permute.xlu0 %2936
      %2938 = vrot.lane.b32.xlu0 %v696, 12
      %v2939 = vpop.permute.xlu0 %2938
      %2940 = vrot.lane.b32.xlu0 %v697, 12
      %v2941 = vpop.permute.xlu0 %2940
      %2942 = vrot.lane.b32.xlu0 %v698, 12
      %v2943 = vpop.permute.xlu0 %2942
      %2944 = vrot.lane.b32.xlu0 %v699, 12
      %v2945 = vpop.permute.xlu0 %2944
      %2946 = vrot.lane.b32.xlu0 %v700, 12
      %v2947 = vpop.permute.xlu0 %2946
      %2948 = vrot.lane.b32.xlu0 %v701, 12
      %v2949 = vpop.permute.xlu0 %2948
      %2950 = vrot.lane.b32.xlu0 %v702, 12
      %v2951 = vpop.permute.xlu0 %2950
      %2952 = vrot.lane.b32.xlu0 %v703, 12
      %v2953 = vpop.permute.xlu0 %2952
      %2954 = vrot.lane.b32.xlu0 %v704, 12
      %v2955 = vpop.permute.xlu0 %2954
      %2956 = vrot.lane.b32.xlu0 %v705, 12
      %v2957 = vpop.permute.xlu0 %2956
      %2958 = vrot.lane.b32.xlu0 %v706, 12
      %v2959 = vpop.permute.xlu0 %2958
      %2960 = vrot.lane.b32.xlu0 %v707, 12
      %v2961 = vpop.permute.xlu0 %2960
      %2962 = vrot.lane.b32.xlu0 %v708, 12
      %v2963 = vpop.permute.xlu0 %2962
      %2964 = vrot.lane.b32.xlu0 %v709, 12
      %v2965 = vpop.permute.xlu0 %2964
      %2966 = vrot.lane.b32.xlu0 %v710, 12
      %v2967 = vpop.permute.xlu0 %2966
      %2968 = vrot.lane.b32.xlu0 %v711, 12
      %v2969 = vpop.permute.xlu0 %2968
      %2970 = vrot.lane.b32.xlu0 %v712, 12
      %v2971 = vpop.permute.xlu0 %2970
      %2972 = vrot.lane.b32.xlu0 %v713, 12
      %v2973 = vpop.permute.xlu0 %2972
      %2974 = vrot.lane.b32.xlu0 %v714, 12
      %v2975 = vpop.permute.xlu0 %2974
      %2976 = vrot.lane.b32.xlu0 %v715, 12
      %v2977 = vpop.permute.xlu0 %2976
      %2978 = vrot.lane.b32.xlu0 %v716, 12
      %v2979 = vpop.permute.xlu0 %2978
      %2980 = vrot.lane.b32.xlu0 %v717, 12
      %v2981 = vpop.permute.xlu0 %2980
      %2982 = vrot.lane.b32.xlu0 %v718, 12
      %v2983 = vpop.permute.xlu0 %2982
      %2984 = vrot.lane.b32.xlu0 %v719, 12
      %v2985 = vpop.permute.xlu0 %2984
      %2986 = vrot.lane.b32.xlu0 %v720, 12
      %v2987 = vpop.permute.xlu0 %2986
      %2988 = vrot.lane.b32.xlu0 %v721, 12
      %v2989 = vpop.permute.xlu0 %2988
      %2990 = vrot.lane.b32.xlu0 %v722, 12
      %v2991 = vpop.permute.xlu0 %2990
      %2992 = vrot.lane.b32.xlu0 %v723, 12
      %v2993 = vpop.permute.xlu0 %2992
      %2994 = vrot.lane.b32.xlu0 %v724, 12
      %v2995 = vpop.permute.xlu0 %2994
      %2996 = vrot.lane.b32.xlu0 %v725, 12
      %v2997 = vpop.permute.xlu0 %2996
      %2998 = vrot.lane.b32.xlu0 %v726, 12
      %v2999 = vpop.permute.xlu0 %2998
      %3000 = vrot.lane.b32.xlu0 %v727, 12
      %v3001 = vpop.permute.xlu0 %3000
      %3002 = vrot.lane.b32.xlu0 %v728, 12
      %v3003 = vpop.permute.xlu0 %3002
      %3004 = vrot.lane.b32.xlu0 %v729, 12
      %v3005 = vpop.permute.xlu0 %3004
      %3006 = vrot.lane.b32.xlu0 %v730, 12
      %v3007 = vpop.permute.xlu0 %3006
      %3008 = vrot.lane.b32.xlu0 %v731, 12
      %v3009 = vpop.permute.xlu0 %3008
      %3010 = vrot.lane.b32.xlu0 %v732, 12
      %v3011 = vpop.permute.xlu0 %3010
      %3012 = vrot.lane.b32.xlu0 %v733, 12
      %v3013 = vpop.permute.xlu0 %3012
      %3014 = vrot.lane.b32.xlu0 %v734, 12
      %v3015 = vpop.permute.xlu0 %3014
      %3016 = vrot.lane.b32.xlu0 %v735, 12
      %v3017 = vpop.permute.xlu0 %3016
      %3018 = vrot.lane.b32.xlu0 %v736, 12
      %v3019 = vpop.permute.xlu0 %3018
      %3020 = vrot.lane.b32.xlu0 %v737, 12
      %v3021 = vpop.permute.xlu0 %3020
      %3022 = vrot.lane.b32.xlu0 %v738, 12
      %v3023 = vpop.permute.xlu0 %3022
      %3024 = vrot.lane.b32.xlu0 %v739, 12
      %v3025 = vpop.permute.xlu0 %3024
      %3026 = vrot.lane.b32.xlu0 %v740, 12
      %v3027 = vpop.permute.xlu0 %3026
      %3028 = vrot.lane.b32.xlu0 %v741, 12
      %v3029 = vpop.permute.xlu0 %3028
      %3030 = vrot.lane.b32.xlu0 %v742, 12
      %v3031 = vpop.permute.xlu0 %3030
      %3032 = vrot.lane.b32.xlu0 %v743, 12
      %v3033 = vpop.permute.xlu0 %3032
      %3034 = vrot.lane.b32.xlu0 %v744, 12
      %v3035 = vpop.permute.xlu0 %3034
      %3036 = vrot.lane.b32.xlu0 %v745, 12
      %v3037 = vpop.permute.xlu0 %3036
      %3038 = vrot.lane.b32.xlu0 %v746, 12
      %v3039 = vpop.permute.xlu0 %3038
      %3040 = vrot.lane.b32.xlu0 %v747, 12
      %v3041 = vpop.permute.xlu0 %3040
      %3042 = vrot.lane.b32.xlu0 %v748, 12
      %v3043 = vpop.permute.xlu0 %3042
      %3044 = vrot.lane.b32.xlu0 %v749, 12
      %v3045 = vpop.permute.xlu0 %3044
      %3046 = vrot.lane.b32.xlu0 %v750, 12
      %v3047 = vpop.permute.xlu0 %3046
      %3048 = vrot.lane.b32.xlu0 %v751, 12
      %v3049 = vpop.permute.xlu0 %3048
      %3050 = vrot.lane.b32.xlu0 %v752, 12
      %v3051 = vpop.permute.xlu0 %3050
      %3052 = vrot.lane.b32.xlu0 %v753, 12
      %v3053 = vpop.permute.xlu0 %3052
      %3054 = vrot.lane.b32.xlu0 %v754, 12
      %v3055 = vpop.permute.xlu0 %3054
      %3056 = vrot.lane.b32.xlu0 %v755, 12
      %v3057 = vpop.permute.xlu0 %3056
      %3058 = vrot.lane.b32.xlu0 %v756, 12
      %v3059 = vpop.permute.xlu0 %3058
      %3060 = vrot.lane.b32.xlu0 %v757, 12
      %v3061 = vpop.permute.xlu0 %3060
      %3062 = vrot.lane.b32.xlu0 %v758, 12
      %v3063 = vpop.permute.xlu0 %3062
      %3064 = vrot.lane.b32.xlu0 %v759, 12
      %v3065 = vpop.permute.xlu0 %3064
      %3066 = vrot.lane.b32.xlu0 %v760, 12
      %v3067 = vpop.permute.xlu0 %3066
      %3068 = vrot.lane.b32.xlu0 %v761, 12
      %v3069 = vpop.permute.xlu0 %3068
      %3070 = vrot.lane.b32.xlu0 %v762, 12
      %v3071 = vpop.permute.xlu0 %3070
      %3072 = vrot.lane.b32.xlu0 %v763, 12
      %v3073 = vpop.permute.xlu0 %3072
      %3074 = vrot.lane.b32.xlu0 %v764, 12
      %v3075 = vpop.permute.xlu0 %3074
      %3076 = vrot.lane.b32.xlu0 %v765, 12
      %v3077 = vpop.permute.xlu0 %3076
      %3078 = vrot.lane.b32.xlu0 %v766, 12
      %v3079 = vpop.permute.xlu0 %3078
      %3080 = vrot.lane.b32.xlu0 %v767, 12
      %v3081 = vpop.permute.xlu0 %3080
      %3082 = vrot.lane.b32.xlu0 %v768, 12
      %v3083 = vpop.permute.xlu0 %3082
      %3084 = vrot.lane.b32.xlu0 %v769, 12
      %v3085 = vpop.permute.xlu0 %3084
      %3086 = vrot.lane.b32.xlu0 %v770, 12
      %v3087 = vpop.permute.xlu0 %3086
      %3088 = vrot.lane.b32.xlu0 %v771, 12
      %v3089 = vpop.permute.xlu0 %3088
      %3090 = vrot.lane.b32.xlu0 %v772, 12
      %v3091 = vpop.permute.xlu0 %3090
      %3092 = vrot.lane.b32.xlu0 %v773, 12
      %v3093 = vpop.permute.xlu0 %3092
      %3366 = vrot.lane.b32.xlu0 %v774, 15
      %v3367 = vpop.permute.xlu0 %3366
      %3368 = vrot.lane.b32.xlu0 %v775, 15
      %v3369 = vpop.permute.xlu0 %3368
      %3370 = vrot.lane.b32.xlu0 %v776, 15
      %v3371 = vpop.permute.xlu0 %3370
      %3372 = vrot.lane.b32.xlu0 %v777, 15
      %v3373 = vpop.permute.xlu0 %3372
      %3374 = vrot.lane.b32.xlu0 %v778, 15
      %v3375 = vpop.permute.xlu0 %3374
      %3376 = vrot.lane.b32.xlu0 %v779, 15
      %v3377 = vpop.permute.xlu0 %3376
      %3378 = vrot.lane.b32.xlu0 %v780, 15
      %v3379 = vpop.permute.xlu0 %3378
      %3380 = vrot.lane.b32.xlu0 %v781, 15
      %v3381 = vpop.permute.xlu0 %3380
      %3382 = vrot.lane.b32.xlu0 %v782, 15
      %v3383 = vpop.permute.xlu0 %3382
      %3384 = vrot.lane.b32.xlu0 %v783, 15
      %v3385 = vpop.permute.xlu0 %3384
      %3386 = vrot.lane.b32.xlu0 %v784, 15
      %v3387 = vpop.permute.xlu0 %3386
      %3388 = vrot.lane.b32.xlu0 %v785, 15
      %v3389 = vpop.permute.xlu0 %3388
      %3390 = vrot.lane.b32.xlu0 %v786, 15
      %v3391 = vpop.permute.xlu0 %3390
      %3392 = vrot.lane.b32.xlu0 %v787, 15
      %v3393 = vpop.permute.xlu0 %3392
      %3394 = vrot.lane.b32.xlu0 %v788, 15
      %v3395 = vpop.permute.xlu0 %3394
      %3396 = vrot.lane.b32.xlu0 %v789, 15
      %v3397 = vpop.permute.xlu0 %3396
      %3398 = vrot.lane.b32.xlu0 %v790, 15
      %v3399 = vpop.permute.xlu0 %3398
      %3400 = vrot.lane.b32.xlu0 %v791, 15
      %v3401 = vpop.permute.xlu0 %3400
      %3402 = vrot.lane.b32.xlu0 %v792, 15
      %v3403 = vpop.permute.xlu0 %3402
      %3404 = vrot.lane.b32.xlu0 %v793, 15
      %v3405 = vpop.permute.xlu0 %3404
      %3406 = vrot.lane.b32.xlu0 %v794, 15
      %v3407 = vpop.permute.xlu0 %3406
      %3408 = vrot.lane.b32.xlu0 %v795, 15
      %v3409 = vpop.permute.xlu0 %3408
      %3410 = vrot.lane.b32.xlu0 %v796, 15
      %v3411 = vpop.permute.xlu0 %3410
      %3412 = vrot.lane.b32.xlu0 %v797, 15
      %v3413 = vpop.permute.xlu0 %3412
      %3414 = vrot.lane.b32.xlu0 %v798, 15
      %v3415 = vpop.permute.xlu0 %3414
      %3416 = vrot.lane.b32.xlu0 %v799, 15
      %v3417 = vpop.permute.xlu0 %3416
      %3418 = vrot.lane.b32.xlu0 %v800, 15
      %v3419 = vpop.permute.xlu0 %3418
      %3420 = vrot.lane.b32.xlu0 %v801, 15
      %v3421 = vpop.permute.xlu0 %3420
      %3422 = vrot.lane.b32.xlu0 %v802, 15
      %v3423 = vpop.permute.xlu0 %3422
      %3424 = vrot.lane.b32.xlu0 %v803, 15
      %v3425 = vpop.permute.xlu0 %3424
      %3426 = vrot.lane.b32.xlu0 %v804, 15
      %v3427 = vpop.permute.xlu0 %3426
      %3428 = vrot.lane.b32.xlu0 %v805, 15
      %v3429 = vpop.permute.xlu0 %3428
      %3430 = vrot.lane.b32.xlu0 %v806, 15
      %v3431 = vpop.permute.xlu0 %3430
      %3432 = vrot.lane.b32.xlu0 %v807, 15
      %v3433 = vpop.permute.xlu0 %3432
      %3434 = vrot.lane.b32.xlu0 %v808, 15
      %v3435 = vpop.permute.xlu0 %3434
      %3436 = vrot.lane.b32.xlu0 %v809, 15
      %v3437 = vpop.permute.xlu0 %3436
      %3438 = vrot.lane.b32.xlu0 %v810, 15
      %v3439 = vpop.permute.xlu0 %3438
      %3440 = vrot.lane.b32.xlu0 %v811, 15
      %v3441 = vpop.permute.xlu0 %3440
      %3442 = vrot.lane.b32.xlu0 %v812, 15
      %v3443 = vpop.permute.xlu0 %3442
      %3444 = vrot.lane.b32.xlu0 %v813, 15
      %v3445 = vpop.permute.xlu0 %3444
      %3446 = vrot.lane.b32.xlu0 %v814, 15
      %v3447 = vpop.permute.xlu0 %3446
      %3448 = vrot.lane.b32.xlu0 %v815, 15
      %v3449 = vpop.permute.xlu0 %3448
      %3450 = vrot.lane.b32.xlu0 %v816, 15
      %v3451 = vpop.permute.xlu0 %3450
      %3452 = vrot.lane.b32.xlu0 %v817, 15
      %v3453 = vpop.permute.xlu0 %3452
      %3454 = vrot.lane.b32.xlu0 %v818, 15
      %v3455 = vpop.permute.xlu0 %3454
      %3456 = vrot.lane.b32.xlu0 %v819, 15
      %v3457 = vpop.permute.xlu0 %3456
      %3458 = vrot.lane.b32.xlu0 %v820, 15
      %v3459 = vpop.permute.xlu0 %3458
      %3460 = vrot.lane.b32.xlu0 %v821, 15
      %v3461 = vpop.permute.xlu0 %3460
      %3462 = vrot.lane.b32.xlu0 %v822, 15
      %v3463 = vpop.permute.xlu0 %3462
      %3464 = vrot.lane.b32.xlu0 %v823, 15
      %v3465 = vpop.permute.xlu0 %3464
      %3466 = vrot.lane.b32.xlu0 %v824, 15
      %v3467 = vpop.permute.xlu0 %3466
      %3468 = vrot.lane.b32.xlu0 %v825, 15
      %v3469 = vpop.permute.xlu0 %3468
      %3470 = vrot.lane.b32.xlu0 %v826, 15
      %v3471 = vpop.permute.xlu0 %3470
      %3472 = vrot.lane.b32.xlu0 %v827, 15
      %v3473 = vpop.permute.xlu0 %3472
      %3474 = vrot.lane.b32.xlu0 %v828, 15
      %v3475 = vpop.permute.xlu0 %3474
      %3476 = vrot.lane.b32.xlu0 %v829, 15
      %v3477 = vpop.permute.xlu0 %3476
      %3478 = vrot.lane.b32.xlu0 %v830, 15
      %v3479 = vpop.permute.xlu0 %3478
      %3480 = vrot.lane.b32.xlu0 %v831, 15
      %v3481 = vpop.permute.xlu0 %3480
      %3482 = vrot.lane.b32.xlu0 %v832, 15
      %v3483 = vpop.permute.xlu0 %3482
      %3484 = vrot.lane.b32.xlu0 %v833, 15
      %v3485 = vpop.permute.xlu0 %3484
      %3486 = vrot.lane.b32.xlu0 %v834, 15
      %v3487 = vpop.permute.xlu0 %3486
      %3488 = vrot.lane.b32.xlu0 %v835, 15
      %v3489 = vpop.permute.xlu0 %3488
      %3490 = vrot.lane.b32.xlu0 %v836, 15
      %v3491 = vpop.permute.xlu0 %3490
      %3492 = vrot.lane.b32.xlu0 %v837, 15
      %v3493 = vpop.permute.xlu0 %3492
      %3494 = vrot.lane.b32.xlu0 %v838, 15
      %v3495 = vpop.permute.xlu0 %3494
      %3496 = vrot.lane.b32.xlu0 %v839, 15
      %v3497 = vpop.permute.xlu0 %3496
      %3498 = vrot.lane.b32.xlu0 %v840, 15
      %v3499 = vpop.permute.xlu0 %3498
      %3500 = vrot.lane.b32.xlu0 %v841, 15
      %v3501 = vpop.permute.xlu0 %3500
      %3502 = vrot.lane.b32.xlu0 %v842, 15
      %v3503 = vpop.permute.xlu0 %3502
      %3504 = vrot.lane.b32.xlu0 %v843, 15
      %v3505 = vpop.permute.xlu0 %3504
      %3506 = vrot.lane.b32.xlu0 %v844, 15
      %v3507 = vpop.permute.xlu0 %3506
      %3508 = vrot.lane.b32.xlu0 %v845, 15
      %v3509 = vpop.permute.xlu0 %3508
      %3510 = vrot.lane.b32.xlu0 %v846, 15
      %v3511 = vpop.permute.xlu0 %3510
      %3512 = vrot.lane.b32.xlu0 %v847, 15
      %v3513 = vpop.permute.xlu0 %3512
      %3514 = vrot.lane.b32.xlu0 %v848, 15
      %v3515 = vpop.permute.xlu0 %3514
      %3516 = vrot.lane.b32.xlu0 %v849, 15
      %v3517 = vpop.permute.xlu0 %3516
      %3518 = vrot.lane.b32.xlu0 %v850, 15
      %v3519 = vpop.permute.xlu0 %3518
      %3520 = vrot.lane.b32.xlu0 %v851, 15
      %v3521 = vpop.permute.xlu0 %3520
      %3522 = vrot.lane.b32.xlu0 %v852, 15
      %v3523 = vpop.permute.xlu0 %3522
      %3524 = vrot.lane.b32.xlu0 %v853, 15
      %v3525 = vpop.permute.xlu0 %3524
      %3526 = vrot.lane.b32.xlu0 %v854, 15
      %v3527 = vpop.permute.xlu0 %3526
      %3528 = vrot.lane.b32.xlu0 %v855, 15
      %v3529 = vpop.permute.xlu0 %3528
      %3530 = vrot.lane.b32.xlu0 %v856, 15
      %v3531 = vpop.permute.xlu0 %3530
      %3532 = vrot.lane.b32.xlu0 %v857, 15
      %v3533 = vpop.permute.xlu0 %3532
      %3534 = vrot.lane.b32.xlu0 %v858, 15
      %v3535 = vpop.permute.xlu0 %3534
      %3536 = vrot.lane.b32.xlu0 %v859, 15
      %v3537 = vpop.permute.xlu0 %3536
      %3538 = vrot.lane.b32.xlu0 %v860, 15
      %v3539 = vpop.permute.xlu0 %3538
      %3540 = vrot.lane.b32.xlu0 %v861, 15
      %v3541 = vpop.permute.xlu0 %3540
      %3542 = vrot.lane.b32.xlu0 %v862, 15
      %v3543 = vpop.permute.xlu0 %3542
      %3544 = vrot.lane.b32.xlu0 %v863, 15
      %v3545 = vpop.permute.xlu0 %3544
      %3546 = vrot.lane.b32.xlu0 %v864, 15
      %v3547 = vpop.permute.xlu0 %3546
      %3548 = vrot.lane.b32.xlu0 %v865, 15
      %v3549 = vpop.permute.xlu0 %3548
      %3550 = vrot.lane.b32.xlu0 %v866, 15
      %v3551 = vpop.permute.xlu0 %3550
      %3552 = vrot.lane.b32.xlu0 %v867, 15
      %v3553 = vpop.permute.xlu0 %3552
      %3554 = vrot.lane.b32.xlu0 %v868, 15
      %v3555 = vpop.permute.xlu0 %3554
      %3556 = vrot.lane.b32.xlu0 %v869, 15
      %v3557 = vpop.permute.xlu0 %3556
      %3558 = vrot.lane.b32.xlu0 %v870, 15
      %v3559 = vpop.permute.xlu0 %3558
      %3560 = vrot.lane.b32.xlu0 %v871, 15
      %v3561 = vpop.permute.xlu0 %3560
      %3562 = vrot.lane.b32.xlu0 %v872, 15
      %v3563 = vpop.permute.xlu0 %3562
      %3564 = vrot.lane.b32.xlu0 %v873, 15
      %v3565 = vpop.permute.xlu0 %3564
      %3566 = vrot.lane.b32.xlu0 %v874, 15
      %v3567 = vpop.permute.xlu0 %3566
      %3568 = vrot.lane.b32.xlu0 %v875, 15
      %v3569 = vpop.permute.xlu0 %3568
      %3570 = vrot.lane.b32.xlu0 %v876, 15
      %v3571 = vpop.permute.xlu0 %3570
      %3572 = vrot.lane.b32.xlu0 %v877, 15
      %v3573 = vpop.permute.xlu0 %3572
      %3574 = vrot.lane.b32.xlu0 %v878, 15
      %v3575 = vpop.permute.xlu0 %3574
      %3576 = vrot.lane.b32.xlu0 %v879, 15
      %v3577 = vpop.permute.xlu0 %3576
      %3578 = vrot.lane.b32.xlu0 %v880, 15
      %v3579 = vpop.permute.xlu0 %3578
      %3580 = vrot.lane.b32.xlu0 %v881, 15
      %v3581 = vpop.permute.xlu0 %3580
      %3582 = vrot.lane.b32.xlu0 %v882, 15
      %v3583 = vpop.permute.xlu0 %3582
      %3584 = vrot.lane.b32.xlu0 %v883, 15
      %v3585 = vpop.permute.xlu0 %3584
      %3586 = vrot.lane.b32.xlu0 %v884, 15
      %v3587 = vpop.permute.xlu0 %3586
      %3588 = vrot.lane.b32.xlu0 %v885, 15
      %v3589 = vpop.permute.xlu0 %3588
      %3590 = vrot.lane.b32.xlu0 %v886, 15
      %v3591 = vpop.permute.xlu0 %3590
      %3592 = vrot.lane.b32.xlu0 %v887, 15
      %v3593 = vpop.permute.xlu0 %3592
      %3594 = vrot.lane.b32.xlu0 %v888, 15
      %v3595 = vpop.permute.xlu0 %3594
      %3596 = vrot.lane.b32.xlu0 %v889, 15
      %v3597 = vpop.permute.xlu0 %3596
      %3598 = vrot.lane.b32.xlu0 %v890, 15
      %v3599 = vpop.permute.xlu0 %3598
      %3600 = vrot.lane.b32.xlu0 %v891, 15
      %v3601 = vpop.permute.xlu0 %3600
      %3602 = vrot.lane.b32.xlu0 %v892, 15
      %v3603 = vpop.permute.xlu0 %3602
      %3604 = vrot.lane.b32.xlu0 %v893, 15
      %v3605 = vpop.permute.xlu0 %3604
      %3606 = vrot.lane.b32.xlu0 %v894, 15
      %v3607 = vpop.permute.xlu0 %3606
      %3608 = vrot.lane.b32.xlu0 %v895, 15
      %v3609 = vpop.permute.xlu0 %3608
      %3610 = vrot.lane.b32.xlu0 %v896, 15
      %v3611 = vpop.permute.xlu0 %3610
      %3612 = vrot.lane.b32.xlu0 %v897, 15
      %v3613 = vpop.permute.xlu0 %3612
      %3614 = vrot.lane.b32.xlu0 %v898, 15
      %v3615 = vpop.permute.xlu0 %3614
      %3616 = vrot.lane.b32.xlu0 %v899, 15
      %v3617 = vpop.permute.xlu0 %3616
      %3618 = vrot.lane.b32.xlu0 %v900, 15
      %v3619 = vpop.permute.xlu0 %3618
      %3620 = vrot.lane.b32.xlu0 %v901, 15
      %v3621 = vpop.permute.xlu0 %3620
      %3622 = vrot.lane.b32.xlu0 %v902, 15
      %v3623 = vpop.permute.xlu0 %3622
      %3624 = vrot.lane.b32.xlu0 %v903, 15
      %v3625 = vpop.permute.xlu0 %3624
      %3626 = vrot.lane.b32.xlu0 %v904, 15
      %v3627 = vpop.permute.xlu0 %3626
      %3628 = vrot.lane.b32.xlu0 %v905, 15
      %v3629 = vpop.permute.xlu0 %3628
      %3630 = vrot.lane.b32.xlu0 %v906, 15
      %v3631 = vpop.permute.xlu0 %3630
      %3632 = vrot.lane.b32.xlu0 %v907, 15
      %v3633 = vpop.permute.xlu0 %3632
      %3634 = vrot.lane.b32.xlu0 %v908, 15
      %v3635 = vpop.permute.xlu0 %3634
      %3636 = vrot.lane.b32.xlu0 %v909, 15
      %v3637 = vpop.permute.xlu0 %3636
      %3778 = vrot.lane.b32.xlu0 %v778, 18
      %v3779 = vpop.permute.xlu0 %3778
      %3780 = vrot.lane.b32.xlu0 %v779, 18
      %v3781 = vpop.permute.xlu0 %3780
      %3782 = vrot.lane.b32.xlu0 %v780, 18
      %v3783 = vpop.permute.xlu0 %3782
      %3784 = vrot.lane.b32.xlu0 %v781, 18
      %v3785 = vpop.permute.xlu0 %3784
      %3786 = vrot.lane.b32.xlu0 %v782, 18
      %v3787 = vpop.permute.xlu0 %3786
      %3788 = vrot.lane.b32.xlu0 %v783, 18
      %v3789 = vpop.permute.xlu0 %3788
      %3790 = vrot.lane.b32.xlu0 %v784, 18
      %v3791 = vpop.permute.xlu0 %3790
      %3792 = vrot.lane.b32.xlu0 %v785, 18
      %v3793 = vpop.permute.xlu0 %3792
      %3794 = vrot.lane.b32.xlu0 %v786, 18
      %v3795 = vpop.permute.xlu0 %3794
      %3796 = vrot.lane.b32.xlu0 %v787, 18
      %v3797 = vpop.permute.xlu0 %3796
      %3798 = vrot.lane.b32.xlu0 %v788, 18
      %v3799 = vpop.permute.xlu0 %3798
      %3800 = vrot.lane.b32.xlu0 %v789, 18
      %v3801 = vpop.permute.xlu0 %3800
      %3802 = vrot.lane.b32.xlu0 %v790, 18
      %v3803 = vpop.permute.xlu0 %3802
      %3804 = vrot.lane.b32.xlu0 %v791, 18
      %v3805 = vpop.permute.xlu0 %3804
      %3806 = vrot.lane.b32.xlu0 %v792, 18
      %v3807 = vpop.permute.xlu0 %3806
      %3808 = vrot.lane.b32.xlu0 %v793, 18
      %v3809 = vpop.permute.xlu0 %3808
      %3810 = vrot.lane.b32.xlu0 %v794, 18
      %v3811 = vpop.permute.xlu0 %3810
      %3812 = vrot.lane.b32.xlu0 %v795, 18
      %v3813 = vpop.permute.xlu0 %3812
      %3814 = vrot.lane.b32.xlu0 %v796, 18
      %v3815 = vpop.permute.xlu0 %3814
      %3816 = vrot.lane.b32.xlu0 %v797, 18
      %v3817 = vpop.permute.xlu0 %3816
      %3818 = vrot.lane.b32.xlu0 %v798, 18
      %v3819 = vpop.permute.xlu0 %3818
      %3820 = vrot.lane.b32.xlu0 %v799, 18
      %v3821 = vpop.permute.xlu0 %3820
      %3822 = vrot.lane.b32.xlu0 %v800, 18
      %v3823 = vpop.permute.xlu0 %3822
      %3824 = vrot.lane.b32.xlu0 %v801, 18
      %v3825 = vpop.permute.xlu0 %3824
      %3826 = vrot.lane.b32.xlu0 %v802, 18
      %v3827 = vpop.permute.xlu0 %3826
      %3828 = vrot.lane.b32.xlu0 %v803, 18
      %v3829 = vpop.permute.xlu0 %3828
      %3830 = vrot.lane.b32.xlu0 %v804, 18
      %v3831 = vpop.permute.xlu0 %3830
      %3832 = vrot.lane.b32.xlu0 %v805, 18
      %v3833 = vpop.permute.xlu0 %3832
      %3834 = vrot.lane.b32.xlu0 %v806, 18
      %v3835 = vpop.permute.xlu0 %3834
      %3836 = vrot.lane.b32.xlu0 %v807, 18
      %v3837 = vpop.permute.xlu0 %3836
      %3838 = vrot.lane.b32.xlu0 %v808, 18
      %v3839 = vpop.permute.xlu0 %3838
      %3840 = vrot.lane.b32.xlu0 %v809, 18
      %v3841 = vpop.permute.xlu0 %3840
      %3842 = vrot.lane.b32.xlu0 %v810, 18
      %v3843 = vpop.permute.xlu0 %3842
      %3844 = vrot.lane.b32.xlu0 %v811, 18
      %v3845 = vpop.permute.xlu0 %3844
      %3846 = vrot.lane.b32.xlu0 %v812, 18
      %v3847 = vpop.permute.xlu0 %3846
      %3848 = vrot.lane.b32.xlu0 %v813, 18
      %v3849 = vpop.permute.xlu0 %3848
      %3850 = vrot.lane.b32.xlu0 %v814, 18
      %v3851 = vpop.permute.xlu0 %3850
      %3852 = vrot.lane.b32.xlu0 %v815, 18
      %v3853 = vpop.permute.xlu0 %3852
      %3854 = vrot.lane.b32.xlu0 %v816, 18
      %v3855 = vpop.permute.xlu0 %3854
      %3856 = vrot.lane.b32.xlu0 %v817, 18
      %v3857 = vpop.permute.xlu0 %3856
      %3858 = vrot.lane.b32.xlu0 %v818, 18
      %v3859 = vpop.permute.xlu0 %3858
      %3860 = vrot.lane.b32.xlu0 %v819, 18
      %v3861 = vpop.permute.xlu0 %3860
      %3862 = vrot.lane.b32.xlu0 %v820, 18
      %v3863 = vpop.permute.xlu0 %3862
      %3864 = vrot.lane.b32.xlu0 %v821, 18
      %v3865 = vpop.permute.xlu0 %3864
      %3866 = vrot.lane.b32.xlu0 %v822, 18
      %v3867 = vpop.permute.xlu0 %3866
      %3868 = vrot.lane.b32.xlu0 %v823, 18
      %v3869 = vpop.permute.xlu0 %3868
      %3870 = vrot.lane.b32.xlu0 %v824, 18
      %v3871 = vpop.permute.xlu0 %3870
      %3872 = vrot.lane.b32.xlu0 %v825, 18
      %v3873 = vpop.permute.xlu0 %3872
      %3874 = vrot.lane.b32.xlu0 %v826, 18
      %v3875 = vpop.permute.xlu0 %3874
      %3876 = vrot.lane.b32.xlu0 %v827, 18
      %v3877 = vpop.permute.xlu0 %3876
      %3878 = vrot.lane.b32.xlu0 %v828, 18
      %v3879 = vpop.permute.xlu0 %3878
      %3880 = vrot.lane.b32.xlu0 %v829, 18
      %v3881 = vpop.permute.xlu0 %3880
      %3882 = vrot.lane.b32.xlu0 %v830, 18
      %v3883 = vpop.permute.xlu0 %3882
      %3884 = vrot.lane.b32.xlu0 %v831, 18
      %v3885 = vpop.permute.xlu0 %3884
      %3886 = vrot.lane.b32.xlu0 %v832, 18
      %v3887 = vpop.permute.xlu0 %3886
      %3888 = vrot.lane.b32.xlu0 %v833, 18
      %v3889 = vpop.permute.xlu0 %3888
      %3890 = vrot.lane.b32.xlu0 %v834, 18
      %v3891 = vpop.permute.xlu0 %3890
      %3892 = vrot.lane.b32.xlu0 %v835, 18
      %v3893 = vpop.permute.xlu0 %3892
      %3894 = vrot.lane.b32.xlu0 %v836, 18
      %v3895 = vpop.permute.xlu0 %3894
      %3896 = vrot.lane.b32.xlu0 %v837, 18
      %v3897 = vpop.permute.xlu0 %3896
      %3898 = vrot.lane.b32.xlu0 %v838, 18
      %v3899 = vpop.permute.xlu0 %3898
      %3900 = vrot.lane.b32.xlu0 %v839, 18
      %v3901 = vpop.permute.xlu0 %3900
      %3902 = vrot.lane.b32.xlu0 %v840, 18
      %v3903 = vpop.permute.xlu0 %3902
      %3904 = vrot.lane.b32.xlu0 %v841, 18
      %v3905 = vpop.permute.xlu0 %3904
      %3906 = vrot.lane.b32.xlu0 %v842, 18
      %v3907 = vpop.permute.xlu0 %3906
      %3908 = vrot.lane.b32.xlu0 %v843, 18
      %v3909 = vpop.permute.xlu0 %3908
      %3910 = vrot.lane.b32.xlu0 %v844, 18
      %v3911 = vpop.permute.xlu0 %3910
      %3912 = vrot.lane.b32.xlu0 %v845, 18
      %v3913 = vpop.permute.xlu0 %3912
      %3914 = vrot.lane.b32.xlu0 %v846, 18
      %v3915 = vpop.permute.xlu0 %3914
      %3916 = vrot.lane.b32.xlu0 %v847, 18
      %v3917 = vpop.permute.xlu0 %3916
      %3918 = vrot.lane.b32.xlu0 %v848, 18
      %v3919 = vpop.permute.xlu0 %3918
      %3920 = vrot.lane.b32.xlu0 %v849, 18
      %v3921 = vpop.permute.xlu0 %3920
      %3922 = vrot.lane.b32.xlu0 %v850, 18
      %v3923 = vpop.permute.xlu0 %3922
      %3924 = vrot.lane.b32.xlu0 %v851, 18
      %v3925 = vpop.permute.xlu0 %3924
      %3926 = vrot.lane.b32.xlu0 %v852, 18
      %v3927 = vpop.permute.xlu0 %3926
      %3928 = vrot.lane.b32.xlu0 %v853, 18
      %v3929 = vpop.permute.xlu0 %3928
      %3930 = vrot.lane.b32.xlu0 %v854, 18
      %v3931 = vpop.permute.xlu0 %3930
      %3932 = vrot.lane.b32.xlu0 %v855, 18
      %v3933 = vpop.permute.xlu0 %3932
      %3934 = vrot.lane.b32.xlu0 %v856, 18
      %v3935 = vpop.permute.xlu0 %3934
      %3936 = vrot.lane.b32.xlu0 %v857, 18
      %v3937 = vpop.permute.xlu0 %3936
      %3938 = vrot.lane.b32.xlu0 %v858, 18
      %v3939 = vpop.permute.xlu0 %3938
      %3940 = vrot.lane.b32.xlu0 %v859, 18
      %v3941 = vpop.permute.xlu0 %3940
      %3942 = vrot.lane.b32.xlu0 %v860, 18
      %v3943 = vpop.permute.xlu0 %3942
      %3944 = vrot.lane.b32.xlu0 %v861, 18
      %v3945 = vpop.permute.xlu0 %3944
      %3946 = vrot.lane.b32.xlu0 %v862, 18
      %v3947 = vpop.permute.xlu0 %3946
      %3948 = vrot.lane.b32.xlu0 %v863, 18
      %v3949 = vpop.permute.xlu0 %3948
      %3950 = vrot.lane.b32.xlu0 %v864, 18
      %v3951 = vpop.permute.xlu0 %3950
      %3952 = vrot.lane.b32.xlu0 %v865, 18
      %v3953 = vpop.permute.xlu0 %3952
      %3954 = vrot.lane.b32.xlu0 %v866, 18
      %v3955 = vpop.permute.xlu0 %3954
      %3956 = vrot.lane.b32.xlu0 %v867, 18
      %v3957 = vpop.permute.xlu0 %3956
      %3958 = vrot.lane.b32.xlu0 %v868, 18
      %v3959 = vpop.permute.xlu0 %3958
      %3960 = vrot.lane.b32.xlu0 %v869, 18
      %v3961 = vpop.permute.xlu0 %3960
      %3962 = vrot.lane.b32.xlu0 %v870, 18
      %v3963 = vpop.permute.xlu0 %3962
      %3964 = vrot.lane.b32.xlu0 %v871, 18
      %v3965 = vpop.permute.xlu0 %3964
      %3966 = vrot.lane.b32.xlu0 %v872, 18
      %v3967 = vpop.permute.xlu0 %3966
      %3968 = vrot.lane.b32.xlu0 %v873, 18
      %v3969 = vpop.permute.xlu0 %3968
      %3970 = vrot.lane.b32.xlu0 %v874, 18
      %v3971 = vpop.permute.xlu0 %3970
      %3972 = vrot.lane.b32.xlu0 %v875, 18
      %v3973 = vpop.permute.xlu0 %3972
      %3974 = vrot.lane.b32.xlu0 %v876, 18
      %v3975 = vpop.permute.xlu0 %3974
      %3976 = vrot.lane.b32.xlu0 %v877, 18
      %v3977 = vpop.permute.xlu0 %3976
      %3978 = vrot.lane.b32.xlu0 %v878, 18
      %v3979 = vpop.permute.xlu0 %3978
      %3980 = vrot.lane.b32.xlu0 %v879, 18
      %v3981 = vpop.permute.xlu0 %3980
      %3982 = vrot.lane.b32.xlu0 %v880, 18
      %v3983 = vpop.permute.xlu0 %3982
      %3984 = vrot.lane.b32.xlu0 %v881, 18
      %v3985 = vpop.permute.xlu0 %3984
      %3986 = vrot.lane.b32.xlu0 %v882, 18
      %v3987 = vpop.permute.xlu0 %3986
      %3988 = vrot.lane.b32.xlu0 %v883, 18
      %v3989 = vpop.permute.xlu0 %3988
      %3990 = vrot.lane.b32.xlu0 %v884, 18
      %v3991 = vpop.permute.xlu0 %3990
      %3992 = vrot.lane.b32.xlu0 %v885, 18
      %v3993 = vpop.permute.xlu0 %3992
      %3994 = vrot.lane.b32.xlu0 %v886, 18
      %v3995 = vpop.permute.xlu0 %3994
      %3996 = vrot.lane.b32.xlu0 %v887, 18
      %v3997 = vpop.permute.xlu0 %3996
      %3998 = vrot.lane.b32.xlu0 %v888, 18
      %v3999 = vpop.permute.xlu0 %3998
      %4000 = vrot.lane.b32.xlu0 %v889, 18
      %v4001 = vpop.permute.xlu0 %4000
      %4002 = vrot.lane.b32.xlu0 %v890, 18
      %v4003 = vpop.permute.xlu0 %4002
      %4004 = vrot.lane.b32.xlu0 %v891, 18
      %v4005 = vpop.permute.xlu0 %4004
      %4006 = vrot.lane.b32.xlu0 %v892, 18
      %v4007 = vpop.permute.xlu0 %4006
      %4008 = vrot.lane.b32.xlu0 %v893, 18
      %v4009 = vpop.permute.xlu0 %4008
      %4010 = vrot.lane.b32.xlu0 %v894, 18
      %v4011 = vpop.permute.xlu0 %4010
      %4012 = vrot.lane.b32.xlu0 %v895, 18
      %v4013 = vpop.permute.xlu0 %4012
      %4014 = vrot.lane.b32.xlu0 %v896, 18
      %v4015 = vpop.permute.xlu0 %4014
      %4016 = vrot.lane.b32.xlu0 %v897, 18
      %v4017 = vpop.permute.xlu0 %4016
      %4018 = vrot.lane.b32.xlu0 %v898, 18
      %v4019 = vpop.permute.xlu0 %4018
      %4020 = vrot.lane.b32.xlu0 %v899, 18
      %v4021 = vpop.permute.xlu0 %4020
      %4022 = vrot.lane.b32.xlu0 %v900, 18
      %v4023 = vpop.permute.xlu0 %4022
      %4024 = vrot.lane.b32.xlu0 %v901, 18
      %v4025 = vpop.permute.xlu0 %4024
      %4026 = vrot.lane.b32.xlu0 %v902, 18
      %v4027 = vpop.permute.xlu0 %4026
      %4028 = vrot.lane.b32.xlu0 %v903, 18
      %v4029 = vpop.permute.xlu0 %4028
      %4030 = vrot.lane.b32.xlu0 %v904, 18
      %v4031 = vpop.permute.xlu0 %4030
      %4032 = vrot.lane.b32.xlu0 %v905, 18
      %v4033 = vpop.permute.xlu0 %4032
      %4034 = vrot.lane.b32.xlu0 %v906, 18
      %v4035 = vpop.permute.xlu0 %4034
      %4036 = vrot.lane.b32.xlu0 %v907, 18
      %v4037 = vpop.permute.xlu0 %4036
      %4038 = vrot.lane.b32.xlu0 %v908, 18
      %v4039 = vpop.permute.xlu0 %4038
      %4040 = vrot.lane.b32.xlu0 %v909, 18
      %v4041 = vpop.permute.xlu0 %4040
      %4042 = vrot.lane.b32.xlu0 %v910, 18
      %v4043 = vpop.permute.xlu0 %4042
      %4044 = vrot.lane.b32.xlu0 %v911, 18
      %v4045 = vpop.permute.xlu0 %4044
      %4046 = vrot.lane.b32.xlu0 %v912, 18
      %v4047 = vpop.permute.xlu0 %4046
      %4048 = vrot.lane.b32.xlu0 %v913, 18
      %v4049 = vpop.permute.xlu0 %4048
      %4322 = vrot.lane.b32.xlu0 %v914, 21
      %v4323 = vpop.permute.xlu0 %4322
      %4324 = vrot.lane.b32.xlu0 %v915, 21
      %v4325 = vpop.permute.xlu0 %4324
      %4326 = vrot.lane.b32.xlu0 %v916, 21
      %v4327 = vpop.permute.xlu0 %4326
      %4328 = vrot.lane.b32.xlu0 %v917, 21
      %v4329 = vpop.permute.xlu0 %4328
      %4330 = vrot.lane.b32.xlu0 %v918, 21
      %v4331 = vpop.permute.xlu0 %4330
      %4332 = vrot.lane.b32.xlu0 %v919, 21
      %v4333 = vpop.permute.xlu0 %4332
      %4334 = vrot.lane.b32.xlu0 %v920, 21
      %v4335 = vpop.permute.xlu0 %4334
      %4336 = vrot.lane.b32.xlu0 %v921, 21
      %v4337 = vpop.permute.xlu0 %4336
      %4338 = vrot.lane.b32.xlu0 %v922, 21
      %v4339 = vpop.permute.xlu0 %4338
      %4340 = vrot.lane.b32.xlu0 %v923, 21
      %v4341 = vpop.permute.xlu0 %4340
      %4342 = vrot.lane.b32.xlu0 %v924, 21
      %v4343 = vpop.permute.xlu0 %4342
      %4344 = vrot.lane.b32.xlu0 %v925, 21
      %v4345 = vpop.permute.xlu0 %4344
      %4346 = vrot.lane.b32.xlu0 %v926, 21
      %v4347 = vpop.permute.xlu0 %4346
      %4348 = vrot.lane.b32.xlu0 %v927, 21
      %v4349 = vpop.permute.xlu0 %4348
      %4350 = vrot.lane.b32.xlu0 %v928, 21
      %v4351 = vpop.permute.xlu0 %4350
      %4352 = vrot.lane.b32.xlu0 %v929, 21
      %v4353 = vpop.permute.xlu0 %4352
      %4354 = vrot.lane.b32.xlu0 %v930, 21
      %v4355 = vpop.permute.xlu0 %4354
      %4356 = vrot.lane.b32.xlu0 %v931, 21
      %v4357 = vpop.permute.xlu0 %4356
      %4358 = vrot.lane.b32.xlu0 %v932, 21
      %v4359 = vpop.permute.xlu0 %4358
      %4360 = vrot.lane.b32.xlu0 %v933, 21
      %v4361 = vpop.permute.xlu0 %4360
      %4362 = vrot.lane.b32.xlu0 %v934, 21
      %v4363 = vpop.permute.xlu0 %4362
      %4364 = vrot.lane.b32.xlu0 %v935, 21
      %v4365 = vpop.permute.xlu0 %4364
      %4366 = vrot.lane.b32.xlu0 %v936, 21
      %v4367 = vpop.permute.xlu0 %4366
      %4368 = vrot.lane.b32.xlu0 %v937, 21
      %v4369 = vpop.permute.xlu0 %4368
      %4370 = vrot.lane.b32.xlu0 %v938, 21
      %v4371 = vpop.permute.xlu0 %4370
      %4372 = vrot.lane.b32.xlu0 %v939, 21
      %v4373 = vpop.permute.xlu0 %4372
      %4374 = vrot.lane.b32.xlu0 %v940, 21
      %v4375 = vpop.permute.xlu0 %4374
      %4376 = vrot.lane.b32.xlu0 %v941, 21
      %v4377 = vpop.permute.xlu0 %4376
      %4378 = vrot.lane.b32.xlu0 %v942, 21
      %v4379 = vpop.permute.xlu0 %4378
      %4380 = vrot.lane.b32.xlu0 %v943, 21
      %v4381 = vpop.permute.xlu0 %4380
      %4382 = vrot.lane.b32.xlu0 %v944, 21
      %v4383 = vpop.permute.xlu0 %4382
      %4384 = vrot.lane.b32.xlu0 %v945, 21
      %v4385 = vpop.permute.xlu0 %4384
      %4386 = vrot.lane.b32.xlu0 %v946, 21
      %v4387 = vpop.permute.xlu0 %4386
      %4388 = vrot.lane.b32.xlu0 %v947, 21
      %v4389 = vpop.permute.xlu0 %4388
      %4390 = vrot.lane.b32.xlu0 %v948, 21
      %v4391 = vpop.permute.xlu0 %4390
      %4392 = vrot.lane.b32.xlu0 %v949, 21
      %v4393 = vpop.permute.xlu0 %4392
      %4394 = vrot.lane.b32.xlu0 %v950, 21
      %v4395 = vpop.permute.xlu0 %4394
      %4396 = vrot.lane.b32.xlu0 %v951, 21
      %v4397 = vpop.permute.xlu0 %4396
      %4398 = vrot.lane.b32.xlu0 %v952, 21
      %v4399 = vpop.permute.xlu0 %4398
      %4400 = vrot.lane.b32.xlu0 %v953, 21
      %v4401 = vpop.permute.xlu0 %4400
      %4402 = vrot.lane.b32.xlu0 %v954, 21
      %v4403 = vpop.permute.xlu0 %4402
      %4404 = vrot.lane.b32.xlu0 %v955, 21
      %v4405 = vpop.permute.xlu0 %4404
      %4406 = vrot.lane.b32.xlu0 %v956, 21
      %v4407 = vpop.permute.xlu0 %4406
      %4408 = vrot.lane.b32.xlu0 %v957, 21
      %v4409 = vpop.permute.xlu0 %4408
      %4410 = vrot.lane.b32.xlu0 %v958, 21
      %v4411 = vpop.permute.xlu0 %4410
      %4412 = vrot.lane.b32.xlu0 %v959, 21
      %v4413 = vpop.permute.xlu0 %4412
      %4414 = vrot.lane.b32.xlu0 %v960, 21
      %v4415 = vpop.permute.xlu0 %4414
      %4416 = vrot.lane.b32.xlu0 %v961, 21
      %v4417 = vpop.permute.xlu0 %4416
      %4418 = vrot.lane.b32.xlu0 %v962, 21
      %v4419 = vpop.permute.xlu0 %4418
      %4420 = vrot.lane.b32.xlu0 %v963, 21
      %v4421 = vpop.permute.xlu0 %4420
      %4422 = vrot.lane.b32.xlu0 %v964, 21
      %v4423 = vpop.permute.xlu0 %4422
      %4424 = vrot.lane.b32.xlu0 %v965, 21
      %v4425 = vpop.permute.xlu0 %4424
      %4426 = vrot.lane.b32.xlu0 %v966, 21
      %v4427 = vpop.permute.xlu0 %4426
      %4428 = vrot.lane.b32.xlu0 %v967, 21
      %v4429 = vpop.permute.xlu0 %4428
      %4430 = vrot.lane.b32.xlu0 %v968, 21
      %v4431 = vpop.permute.xlu0 %4430
      %4432 = vrot.lane.b32.xlu0 %v969, 21
      %v4433 = vpop.permute.xlu0 %4432
      %4434 = vrot.lane.b32.xlu0 %v970, 21
      %v4435 = vpop.permute.xlu0 %4434
      %4436 = vrot.lane.b32.xlu0 %v971, 21
      %v4437 = vpop.permute.xlu0 %4436
      %4438 = vrot.lane.b32.xlu0 %v972, 21
      %v4439 = vpop.permute.xlu0 %4438
      %4440 = vrot.lane.b32.xlu0 %v973, 21
      %v4441 = vpop.permute.xlu0 %4440
      %4442 = vrot.lane.b32.xlu0 %v974, 21
      %v4443 = vpop.permute.xlu0 %4442
      %4444 = vrot.lane.b32.xlu0 %v975, 21
      %v4445 = vpop.permute.xlu0 %4444
      %4446 = vrot.lane.b32.xlu0 %v976, 21
      %v4447 = vpop.permute.xlu0 %4446
      %4448 = vrot.lane.b32.xlu0 %v977, 21
      %v4449 = vpop.permute.xlu0 %4448
      %4450 = vrot.lane.b32.xlu0 %v978, 21
      %v4451 = vpop.permute.xlu0 %4450
      %4452 = vrot.lane.b32.xlu0 %v979, 21
      %v4453 = vpop.permute.xlu0 %4452
      %4454 = vrot.lane.b32.xlu0 %v980, 21
      %v4455 = vpop.permute.xlu0 %4454
      %4456 = vrot.lane.b32.xlu0 %v981, 21
      %v4457 = vpop.permute.xlu0 %4456
      %4458 = vrot.lane.b32.xlu0 %v982, 21
      %v4459 = vpop.permute.xlu0 %4458
      %4460 = vrot.lane.b32.xlu0 %v983, 21
      %v4461 = vpop.permute.xlu0 %4460
      %4462 = vrot.lane.b32.xlu0 %v984, 21
      %v4463 = vpop.permute.xlu0 %4462
      %4464 = vrot.lane.b32.xlu0 %v985, 21
      %v4465 = vpop.permute.xlu0 %4464
      %4466 = vrot.lane.b32.xlu0 %v986, 21
      %v4467 = vpop.permute.xlu0 %4466
      %4468 = vrot.lane.b32.xlu0 %v987, 21
      %v4469 = vpop.permute.xlu0 %4468
      %4470 = vrot.lane.b32.xlu0 %v988, 21
      %v4471 = vpop.permute.xlu0 %4470
      %4472 = vrot.lane.b32.xlu0 %v989, 21
      %v4473 = vpop.permute.xlu0 %4472
      %4474 = vrot.lane.b32.xlu0 %v990, 21
      %v4475 = vpop.permute.xlu0 %4474
      %4476 = vrot.lane.b32.xlu0 %v991, 21
      %v4477 = vpop.permute.xlu0 %4476
      %4478 = vrot.lane.b32.xlu0 %v992, 21
      %v4479 = vpop.permute.xlu0 %4478
      %4480 = vrot.lane.b32.xlu0 %v993, 21
      %v4481 = vpop.permute.xlu0 %4480
      %4482 = vrot.lane.b32.xlu0 %v994, 21
      %v4483 = vpop.permute.xlu0 %4482
      %4484 = vrot.lane.b32.xlu0 %v995, 21
      %v4485 = vpop.permute.xlu0 %4484
      %4486 = vrot.lane.b32.xlu0 %v996, 21
      %v4487 = vpop.permute.xlu0 %4486
      %4488 = vrot.lane.b32.xlu0 %v997, 21
      %v4489 = vpop.permute.xlu0 %4488
      %4490 = vrot.lane.b32.xlu0 %v998, 21
      %v4491 = vpop.permute.xlu0 %4490
      %4492 = vrot.lane.b32.xlu0 %v999, 21
      %v4493 = vpop.permute.xlu0 %4492
      %4494 = vrot.lane.b32.xlu0 %v1000, 21
      %v4495 = vpop.permute.xlu0 %4494
      %4496 = vrot.lane.b32.xlu0 %v1001, 21
      %v4497 = vpop.permute.xlu0 %4496
      %4498 = vrot.lane.b32.xlu0 %v1002, 21
      %v4499 = vpop.permute.xlu0 %4498
      %4500 = vrot.lane.b32.xlu0 %v1003, 21
      %v4501 = vpop.permute.xlu0 %4500
      %4502 = vrot.lane.b32.xlu0 %v1004, 21
      %v4503 = vpop.permute.xlu0 %4502
      %4504 = vrot.lane.b32.xlu0 %v1005, 21
      %v4505 = vpop.permute.xlu0 %4504
      %4506 = vrot.lane.b32.xlu0 %v1006, 21
      %v4507 = vpop.permute.xlu0 %4506
      %4508 = vrot.lane.b32.xlu0 %v1007, 21
      %v4509 = vpop.permute.xlu0 %4508
      %4510 = vrot.lane.b32.xlu0 %v1008, 21
      %v4511 = vpop.permute.xlu0 %4510
      %4512 = vrot.lane.b32.xlu0 %v1009, 21
      %v4513 = vpop.permute.xlu0 %4512
      %4514 = vrot.lane.b32.xlu0 %v1010, 21
      %v4515 = vpop.permute.xlu0 %4514
      %4516 = vrot.lane.b32.xlu0 %v1011, 21
      %v4517 = vpop.permute.xlu0 %4516
      %4518 = vrot.lane.b32.xlu0 %v1012, 21
      %v4519 = vpop.permute.xlu0 %4518
      %4520 = vrot.lane.b32.xlu0 %v1013, 21
      %v4521 = vpop.permute.xlu0 %4520
      %4522 = vrot.lane.b32.xlu0 %v1014, 21
      %v4523 = vpop.permute.xlu0 %4522
      %4524 = vrot.lane.b32.xlu0 %v1015, 21
      %v4525 = vpop.permute.xlu0 %4524
      %4526 = vrot.lane.b32.xlu0 %v1016, 21
      %v4527 = vpop.permute.xlu0 %4526
      %4528 = vrot.lane.b32.xlu0 %v1017, 21
      %v4529 = vpop.permute.xlu0 %4528
      %4530 = vrot.lane.b32.xlu0 %v1018, 21
      %v4531 = vpop.permute.xlu0 %4530
      %4532 = vrot.lane.b32.xlu0 %v1019, 21
      %v4533 = vpop.permute.xlu0 %4532
      %4534 = vrot.lane.b32.xlu0 %v1020, 21
      %v4535 = vpop.permute.xlu0 %4534
      %4536 = vrot.lane.b32.xlu0 %v1021, 21
      %v4537 = vpop.permute.xlu0 %4536
      %4538 = vrot.lane.b32.xlu0 %v1022, 21
      %v4539 = vpop.permute.xlu0 %4538
      %4540 = vrot.lane.b32.xlu0 %v1023, 21
      %v4541 = vpop.permute.xlu0 %4540
      %4542 = vrot.lane.b32.xlu0 %v1024, 21
      %v4543 = vpop.permute.xlu0 %4542
      %4544 = vrot.lane.b32.xlu0 %v1025, 21
      %v4545 = vpop.permute.xlu0 %4544
      %4546 = vrot.lane.b32.xlu0 %v1026, 21
      %v4547 = vpop.permute.xlu0 %4546
      %4548 = vrot.lane.b32.xlu0 %v1027, 21
      %v4549 = vpop.permute.xlu0 %4548
      %4550 = vrot.lane.b32.xlu0 %v1028, 21
      %v4551 = vpop.permute.xlu0 %4550
      %4552 = vrot.lane.b32.xlu0 %v1029, 21
      %v4553 = vpop.permute.xlu0 %4552
      %4554 = vrot.lane.b32.xlu0 %v1030, 21
      %v4555 = vpop.permute.xlu0 %4554
      %4556 = vrot.lane.b32.xlu0 %v1031, 21
      %v4557 = vpop.permute.xlu0 %4556
      %4558 = vrot.lane.b32.xlu0 %v1032, 21
      %v4559 = vpop.permute.xlu0 %4558
      %4560 = vrot.lane.b32.xlu0 %v1033, 21
      %v4561 = vpop.permute.xlu0 %4560
      %4562 = vrot.lane.b32.xlu0 %v1034, 21
      %v4563 = vpop.permute.xlu0 %4562
      %4564 = vrot.lane.b32.xlu0 %v1035, 21
      %v4565 = vpop.permute.xlu0 %4564
      %4566 = vrot.lane.b32.xlu0 %v1036, 21
      %v4567 = vpop.permute.xlu0 %4566
      %4568 = vrot.lane.b32.xlu0 %v1037, 21
      %v4569 = vpop.permute.xlu0 %4568
      %4570 = vrot.lane.b32.xlu0 %v1038, 21
      %v4571 = vpop.permute.xlu0 %4570
      %4572 = vrot.lane.b32.xlu0 %v1039, 21
      %v4573 = vpop.permute.xlu0 %4572
      %4574 = vrot.lane.b32.xlu0 %v1040, 21
      %v4575 = vpop.permute.xlu0 %4574
      %4576 = vrot.lane.b32.xlu0 %v1041, 21
      %v4577 = vpop.permute.xlu0 %4576
      %4578 = vrot.lane.b32.xlu0 %v1042, 21
      %v4579 = vpop.permute.xlu0 %4578
      %4580 = vrot.lane.b32.xlu0 %v1043, 21
      %v4581 = vpop.permute.xlu0 %4580
      %4582 = vrot.lane.b32.xlu0 %v1044, 21
      %v4583 = vpop.permute.xlu0 %4582
      %4584 = vrot.lane.b32.xlu0 %v1045, 21
      %v4585 = vpop.permute.xlu0 %4584
      %4586 = vrot.lane.b32.xlu0 %v1046, 21
      %v4587 = vpop.permute.xlu0 %4586
      %4588 = vrot.lane.b32.xlu0 %v1047, 21
      %v4589 = vpop.permute.xlu0 %4588
      %4590 = vrot.lane.b32.xlu0 %v1048, 21
      %v4591 = vpop.permute.xlu0 %4590
      %4592 = vrot.lane.b32.xlu0 %v1049, 21
      %v4593 = vpop.permute.xlu0 %4592
      %4866 = vrot.lane.b32.xlu0 %v1050, 24
      %v4867 = vpop.permute.xlu0 %4866
      %4868 = vrot.lane.b32.xlu0 %v1051, 24
      %v4869 = vpop.permute.xlu0 %4868
      %4870 = vrot.lane.b32.xlu0 %v1052, 24
      %v4871 = vpop.permute.xlu0 %4870
      %4872 = vrot.lane.b32.xlu0 %v1053, 24
      %v4873 = vpop.permute.xlu0 %4872
      %4874 = vrot.lane.b32.xlu0 %v1054, 24
      %v4875 = vpop.permute.xlu0 %4874
      %4876 = vrot.lane.b32.xlu0 %v1055, 24
      %v4877 = vpop.permute.xlu0 %4876
      %4878 = vrot.lane.b32.xlu0 %v1056, 24
      %v4879 = vpop.permute.xlu0 %4878
      %4880 = vrot.lane.b32.xlu0 %v1057, 24
      %v4881 = vpop.permute.xlu0 %4880
      %4882 = vrot.lane.b32.xlu0 %v1058, 24
      %v4883 = vpop.permute.xlu0 %4882
      %4884 = vrot.lane.b32.xlu0 %v1059, 24
      %v4885 = vpop.permute.xlu0 %4884
      %4886 = vrot.lane.b32.xlu0 %v1060, 24
      %v4887 = vpop.permute.xlu0 %4886
      %4888 = vrot.lane.b32.xlu0 %v1061, 24
      %v4889 = vpop.permute.xlu0 %4888
      %4890 = vrot.lane.b32.xlu0 %v1062, 24
      %v4891 = vpop.permute.xlu0 %4890
      %4892 = vrot.lane.b32.xlu0 %v1063, 24
      %v4893 = vpop.permute.xlu0 %4892
      %4894 = vrot.lane.b32.xlu0 %v1064, 24
      %v4895 = vpop.permute.xlu0 %4894
      %4896 = vrot.lane.b32.xlu0 %v1065, 24
      %v4897 = vpop.permute.xlu0 %4896
      %4898 = vrot.lane.b32.xlu0 %v1066, 24
      %v4899 = vpop.permute.xlu0 %4898
      %4900 = vrot.lane.b32.xlu0 %v1067, 24
      %v4901 = vpop.permute.xlu0 %4900
      %4902 = vrot.lane.b32.xlu0 %v1068, 24
      %v4903 = vpop.permute.xlu0 %4902
      %4904 = vrot.lane.b32.xlu0 %v1069, 24
      %v4905 = vpop.permute.xlu0 %4904
      %4906 = vrot.lane.b32.xlu0 %v1070, 24
      %v4907 = vpop.permute.xlu0 %4906
      %4908 = vrot.lane.b32.xlu0 %v1071, 24
      %v4909 = vpop.permute.xlu0 %4908
      %4910 = vrot.lane.b32.xlu0 %v1072, 24
      %v4911 = vpop.permute.xlu0 %4910
      %4912 = vrot.lane.b32.xlu0 %v1073, 24
      %v4913 = vpop.permute.xlu0 %4912
      %4914 = vrot.lane.b32.xlu0 %v1074, 24
      %v4915 = vpop.permute.xlu0 %4914
      %4916 = vrot.lane.b32.xlu0 %v1075, 24
      %v4917 = vpop.permute.xlu0 %4916
      %4918 = vrot.lane.b32.xlu0 %v1076, 24
      %v4919 = vpop.permute.xlu0 %4918
      %4920 = vrot.lane.b32.xlu0 %v1077, 24
      %v4921 = vpop.permute.xlu0 %4920
      %4922 = vrot.lane.b32.xlu0 %v1078, 24
      %v4923 = vpop.permute.xlu0 %4922
      %4924 = vrot.lane.b32.xlu0 %v1079, 24
      %v4925 = vpop.permute.xlu0 %4924
      %4926 = vrot.lane.b32.xlu0 %v1080, 24
      %v4927 = vpop.permute.xlu0 %4926
      %4928 = vrot.lane.b32.xlu0 %v1081, 24
      %v4929 = vpop.permute.xlu0 %4928
      %4930 = vrot.lane.b32.xlu0 %v1082, 24
      %v4931 = vpop.permute.xlu0 %4930
      %4932 = vrot.lane.b32.xlu0 %v1083, 24
      %v4933 = vpop.permute.xlu0 %4932
      %4934 = vrot.lane.b32.xlu0 %v1084, 24
      %v4935 = vpop.permute.xlu0 %4934
      %4936 = vrot.lane.b32.xlu0 %v1085, 24
      %v4937 = vpop.permute.xlu0 %4936
      %4938 = vrot.lane.b32.xlu0 %v1086, 24
      %v4939 = vpop.permute.xlu0 %4938
      %4940 = vrot.lane.b32.xlu0 %v1087, 24
      %v4941 = vpop.permute.xlu0 %4940
      %4942 = vrot.lane.b32.xlu0 %v1088, 24
      %v4943 = vpop.permute.xlu0 %4942
      %4944 = vrot.lane.b32.xlu0 %v1089, 24
      %v4945 = vpop.permute.xlu0 %4944
      %4946 = vrot.lane.b32.xlu0 %v1090, 24
      %v4947 = vpop.permute.xlu0 %4946
      %4948 = vrot.lane.b32.xlu0 %v1091, 24
      %v4949 = vpop.permute.xlu0 %4948
      %4950 = vrot.lane.b32.xlu0 %v1092, 24
      %v4951 = vpop.permute.xlu0 %4950
      %4952 = vrot.lane.b32.xlu0 %v1093, 24
      %v4953 = vpop.permute.xlu0 %4952
      %4954 = vrot.lane.b32.xlu0 %v1094, 24
      %v4955 = vpop.permute.xlu0 %4954
      %4956 = vrot.lane.b32.xlu0 %v1095, 24
      %v4957 = vpop.permute.xlu0 %4956
      %4958 = vrot.lane.b32.xlu0 %v1096, 24
      %v4959 = vpop.permute.xlu0 %4958
      %4960 = vrot.lane.b32.xlu0 %v1097, 24
      %v4961 = vpop.permute.xlu0 %4960
      %4962 = vrot.lane.b32.xlu0 %v1098, 24
      %v4963 = vpop.permute.xlu0 %4962
      %4964 = vrot.lane.b32.xlu0 %v1099, 24
      %v4965 = vpop.permute.xlu0 %4964
      %4966 = vrot.lane.b32.xlu0 %v1100, 24
      %v4967 = vpop.permute.xlu0 %4966
      %4968 = vrot.lane.b32.xlu0 %v1101, 24
      %v4969 = vpop.permute.xlu0 %4968
      %4970 = vrot.lane.b32.xlu0 %v1102, 24
      %v4971 = vpop.permute.xlu0 %4970
      %4972 = vrot.lane.b32.xlu0 %v1103, 24
      %v4973 = vpop.permute.xlu0 %4972
      %4974 = vrot.lane.b32.xlu0 %v1104, 24
      %v4975 = vpop.permute.xlu0 %4974
      %4976 = vrot.lane.b32.xlu0 %v1105, 24
      %v4977 = vpop.permute.xlu0 %4976
      %4978 = vrot.lane.b32.xlu0 %v1106, 24
      %v4979 = vpop.permute.xlu0 %4978
      %4980 = vrot.lane.b32.xlu0 %v1107, 24
      %v4981 = vpop.permute.xlu0 %4980
      %4982 = vrot.lane.b32.xlu0 %v1108, 24
      %v4983 = vpop.permute.xlu0 %4982
      %4984 = vrot.lane.b32.xlu0 %v1109, 24
      %v4985 = vpop.permute.xlu0 %4984
      %4986 = vrot.lane.b32.xlu0 %v1110, 24
      %v4987 = vpop.permute.xlu0 %4986
      %4988 = vrot.lane.b32.xlu0 %v1111, 24
      %v4989 = vpop.permute.xlu0 %4988
      %4990 = vrot.lane.b32.xlu0 %v1112, 24
      %v4991 = vpop.permute.xlu0 %4990
      %4992 = vrot.lane.b32.xlu0 %v1113, 24
      %v4993 = vpop.permute.xlu0 %4992
      %4994 = vrot.lane.b32.xlu0 %v1114, 24
      %v4995 = vpop.permute.xlu0 %4994
      %4996 = vrot.lane.b32.xlu0 %v1115, 24
      %v4997 = vpop.permute.xlu0 %4996
      %4998 = vrot.lane.b32.xlu0 %v1116, 24
      %v4999 = vpop.permute.xlu0 %4998
      %5000 = vrot.lane.b32.xlu0 %v1117, 24
      %v5001 = vpop.permute.xlu0 %5000
      %5002 = vrot.lane.b32.xlu0 %v1118, 24
      %v5003 = vpop.permute.xlu0 %5002
      %5004 = vrot.lane.b32.xlu0 %v1119, 24
      %v5005 = vpop.permute.xlu0 %5004
      %5006 = vrot.lane.b32.xlu0 %v1120, 24
      %v5007 = vpop.permute.xlu0 %5006
      %5008 = vrot.lane.b32.xlu0 %v1121, 24
      %v5009 = vpop.permute.xlu0 %5008
      %5010 = vrot.lane.b32.xlu0 %v1122, 24
      %v5011 = vpop.permute.xlu0 %5010
      %5012 = vrot.lane.b32.xlu0 %v1123, 24
      %v5013 = vpop.permute.xlu0 %5012
      %5014 = vrot.lane.b32.xlu0 %v1124, 24
      %v5015 = vpop.permute.xlu0 %5014
      %5016 = vrot.lane.b32.xlu0 %v1125, 24
      %v5017 = vpop.permute.xlu0 %5016
      %5018 = vrot.lane.b32.xlu0 %v1126, 24
      %v5019 = vpop.permute.xlu0 %5018
      %5020 = vrot.lane.b32.xlu0 %v1127, 24
      %v5021 = vpop.permute.xlu0 %5020
      %5022 = vrot.lane.b32.xlu0 %v1128, 24
      %v5023 = vpop.permute.xlu0 %5022
      %5024 = vrot.lane.b32.xlu0 %v1129, 24
      %v5025 = vpop.permute.xlu0 %5024
      %5026 = vrot.lane.b32.xlu0 %v1130, 24
      %v5027 = vpop.permute.xlu0 %5026
      %5028 = vrot.lane.b32.xlu0 %v1131, 24
      %v5029 = vpop.permute.xlu0 %5028
      %5030 = vrot.lane.b32.xlu0 %v1132, 24
      %v5031 = vpop.permute.xlu0 %5030
      %5032 = vrot.lane.b32.xlu0 %v1133, 24
      %v5033 = vpop.permute.xlu0 %5032
      %5034 = vrot.lane.b32.xlu0 %v1134, 24
      %v5035 = vpop.permute.xlu0 %5034
      %5036 = vrot.lane.b32.xlu0 %v1135, 24
      %v5037 = vpop.permute.xlu0 %5036
      %5038 = vrot.lane.b32.xlu0 %v1136, 24
      %v5039 = vpop.permute.xlu0 %5038
      %5040 = vrot.lane.b32.xlu0 %v1137, 24
      %v5041 = vpop.permute.xlu0 %5040
      %5042 = vrot.lane.b32.xlu0 %v1138, 24
      %v5043 = vpop.permute.xlu0 %5042
      %5044 = vrot.lane.b32.xlu0 %v1139, 24
      %v5045 = vpop.permute.xlu0 %5044
      %5046 = vrot.lane.b32.xlu0 %v1140, 24
      %v5047 = vpop.permute.xlu0 %5046
      %5048 = vrot.lane.b32.xlu0 %v1141, 24
      %v5049 = vpop.permute.xlu0 %5048
      %5050 = vrot.lane.b32.xlu0 %v1142, 24
      %v5051 = vpop.permute.xlu0 %5050
      %5052 = vrot.lane.b32.xlu0 %v1143, 24
      %v5053 = vpop.permute.xlu0 %5052
      %5054 = vrot.lane.b32.xlu0 %v1144, 24
      %v5055 = vpop.permute.xlu0 %5054
      %5056 = vrot.lane.b32.xlu0 %v1145, 24
      %v5057 = vpop.permute.xlu0 %5056
      %5058 = vrot.lane.b32.xlu0 %v1146, 24
      %v5059 = vpop.permute.xlu0 %5058
      %5060 = vrot.lane.b32.xlu0 %v1147, 24
      %v5061 = vpop.permute.xlu0 %5060
      %5062 = vrot.lane.b32.xlu0 %v1148, 24
      %v5063 = vpop.permute.xlu0 %5062
      %5064 = vrot.lane.b32.xlu0 %v1149, 24
      %v5065 = vpop.permute.xlu0 %5064
      %5066 = vrot.lane.b32.xlu0 %v1150, 24
      %v5067 = vpop.permute.xlu0 %5066
      %5068 = vrot.lane.b32.xlu0 %v1151, 24
      %v5069 = vpop.permute.xlu0 %5068
      %5070 = vrot.lane.b32.xlu0 %v1152, 24
      %v5071 = vpop.permute.xlu0 %5070
      %5072 = vrot.lane.b32.xlu0 %v1153, 24
      %v5073 = vpop.permute.xlu0 %5072
      %5074 = vrot.lane.b32.xlu0 %v1154, 24
      %v5075 = vpop.permute.xlu0 %5074
      %5076 = vrot.lane.b32.xlu0 %v1155, 24
      %v5077 = vpop.permute.xlu0 %5076
      %5078 = vrot.lane.b32.xlu0 %v1156, 24
      %v5079 = vpop.permute.xlu0 %5078
      %5080 = vrot.lane.b32.xlu0 %v1157, 24
      %v5081 = vpop.permute.xlu0 %5080
      %5082 = vrot.lane.b32.xlu0 %v1158, 24
      %v5083 = vpop.permute.xlu0 %5082
      %5084 = vrot.lane.b32.xlu0 %v1159, 24
      %v5085 = vpop.permute.xlu0 %5084
      %5086 = vrot.lane.b32.xlu0 %v1160, 24
      %v5087 = vpop.permute.xlu0 %5086
      %5088 = vrot.lane.b32.xlu0 %v1161, 24
      %v5089 = vpop.permute.xlu0 %5088
      %5090 = vrot.lane.b32.xlu0 %v1162, 24
      %v5091 = vpop.permute.xlu0 %5090
      %5092 = vrot.lane.b32.xlu0 %v1163, 24
      %v5093 = vpop.permute.xlu0 %5092
      %5094 = vrot.lane.b32.xlu0 %v1164, 24
      %v5095 = vpop.permute.xlu0 %5094
      %5096 = vrot.lane.b32.xlu0 %v1165, 24
      %v5097 = vpop.permute.xlu0 %5096
      %5098 = vrot.lane.b32.xlu0 %v1166, 24
      %v5099 = vpop.permute.xlu0 %5098
      %5100 = vrot.lane.b32.xlu0 %v1167, 24
      %v5101 = vpop.permute.xlu0 %5100
      %5102 = vrot.lane.b32.xlu0 %v1168, 24
      %v5103 = vpop.permute.xlu0 %5102
      %5104 = vrot.lane.b32.xlu0 %v1169, 24
      %v5105 = vpop.permute.xlu0 %5104
      %5106 = vrot.lane.b32.xlu0 %v1170, 24
      %v5107 = vpop.permute.xlu0 %5106
      %5108 = vrot.lane.b32.xlu0 %v1171, 24
      %v5109 = vpop.permute.xlu0 %5108
      %5110 = vrot.lane.b32.xlu0 %v1172, 24
      %v5111 = vpop.permute.xlu0 %5110
      %5112 = vrot.lane.b32.xlu0 %v1173, 24
      %v5113 = vpop.permute.xlu0 %5112
      %5114 = vrot.lane.b32.xlu0 %v1174, 24
      %v5115 = vpop.permute.xlu0 %5114
      %5116 = vrot.lane.b32.xlu0 %v1175, 24
      %v5117 = vpop.permute.xlu0 %5116
      %5118 = vrot.lane.b32.xlu0 %v1176, 24
      %v5119 = vpop.permute.xlu0 %5118
      %5120 = vrot.lane.b32.xlu0 %v1177, 24
      %v5121 = vpop.permute.xlu0 %5120
      %5122 = vrot.lane.b32.xlu0 %v1178, 24
      %v5123 = vpop.permute.xlu0 %5122
      %5124 = vrot.lane.b32.xlu0 %v1179, 24
      %v5125 = vpop.permute.xlu0 %5124
      %5126 = vrot.lane.b32.xlu0 %v1180, 24
      %v5127 = vpop.permute.xlu0 %5126
      %5128 = vrot.lane.b32.xlu0 %v1181, 24
      %v5129 = vpop.permute.xlu0 %5128
      %5130 = vrot.lane.b32.xlu0 %v1182, 24
      %v5131 = vpop.permute.xlu0 %5130
      %5132 = vrot.lane.b32.xlu0 %v1183, 24
      %v5133 = vpop.permute.xlu0 %5132
      %5134 = vrot.lane.b32.xlu0 %v1184, 24
      %v5135 = vpop.permute.xlu0 %5134
      %5136 = vrot.lane.b32.xlu0 %v1185, 24
      %v5137 = vpop.permute.xlu0 %5136
      %vm5274 = vcmask 23552
      %v5275 = vsel %vm5274, %v226, %v1323
      %v5276 = vsel %vm5274, %v227, %v1325
      %v5277 = vsel %vm5274, %v228, %v1327
      %v5278 = vsel %vm5274, %v229, %v1329
      %v5279 = vsel %vm5274, %v230, %v1331
      %v5280 = vsel %vm5274, %v231, %v1333
      %v5281 = vsel %vm5274, %v232, %v1335
      %v5282 = vsel %vm5274, %v233, %v1337
      %v5283 = vsel %vm5274, %v234, %v1339
      %v5284 = vsel %vm5274, %v235, %v1341
      %v5285 = vsel %vm5274, %v236, %v1343
      %v5286 = vsel %vm5274, %v237, %v1345
      %v5287 = vsel %vm5274, %v238, %v1347
      %v5288 = vsel %vm5274, %v239, %v1349
      %v5289 = vsel %vm5274, %v240, %v1351
      %v5290 = vsel %vm5274, %v241, %v1353
      %v5291 = vsel %vm5274, %v242, %v1355
      %v5292 = vsel %vm5274, %v243, %v1357
      %v5293 = vsel %vm5274, %v244, %v1359
      %v5294 = vsel %vm5274, %v245, %v1361
      %v5295 = vsel %vm5274, %v246, %v1363
      %v5296 = vsel %vm5274, %v247, %v1365
      %v5297 = vsel %vm5274, %v248, %v1367
      %v5298 = vsel %vm5274, %v249, %v1369
      %v5299 = vsel %vm5274, %v250, %v1371
      %v5300 = vsel %vm5274, %v251, %v1373
      %v5301 = vsel %vm5274, %v252, %v1375
      %v5302 = vsel %vm5274, %v253, %v1377
      %v5303 = vsel %vm5274, %v254, %v1379
      %v5304 = vsel %vm5274, %v255, %v1381
      %v5305 = vsel %vm5274, %v256, %v1383
      %v5306 = vsel %vm5274, %v257, %v1385
      %v5307 = vsel %vm5274, %v258, %v1387
      %v5308 = vsel %vm5274, %v259, %v1389
      %v5309 = vsel %vm5274, %v260, %v1391
      %v5310 = vsel %vm5274, %v261, %v1393
      %v5311 = vsel %vm5274, %v262, %v1395
      %v5312 = vsel %vm5274, %v263, %v1397
      %v5313 = vsel %vm5274, %v264, %v1399
      %v5314 = vsel %vm5274, %v265, %v1401
      %v5315 = vsel %vm5274, %v266, %v1403
      %v5316 = vsel %vm5274, %v267, %v1405
      %v5317 = vsel %vm5274, %v268, %v1407
      %v5318 = vsel %vm5274, %v269, %v1409
      %v5319 = vsel %vm5274, %v270, %v1411
      %v5320 = vsel %vm5274, %v271, %v1413
      %v5321 = vsel %vm5274, %v272, %v1415
      %v5322 = vsel %vm5274, %v273, %v1417
      %v5323 = vsel %vm5274, %v274, %v1419
      %v5324 = vsel %vm5274, %v275, %v1421
      %v5325 = vsel %vm5274, %v276, %v1423
      %v5326 = vsel %vm5274, %v277, %v1425
      %v5327 = vsel %vm5274, %v278, %v1427
      %v5328 = vsel %vm5274, %v279, %v1429
      %v5329 = vsel %vm5274, %v280, %v1431
      %v5330 = vsel %vm5274, %v281, %v1433
      %v5331 = vsel %vm5274, %v282, %v1435
      %v5332 = vsel %vm5274, %v283, %v1437
      %v5333 = vsel %vm5274, %v284, %v1439
      %v5334 = vsel %vm5274, %v285, %v1441
      %v5335 = vsel %vm5274, %v286, %v1443
      %v5336 = vsel %vm5274, %v287, %v1445
      %v5337 = vsel %vm5274, %v288, %v1447
      %v5338 = vsel %vm5274, %v289, %v1449
      %v5339 = vsel %vm5274, %v290, %v1451
      %v5340 = vsel %vm5274, %v291, %v1453
      %v5341 = vsel %vm5274, %v292, %v1455
      %v5342 = vsel %vm5274, %v293, %v1457
      %v5343 = vsel %vm5274, %v294, %v1459
      %v5344 = vsel %vm5274, %v295, %v1461
      %v5345 = vsel %vm5274, %v296, %v1463
      %v5346 = vsel %vm5274, %v297, %v1465
      %v5347 = vsel %vm5274, %v298, %v1467
      %v5348 = vsel %vm5274, %v299, %v1469
      %v5349 = vsel %vm5274, %v300, %v1471
      %v5350 = vsel %vm5274, %v301, %v1473
      %v5351 = vsel %vm5274, %v302, %v1475
      %v5352 = vsel %vm5274, %v303, %v1477
      %v5353 = vsel %vm5274, %v304, %v1479
      %v5354 = vsel %vm5274, %v305, %v1481
      %v5355 = vsel %vm5274, %v306, %v1483
      %v5356 = vsel %vm5274, %v307, %v1485
      %v5357 = vsel %vm5274, %v308, %v1487
      %v5358 = vsel %vm5274, %v309, %v1489
      %v5359 = vsel %vm5274, %v310, %v1491
      %v5360 = vsel %vm5274, %v311, %v1493
      %v5361 = vsel %vm5274, %v312, %v1495
      %v5362 = vsel %vm5274, %v313, %v1497
      %v5363 = vsel %vm5274, %v314, %v1499
      %v5364 = vsel %vm5274, %v315, %v1501
      %v5365 = vsel %vm5274, %v316, %v1503
      %v5366 = vsel %vm5274, %v317, %v1505
      %v5367 = vsel %vm5274, %v318, %v1507
      %v5368 = vsel %vm5274, %v319, %v1509
      %v5369 = vsel %vm5274, %v320, %v1511
      %v5370 = vsel %vm5274, %v321, %v1513
      %v5371 = vsel %vm5274, %v322, %v1515
      %v5372 = vsel %vm5274, %v323, %v1517
      %v5373 = vsel %vm5274, %v324, %v1519
      %v5374 = vsel %vm5274, %v325, %v1521
      %v5375 = vsel %vm5274, %v326, %v1523
      %v5376 = vsel %vm5274, %v327, %v1525
      %v5377 = vsel %vm5274, %v328, %v1527
      %v5378 = vsel %vm5274, %v329, %v1529
      %v5379 = vsel %vm5274, %v330, %v1531
      %v5380 = vsel %vm5274, %v331, %v1533
      %v5381 = vsel %vm5274, %v332, %v1535
      %v5382 = vsel %vm5274, %v333, %v1537
      %v5383 = vsel %vm5274, %v334, %v1539
      %v5384 = vsel %vm5274, %v335, %v1541
      %v5385 = vsel %vm5274, %v336, %v1543
      %v5386 = vsel %vm5274, %v337, %v1545
      %v5387 = vsel %vm5274, %v338, %v1547
      %v5388 = vsel %vm5274, %v339, %v1549
      %v5389 = vsel %vm5274, %v340, %v1551
      %v5390 = vsel %vm5274, %v341, %v1553
      %v5391 = vsel %vm5274, %v342, %v1555
      %v5392 = vsel %vm5274, %v343, %v1557
      %v5393 = vsel %vm5274, %v344, %v1559
      %v5394 = vsel %vm5274, %v345, %v1561
      %v5395 = vsel %vm5274, %v346, %v1563
      %v5396 = vsel %vm5274, %v347, %v1565
      %v5397 = vsel %vm5274, %v348, %v1567
      %v5398 = vsel %vm5274, %v349, %v1569
      %v5399 = vsel %vm5274, %v350, %v1571
      %v5400 = vsel %vm5274, %v351, %v1573
      %v5401 = vsel %vm5274, %v352, %v1575
      %v5402 = vsel %vm5274, %v353, %v1577
      %v5403 = vsel %vm5274, %v354, %v1579
      %v5404 = vsel %vm5274, %v355, %v1581
      %v5405 = vsel %vm5274, %v356, %v1583
      %v5406 = vsel %vm5274, %v357, %v1585
      %v5407 = vsel %vm5274, %v358, %v1587
      %v5408 = vsel %vm5274, %v359, %v1589
      %v5409 = vsel %vm5274, %v360, %v1591
      %v5410 = vsel %vm5274, %v361, %v1593
      %vm5411 = vcmask 48128
      %v5412 = vsel %vm5411, %v5275, %v1867
      %v5413 = vsel %vm5411, %v5276, %v1869
      %v5414 = vsel %vm5411, %v5277, %v1871
      %v5415 = vsel %vm5411, %v5278, %v1873
      %v5416 = vsel %vm5411, %v5279, %v1875
      %v5417 = vsel %vm5411, %v5280, %v1877
      %v5418 = vsel %vm5411, %v5281, %v1879
      %v5419 = vsel %vm5411, %v5282, %v1881
      %v5420 = vsel %vm5411, %v5283, %v1883
      %v5421 = vsel %vm5411, %v5284, %v1885
      %v5422 = vsel %vm5411, %v5285, %v1887
      %v5423 = vsel %vm5411, %v5286, %v1889
      %v5424 = vsel %vm5411, %v5287, %v1891
      %v5425 = vsel %vm5411, %v5288, %v1893
      %v5426 = vsel %vm5411, %v5289, %v1895
      %v5427 = vsel %vm5411, %v5290, %v1897
      %v5428 = vsel %vm5411, %v5291, %v1899
      %v5429 = vsel %vm5411, %v5292, %v1901
      %v5430 = vsel %vm5411, %v5293, %v1903
      %v5431 = vsel %vm5411, %v5294, %v1905
      %v5432 = vsel %vm5411, %v5295, %v1907
      %v5433 = vsel %vm5411, %v5296, %v1909
      %v5434 = vsel %vm5411, %v5297, %v1911
      %v5435 = vsel %vm5411, %v5298, %v1913
      %v5436 = vsel %vm5411, %v5299, %v1915
      %v5437 = vsel %vm5411, %v5300, %v1917
      %v5438 = vsel %vm5411, %v5301, %v1919
      %v5439 = vsel %vm5411, %v5302, %v1921
      %v5440 = vsel %vm5411, %v5303, %v1923
      %v5441 = vsel %vm5411, %v5304, %v1925
      %v5442 = vsel %vm5411, %v5305, %v1927
      %v5443 = vsel %vm5411, %v5306, %v1929
      %v5444 = vsel %vm5411, %v5307, %v1931
      %v5445 = vsel %vm5411, %v5308, %v1933
      %v5446 = vsel %vm5411, %v5309, %v1935
      %v5447 = vsel %vm5411, %v5310, %v1937
      %v5448 = vsel %vm5411, %v5311, %v1939
      %v5449 = vsel %vm5411, %v5312, %v1941
      %v5450 = vsel %vm5411, %v5313, %v1943
      %v5451 = vsel %vm5411, %v5314, %v1945
      %v5452 = vsel %vm5411, %v5315, %v1947
      %v5453 = vsel %vm5411, %v5316, %v1949
      %v5454 = vsel %vm5411, %v5317, %v1951
      %v5455 = vsel %vm5411, %v5318, %v1953
      %v5456 = vsel %vm5411, %v5319, %v1955
      %v5457 = vsel %vm5411, %v5320, %v1957
      %v5458 = vsel %vm5411, %v5321, %v1959
      %v5459 = vsel %vm5411, %v5322, %v1961
      %v5460 = vsel %vm5411, %v5323, %v1963
      %v5461 = vsel %vm5411, %v5324, %v1965
      %v5462 = vsel %vm5411, %v5325, %v1967
      %v5463 = vsel %vm5411, %v5326, %v1969
      %v5464 = vsel %vm5411, %v5327, %v1971
      %v5465 = vsel %vm5411, %v5328, %v1973
      %v5466 = vsel %vm5411, %v5329, %v1975
      %v5467 = vsel %vm5411, %v5330, %v1977
      %v5468 = vsel %vm5411, %v5331, %v1979
      %v5469 = vsel %vm5411, %v5332, %v1981
      %v5470 = vsel %vm5411, %v5333, %v1983
      %v5471 = vsel %vm5411, %v5334, %v1985
      %v5472 = vsel %vm5411, %v5335, %v1987
      %v5473 = vsel %vm5411, %v5336, %v1989
      %v5474 = vsel %vm5411, %v5337, %v1991
      %v5475 = vsel %vm5411, %v5338, %v1993
      %v5476 = vsel %vm5411, %v5339, %v1995
      %v5477 = vsel %vm5411, %v5340, %v1997
      %v5478 = vsel %vm5411, %v5341, %v1999
      %v5479 = vsel %vm5411, %v5342, %v2001
      %v5480 = vsel %vm5411, %v5343, %v2003
      %v5481 = vsel %vm5411, %v5344, %v2005
      %v5482 = vsel %vm5411, %v5345, %v2007
      %v5483 = vsel %vm5411, %v5346, %v2009
      %v5484 = vsel %vm5411, %v5347, %v2011
      %v5485 = vsel %vm5411, %v5348, %v2013
      %v5486 = vsel %vm5411, %v5349, %v2015
      %v5487 = vsel %vm5411, %v5350, %v2017
      %v5488 = vsel %vm5411, %v5351, %v2019
      %v5489 = vsel %vm5411, %v5352, %v2021
      %v5490 = vsel %vm5411, %v5353, %v2023
      %v5491 = vsel %vm5411, %v5354, %v2025
      %v5492 = vsel %vm5411, %v5355, %v2027
      %v5493 = vsel %vm5411, %v5356, %v2029
      %v5494 = vsel %vm5411, %v5357, %v2031
      %v5495 = vsel %vm5411, %v5358, %v2033
      %v5496 = vsel %vm5411, %v5359, %v2035
      %v5497 = vsel %vm5411, %v5360, %v2037
      %v5498 = vsel %vm5411, %v5361, %v2039
      %v5499 = vsel %vm5411, %v5362, %v2041
      %v5500 = vsel %vm5411, %v5363, %v2043
      %v5501 = vsel %vm5411, %v5364, %v2045
      %v5502 = vsel %vm5411, %v5365, %v2047
      %v5503 = vsel %vm5411, %v5366, %v2049
      %v5504 = vsel %vm5411, %v5367, %v2051
      %v5505 = vsel %vm5411, %v5368, %v2053
      %v5506 = vsel %vm5411, %v5369, %v2055
      %v5507 = vsel %vm5411, %v5370, %v2057
      %v5508 = vsel %vm5411, %v5371, %v2059
      %v5509 = vsel %vm5411, %v5372, %v2061
      %v5510 = vsel %vm5411, %v5373, %v2063
      %v5511 = vsel %vm5411, %v5374, %v2065
      %v5512 = vsel %vm5411, %v5375, %v2067
      %v5513 = vsel %vm5411, %v5376, %v2069
      %v5514 = vsel %vm5411, %v5377, %v2071
      %v5515 = vsel %vm5411, %v5378, %v2073
      %v5516 = vsel %vm5411, %v5379, %v2075
      %v5517 = vsel %vm5411, %v5380, %v2077
      %v5518 = vsel %vm5411, %v5381, %v2079
      %v5519 = vsel %vm5411, %v5382, %v2081
      %v5520 = vsel %vm5411, %v5383, %v2083
      %v5521 = vsel %vm5411, %v5384, %v2085
      %v5522 = vsel %vm5411, %v5385, %v2087
      %v5523 = vsel %vm5411, %v5386, %v2089
      %v5524 = vsel %vm5411, %v5387, %v2091
      %v5525 = vsel %vm5411, %v5388, %v2093
      %v5526 = vsel %vm5411, %v5389, %v2095
      %v5527 = vsel %vm5411, %v5390, %v2097
      %v5528 = vsel %vm5411, %v5391, %v2099
      %v5529 = vsel %vm5411, %v5392, %v2101
      %v5530 = vsel %vm5411, %v5393, %v2103
      %v5531 = vsel %vm5411, %v5394, %v2105
      %v5532 = vsel %vm5411, %v5395, %v2107
      %v5533 = vsel %vm5411, %v5396, %v2109
      %v5534 = vsel %vm5411, %v5397, %v2111
      %v5535 = vsel %vm5411, %v5398, %v2113
      %v5536 = vsel %vm5411, %v5399, %v2115
      %v5537 = vsel %vm5411, %v5400, %v2117
      %v5538 = vsel %vm5411, %v5401, %v2119
      %v5539 = vsel %vm5411, %v5402, %v2121
      %v5540 = vsel %vm5411, %v5403, %v2123
      %v5541 = vsel %vm5411, %v5404, %v2125
      %v5542 = vsel %vm5411, %v5405, %v2127
      %v5543 = vsel %vm5411, %v5406, %v2129
      %v5544 = vsel %vm5411, %v5407, %v2131
      %v5545 = vsel %vm5411, %v5408, %v2133
      %v5546 = vsel %vm5411, %v5409, %v2135
      %v5547 = vsel %vm5411, %v5410, %v2137
      %vm5548 = vcmask 72704
      %v5549 = vsel %vm5548, %v5412, %v2279
      %v5550 = vsel %vm5548, %v5413, %v2281
      %v5551 = vsel %vm5548, %v5414, %v2283
      %v5552 = vsel %vm5548, %v5415, %v2285
      %v5553 = vsel %vm5548, %v5416, %v2287
      %v5554 = vsel %vm5548, %v5417, %v2289
      %v5555 = vsel %vm5548, %v5418, %v2291
      %v5556 = vsel %vm5548, %v5419, %v2293
      %v5557 = vsel %vm5548, %v5420, %v2295
      %v5558 = vsel %vm5548, %v5421, %v2297
      %v5559 = vsel %vm5548, %v5422, %v2299
      %v5560 = vsel %vm5548, %v5423, %v2301
      %v5561 = vsel %vm5548, %v5424, %v2303
      %v5562 = vsel %vm5548, %v5425, %v2305
      %v5563 = vsel %vm5548, %v5426, %v2307
      %v5564 = vsel %vm5548, %v5427, %v2309
      %v5565 = vsel %vm5548, %v5428, %v2311
      %v5566 = vsel %vm5548, %v5429, %v2313
      %v5567 = vsel %vm5548, %v5430, %v2315
      %v5568 = vsel %vm5548, %v5431, %v2317
      %v5569 = vsel %vm5548, %v5432, %v2319
      %v5570 = vsel %vm5548, %v5433, %v2321
      %v5571 = vsel %vm5548, %v5434, %v2323
      %v5572 = vsel %vm5548, %v5435, %v2325
      %v5573 = vsel %vm5548, %v5436, %v2327
      %v5574 = vsel %vm5548, %v5437, %v2329
      %v5575 = vsel %vm5548, %v5438, %v2331
      %v5576 = vsel %vm5548, %v5439, %v2333
      %v5577 = vsel %vm5548, %v5440, %v2335
      %v5578 = vsel %vm5548, %v5441, %v2337
      %v5579 = vsel %vm5548, %v5442, %v2339
      %v5580 = vsel %vm5548, %v5443, %v2341
      %v5581 = vsel %vm5548, %v5444, %v2343
      %v5582 = vsel %vm5548, %v5445, %v2345
      %v5583 = vsel %vm5548, %v5446, %v2347
      %v5584 = vsel %vm5548, %v5447, %v2349
      %v5585 = vsel %vm5548, %v5448, %v2351
      %v5586 = vsel %vm5548, %v5449, %v2353
      %v5587 = vsel %vm5548, %v5450, %v2355
      %v5588 = vsel %vm5548, %v5451, %v2357
      %v5589 = vsel %vm5548, %v5452, %v2359
      %v5590 = vsel %vm5548, %v5453, %v2361
      %v5591 = vsel %vm5548, %v5454, %v2363
      %v5592 = vsel %vm5548, %v5455, %v2365
      %v5593 = vsel %vm5548, %v5456, %v2367
      %v5594 = vsel %vm5548, %v5457, %v2369
      %v5595 = vsel %vm5548, %v5458, %v2371
      %v5596 = vsel %vm5548, %v5459, %v2373
      %v5597 = vsel %vm5548, %v5460, %v2375
      %v5598 = vsel %vm5548, %v5461, %v2377
      %v5599 = vsel %vm5548, %v5462, %v2379
      %v5600 = vsel %vm5548, %v5463, %v2381
      %v5601 = vsel %vm5548, %v5464, %v2383
      %v5602 = vsel %vm5548, %v5465, %v2385
      %v5603 = vsel %vm5548, %v5466, %v2387
      %v5604 = vsel %vm5548, %v5467, %v2389
      %v5605 = vsel %vm5548, %v5468, %v2391
      %v5606 = vsel %vm5548, %v5469, %v2393
      %v5607 = vsel %vm5548, %v5470, %v2395
      %v5608 = vsel %vm5548, %v5471, %v2397
      %v5609 = vsel %vm5548, %v5472, %v2399
      %v5610 = vsel %vm5548, %v5473, %v2401
      %v5611 = vsel %vm5548, %v5474, %v2403
      %v5612 = vsel %vm5548, %v5475, %v2405
      %v5613 = vsel %vm5548, %v5476, %v2407
      %v5614 = vsel %vm5548, %v5477, %v2409
      %v5615 = vsel %vm5548, %v5478, %v2411
      %v5616 = vsel %vm5548, %v5479, %v2413
      %v5617 = vsel %vm5548, %v5480, %v2415
      %v5618 = vsel %vm5548, %v5481, %v2417
      %v5619 = vsel %vm5548, %v5482, %v2419
      %v5620 = vsel %vm5548, %v5483, %v2421
      %v5621 = vsel %vm5548, %v5484, %v2423
      %v5622 = vsel %vm5548, %v5485, %v2425
      %v5623 = vsel %vm5548, %v5486, %v2427
      %v5624 = vsel %vm5548, %v5487, %v2429
      %v5625 = vsel %vm5548, %v5488, %v2431
      %v5626 = vsel %vm5548, %v5489, %v2433
      %v5627 = vsel %vm5548, %v5490, %v2435
      %v5628 = vsel %vm5548, %v5491, %v2437
      %v5629 = vsel %vm5548, %v5492, %v2439
      %v5630 = vsel %vm5548, %v5493, %v2441
      %v5631 = vsel %vm5548, %v5494, %v2443
      %v5632 = vsel %vm5548, %v5495, %v2445
      %v5633 = vsel %vm5548, %v5496, %v2447
      %v5634 = vsel %vm5548, %v5497, %v2449
      %v5635 = vsel %vm5548, %v5498, %v2451
      %v5636 = vsel %vm5548, %v5499, %v2453
      %v5637 = vsel %vm5548, %v5500, %v2455
      %v5638 = vsel %vm5548, %v5501, %v2457
      %v5639 = vsel %vm5548, %v5502, %v2459
      %v5640 = vsel %vm5548, %v5503, %v2461
      %v5641 = vsel %vm5548, %v5504, %v2463
      %v5642 = vsel %vm5548, %v5505, %v2465
      %v5643 = vsel %vm5548, %v5506, %v2467
      %v5644 = vsel %vm5548, %v5507, %v2469
      %v5645 = vsel %vm5548, %v5508, %v2471
      %v5646 = vsel %vm5548, %v5509, %v2473
      %v5647 = vsel %vm5548, %v5510, %v2475
      %v5648 = vsel %vm5548, %v5511, %v2477
      %v5649 = vsel %vm5548, %v5512, %v2479
      %v5650 = vsel %vm5548, %v5513, %v2481
      %v5651 = vsel %vm5548, %v5514, %v2483
      %v5652 = vsel %vm5548, %v5515, %v2485
      %v5653 = vsel %vm5548, %v5516, %v2487
      %v5654 = vsel %vm5548, %v5517, %v2489
      %v5655 = vsel %vm5548, %v5518, %v2491
      %v5656 = vsel %vm5548, %v5519, %v2493
      %v5657 = vsel %vm5548, %v5520, %v2495
      %v5658 = vsel %vm5548, %v5521, %v2497
      %v5659 = vsel %vm5548, %v5522, %v2499
      %v5660 = vsel %vm5548, %v5523, %v2501
      %v5661 = vsel %vm5548, %v5524, %v2503
      %v5662 = vsel %vm5548, %v5525, %v2505
      %v5663 = vsel %vm5548, %v5526, %v2507
      %v5664 = vsel %vm5548, %v5527, %v2509
      %v5665 = vsel %vm5548, %v5528, %v2511
      %v5666 = vsel %vm5548, %v5529, %v2513
      %v5667 = vsel %vm5548, %v5530, %v2515
      %v5668 = vsel %vm5548, %v5531, %v2517
      %v5669 = vsel %vm5548, %v5532, %v2519
      %v5670 = vsel %vm5548, %v5533, %v2521
      %v5671 = vsel %vm5548, %v5534, %v2523
      %v5672 = vsel %vm5548, %v5535, %v2525
      %v5673 = vsel %vm5548, %v5536, %v2527
      %v5674 = vsel %vm5548, %v5537, %v2529
      %v5675 = vsel %vm5548, %v5538, %v2531
      %v5676 = vsel %vm5548, %v5539, %v2533
      %v5677 = vsel %vm5548, %v5540, %v2535
      %v5678 = vsel %vm5548, %v5541, %v2537
      %v5679 = vsel %vm5548, %v5542, %v2539
      %v5680 = vsel %vm5548, %v5543, %v2541
      %v5681 = vsel %vm5548, %v5544, %v2543
      %v5682 = vsel %vm5548, %v5545, %v2545
      %v5683 = vsel %vm5548, %v5546, %v2547
      %v5684 = vsel %vm5548, %v5547, %v2549
      %vm5685 = vcmask 97280
      %v5686 = vsel %vm5685, %v5549, %v2823
      %v5687 = vsel %vm5685, %v5550, %v2825
      %v5688 = vsel %vm5685, %v5551, %v2827
      %v5689 = vsel %vm5685, %v5552, %v2829
      %v5690 = vsel %vm5685, %v5553, %v2831
      %v5691 = vsel %vm5685, %v5554, %v2833
      %v5692 = vsel %vm5685, %v5555, %v2835
      %v5693 = vsel %vm5685, %v5556, %v2837
      %v5694 = vsel %vm5685, %v5557, %v2839
      %v5695 = vsel %vm5685, %v5558, %v2841
      %v5696 = vsel %vm5685, %v5559, %v2843
      %v5697 = vsel %vm5685, %v5560, %v2845
      %v5698 = vsel %vm5685, %v5561, %v2847
      %v5699 = vsel %vm5685, %v5562, %v2849
      %v5700 = vsel %vm5685, %v5563, %v2851
      %v5701 = vsel %vm5685, %v5564, %v2853
      %v5702 = vsel %vm5685, %v5565, %v2855
      %v5703 = vsel %vm5685, %v5566, %v2857
      %v5704 = vsel %vm5685, %v5567, %v2859
      %v5705 = vsel %vm5685, %v5568, %v2861
      %v5706 = vsel %vm5685, %v5569, %v2863
      %v5707 = vsel %vm5685, %v5570, %v2865
      %v5708 = vsel %vm5685, %v5571, %v2867
      %v5709 = vsel %vm5685, %v5572, %v2869
      %v5710 = vsel %vm5685, %v5573, %v2871
      %v5711 = vsel %vm5685, %v5574, %v2873
      %v5712 = vsel %vm5685, %v5575, %v2875
      %v5713 = vsel %vm5685, %v5576, %v2877
      %v5714 = vsel %vm5685, %v5577, %v2879
      %v5715 = vsel %vm5685, %v5578, %v2881
      %v5716 = vsel %vm5685, %v5579, %v2883
      %v5717 = vsel %vm5685, %v5580, %v2885
      %v5718 = vsel %vm5685, %v5581, %v2887
      %v5719 = vsel %vm5685, %v5582, %v2889
      %v5720 = vsel %vm5685, %v5583, %v2891
      %v5721 = vsel %vm5685, %v5584, %v2893
      %v5722 = vsel %vm5685, %v5585, %v2895
      %v5723 = vsel %vm5685, %v5586, %v2897
      %v5724 = vsel %vm5685, %v5587, %v2899
      %v5725 = vsel %vm5685, %v5588, %v2901
      %v5726 = vsel %vm5685, %v5589, %v2903
      %v5727 = vsel %vm5685, %v5590, %v2905
      %v5728 = vsel %vm5685, %v5591, %v2907
      %v5729 = vsel %vm5685, %v5592, %v2909
      %v5730 = vsel %vm5685, %v5593, %v2911
      %v5731 = vsel %vm5685, %v5594, %v2913
      %v5732 = vsel %vm5685, %v5595, %v2915
      %v5733 = vsel %vm5685, %v5596, %v2917
      %v5734 = vsel %vm5685, %v5597, %v2919
      %v5735 = vsel %vm5685, %v5598, %v2921
      %v5736 = vsel %vm5685, %v5599, %v2923
      %v5737 = vsel %vm5685, %v5600, %v2925
      %v5738 = vsel %vm5685, %v5601, %v2927
      %v5739 = vsel %vm5685, %v5602, %v2929
      %v5740 = vsel %vm5685, %v5603, %v2931
      %v5741 = vsel %vm5685, %v5604, %v2933
      %v5742 = vsel %vm5685, %v5605, %v2935
      %v5743 = vsel %vm5685, %v5606, %v2937
      %v5744 = vsel %vm5685, %v5607, %v2939
      %v5745 = vsel %vm5685, %v5608, %v2941
      %v5746 = vsel %vm5685, %v5609, %v2943
      %v5747 = vsel %vm5685, %v5610, %v2945
      %v5748 = vsel %vm5685, %v5611, %v2947
      %v5749 = vsel %vm5685, %v5612, %v2949
      %v5750 = vsel %vm5685, %v5613, %v2951
      %v5751 = vsel %vm5685, %v5614, %v2953
      %v5752 = vsel %vm5685, %v5615, %v2955
      %v5753 = vsel %vm5685, %v5616, %v2957
      %v5754 = vsel %vm5685, %v5617, %v2959
      %v5755 = vsel %vm5685, %v5618, %v2961
      %v5756 = vsel %vm5685, %v5619, %v2963
      %v5757 = vsel %vm5685, %v5620, %v2965
      %v5758 = vsel %vm5685, %v5621, %v2967
      %v5759 = vsel %vm5685, %v5622, %v2969
      %v5760 = vsel %vm5685, %v5623, %v2971
      %v5761 = vsel %vm5685, %v5624, %v2973
      %v5762 = vsel %vm5685, %v5625, %v2975
      %v5763 = vsel %vm5685, %v5626, %v2977
      %v5764 = vsel %vm5685, %v5627, %v2979
      %v5765 = vsel %vm5685, %v5628, %v2981
      %v5766 = vsel %vm5685, %v5629, %v2983
      %v5767 = vsel %vm5685, %v5630, %v2985
      %v5768 = vsel %vm5685, %v5631, %v2987
      %v5769 = vsel %vm5685, %v5632, %v2989
      %v5770 = vsel %vm5685, %v5633, %v2991
      %v5771 = vsel %vm5685, %v5634, %v2993
      %v5772 = vsel %vm5685, %v5635, %v2995
      %v5773 = vsel %vm5685, %v5636, %v2997
      %v5774 = vsel %vm5685, %v5637, %v2999
      %v5775 = vsel %vm5685, %v5638, %v3001
      %v5776 = vsel %vm5685, %v5639, %v3003
      %v5777 = vsel %vm5685, %v5640, %v3005
      %v5778 = vsel %vm5685, %v5641, %v3007
      %v5779 = vsel %vm5685, %v5642, %v3009
      %v5780 = vsel %vm5685, %v5643, %v3011
      %v5781 = vsel %vm5685, %v5644, %v3013
      %v5782 = vsel %vm5685, %v5645, %v3015
      %v5783 = vsel %vm5685, %v5646, %v3017
      %v5784 = vsel %vm5685, %v5647, %v3019
      %v5785 = vsel %vm5685, %v5648, %v3021
      %v5786 = vsel %vm5685, %v5649, %v3023
      %v5787 = vsel %vm5685, %v5650, %v3025
      %v5788 = vsel %vm5685, %v5651, %v3027
      %v5789 = vsel %vm5685, %v5652, %v3029
      %v5790 = vsel %vm5685, %v5653, %v3031
      %v5791 = vsel %vm5685, %v5654, %v3033
      %v5792 = vsel %vm5685, %v5655, %v3035
      %v5793 = vsel %vm5685, %v5656, %v3037
      %v5794 = vsel %vm5685, %v5657, %v3039
      %v5795 = vsel %vm5685, %v5658, %v3041
      %v5796 = vsel %vm5685, %v5659, %v3043
      %v5797 = vsel %vm5685, %v5660, %v3045
      %v5798 = vsel %vm5685, %v5661, %v3047
      %v5799 = vsel %vm5685, %v5662, %v3049
      %v5800 = vsel %vm5685, %v5663, %v3051
      %v5801 = vsel %vm5685, %v5664, %v3053
      %v5802 = vsel %vm5685, %v5665, %v3055
      %v5803 = vsel %vm5685, %v5666, %v3057
      %v5804 = vsel %vm5685, %v5667, %v3059
      %v5805 = vsel %vm5685, %v5668, %v3061
      %v5806 = vsel %vm5685, %v5669, %v3063
      %v5807 = vsel %vm5685, %v5670, %v3065
      %v5808 = vsel %vm5685, %v5671, %v3067
      %v5809 = vsel %vm5685, %v5672, %v3069
      %v5810 = vsel %vm5685, %v5673, %v3071
      %v5811 = vsel %vm5685, %v5674, %v3073
      %v5812 = vsel %vm5685, %v5675, %v3075
      %v5813 = vsel %vm5685, %v5676, %v3077
      %v5814 = vsel %vm5685, %v5677, %v3079
      %v5815 = vsel %vm5685, %v5678, %v3081
      %v5816 = vsel %vm5685, %v5679, %v3083
      %v5817 = vsel %vm5685, %v5680, %v3085
      %v5818 = vsel %vm5685, %v5681, %v3087
      %v5819 = vsel %vm5685, %v5682, %v3089
      %v5820 = vsel %vm5685, %v5683, %v3091
      %v5821 = vsel %vm5685, %v5684, %v3093
      %vm5822 = vcmask 121856
      %v5823 = vsel %vm5822, %v5686, %v3367
      %v5824 = vsel %vm5822, %v5687, %v3369
      %v5825 = vsel %vm5822, %v5688, %v3371
      %v5826 = vsel %vm5822, %v5689, %v3373
      %v5827 = vsel %vm5822, %v5690, %v3375
      %v5828 = vsel %vm5822, %v5691, %v3377
      %v5829 = vsel %vm5822, %v5692, %v3379
      %v5830 = vsel %vm5822, %v5693, %v3381
      %v5831 = vsel %vm5822, %v5694, %v3383
      %v5832 = vsel %vm5822, %v5695, %v3385
      %v5833 = vsel %vm5822, %v5696, %v3387
      %v5834 = vsel %vm5822, %v5697, %v3389
      %v5835 = vsel %vm5822, %v5698, %v3391
      %v5836 = vsel %vm5822, %v5699, %v3393
      %v5837 = vsel %vm5822, %v5700, %v3395
      %v5838 = vsel %vm5822, %v5701, %v3397
      %v5839 = vsel %vm5822, %v5702, %v3399
      %v5840 = vsel %vm5822, %v5703, %v3401
      %v5841 = vsel %vm5822, %v5704, %v3403
      %v5842 = vsel %vm5822, %v5705, %v3405
      %v5843 = vsel %vm5822, %v5706, %v3407
      %v5844 = vsel %vm5822, %v5707, %v3409
      %v5845 = vsel %vm5822, %v5708, %v3411
      %v5846 = vsel %vm5822, %v5709, %v3413
      %v5847 = vsel %vm5822, %v5710, %v3415
      %v5848 = vsel %vm5822, %v5711, %v3417
      %v5849 = vsel %vm5822, %v5712, %v3419
      %v5850 = vsel %vm5822, %v5713, %v3421
      %v5851 = vsel %vm5822, %v5714, %v3423
      %v5852 = vsel %vm5822, %v5715, %v3425
      %v5853 = vsel %vm5822, %v5716, %v3427
      %v5854 = vsel %vm5822, %v5717, %v3429
      %v5855 = vsel %vm5822, %v5718, %v3431
      %v5856 = vsel %vm5822, %v5719, %v3433
      %v5857 = vsel %vm5822, %v5720, %v3435
      %v5858 = vsel %vm5822, %v5721, %v3437
      %v5859 = vsel %vm5822, %v5722, %v3439
      %v5860 = vsel %vm5822, %v5723, %v3441
      %v5861 = vsel %vm5822, %v5724, %v3443
      %v5862 = vsel %vm5822, %v5725, %v3445
      %v5863 = vsel %vm5822, %v5726, %v3447
      %v5864 = vsel %vm5822, %v5727, %v3449
      %v5865 = vsel %vm5822, %v5728, %v3451
      %v5866 = vsel %vm5822, %v5729, %v3453
      %v5867 = vsel %vm5822, %v5730, %v3455
      %v5868 = vsel %vm5822, %v5731, %v3457
      %v5869 = vsel %vm5822, %v5732, %v3459
      %v5870 = vsel %vm5822, %v5733, %v3461
      %v5871 = vsel %vm5822, %v5734, %v3463
      %v5872 = vsel %vm5822, %v5735, %v3465
      %v5873 = vsel %vm5822, %v5736, %v3467
      %v5874 = vsel %vm5822, %v5737, %v3469
      %v5875 = vsel %vm5822, %v5738, %v3471
      %v5876 = vsel %vm5822, %v5739, %v3473
      %v5877 = vsel %vm5822, %v5740, %v3475
      %v5878 = vsel %vm5822, %v5741, %v3477
      %v5879 = vsel %vm5822, %v5742, %v3479
      %v5880 = vsel %vm5822, %v5743, %v3481
      %v5881 = vsel %vm5822, %v5744, %v3483
      %v5882 = vsel %vm5822, %v5745, %v3485
      %v5883 = vsel %vm5822, %v5746, %v3487
      %v5884 = vsel %vm5822, %v5747, %v3489
      %v5885 = vsel %vm5822, %v5748, %v3491
      %v5886 = vsel %vm5822, %v5749, %v3493
      %v5887 = vsel %vm5822, %v5750, %v3495
      %v5888 = vsel %vm5822, %v5751, %v3497
      %v5889 = vsel %vm5822, %v5752, %v3499
      %v5890 = vsel %vm5822, %v5753, %v3501
      %v5891 = vsel %vm5822, %v5754, %v3503
      %v5892 = vsel %vm5822, %v5755, %v3505
      %v5893 = vsel %vm5822, %v5756, %v3507
      %v5894 = vsel %vm5822, %v5757, %v3509
      %v5895 = vsel %vm5822, %v5758, %v3511
      %v5896 = vsel %vm5822, %v5759, %v3513
      %v5897 = vsel %vm5822, %v5760, %v3515
      %v5898 = vsel %vm5822, %v5761, %v3517
      %v5899 = vsel %vm5822, %v5762, %v3519
      %v5900 = vsel %vm5822, %v5763, %v3521
      %v5901 = vsel %vm5822, %v5764, %v3523
      %v5902 = vsel %vm5822, %v5765, %v3525
      %v5903 = vsel %vm5822, %v5766, %v3527
      %v5904 = vsel %vm5822, %v5767, %v3529
      %v5905 = vsel %vm5822, %v5768, %v3531
      %v5906 = vsel %vm5822, %v5769, %v3533
      %v5907 = vsel %vm5822, %v5770, %v3535
      %v5908 = vsel %vm5822, %v5771, %v3537
      %v5909 = vsel %vm5822, %v5772, %v3539
      %v5910 = vsel %vm5822, %v5773, %v3541
      %v5911 = vsel %vm5822, %v5774, %v3543
      %v5912 = vsel %vm5822, %v5775, %v3545
      %v5913 = vsel %vm5822, %v5776, %v3547
      %v5914 = vsel %vm5822, %v5777, %v3549
      %v5915 = vsel %vm5822, %v5778, %v3551
      %v5916 = vsel %vm5822, %v5779, %v3553
      %v5917 = vsel %vm5822, %v5780, %v3555
      %v5918 = vsel %vm5822, %v5781, %v3557
      %v5919 = vsel %vm5822, %v5782, %v3559
      %v5920 = vsel %vm5822, %v5783, %v3561
      %v5921 = vsel %vm5822, %v5784, %v3563
      %v5922 = vsel %vm5822, %v5785, %v3565
      %v5923 = vsel %vm5822, %v5786, %v3567
      %v5924 = vsel %vm5822, %v5787, %v3569
      %v5925 = vsel %vm5822, %v5788, %v3571
      %v5926 = vsel %vm5822, %v5789, %v3573
      %v5927 = vsel %vm5822, %v5790, %v3575
      %v5928 = vsel %vm5822, %v5791, %v3577
      %v5929 = vsel %vm5822, %v5792, %v3579
      %v5930 = vsel %vm5822, %v5793, %v3581
      %v5931 = vsel %vm5822, %v5794, %v3583
      %v5932 = vsel %vm5822, %v5795, %v3585
      %v5933 = vsel %vm5822, %v5796, %v3587
      %v5934 = vsel %vm5822, %v5797, %v3589
      %v5935 = vsel %vm5822, %v5798, %v3591
      %v5936 = vsel %vm5822, %v5799, %v3593
      %v5937 = vsel %vm5822, %v5800, %v3595
      %v5938 = vsel %vm5822, %v5801, %v3597
      %v5939 = vsel %vm5822, %v5802, %v3599
      %v5940 = vsel %vm5822, %v5803, %v3601
      %v5941 = vsel %vm5822, %v5804, %v3603
      %v5942 = vsel %vm5822, %v5805, %v3605
      %v5943 = vsel %vm5822, %v5806, %v3607
      %v5944 = vsel %vm5822, %v5807, %v3609
      %v5945 = vsel %vm5822, %v5808, %v3611
      %v5946 = vsel %vm5822, %v5809, %v3613
      %v5947 = vsel %vm5822, %v5810, %v3615
      %v5948 = vsel %vm5822, %v5811, %v3617
      %v5949 = vsel %vm5822, %v5812, %v3619
      %v5950 = vsel %vm5822, %v5813, %v3621
      %v5951 = vsel %vm5822, %v5814, %v3623
      %v5952 = vsel %vm5822, %v5815, %v3625
      %v5953 = vsel %vm5822, %v5816, %v3627
      %v5954 = vsel %vm5822, %v5817, %v3629
      %v5955 = vsel %vm5822, %v5818, %v3631
      %v5956 = vsel %vm5822, %v5819, %v3633
      %v5957 = vsel %vm5822, %v5820, %v3635
      %v5958 = vsel %vm5822, %v5821, %v3637
      %vm5959 = vcmask 146432
      %v5960 = vsel %vm5959, %v5823, %v3779
      %v5961 = vsel %vm5959, %v5824, %v3781
      %v5962 = vsel %vm5959, %v5825, %v3783
      %v5963 = vsel %vm5959, %v5826, %v3785
      %v5964 = vsel %vm5959, %v5827, %v3787
      %v5965 = vsel %vm5959, %v5828, %v3789
      %v5966 = vsel %vm5959, %v5829, %v3791
      %v5967 = vsel %vm5959, %v5830, %v3793
      %v5968 = vsel %vm5959, %v5831, %v3795
      %v5969 = vsel %vm5959, %v5832, %v3797
      %v5970 = vsel %vm5959, %v5833, %v3799
      %v5971 = vsel %vm5959, %v5834, %v3801
      %v5972 = vsel %vm5959, %v5835, %v3803
      %v5973 = vsel %vm5959, %v5836, %v3805
      %v5974 = vsel %vm5959, %v5837, %v3807
      %v5975 = vsel %vm5959, %v5838, %v3809
      %v5976 = vsel %vm5959, %v5839, %v3811
      %v5977 = vsel %vm5959, %v5840, %v3813
      %v5978 = vsel %vm5959, %v5841, %v3815
      %v5979 = vsel %vm5959, %v5842, %v3817
      %v5980 = vsel %vm5959, %v5843, %v3819
      %v5981 = vsel %vm5959, %v5844, %v3821
      %v5982 = vsel %vm5959, %v5845, %v3823
      %v5983 = vsel %vm5959, %v5846, %v3825
      %v5984 = vsel %vm5959, %v5847, %v3827
      %v5985 = vsel %vm5959, %v5848, %v3829
      %v5986 = vsel %vm5959, %v5849, %v3831
      %v5987 = vsel %vm5959, %v5850, %v3833
      %v5988 = vsel %vm5959, %v5851, %v3835
      %v5989 = vsel %vm5959, %v5852, %v3837
      %v5990 = vsel %vm5959, %v5853, %v3839
      %v5991 = vsel %vm5959, %v5854, %v3841
      %v5992 = vsel %vm5959, %v5855, %v3843
      %v5993 = vsel %vm5959, %v5856, %v3845
      %v5994 = vsel %vm5959, %v5857, %v3847
      %v5995 = vsel %vm5959, %v5858, %v3849
      %v5996 = vsel %vm5959, %v5859, %v3851
      %v5997 = vsel %vm5959, %v5860, %v3853
      %v5998 = vsel %vm5959, %v5861, %v3855
      %v5999 = vsel %vm5959, %v5862, %v3857
      %v6000 = vsel %vm5959, %v5863, %v3859
      %v6001 = vsel %vm5959, %v5864, %v3861
      %v6002 = vsel %vm5959, %v5865, %v3863
      %v6003 = vsel %vm5959, %v5866, %v3865
      %v6004 = vsel %vm5959, %v5867, %v3867
      %v6005 = vsel %vm5959, %v5868, %v3869
      %v6006 = vsel %vm5959, %v5869, %v3871
      %v6007 = vsel %vm5959, %v5870, %v3873
      %v6008 = vsel %vm5959, %v5871, %v3875
      %v6009 = vsel %vm5959, %v5872, %v3877
      %v6010 = vsel %vm5959, %v5873, %v3879
      %v6011 = vsel %vm5959, %v5874, %v3881
      %v6012 = vsel %vm5959, %v5875, %v3883
      %v6013 = vsel %vm5959, %v5876, %v3885
      %v6014 = vsel %vm5959, %v5877, %v3887
      %v6015 = vsel %vm5959, %v5878, %v3889
      %v6016 = vsel %vm5959, %v5879, %v3891
      %v6017 = vsel %vm5959, %v5880, %v3893
      %v6018 = vsel %vm5959, %v5881, %v3895
      %v6019 = vsel %vm5959, %v5882, %v3897
      %v6020 = vsel %vm5959, %v5883, %v3899
      %v6021 = vsel %vm5959, %v5884, %v3901
      %v6022 = vsel %vm5959, %v5885, %v3903
      %v6023 = vsel %vm5959, %v5886, %v3905
      %v6024 = vsel %vm5959, %v5887, %v3907
      %v6025 = vsel %vm5959, %v5888, %v3909
      %v6026 = vsel %vm5959, %v5889, %v3911
      %v6027 = vsel %vm5959, %v5890, %v3913
      %v6028 = vsel %vm5959, %v5891, %v3915
      %v6029 = vsel %vm5959, %v5892, %v3917
      %v6030 = vsel %vm5959, %v5893, %v3919
      %v6031 = vsel %vm5959, %v5894, %v3921
      %v6032 = vsel %vm5959, %v5895, %v3923
      %v6033 = vsel %vm5959, %v5896, %v3925
      %v6034 = vsel %vm5959, %v5897, %v3927
      %v6035 = vsel %vm5959, %v5898, %v3929
      %v6036 = vsel %vm5959, %v5899, %v3931
      %v6037 = vsel %vm5959, %v5900, %v3933
      %v6038 = vsel %vm5959, %v5901, %v3935
      %v6039 = vsel %vm5959, %v5902, %v3937
      %v6040 = vsel %vm5959, %v5903, %v3939
      %v6041 = vsel %vm5959, %v5904, %v3941
      %v6042 = vsel %vm5959, %v5905, %v3943
      %v6043 = vsel %vm5959, %v5906, %v3945
      %v6044 = vsel %vm5959, %v5907, %v3947
      %v6045 = vsel %vm5959, %v5908, %v3949
      %v6046 = vsel %vm5959, %v5909, %v3951
      %v6047 = vsel %vm5959, %v5910, %v3953
      %v6048 = vsel %vm5959, %v5911, %v3955
      %v6049 = vsel %vm5959, %v5912, %v3957
      %v6050 = vsel %vm5959, %v5913, %v3959
      %v6051 = vsel %vm5959, %v5914, %v3961
      %v6052 = vsel %vm5959, %v5915, %v3963
      %v6053 = vsel %vm5959, %v5916, %v3965
      %v6054 = vsel %vm5959, %v5917, %v3967
      %v6055 = vsel %vm5959, %v5918, %v3969
      %v6056 = vsel %vm5959, %v5919, %v3971
      %v6057 = vsel %vm5959, %v5920, %v3973
      %v6058 = vsel %vm5959, %v5921, %v3975
      %v6059 = vsel %vm5959, %v5922, %v3977
      %v6060 = vsel %vm5959, %v5923, %v3979
      %v6061 = vsel %vm5959, %v5924, %v3981
      %v6062 = vsel %vm5959, %v5925, %v3983
      %v6063 = vsel %vm5959, %v5926, %v3985
      %v6064 = vsel %vm5959, %v5927, %v3987
      %v6065 = vsel %vm5959, %v5928, %v3989
      %v6066 = vsel %vm5959, %v5929, %v3991
      %v6067 = vsel %vm5959, %v5930, %v3993
      %v6068 = vsel %vm5959, %v5931, %v3995
      %v6069 = vsel %vm5959, %v5932, %v3997
      %v6070 = vsel %vm5959, %v5933, %v3999
      %v6071 = vsel %vm5959, %v5934, %v4001
      %v6072 = vsel %vm5959, %v5935, %v4003
      %v6073 = vsel %vm5959, %v5936, %v4005
      %v6074 = vsel %vm5959, %v5937, %v4007
      %v6075 = vsel %vm5959, %v5938, %v4009
      %v6076 = vsel %vm5959, %v5939, %v4011
      %v6077 = vsel %vm5959, %v5940, %v4013
      %v6078 = vsel %vm5959, %v5941, %v4015
      %v6079 = vsel %vm5959, %v5942, %v4017
      %v6080 = vsel %vm5959, %v5943, %v4019
      %v6081 = vsel %vm5959, %v5944, %v4021
      %v6082 = vsel %vm5959, %v5945, %v4023
      %v6083 = vsel %vm5959, %v5946, %v4025
      %v6084 = vsel %vm5959, %v5947, %v4027
      %v6085 = vsel %vm5959, %v5948, %v4029
      %v6086 = vsel %vm5959, %v5949, %v4031
      %v6087 = vsel %vm5959, %v5950, %v4033
      %v6088 = vsel %vm5959, %v5951, %v4035
      %v6089 = vsel %vm5959, %v5952, %v4037
      %v6090 = vsel %vm5959, %v5953, %v4039
      %v6091 = vsel %vm5959, %v5954, %v4041
      %v6092 = vsel %vm5959, %v5955, %v4043
      %v6093 = vsel %vm5959, %v5956, %v4045
      %v6094 = vsel %vm5959, %v5957, %v4047
      %v6095 = vsel %vm5959, %v5958, %v4049
      %vm6096 = vcmask 171008
      %v6097 = vsel %vm6096, %v5960, %v4323
      %v6098 = vsel %vm6096, %v5961, %v4325
      %v6099 = vsel %vm6096, %v5962, %v4327
      %v6100 = vsel %vm6096, %v5963, %v4329
      %v6101 = vsel %vm6096, %v5964, %v4331
      %v6102 = vsel %vm6096, %v5965, %v4333
      %v6103 = vsel %vm6096, %v5966, %v4335
      %v6104 = vsel %vm6096, %v5967, %v4337
      %v6105 = vsel %vm6096, %v5968, %v4339
      %v6106 = vsel %vm6096, %v5969, %v4341
      %v6107 = vsel %vm6096, %v5970, %v4343
      %v6108 = vsel %vm6096, %v5971, %v4345
      %v6109 = vsel %vm6096, %v5972, %v4347
      %v6110 = vsel %vm6096, %v5973, %v4349
      %v6111 = vsel %vm6096, %v5974, %v4351
      %v6112 = vsel %vm6096, %v5975, %v4353
      %v6113 = vsel %vm6096, %v5976, %v4355
      %v6114 = vsel %vm6096, %v5977, %v4357
      %v6115 = vsel %vm6096, %v5978, %v4359
      %v6116 = vsel %vm6096, %v5979, %v4361
      %v6117 = vsel %vm6096, %v5980, %v4363
      %v6118 = vsel %vm6096, %v5981, %v4365
      %v6119 = vsel %vm6096, %v5982, %v4367
      %v6120 = vsel %vm6096, %v5983, %v4369
      %v6121 = vsel %vm6096, %v5984, %v4371
      %v6122 = vsel %vm6096, %v5985, %v4373
      %v6123 = vsel %vm6096, %v5986, %v4375
      %v6124 = vsel %vm6096, %v5987, %v4377
      %v6125 = vsel %vm6096, %v5988, %v4379
      %v6126 = vsel %vm6096, %v5989, %v4381
      %v6127 = vsel %vm6096, %v5990, %v4383
      %v6128 = vsel %vm6096, %v5991, %v4385
      %v6129 = vsel %vm6096, %v5992, %v4387
      %v6130 = vsel %vm6096, %v5993, %v4389
      %v6131 = vsel %vm6096, %v5994, %v4391
      %v6132 = vsel %vm6096, %v5995, %v4393
      %v6133 = vsel %vm6096, %v5996, %v4395
      %v6134 = vsel %vm6096, %v5997, %v4397
      %v6135 = vsel %vm6096, %v5998, %v4399
      %v6136 = vsel %vm6096, %v5999, %v4401
      %v6137 = vsel %vm6096, %v6000, %v4403
      %v6138 = vsel %vm6096, %v6001, %v4405
      %v6139 = vsel %vm6096, %v6002, %v4407
      %v6140 = vsel %vm6096, %v6003, %v4409
      %v6141 = vsel %vm6096, %v6004, %v4411
      %v6142 = vsel %vm6096, %v6005, %v4413
      %v6143 = vsel %vm6096, %v6006, %v4415
      %v6144 = vsel %vm6096, %v6007, %v4417
      %v6145 = vsel %vm6096, %v6008, %v4419
      %v6146 = vsel %vm6096, %v6009, %v4421
      %v6147 = vsel %vm6096, %v6010, %v4423
      %v6148 = vsel %vm6096, %v6011, %v4425
      %v6149 = vsel %vm6096, %v6012, %v4427
      %v6150 = vsel %vm6096, %v6013, %v4429
      %v6151 = vsel %vm6096, %v6014, %v4431
      %v6152 = vsel %vm6096, %v6015, %v4433
      %v6153 = vsel %vm6096, %v6016, %v4435
      %v6154 = vsel %vm6096, %v6017, %v4437
      %v6155 = vsel %vm6096, %v6018, %v4439
      %v6156 = vsel %vm6096, %v6019, %v4441
      %v6157 = vsel %vm6096, %v6020, %v4443
      %v6158 = vsel %vm6096, %v6021, %v4445
      %v6159 = vsel %vm6096, %v6022, %v4447
      %v6160 = vsel %vm6096, %v6023, %v4449
      %v6161 = vsel %vm6096, %v6024, %v4451
      %v6162 = vsel %vm6096, %v6025, %v4453
      %v6163 = vsel %vm6096, %v6026, %v4455
      %v6164 = vsel %vm6096, %v6027, %v4457
      %v6165 = vsel %vm6096, %v6028, %v4459
      %v6166 = vsel %vm6096, %v6029, %v4461
      %v6167 = vsel %vm6096, %v6030, %v4463
      %v6168 = vsel %vm6096, %v6031, %v4465
      %v6169 = vsel %vm6096, %v6032, %v4467
      %v6170 = vsel %vm6096, %v6033, %v4469
      %v6171 = vsel %vm6096, %v6034, %v4471
      %v6172 = vsel %vm6096, %v6035, %v4473
      %v6173 = vsel %vm6096, %v6036, %v4475
      %v6174 = vsel %vm6096, %v6037, %v4477
      %v6175 = vsel %vm6096, %v6038, %v4479
      %v6176 = vsel %vm6096, %v6039, %v4481
      %v6177 = vsel %vm6096, %v6040, %v4483
      %v6178 = vsel %vm6096, %v6041, %v4485
      %v6179 = vsel %vm6096, %v6042, %v4487
      %v6180 = vsel %vm6096, %v6043, %v4489
      %v6181 = vsel %vm6096, %v6044, %v4491
      %v6182 = vsel %vm6096, %v6045, %v4493
      %v6183 = vsel %vm6096, %v6046, %v4495
      %v6184 = vsel %vm6096, %v6047, %v4497
      %v6185 = vsel %vm6096, %v6048, %v4499
      %v6186 = vsel %vm6096, %v6049, %v4501
      %v6187 = vsel %vm6096, %v6050, %v4503
      %v6188 = vsel %vm6096, %v6051, %v4505
      %v6189 = vsel %vm6096, %v6052, %v4507
      %v6190 = vsel %vm6096, %v6053, %v4509
      %v6191 = vsel %vm6096, %v6054, %v4511
      %v6192 = vsel %vm6096, %v6055, %v4513
      %v6193 = vsel %vm6096, %v6056, %v4515
      %v6194 = vsel %vm6096, %v6057, %v4517
      %v6195 = vsel %vm6096, %v6058, %v4519
      %v6196 = vsel %vm6096, %v6059, %v4521
      %v6197 = vsel %vm6096, %v6060, %v4523
      %v6198 = vsel %vm6096, %v6061, %v4525
      %v6199 = vsel %vm6096, %v6062, %v4527
      %v6200 = vsel %vm6096, %v6063, %v4529
      %v6201 = vsel %vm6096, %v6064, %v4531
      %v6202 = vsel %vm6096, %v6065, %v4533
      %v6203 = vsel %vm6096, %v6066, %v4535
      %v6204 = vsel %vm6096, %v6067, %v4537
      %v6205 = vsel %vm6096, %v6068, %v4539
      %v6206 = vsel %vm6096, %v6069, %v4541
      %v6207 = vsel %vm6096, %v6070, %v4543
      %v6208 = vsel %vm6096, %v6071, %v4545
      %v6209 = vsel %vm6096, %v6072, %v4547
      %v6210 = vsel %vm6096, %v6073, %v4549
      %v6211 = vsel %vm6096, %v6074, %v4551
      %v6212 = vsel %vm6096, %v6075, %v4553
      %v6213 = vsel %vm6096, %v6076, %v4555
      %v6214 = vsel %vm6096, %v6077, %v4557
      %v6215 = vsel %vm6096, %v6078, %v4559
      %v6216 = vsel %vm6096, %v6079, %v4561
      %v6217 = vsel %vm6096, %v6080, %v4563
      %v6218 = vsel %vm6096, %v6081, %v4565
      %v6219 = vsel %vm6096, %v6082, %v4567
      %v6220 = vsel %vm6096, %v6083, %v4569
      %v6221 = vsel %vm6096, %v6084, %v4571
      %v6222 = vsel %vm6096, %v6085, %v4573
      %v6223 = vsel %vm6096, %v6086, %v4575
      %v6224 = vsel %vm6096, %v6087, %v4577
      %v6225 = vsel %vm6096, %v6088, %v4579
      %v6226 = vsel %vm6096, %v6089, %v4581
      %v6227 = vsel %vm6096, %v6090, %v4583
      %v6228 = vsel %vm6096, %v6091, %v4585
      %v6229 = vsel %vm6096, %v6092, %v4587
      %v6230 = vsel %vm6096, %v6093, %v4589
      %v6231 = vsel %vm6096, %v6094, %v4591
      %v6232 = vsel %vm6096, %v6095, %v4593
      %vm6233 = vcmask 195584
      %v6234 = vsel %vm6233, %v6097, %v4867
      %v6235 = vsel %vm6233, %v6098, %v4869
      %v6236 = vsel %vm6233, %v6099, %v4871
      %v6237 = vsel %vm6233, %v6100, %v4873
      %v6238 = vsel %vm6233, %v6101, %v4875
      %v6239 = vsel %vm6233, %v6102, %v4877
      %v6240 = vsel %vm6233, %v6103, %v4879
      %v6241 = vsel %vm6233, %v6104, %v4881
      %v6242 = vsel %vm6233, %v6105, %v4883
      %v6243 = vsel %vm6233, %v6106, %v4885
      %v6244 = vsel %vm6233, %v6107, %v4887
      %v6245 = vsel %vm6233, %v6108, %v4889
      %v6246 = vsel %vm6233, %v6109, %v4891
      %v6247 = vsel %vm6233, %v6110, %v4893
      %v6248 = vsel %vm6233, %v6111, %v4895
      %v6249 = vsel %vm6233, %v6112, %v4897
      %v6250 = vsel %vm6233, %v6113, %v4899
      %v6251 = vsel %vm6233, %v6114, %v4901
      %v6252 = vsel %vm6233, %v6115, %v4903
      %v6253 = vsel %vm6233, %v6116, %v4905
      %v6254 = vsel %vm6233, %v6117, %v4907
      %v6255 = vsel %vm6233, %v6118, %v4909
      %v6256 = vsel %vm6233, %v6119, %v4911
      %v6257 = vsel %vm6233, %v6120, %v4913
      %v6258 = vsel %vm6233, %v6121, %v4915
      %v6259 = vsel %vm6233, %v6122, %v4917
      %v6260 = vsel %vm6233, %v6123, %v4919
      %v6261 = vsel %vm6233, %v6124, %v4921
      %v6262 = vsel %vm6233, %v6125, %v4923
      %v6263 = vsel %vm6233, %v6126, %v4925
      %v6264 = vsel %vm6233, %v6127, %v4927
      %v6265 = vsel %vm6233, %v6128, %v4929
      %v6266 = vsel %vm6233, %v6129, %v4931
      %v6267 = vsel %vm6233, %v6130, %v4933
      %v6268 = vsel %vm6233, %v6131, %v4935
      %v6269 = vsel %vm6233, %v6132, %v4937
      %v6270 = vsel %vm6233, %v6133, %v4939
      %v6271 = vsel %vm6233, %v6134, %v4941
      %v6272 = vsel %vm6233, %v6135, %v4943
      %v6273 = vsel %vm6233, %v6136, %v4945
      %v6274 = vsel %vm6233, %v6137, %v4947
      %v6275 = vsel %vm6233, %v6138, %v4949
      %v6276 = vsel %vm6233, %v6139, %v4951
      %v6277 = vsel %vm6233, %v6140, %v4953
      %v6278 = vsel %vm6233, %v6141, %v4955
      %v6279 = vsel %vm6233, %v6142, %v4957
      %v6280 = vsel %vm6233, %v6143, %v4959
      %v6281 = vsel %vm6233, %v6144, %v4961
      %v6282 = vsel %vm6233, %v6145, %v4963
      %v6283 = vsel %vm6233, %v6146, %v4965
      %v6284 = vsel %vm6233, %v6147, %v4967
      %v6285 = vsel %vm6233, %v6148, %v4969
      %v6286 = vsel %vm6233, %v6149, %v4971
      %v6287 = vsel %vm6233, %v6150, %v4973
      %v6288 = vsel %vm6233, %v6151, %v4975
      %v6289 = vsel %vm6233, %v6152, %v4977
      %v6290 = vsel %vm6233, %v6153, %v4979
      %v6291 = vsel %vm6233, %v6154, %v4981
      %v6292 = vsel %vm6233, %v6155, %v4983
      %v6293 = vsel %vm6233, %v6156, %v4985
      %v6294 = vsel %vm6233, %v6157, %v4987
      %v6295 = vsel %vm6233, %v6158, %v4989
      %v6296 = vsel %vm6233, %v6159, %v4991
      %v6297 = vsel %vm6233, %v6160, %v4993
      %v6298 = vsel %vm6233, %v6161, %v4995
      %v6299 = vsel %vm6233, %v6162, %v4997
      %v6300 = vsel %vm6233, %v6163, %v4999
      %v6301 = vsel %vm6233, %v6164, %v5001
      %v6302 = vsel %vm6233, %v6165, %v5003
      %v6303 = vsel %vm6233, %v6166, %v5005
      %v6304 = vsel %vm6233, %v6167, %v5007
      %v6305 = vsel %vm6233, %v6168, %v5009
      %v6306 = vsel %vm6233, %v6169, %v5011
      %v6307 = vsel %vm6233, %v6170, %v5013
      %v6308 = vsel %vm6233, %v6171, %v5015
      %v6309 = vsel %vm6233, %v6172, %v5017
      %v6310 = vsel %vm6233, %v6173, %v5019
      %v6311 = vsel %vm6233, %v6174, %v5021
      %v6312 = vsel %vm6233, %v6175, %v5023
      %v6313 = vsel %vm6233, %v6176, %v5025
      %v6314 = vsel %vm6233, %v6177, %v5027
      %v6315 = vsel %vm6233, %v6178, %v5029
      %v6316 = vsel %vm6233, %v6179, %v5031
      %v6317 = vsel %vm6233, %v6180, %v5033
      %v6318 = vsel %vm6233, %v6181, %v5035
      %v6319 = vsel %vm6233, %v6182, %v5037
      %v6320 = vsel %vm6233, %v6183, %v5039
      %v6321 = vsel %vm6233, %v6184, %v5041
      %v6322 = vsel %vm6233, %v6185, %v5043
      %v6323 = vsel %vm6233, %v6186, %v5045
      %v6324 = vsel %vm6233, %v6187, %v5047
      %v6325 = vsel %vm6233, %v6188, %v5049
      %v6326 = vsel %vm6233, %v6189, %v5051
      %v6327 = vsel %vm6233, %v6190, %v5053
      %v6328 = vsel %vm6233, %v6191, %v5055
      %v6329 = vsel %vm6233, %v6192, %v5057
      %v6330 = vsel %vm6233, %v6193, %v5059
      %v6331 = vsel %vm6233, %v6194, %v5061
      %v6332 = vsel %vm6233, %v6195, %v5063
      %v6333 = vsel %vm6233, %v6196, %v5065
      %v6334 = vsel %vm6233, %v6197, %v5067
      %v6335 = vsel %vm6233, %v6198, %v5069
      %v6336 = vsel %vm6233, %v6199, %v5071
      %v6337 = vsel %vm6233, %v6200, %v5073
      %v6338 = vsel %vm6233, %v6201, %v5075
      %v6339 = vsel %vm6233, %v6202, %v5077
      %v6340 = vsel %vm6233, %v6203, %v5079
      %v6341 = vsel %vm6233, %v6204, %v5081
      %v6342 = vsel %vm6233, %v6205, %v5083
      %v6343 = vsel %vm6233, %v6206, %v5085
      %v6344 = vsel %vm6233, %v6207, %v5087
      %v6345 = vsel %vm6233, %v6208, %v5089
      %v6346 = vsel %vm6233, %v6209, %v5091
      %v6347 = vsel %vm6233, %v6210, %v5093
      %v6348 = vsel %vm6233, %v6211, %v5095
      %v6349 = vsel %vm6233, %v6212, %v5097
      %v6350 = vsel %vm6233, %v6213, %v5099
      %v6351 = vsel %vm6233, %v6214, %v5101
      %v6352 = vsel %vm6233, %v6215, %v5103
      %v6353 = vsel %vm6233, %v6216, %v5105
      %v6354 = vsel %vm6233, %v6217, %v5107
      %v6355 = vsel %vm6233, %v6218, %v5109
      %v6356 = vsel %vm6233, %v6219, %v5111
      %v6357 = vsel %vm6233, %v6220, %v5113
      %v6358 = vsel %vm6233, %v6221, %v5115
      %v6359 = vsel %vm6233, %v6222, %v5117
      %v6360 = vsel %vm6233, %v6223, %v5119
      %v6361 = vsel %vm6233, %v6224, %v5121
      %v6362 = vsel %vm6233, %v6225, %v5123
      %v6363 = vsel %vm6233, %v6226, %v5125
      %v6364 = vsel %vm6233, %v6227, %v5127
      %v6365 = vsel %vm6233, %v6228, %v5129
      %v6366 = vsel %vm6233, %v6229, %v5131
      %v6367 = vsel %vm6233, %v6230, %v5133
      %v6368 = vsel %vm6233, %v6231, %v5135
      %v6369 = vsel %vm6233, %v6232, %v5137
      %v6370 = vpack.c.bf16 %v6235, %v6234
      %v6371 = vpack.c.bf16 %v6237, %v6236
      %v6372 = vpack.c.bf16 %v6239, %v6238
      %v6373 = vpack.c.bf16 %v6241, %v6240
      %v6374 = vpack.c.bf16 %v6243, %v6242
      %v6375 = vpack.c.bf16 %v6245, %v6244
      %v6376 = vpack.c.bf16 %v6247, %v6246
      %v6377 = vpack.c.bf16 %v6249, %v6248
      %v6378 = vpack.c.bf16 %v6251, %v6250
      %v6379 = vpack.c.bf16 %v6253, %v6252
      %v6380 = vpack.c.bf16 %v6255, %v6254
      %v6381 = vpack.c.bf16 %v6257, %v6256
      %v6382 = vpack.c.bf16 %v6259, %v6258
      %v6383 = vpack.c.bf16 %v6261, %v6260
      %v6384 = vpack.c.bf16 %v6263, %v6262
      %v6385 = vpack.c.bf16 %v6265, %v6264
      %v6386 = vpack.c.bf16 %v6267, %v6266
      %v6387 = vpack.c.bf16 %v6269, %v6268
      %v6388 = vpack.c.bf16 %v6271, %v6270
      %v6389 = vpack.c.bf16 %v6273, %v6272
      %v6390 = vpack.c.bf16 %v6275, %v6274
      %v6391 = vpack.c.bf16 %v6277, %v6276
      %v6392 = vpack.c.bf16 %v6279, %v6278
      %v6393 = vpack.c.bf16 %v6281, %v6280
      %v6394 = vpack.c.bf16 %v6283, %v6282
      %v6395 = vpack.c.bf16 %v6285, %v6284
      %v6396 = vpack.c.bf16 %v6287, %v6286
      %v6397 = vpack.c.bf16 %v6289, %v6288
      %v6398 = vpack.c.bf16 %v6291, %v6290
      %v6399 = vpack.c.bf16 %v6293, %v6292
      %v6400 = vpack.c.bf16 %v6295, %v6294
      %v6401 = vpack.c.bf16 %v6297, %v6296
      %v6402 = vpack.c.bf16 %v6299, %v6298
      %v6403 = vpack.c.bf16 %v6301, %v6300
      %v6404 = vpack.c.bf16 %v6303, %v6302
      %v6405 = vpack.c.bf16 %v6305, %v6304
      %v6406 = vpack.c.bf16 %v6307, %v6306
      %v6407 = vpack.c.bf16 %v6309, %v6308
      %v6408 = vpack.c.bf16 %v6311, %v6310
      %v6409 = vpack.c.bf16 %v6313, %v6312
      %v6410 = vpack.c.bf16 %v6315, %v6314
      %v6411 = vpack.c.bf16 %v6317, %v6316
      %v6412 = vpack.c.bf16 %v6319, %v6318
      %v6413 = vpack.c.bf16 %v6321, %v6320
      %v6414 = vpack.c.bf16 %v6323, %v6322
      %v6415 = vpack.c.bf16 %v6325, %v6324
      %v6416 = vpack.c.bf16 %v6327, %v6326
      %v6417 = vpack.c.bf16 %v6329, %v6328
      %v6418 = vpack.c.bf16 %v6331, %v6330
      %v6419 = vpack.c.bf16 %v6333, %v6332
      %v6420 = vpack.c.bf16 %v6335, %v6334
      %v6421 = vpack.c.bf16 %v6337, %v6336
      %v6422 = vpack.c.bf16 %v6339, %v6338
      %v6423 = vpack.c.bf16 %v6341, %v6340
      %v6424 = vpack.c.bf16 %v6343, %v6342
      %v6425 = vpack.c.bf16 %v6345, %v6344
      %v6426 = vpack.c.bf16 %v6347, %v6346
      %v6427 = vpack.c.bf16 %v6349, %v6348
      %v6428 = vpack.c.bf16 %v6351, %v6350
      %v6429 = vpack.c.bf16 %v6353, %v6352
      %v6430 = vpack.c.bf16 %v6355, %v6354
      %v6431 = vpack.c.bf16 %v6357, %v6356
      %v6432 = vpack.c.bf16 %v6359, %v6358
      %v6433 = vpack.c.bf16 %v6361, %v6360
      %v6434 = vpack.c.bf16 %v6363, %v6362
      %v6435 = vpack.c.bf16 %v6365, %v6364
      %v6436 = vpack.c.bf16 %v6367, %v6366
      %v6437 = vpack.c.bf16 %v6369, %v6368
      %v6438 = vld [vmem:[%s1] sm:$0xf]
      %v6439 = vld [vmem:[%s1 + $0x4] sm:$0xf]
      %v6440 = vld [vmem:[%s1 + $0x8] sm:$0xf]
      %v6441 = vld [vmem:[%s1 + $0xc] sm:$0x3]
      %v6442 = vld [vmem:[%s2] sm:$0x1]
      %v6444 = vperm.slane %v6442, 0
      %v6450 = vunpack.c.l.b16 %v6438
      %v6451 = vunpack.c.l.b16 %v6439
      %v6452 = vunpack.c.l.b16 %v6440
      %v6453 = vunpack.c.l.b16 %v6441
      %v6454 = vpack.c.b16 %v6451, %v6450
      %v6455 = vpack.c.b16 %v6453, %v6452
      %vm6457 = vcmask 220160
      %v6459 = vsel %vm6457, %v6370, 0
      %v6462 = vsel %vm6457, %v6371, 0
      %v6465 = vsel %vm6457, %v6372, 0
      %v6468 = vsel %vm6457, %v6373, 0
      %v6471 = vsel %vm6457, %v6374, 0
      %v6474 = vsel %vm6457, %v6375, 0
      %v6477 = vsel %vm6457, %v6376, 0
      %v6480 = vsel %vm6457, %v6377, 0
      %v6483 = vsel %vm6457, %v6378, 0
      %v6486 = vsel %vm6457, %v6379, 0
      %v6489 = vsel %vm6457, %v6380, 0
      %v6492 = vsel %vm6457, %v6381, 0
      %v6495 = vsel %vm6457, %v6382, 0
      %v6498 = vsel %vm6457, %v6383, 0
      %v6501 = vsel %vm6457, %v6384, 0
      %v6504 = vsel %vm6457, %v6385, 0
      %v6507 = vsel %vm6457, %v6386, 0
      %v6510 = vsel %vm6457, %v6387, 0
      %v6513 = vsel %vm6457, %v6388, 0
      %v6516 = vsel %vm6457, %v6389, 0
      %v6519 = vsel %vm6457, %v6390, 0
      %v6522 = vsel %vm6457, %v6391, 0
      %v6525 = vsel %vm6457, %v6392, 0
      %v6528 = vsel %vm6457, %v6393, 0
      %v6531 = vsel %vm6457, %v6394, 0
      %v6534 = vsel %vm6457, %v6395, 0
      %v6537 = vsel %vm6457, %v6396, 0
      %v6540 = vsel %vm6457, %v6397, 0
      %v6543 = vsel %vm6457, %v6398, 0
      %v6546 = vsel %vm6457, %v6399, 0
      %v6549 = vsel %vm6457, %v6400, 0
      %v6552 = vsel %vm6457, %v6401, 0
      %v6555 = vsel %vm6457, %v6402, 0
      %v6558 = vsel %vm6457, %v6403, 0
      %v6561 = vsel %vm6457, %v6404, 0
      %v6564 = vsel %vm6457, %v6405, 0
      %v6567 = vsel %vm6457, %v6406, 0
      %v6570 = vsel %vm6457, %v6407, 0
      %v6573 = vsel %vm6457, %v6408, 0
      %v6576 = vsel %vm6457, %v6409, 0
      %v6579 = vsel %vm6457, %v6410, 0
      %v6582 = vsel %vm6457, %v6411, 0
      %v6585 = vsel %vm6457, %v6412, 0
      %v6588 = vsel %vm6457, %v6413, 0
      %v6591 = vsel %vm6457, %v6414, 0
      %v6594 = vsel %vm6457, %v6415, 0
      %v6597 = vsel %vm6457, %v6416, 0
      %v6600 = vsel %vm6457, %v6417, 0
      %v6603 = vsel %vm6457, %v6418, 0
      %v6606 = vsel %vm6457, %v6419, 0
      %v6609 = vsel %vm6457, %v6420, 0
      %v6612 = vsel %vm6457, %v6421, 0
      %v6615 = vsel %vm6457, %v6422, 0
      %v6618 = vsel %vm6457, %v6423, 0
      %v6621 = vsel %vm6457, %v6424, 0
      %v6624 = vsel %vm6457, %v6425, 0
      %v6627 = vsel %vm6457, %v6426, 0
      %v6630 = vsel %vm6457, %v6427, 0
      %v6633 = vsel %vm6457, %v6428, 0
      %v6636 = vsel %vm6457, %v6429, 0
      %v6639 = vsel %vm6457, %v6430, 0
      %v6642 = vsel %vm6457, %v6431, 0
      %v6645 = vsel %vm6457, %v6432, 0
      %v6648 = vsel %vm6457, %v6433, 0
      %v6651 = vsel %vm6457, %v6434, 0
      %v6654 = vsel %vm6457, %v6435, 0
      %v6657 = vsel %vm6457, %v6436, 0
      %v6660 = vsel %vm6457, %v6437, 0
      %vm6662 = vcmask 1044480
      %vm6663 = vcmask 1045504
      %v6664 = vsel %vm6662, 4294967295, 65535
      %v6665 = vsel %vm6663, %v6664, 0
      %v6667 = vand.u32 %v6455, %v6665
      %6669 = vmatpush.bf16.msra.mxu0 0
      %6670 = vmatpush.bf16.msra.mxu0 0
      %6671 = vmatpush.bf16.msra.mxu0 0
      %6672 = vmatpush.bf16.msra.mxu0 0
      %6673 = vmatpush.bf16.msra.mxu0 0
      %6674 = vmatpush.bf16.msra.mxu0 0
      %6675 = vmatpush.bf16.msra.mxu0 %v6667
      %6676 = vmatpush.bf16.msra.mxu0 %v6454
      %6677 = vmatmul.bf16.gmra.mxu0 %v6459
      %v6678 = vpop.f32.mrf.mxu0
      %v6679 = vadd.f32 %v6444, %v6678
      %v6680 = vpop.f32.mrf.mxu0
      %v6681 = vadd.f32 %v6444, %v6680
      %6682 = vmatmul.bf16.gmra.mxu0 %v6462
      %v6683 = vpop.f32.mrf.mxu0
      %v6684 = vadd.f32 %v6444, %v6683
      %v6685 = vpop.f32.mrf.mxu0
      %v6686 = vadd.f32 %v6444, %v6685
      %6687 = vmatmul.bf16.gmra.mxu0 %v6465
      %v6688 = vpop.f32.mrf.mxu0
      %v6689 = vadd.f32 %v6444, %v6688
      %v6690 = vpop.f32.mrf.mxu0
      %v6691 = vadd.f32 %v6444, %v6690
      %6692 = vmatmul.bf16.gmra.mxu0 %v6468
      %v6693 = vpop.f32.mrf.mxu0
      %v6694 = vadd.f32 %v6444, %v6693
      %v6695 = vpop.f32.mrf.mxu0
      %v6696 = vadd.f32 %v6444, %v6695
      %6697 = vmatmul.bf16.gmra.mxu0 %v6471
      %v6698 = vpop.f32.mrf.mxu0
      %v6699 = vadd.f32 %v6444, %v6698
      %v6700 = vpop.f32.mrf.mxu0
      %v6701 = vadd.f32 %v6444, %v6700
      %6702 = vmatmul.bf16.gmra.mxu0 %v6474
      %v6703 = vpop.f32.mrf.mxu0
      %v6704 = vadd.f32 %v6444, %v6703
      %v6705 = vpop.f32.mrf.mxu0
      %v6706 = vadd.f32 %v6444, %v6705
      %6707 = vmatmul.bf16.gmra.mxu0 %v6477
      %v6708 = vpop.f32.mrf.mxu0
      %v6709 = vadd.f32 %v6444, %v6708
      %v6710 = vpop.f32.mrf.mxu0
      %v6711 = vadd.f32 %v6444, %v6710
      %6712 = vmatmul.bf16.gmra.mxu0 %v6480
      %v6713 = vpop.f32.mrf.mxu0
      %v6714 = vadd.f32 %v6444, %v6713
      %v6715 = vpop.f32.mrf.mxu0
      %v6716 = vadd.f32 %v6444, %v6715
      %6717 = vmatmul.bf16.gmra.mxu0 %v6483
      %v6718 = vpop.f32.mrf.mxu0
      %v6719 = vadd.f32 %v6444, %v6718
      %v6720 = vpop.f32.mrf.mxu0
      %v6721 = vadd.f32 %v6444, %v6720
      %6722 = vmatmul.bf16.gmra.mxu0 %v6486
      %v6723 = vpop.f32.mrf.mxu0
      %v6724 = vadd.f32 %v6444, %v6723
      %v6725 = vpop.f32.mrf.mxu0
      %v6726 = vadd.f32 %v6444, %v6725
      %6727 = vmatmul.bf16.gmra.mxu0 %v6489
      %v6728 = vpop.f32.mrf.mxu0
      %v6729 = vadd.f32 %v6444, %v6728
      %v6730 = vpop.f32.mrf.mxu0
      %v6731 = vadd.f32 %v6444, %v6730
      %6732 = vmatmul.bf16.gmra.mxu0 %v6492
      %v6733 = vpop.f32.mrf.mxu0
      %v6734 = vadd.f32 %v6444, %v6733
      %v6735 = vpop.f32.mrf.mxu0
      %v6736 = vadd.f32 %v6444, %v6735
      %6737 = vmatmul.bf16.gmra.mxu0 %v6495
      %v6738 = vpop.f32.mrf.mxu0
      %v6739 = vadd.f32 %v6444, %v6738
      %v6740 = vpop.f32.mrf.mxu0
      %v6741 = vadd.f32 %v6444, %v6740
      %6742 = vmatmul.bf16.gmra.mxu0 %v6498
      %v6743 = vpop.f32.mrf.mxu0
      %v6744 = vadd.f32 %v6444, %v6743
      %v6745 = vpop.f32.mrf.mxu0
      %v6746 = vadd.f32 %v6444, %v6745
      %6747 = vmatmul.bf16.gmra.mxu0 %v6501
      %v6748 = vpop.f32.mrf.mxu0
      %v6749 = vadd.f32 %v6444, %v6748
      %v6750 = vpop.f32.mrf.mxu0
      %v6751 = vadd.f32 %v6444, %v6750
      %6752 = vmatmul.bf16.gmra.mxu0 %v6504
      %v6753 = vpop.f32.mrf.mxu0
      %v6754 = vadd.f32 %v6444, %v6753
      %v6755 = vpop.f32.mrf.mxu0
      %v6756 = vadd.f32 %v6444, %v6755
      %6757 = vmatmul.bf16.gmra.mxu0 %v6507
      %v6758 = vpop.f32.mrf.mxu0
      %v6759 = vadd.f32 %v6444, %v6758
      %v6760 = vpop.f32.mrf.mxu0
      %v6761 = vadd.f32 %v6444, %v6760
      %6762 = vmatmul.bf16.gmra.mxu0 %v6510
      %v6763 = vpop.f32.mrf.mxu0
      %v6764 = vadd.f32 %v6444, %v6763
      %v6765 = vpop.f32.mrf.mxu0
      %v6766 = vadd.f32 %v6444, %v6765
      %6767 = vmatmul.bf16.gmra.mxu0 %v6513
      %v6768 = vpop.f32.mrf.mxu0
      %v6769 = vadd.f32 %v6444, %v6768
      %v6770 = vpop.f32.mrf.mxu0
      %v6771 = vadd.f32 %v6444, %v6770
      %6772 = vmatmul.bf16.gmra.mxu0 %v6516
      %v6773 = vpop.f32.mrf.mxu0
      %v6774 = vadd.f32 %v6444, %v6773
      %v6775 = vpop.f32.mrf.mxu0
      %v6776 = vadd.f32 %v6444, %v6775
      %6777 = vmatmul.bf16.gmra.mxu0 %v6519
      %v6778 = vpop.f32.mrf.mxu0
      %v6779 = vadd.f32 %v6444, %v6778
      %v6780 = vpop.f32.mrf.mxu0
      %v6781 = vadd.f32 %v6444, %v6780
      %6782 = vmatmul.bf16.gmra.mxu0 %v6522
      %v6783 = vpop.f32.mrf.mxu0
      %v6784 = vadd.f32 %v6444, %v6783
      %v6785 = vpop.f32.mrf.mxu0
      %v6786 = vadd.f32 %v6444, %v6785
      %6787 = vmatmul.bf16.gmra.mxu0 %v6525
      %v6788 = vpop.f32.mrf.mxu0
      %v6789 = vadd.f32 %v6444, %v6788
      %v6790 = vpop.f32.mrf.mxu0
      %v6791 = vadd.f32 %v6444, %v6790
      %6792 = vmatmul.bf16.gmra.mxu0 %v6528
      %v6793 = vpop.f32.mrf.mxu0
      %v6794 = vadd.f32 %v6444, %v6793
      %v6795 = vpop.f32.mrf.mxu0
      %v6796 = vadd.f32 %v6444, %v6795
      %6797 = vmatmul.bf16.gmra.mxu0 %v6531
      %v6798 = vpop.f32.mrf.mxu0
      %v6799 = vadd.f32 %v6444, %v6798
      %v6800 = vpop.f32.mrf.mxu0
      %v6801 = vadd.f32 %v6444, %v6800
      %6802 = vmatmul.bf16.gmra.mxu0 %v6534
      %v6803 = vpop.f32.mrf.mxu0
      %v6804 = vadd.f32 %v6444, %v6803
      %v6805 = vpop.f32.mrf.mxu0
      %v6806 = vadd.f32 %v6444, %v6805
      %6807 = vmatmul.bf16.gmra.mxu0 %v6537
      %v6808 = vpop.f32.mrf.mxu0
      %v6809 = vadd.f32 %v6444, %v6808
      %v6810 = vpop.f32.mrf.mxu0
      %v6811 = vadd.f32 %v6444, %v6810
      %6812 = vmatmul.bf16.gmra.mxu0 %v6540
      %v6813 = vpop.f32.mrf.mxu0
      %v6814 = vadd.f32 %v6444, %v6813
      %v6815 = vpop.f32.mrf.mxu0
      %v6816 = vadd.f32 %v6444, %v6815
      %6817 = vmatmul.bf16.gmra.mxu0 %v6543
      %v6818 = vpop.f32.mrf.mxu0
      %v6819 = vadd.f32 %v6444, %v6818
      %v6820 = vpop.f32.mrf.mxu0
      %v6821 = vadd.f32 %v6444, %v6820
      %6822 = vmatmul.bf16.gmra.mxu0 %v6546
      %v6823 = vpop.f32.mrf.mxu0
      %v6824 = vadd.f32 %v6444, %v6823
      %v6825 = vpop.f32.mrf.mxu0
      %v6826 = vadd.f32 %v6444, %v6825
      %6827 = vmatmul.bf16.gmra.mxu0 %v6549
      %v6828 = vpop.f32.mrf.mxu0
      %v6829 = vadd.f32 %v6444, %v6828
      %v6830 = vpop.f32.mrf.mxu0
      %v6831 = vadd.f32 %v6444, %v6830
      %6832 = vmatmul.bf16.gmra.mxu0 %v6552
      %v6833 = vpop.f32.mrf.mxu0
      %v6834 = vadd.f32 %v6444, %v6833
      %v6835 = vpop.f32.mrf.mxu0
      %v6836 = vadd.f32 %v6444, %v6835
      %6837 = vmatmul.bf16.gmra.mxu0 %v6555
      %v6838 = vpop.f32.mrf.mxu0
      %v6839 = vadd.f32 %v6444, %v6838
      %v6840 = vpop.f32.mrf.mxu0
      %v6841 = vadd.f32 %v6444, %v6840
      %6842 = vmatmul.bf16.gmra.mxu0 %v6558
      %v6843 = vpop.f32.mrf.mxu0
      %v6844 = vadd.f32 %v6444, %v6843
      %v6845 = vpop.f32.mrf.mxu0
      %v6846 = vadd.f32 %v6444, %v6845
      %6847 = vmatmul.bf16.gmra.mxu0 %v6561
      %v6848 = vpop.f32.mrf.mxu0
      %v6849 = vadd.f32 %v6444, %v6848
      %v6850 = vpop.f32.mrf.mxu0
      %v6851 = vadd.f32 %v6444, %v6850
      %6852 = vmatmul.bf16.gmra.mxu0 %v6564
      %v6853 = vpop.f32.mrf.mxu0
      %v6854 = vadd.f32 %v6444, %v6853
      %v6855 = vpop.f32.mrf.mxu0
      %v6856 = vadd.f32 %v6444, %v6855
      %6857 = vmatmul.bf16.gmra.mxu0 %v6567
      %v6858 = vpop.f32.mrf.mxu0
      %v6859 = vadd.f32 %v6444, %v6858
      %v6860 = vpop.f32.mrf.mxu0
      %v6861 = vadd.f32 %v6444, %v6860
      %6862 = vmatmul.bf16.gmra.mxu0 %v6570
      %v6863 = vpop.f32.mrf.mxu0
      %v6864 = vadd.f32 %v6444, %v6863
      %v6865 = vpop.f32.mrf.mxu0
      %v6866 = vadd.f32 %v6444, %v6865
      %6867 = vmatmul.bf16.gmra.mxu0 %v6573
      %v6868 = vpop.f32.mrf.mxu0
      %v6869 = vadd.f32 %v6444, %v6868
      %v6870 = vpop.f32.mrf.mxu0
      %v6871 = vadd.f32 %v6444, %v6870
      %6872 = vmatmul.bf16.gmra.mxu0 %v6576
      %v6873 = vpop.f32.mrf.mxu0
      %v6874 = vadd.f32 %v6444, %v6873
      %v6875 = vpop.f32.mrf.mxu0
      %v6876 = vadd.f32 %v6444, %v6875
      %6877 = vmatmul.bf16.gmra.mxu0 %v6579
      %v6878 = vpop.f32.mrf.mxu0
      %v6879 = vadd.f32 %v6444, %v6878
      %v6880 = vpop.f32.mrf.mxu0
      %v6881 = vadd.f32 %v6444, %v6880
      %6882 = vmatmul.bf16.gmra.mxu0 %v6582
      %v6883 = vpop.f32.mrf.mxu0
      %v6884 = vadd.f32 %v6444, %v6883
      %v6885 = vpop.f32.mrf.mxu0
      %v6886 = vadd.f32 %v6444, %v6885
      %6887 = vmatmul.bf16.gmra.mxu0 %v6585
      %v6888 = vpop.f32.mrf.mxu0
      %v6889 = vadd.f32 %v6444, %v6888
      %v6890 = vpop.f32.mrf.mxu0
      %v6891 = vadd.f32 %v6444, %v6890
      %6892 = vmatmul.bf16.gmra.mxu0 %v6588
      %v6893 = vpop.f32.mrf.mxu0
      %v6894 = vadd.f32 %v6444, %v6893
      %v6895 = vpop.f32.mrf.mxu0
      %v6896 = vadd.f32 %v6444, %v6895
      %6897 = vmatmul.bf16.gmra.mxu0 %v6591
      %v6898 = vpop.f32.mrf.mxu0
      %v6899 = vadd.f32 %v6444, %v6898
      %v6900 = vpop.f32.mrf.mxu0
      %v6901 = vadd.f32 %v6444, %v6900
      %6902 = vmatmul.bf16.gmra.mxu0 %v6594
      %v6903 = vpop.f32.mrf.mxu0
      %v6904 = vadd.f32 %v6444, %v6903
      %v6905 = vpop.f32.mrf.mxu0
      %v6906 = vadd.f32 %v6444, %v6905
      %6907 = vmatmul.bf16.gmra.mxu0 %v6597
      %v6908 = vpop.f32.mrf.mxu0
      %v6909 = vadd.f32 %v6444, %v6908
      %v6910 = vpop.f32.mrf.mxu0
      %v6911 = vadd.f32 %v6444, %v6910
      %6912 = vmatmul.bf16.gmra.mxu0 %v6600
      %v6913 = vpop.f32.mrf.mxu0
      %v6914 = vadd.f32 %v6444, %v6913
      %v6915 = vpop.f32.mrf.mxu0
      %v6916 = vadd.f32 %v6444, %v6915
      %6917 = vmatmul.bf16.gmra.mxu0 %v6603
      %v6918 = vpop.f32.mrf.mxu0
      %v6919 = vadd.f32 %v6444, %v6918
      %v6920 = vpop.f32.mrf.mxu0
      %v6921 = vadd.f32 %v6444, %v6920
      %6922 = vmatmul.bf16.gmra.mxu0 %v6606
      %v6923 = vpop.f32.mrf.mxu0
      %v6924 = vadd.f32 %v6444, %v6923
      %v6925 = vpop.f32.mrf.mxu0
      %v6926 = vadd.f32 %v6444, %v6925
      %6927 = vmatmul.bf16.gmra.mxu0 %v6609
      %v6928 = vpop.f32.mrf.mxu0
      %v6929 = vadd.f32 %v6444, %v6928
      %v6930 = vpop.f32.mrf.mxu0
      %v6931 = vadd.f32 %v6444, %v6930
      %6932 = vmatmul.bf16.gmra.mxu0 %v6612
      %v6933 = vpop.f32.mrf.mxu0
      %v6934 = vadd.f32 %v6444, %v6933
      %v6935 = vpop.f32.mrf.mxu0
      %v6936 = vadd.f32 %v6444, %v6935
      %6937 = vmatmul.bf16.gmra.mxu0 %v6615
      %v6938 = vpop.f32.mrf.mxu0
      %v6939 = vadd.f32 %v6444, %v6938
      %v6940 = vpop.f32.mrf.mxu0
      %v6941 = vadd.f32 %v6444, %v6940
      %6942 = vmatmul.bf16.gmra.mxu0 %v6618
      %v6943 = vpop.f32.mrf.mxu0
      %v6944 = vadd.f32 %v6444, %v6943
      %v6945 = vpop.f32.mrf.mxu0
      %v6946 = vadd.f32 %v6444, %v6945
      %6947 = vmatmul.bf16.gmra.mxu0 %v6621
      %v6948 = vpop.f32.mrf.mxu0
      %v6949 = vadd.f32 %v6444, %v6948
      %v6950 = vpop.f32.mrf.mxu0
      %v6951 = vadd.f32 %v6444, %v6950
      %6952 = vmatmul.bf16.gmra.mxu0 %v6624
      %v6953 = vpop.f32.mrf.mxu0
      %v6954 = vadd.f32 %v6444, %v6953
      %v6955 = vpop.f32.mrf.mxu0
      %v6956 = vadd.f32 %v6444, %v6955
      %6957 = vmatmul.bf16.gmra.mxu0 %v6627
      %v6958 = vpop.f32.mrf.mxu0
      %v6959 = vadd.f32 %v6444, %v6958
      %v6960 = vpop.f32.mrf.mxu0
      %v6961 = vadd.f32 %v6444, %v6960
      %6962 = vmatmul.bf16.gmra.mxu0 %v6630
      %v6963 = vpop.f32.mrf.mxu0
      %v6964 = vadd.f32 %v6444, %v6963
      %v6965 = vpop.f32.mrf.mxu0
      %v6966 = vadd.f32 %v6444, %v6965
      %6967 = vmatmul.bf16.gmra.mxu0 %v6633
      %v6968 = vpop.f32.mrf.mxu0
      %v6969 = vadd.f32 %v6444, %v6968
      %v6970 = vpop.f32.mrf.mxu0
      %v6971 = vadd.f32 %v6444, %v6970
      %6972 = vmatmul.bf16.gmra.mxu0 %v6636
      %v6973 = vpop.f32.mrf.mxu0
      %v6974 = vadd.f32 %v6444, %v6973
      %v6975 = vpop.f32.mrf.mxu0
      %v6976 = vadd.f32 %v6444, %v6975
      %6977 = vmatmul.bf16.gmra.mxu0 %v6639
      %v6978 = vpop.f32.mrf.mxu0
      %v6979 = vadd.f32 %v6444, %v6978
      %v6980 = vpop.f32.mrf.mxu0
      %v6981 = vadd.f32 %v6444, %v6980
      %6982 = vmatmul.bf16.gmra.mxu0 %v6642
      %v6983 = vpop.f32.mrf.mxu0
      %v6984 = vadd.f32 %v6444, %v6983
      %v6985 = vpop.f32.mrf.mxu0
      %v6986 = vadd.f32 %v6444, %v6985
      %6987 = vmatmul.bf16.gmra.mxu0 %v6645
      %v6988 = vpop.f32.mrf.mxu0
      %v6989 = vadd.f32 %v6444, %v6988
      %v6990 = vpop.f32.mrf.mxu0
      %v6991 = vadd.f32 %v6444, %v6990
      %6992 = vmatmul.bf16.gmra.mxu0 %v6648
      %v6993 = vpop.f32.mrf.mxu0
      %v6994 = vadd.f32 %v6444, %v6993
      %v6995 = vpop.f32.mrf.mxu0
      %v6996 = vadd.f32 %v6444, %v6995
      %6997 = vmatmul.bf16.gmra.mxu0 %v6651
      %v6998 = vpop.f32.mrf.mxu0
      %v6999 = vadd.f32 %v6444, %v6998
      %v7000 = vpop.f32.mrf.mxu0
      %v7001 = vadd.f32 %v6444, %v7000
      %7002 = vmatmul.bf16.gmra.mxu0 %v6654
      %v7003 = vpop.f32.mrf.mxu0
      %v7004 = vadd.f32 %v6444, %v7003
      %v7005 = vpop.f32.mrf.mxu0
      %v7006 = vadd.f32 %v6444, %v7005
      %7007 = vmatmul.bf16.gmra.mxu0 %v6657
      %v7008 = vpop.f32.mrf.mxu0
      %v7009 = vadd.f32 %v6444, %v7008
      %v7010 = vpop.f32.mrf.mxu0
      %v7011 = vadd.f32 %v6444, %v7010
      %7012 = vmatmul.bf16.gmra.mxu0 %v6660
      %v7013 = vpop.f32.mrf.mxu0
      %v7014 = vadd.f32 %v6444, %v7013
      %v7015 = vpop.f32.mrf.mxu0
      %v7016 = vadd.f32 %v6444, %v7015
      %7017 = vdwg.mxu0
      %v7018 = vmax.f32 %v6679, 0.0
      %v7019 = vmax.f32 %v6681, 0.0
      %v7020 = vmax.f32 %v6684, 0.0
      %v7021 = vmax.f32 %v6686, 0.0
      %v7022 = vmax.f32 %v6689, 0.0
      %v7023 = vmax.f32 %v6691, 0.0
      %v7024 = vmax.f32 %v6694, 0.0
      %v7025 = vmax.f32 %v6696, 0.0
      %v7026 = vmax.f32 %v6699, 0.0
      %v7027 = vmax.f32 %v6701, 0.0
      %v7028 = vmax.f32 %v6704, 0.0
      %v7029 = vmax.f32 %v6706, 0.0
      %v7030 = vmax.f32 %v6709, 0.0
      %v7031 = vmax.f32 %v6711, 0.0
      %v7032 = vmax.f32 %v6714, 0.0
      %v7033 = vmax.f32 %v6716, 0.0
      %v7034 = vmax.f32 %v6719, 0.0
      %v7035 = vmax.f32 %v6721, 0.0
      %v7036 = vmax.f32 %v6724, 0.0
      %v7037 = vmax.f32 %v6726, 0.0
      %v7038 = vmax.f32 %v6729, 0.0
      %v7039 = vmax.f32 %v6731, 0.0
      %v7040 = vmax.f32 %v6734, 0.0
      %v7041 = vmax.f32 %v6736, 0.0
      %v7042 = vmax.f32 %v6739, 0.0
      %v7043 = vmax.f32 %v6741, 0.0
      %v7044 = vmax.f32 %v6744, 0.0
      %v7045 = vmax.f32 %v6746, 0.0
      %v7046 = vmax.f32 %v6749, 0.0
      %v7047 = vmax.f32 %v6751, 0.0
      %v7048 = vmax.f32 %v6754, 0.0
      %v7049 = vmax.f32 %v6756, 0.0
      %v7050 = vmax.f32 %v6759, 0.0
      %v7051 = vmax.f32 %v6761, 0.0
      %v7052 = vmax.f32 %v6764, 0.0
      %v7053 = vmax.f32 %v6766, 0.0
      %v7054 = vmax.f32 %v6769, 0.0
      %v7055 = vmax.f32 %v6771, 0.0
      %v7056 = vmax.f32 %v6774, 0.0
      %v7057 = vmax.f32 %v6776, 0.0
      %v7058 = vmax.f32 %v6779, 0.0
      %v7059 = vmax.f32 %v6781, 0.0
      %v7060 = vmax.f32 %v6784, 0.0
      %v7061 = vmax.f32 %v6786, 0.0
      %v7062 = vmax.f32 %v6789, 0.0
      %v7063 = vmax.f32 %v6791, 0.0
      %v7064 = vmax.f32 %v6794, 0.0
      %v7065 = vmax.f32 %v6796, 0.0
      %v7066 = vmax.f32 %v6799, 0.0
      %v7067 = vmax.f32 %v6801, 0.0
      %v7068 = vmax.f32 %v6804, 0.0
      %v7069 = vmax.f32 %v6806, 0.0
      %v7070 = vmax.f32 %v6809, 0.0
      %v7071 = vmax.f32 %v6811, 0.0
      %v7072 = vmax.f32 %v6814, 0.0
      %v7073 = vmax.f32 %v6816, 0.0
      %v7074 = vmax.f32 %v6819, 0.0
      %v7075 = vmax.f32 %v6821, 0.0
      %v7076 = vmax.f32 %v6824, 0.0
      %v7077 = vmax.f32 %v6826, 0.0
      %v7078 = vmax.f32 %v6829, 0.0
      %v7079 = vmax.f32 %v6831, 0.0
      %v7080 = vmax.f32 %v6834, 0.0
      %v7081 = vmax.f32 %v6836, 0.0
      %v7082 = vmax.f32 %v6839, 0.0
      %v7083 = vmax.f32 %v6841, 0.0
      %v7084 = vmax.f32 %v6844, 0.0
      %v7085 = vmax.f32 %v6846, 0.0
      %v7086 = vmax.f32 %v6849, 0.0
      %v7087 = vmax.f32 %v6851, 0.0
      %v7088 = vmax.f32 %v6854, 0.0
      %v7089 = vmax.f32 %v6856, 0.0
      %v7090 = vmax.f32 %v6859, 0.0
      %v7091 = vmax.f32 %v6861, 0.0
      %v7092 = vmax.f32 %v6864, 0.0
      %v7093 = vmax.f32 %v6866, 0.0
      %v7094 = vmax.f32 %v6869, 0.0
      %v7095 = vmax.f32 %v6871, 0.0
      %v7096 = vmax.f32 %v6874, 0.0
      %v7097 = vmax.f32 %v6876, 0.0
      %v7098 = vmax.f32 %v6879, 0.0
      %v7099 = vmax.f32 %v6881, 0.0
      %v7100 = vmax.f32 %v6884, 0.0
      %v7101 = vmax.f32 %v6886, 0.0
      %v7102 = vmax.f32 %v6889, 0.0
      %v7103 = vmax.f32 %v6891, 0.0
      %v7104 = vmax.f32 %v6894, 0.0
      %v7105 = vmax.f32 %v6896, 0.0
      %v7106 = vmax.f32 %v6899, 0.0
      %v7107 = vmax.f32 %v6901, 0.0
      %v7108 = vmax.f32 %v6904, 0.0
      %v7109 = vmax.f32 %v6906, 0.0
      %v7110 = vmax.f32 %v6909, 0.0
      %v7111 = vmax.f32 %v6911, 0.0
      %v7112 = vmax.f32 %v6914, 0.0
      %v7113 = vmax.f32 %v6916, 0.0
      %v7114 = vmax.f32 %v6919, 0.0
      %v7115 = vmax.f32 %v6921, 0.0
      %v7116 = vmax.f32 %v6924, 0.0
      %v7117 = vmax.f32 %v6926, 0.0
      %v7118 = vmax.f32 %v6929, 0.0
      %v7119 = vmax.f32 %v6931, 0.0
      %v7120 = vmax.f32 %v6934, 0.0
      %v7121 = vmax.f32 %v6936, 0.0
      %v7122 = vmax.f32 %v6939, 0.0
      %v7123 = vmax.f32 %v6941, 0.0
      %v7124 = vmax.f32 %v6944, 0.0
      %v7125 = vmax.f32 %v6946, 0.0
      %v7126 = vmax.f32 %v6949, 0.0
      %v7127 = vmax.f32 %v6951, 0.0
      %v7128 = vmax.f32 %v6954, 0.0
      %v7129 = vmax.f32 %v6956, 0.0
      %v7130 = vmax.f32 %v6959, 0.0
      %v7131 = vmax.f32 %v6961, 0.0
      %v7132 = vmax.f32 %v6964, 0.0
      %v7133 = vmax.f32 %v6966, 0.0
      %v7134 = vmax.f32 %v6969, 0.0
      %v7135 = vmax.f32 %v6971, 0.0
      %v7136 = vmax.f32 %v6974, 0.0
      %v7137 = vmax.f32 %v6976, 0.0
      %v7138 = vmax.f32 %v6979, 0.0
      %v7139 = vmax.f32 %v6981, 0.0
      %v7140 = vmax.f32 %v6984, 0.0
      %v7141 = vmax.f32 %v6986, 0.0
      %v7142 = vmax.f32 %v6989, 0.0
      %v7143 = vmax.f32 %v6991, 0.0
      %v7144 = vmax.f32 %v6994, 0.0
      %v7145 = vmax.f32 %v6996, 0.0
      %v7146 = vmax.f32 %v6999, 0.0
      %v7147 = vmax.f32 %v7001, 0.0
      %v7148 = vmax.f32 %v7004, 0.0
      %v7149 = vmax.f32 %v7006, 0.0
      %v7150 = vmax.f32 %v7009, 0.0
      %v7151 = vmax.f32 %v7011, 0.0
      %v7152 = vmax.f32 %v7014, 0.0
      %v7153 = vmax.f32 %v7016, 0.0
      %vm7154 = vcmask 31744
      %7155 = vst.msk [vmem:[#allocation2] sm:$0xff] %vm7154, %v7018
      %7156 = vst.msk [vmem:[#allocation2 + $0x8] sm:$0xff] %vm7154, %v7019
      %7157 = vst.msk [vmem:[#allocation2 + $0x10] sm:$0xff] %vm7154, %v7020
      %7158 = vst.msk [vmem:[#allocation2 + $0x18] sm:$0xff] %vm7154, %v7021
      %7159 = vst.msk [vmem:[#allocation2 + $0x20] sm:$0xff] %vm7154, %v7022
      %7160 = vst.msk [vmem:[#allocation2 + $0x28] sm:$0xff] %vm7154, %v7023
      %7161 = vst.msk [vmem:[#allocation2 + $0x30] sm:$0xff] %vm7154, %v7024
      %7162 = vst.msk [vmem:[#allocation2 + $0x38] sm:$0xff] %vm7154, %v7025
      %7163 = vst.msk [vmem:[#allocation2 + $0x40] sm:$0xff] %vm7154, %v7026
      %7164 = vst.msk [vmem:[#allocation2 + $0x48] sm:$0xff] %vm7154, %v7027
      %7165 = vst.msk [vmem:[#allocation2 + $0x50] sm:$0xff] %vm7154, %v7028
      %7166 = vst.msk [vmem:[#allocation2 + $0x58] sm:$0xff] %vm7154, %v7029
      %7167 = vst.msk [vmem:[#allocation2 + $0x60] sm:$0xff] %vm7154, %v7030
      %7168 = vst.msk [vmem:[#allocation2 + $0x68] sm:$0xff] %vm7154, %v7031
      %7169 = vst.msk [vmem:[#allocation2 + $0x70] sm:$0xff] %vm7154, %v7032
      %7170 = vst.msk [vmem:[#allocation2 + $0x78] sm:$0xff] %vm7154, %v7033
      %7171 = vst.msk [vmem:[#allocation2 + $0x80] sm:$0xff] %vm7154, %v7034
      %7172 = vst.msk [vmem:[#allocation2 + $0x88] sm:$0xff] %vm7154, %v7035
      %7173 = vst.msk [vmem:[#allocation2 + $0x90] sm:$0xff] %vm7154, %v7036
      %7174 = vst.msk [vmem:[#allocation2 + $0x98] sm:$0xff] %vm7154, %v7037
      %7175 = vst.msk [vmem:[#allocation2 + $0xa0] sm:$0xff] %vm7154, %v7038
      %7176 = vst.msk [vmem:[#allocation2 + $0xa8] sm:$0xff] %vm7154, %v7039
      %7177 = vst.msk [vmem:[#allocation2 + $0xb0] sm:$0xff] %vm7154, %v7040
      %7178 = vst.msk [vmem:[#allocation2 + $0xb8] sm:$0xff] %vm7154, %v7041
      %7179 = vst.msk [vmem:[#allocation2 + $0xc0] sm:$0xff] %vm7154, %v7042
      %7180 = vst.msk [vmem:[#allocation2 + $0xc8] sm:$0xff] %vm7154, %v7043
      %7181 = vst.msk [vmem:[#allocation2 + $0xd0] sm:$0xff] %vm7154, %v7044
      %7182 = vst.msk [vmem:[#allocation2 + $0xd8] sm:$0xff] %vm7154, %v7045
      %7183 = vst.msk [vmem:[#allocation2 + $0xe0] sm:$0xff] %vm7154, %v7046
      %7184 = vst.msk [vmem:[#allocation2 + $0xe8] sm:$0xff] %vm7154, %v7047
      %7185 = vst.msk [vmem:[#allocation2 + $0xf0] sm:$0xff] %vm7154, %v7048
      %7186 = vst.msk [vmem:[#allocation2 + $0xf8] sm:$0xff] %vm7154, %v7049
      %7187 = vst.msk [vmem:[#allocation2 + $0x100] sm:$0xff] %vm7154, %v7050
      %7188 = vst.msk [vmem:[#allocation2 + $0x108] sm:$0xff] %vm7154, %v7051
      %7189 = vst.msk [vmem:[#allocation2 + $0x110] sm:$0xff] %vm7154, %v7052
      %7190 = vst.msk [vmem:[#allocation2 + $0x118] sm:$0xff] %vm7154, %v7053
      %7191 = vst.msk [vmem:[#allocation2 + $0x120] sm:$0xff] %vm7154, %v7054
      %7192 = vst.msk [vmem:[#allocation2 + $0x128] sm:$0xff] %vm7154, %v7055
      %7193 = vst.msk [vmem:[#allocation2 + $0x130] sm:$0xff] %vm7154, %v7056
      %7194 = vst.msk [vmem:[#allocation2 + $0x138] sm:$0xff] %vm7154, %v7057
      %7195 = vst.msk [vmem:[#allocation2 + $0x140] sm:$0xff] %vm7154, %v7058
      %7196 = vst.msk [vmem:[#allocation2 + $0x148] sm:$0xff] %vm7154, %v7059
      %7197 = vst.msk [vmem:[#allocation2 + $0x150] sm:$0xff] %vm7154, %v7060
      %7198 = vst.msk [vmem:[#allocation2 + $0x158] sm:$0xff] %vm7154, %v7061
      %7199 = vst.msk [vmem:[#allocation2 + $0x160] sm:$0xff] %vm7154, %v7062
      %7200 = vst.msk [vmem:[#allocation2 + $0x168] sm:$0xff] %vm7154, %v7063
      %7201 = vst.msk [vmem:[#allocation2 + $0x170] sm:$0xff] %vm7154, %v7064
      %7202 = vst.msk [vmem:[#allocation2 + $0x178] sm:$0xff] %vm7154, %v7065
      %7203 = vst.msk [vmem:[#allocation2 + $0x180] sm:$0xff] %vm7154, %v7066
      %7204 = vst.msk [vmem:[#allocation2 + $0x188] sm:$0xff] %vm7154, %v7067
      %7205 = vst.msk [vmem:[#allocation2 + $0x190] sm:$0xff] %vm7154, %v7068
      %7206 = vst.msk [vmem:[#allocation2 + $0x198] sm:$0xff] %vm7154, %v7069
      %7207 = vst.msk [vmem:[#allocation2 + $0x1a0] sm:$0xff] %vm7154, %v7070
      %7208 = vst.msk [vmem:[#allocation2 + $0x1a8] sm:$0xff] %vm7154, %v7071
      %7209 = vst.msk [vmem:[#allocation2 + $0x1b0] sm:$0xff] %vm7154, %v7072
      %7210 = vst.msk [vmem:[#allocation2 + $0x1b8] sm:$0xff] %vm7154, %v7073
      %7211 = vst.msk [vmem:[#allocation2 + $0x1c0] sm:$0xff] %vm7154, %v7074
      %7212 = vst.msk [vmem:[#allocation2 + $0x1c8] sm:$0xff] %vm7154, %v7075
      %7213 = vst.msk [vmem:[#allocation2 + $0x1d0] sm:$0xff] %vm7154, %v7076
      %7214 = vst.msk [vmem:[#allocation2 + $0x1d8] sm:$0xff] %vm7154, %v7077
      %7215 = vst.msk [vmem:[#allocation2 + $0x1e0] sm:$0xff] %vm7154, %v7078
      %7216 = vst.msk [vmem:[#allocation2 + $0x1e8] sm:$0xff] %vm7154, %v7079
      %7217 = vst.msk [vmem:[#allocation2 + $0x1f0] sm:$0xff] %vm7154, %v7080
      %7218 = vst.msk [vmem:[#allocation2 + $0x1f8] sm:$0xff] %vm7154, %v7081
      %7219 = vst.msk [vmem:[#allocation2 + $0x200] sm:$0xff] %vm7154, %v7082
      %7220 = vst.msk [vmem:[#allocation2 + $0x208] sm:$0xff] %vm7154, %v7083
      %7221 = vst.msk [vmem:[#allocation2 + $0x210] sm:$0xff] %vm7154, %v7084
      %7222 = vst.msk [vmem:[#allocation2 + $0x218] sm:$0xff] %vm7154, %v7085
      %7223 = vst.msk [vmem:[#allocation2 + $0x220] sm:$0xff] %vm7154, %v7086
      %7224 = vst.msk [vmem:[#allocation2 + $0x228] sm:$0xff] %vm7154, %v7087
      %7225 = vst.msk [vmem:[#allocation2 + $0x230] sm:$0xff] %vm7154, %v7088
      %7226 = vst.msk [vmem:[#allocation2 + $0x238] sm:$0xff] %vm7154, %v7089
      %7227 = vst.msk [vmem:[#allocation2 + $0x240] sm:$0xff] %vm7154, %v7090
      %7228 = vst.msk [vmem:[#allocation2 + $0x248] sm:$0xff] %vm7154, %v7091
      %7229 = vst.msk [vmem:[#allocation2 + $0x250] sm:$0xff] %vm7154, %v7092
      %7230 = vst.msk [vmem:[#allocation2 + $0x258] sm:$0xff] %vm7154, %v7093
      %7231 = vst.msk [vmem:[#allocation2 + $0x260] sm:$0xff] %vm7154, %v7094
      %7232 = vst.msk [vmem:[#allocation2 + $0x268] sm:$0xff] %vm7154, %v7095
      %7233 = vst.msk [vmem:[#allocation2 + $0x270] sm:$0xff] %vm7154, %v7096
      %7234 = vst.msk [vmem:[#allocation2 + $0x278] sm:$0xff] %vm7154, %v7097
      %7235 = vst.msk [vmem:[#allocation2 + $0x280] sm:$0xff] %vm7154, %v7098
      %7236 = vst.msk [vmem:[#allocation2 + $0x288] sm:$0xff] %vm7154, %v7099
      %7237 = vst.msk [vmem:[#allocation2 + $0x290] sm:$0xff] %vm7154, %v7100
      %7238 = vst.msk [vmem:[#allocation2 + $0x298] sm:$0xff] %vm7154, %v7101
      %7239 = vst.msk [vmem:[#allocation2 + $0x2a0] sm:$0xff] %vm7154, %v7102
      %7240 = vst.msk [vmem:[#allocation2 + $0x2a8] sm:$0xff] %vm7154, %v7103
      %7241 = vst.msk [vmem:[#allocation2 + $0x2b0] sm:$0xff] %vm7154, %v7104
      %7242 = vst.msk [vmem:[#allocation2 + $0x2b8] sm:$0xff] %vm7154, %v7105
      %7243 = vst.msk [vmem:[#allocation2 + $0x2c0] sm:$0xff] %vm7154, %v7106
      %7244 = vst.msk [vmem:[#allocation2 + $0x2c8] sm:$0xff] %vm7154, %v7107
      %7245 = vst.msk [vmem:[#allocation2 + $0x2d0] sm:$0xff] %vm7154, %v7108
      %7246 = vst.msk [vmem:[#allocation2 + $0x2d8] sm:$0xff] %vm7154, %v7109
      %7247 = vst.msk [vmem:[#allocation2 + $0x2e0] sm:$0xff] %vm7154, %v7110
      %7248 = vst.msk [vmem:[#allocation2 + $0x2e8] sm:$0xff] %vm7154, %v7111
      %7249 = vst.msk [vmem:[#allocation2 + $0x2f0] sm:$0xff] %vm7154, %v7112
      %7250 = vst.msk [vmem:[#allocation2 + $0x2f8] sm:$0xff] %vm7154, %v7113
      %7251 = vst.msk [vmem:[#allocation2 + $0x300] sm:$0xff] %vm7154, %v7114
      %7252 = vst.msk [vmem:[#allocation2 + $0x308] sm:$0xff] %vm7154, %v7115
      %7253 = vst.msk [vmem:[#allocation2 + $0x310] sm:$0xff] %vm7154, %v7116
      %7254 = vst.msk [vmem:[#allocation2 + $0x318] sm:$0xff] %vm7154, %v7117
      %7255 = vst.msk [vmem:[#allocation2 + $0x320] sm:$0xff] %vm7154, %v7118
      %7256 = vst.msk [vmem:[#allocation2 + $0x328] sm:$0xff] %vm7154, %v7119
      %7257 = vst.msk [vmem:[#allocation2 + $0x330] sm:$0xff] %vm7154, %v7120
      %7258 = vst.msk [vmem:[#allocation2 + $0x338] sm:$0xff] %vm7154, %v7121
      %7259 = vst.msk [vmem:[#allocation2 + $0x340] sm:$0xff] %vm7154, %v7122
      %7260 = vst.msk [vmem:[#allocation2 + $0x348] sm:$0xff] %vm7154, %v7123
      %7261 = vst.msk [vmem:[#allocation2 + $0x350] sm:$0xff] %vm7154, %v7124
      %7262 = vst.msk [vmem:[#allocation2 + $0x358] sm:$0xff] %vm7154, %v7125
      %7263 = vst.msk [vmem:[#allocation2 + $0x360] sm:$0xff] %vm7154, %v7126
      %7264 = vst.msk [vmem:[#allocation2 + $0x368] sm:$0xff] %vm7154, %v7127
      %7265 = vst.msk [vmem:[#allocation2 + $0x370] sm:$0xff] %vm7154, %v7128
      %7266 = vst.msk [vmem:[#allocation2 + $0x378] sm:$0xff] %vm7154, %v7129
      %7267 = vst.msk [vmem:[#allocation2 + $0x380] sm:$0xff] %vm7154, %v7130
      %7268 = vst.msk [vmem:[#allocation2 + $0x388] sm:$0xff] %vm7154, %v7131
      %7269 = vst.msk [vmem:[#allocation2 + $0x390] sm:$0xff] %vm7154, %v7132
      %7270 = vst.msk [vmem:[#allocation2 + $0x398] sm:$0xff] %vm7154, %v7133
      %7271 = vst.msk [vmem:[#allocation2 + $0x3a0] sm:$0xff] %vm7154, %v7134
      %7272 = vst.msk [vmem:[#allocation2 + $0x3a8] sm:$0xff] %vm7154, %v7135
      %7273 = vst.msk [vmem:[#allocation2 + $0x3b0] sm:$0xff] %vm7154, %v7136
      %7274 = vst.msk [vmem:[#allocation2 + $0x3b8] sm:$0xff] %vm7154, %v7137
      %7275 = vst.msk [vmem:[#allocation2 + $0x3c0] sm:$0xff] %vm7154, %v7138
      %7276 = vst.msk [vmem:[#allocation2 + $0x3c8] sm:$0xff] %vm7154, %v7139
      %7277 = vst.msk [vmem:[#allocation2 + $0x3d0] sm:$0xff] %vm7154, %v7140
      %7278 = vst.msk [vmem:[#allocation2 + $0x3d8] sm:$0xff] %vm7154, %v7141
      %7279 = vst.msk [vmem:[#allocation2 + $0x3e0] sm:$0xff] %vm7154, %v7142
      %7280 = vst.msk [vmem:[#allocation2 + $0x3e8] sm:$0xff] %vm7154, %v7143
      %7281 = vst.msk [vmem:[#allocation2 + $0x3f0] sm:$0xff] %vm7154, %v7144
      %7282 = vst.msk [vmem:[#allocation2 + $0x3f8] sm:$0xff] %vm7154, %v7145
      %7283 = vst.msk [vmem:[#allocation2 + $0x400] sm:$0xff] %vm7154, %v7146
      %7284 = vst.msk [vmem:[#allocation2 + $0x408] sm:$0xff] %vm7154, %v7147
      %7285 = vst.msk [vmem:[#allocation2 + $0x410] sm:$0xff] %vm7154, %v7148
      %7286 = vst.msk [vmem:[#allocation2 + $0x418] sm:$0xff] %vm7154, %v7149
      %7287 = vst.msk [vmem:[#allocation2 + $0x420] sm:$0xff] %vm7154, %v7150
      %7288 = vst.msk [vmem:[#allocation2 + $0x428] sm:$0xff] %vm7154, %v7151
      %7289 = vst.msk [vmem:[#allocation2 + $0x430] sm:$0xff] %vm7154, %v7152
      %7290 = vst.msk [vmem:[#allocation2 + $0x438] sm:$0xff] %vm7154, %v7153
      %v7291 = vld [vmem:[#allocation2] ss:$2 sm:$0xff]
      %s7292 = scalar_lea.vmem [#allocation2], 16
      %v7293 = vld [vmem:[%s7292] ss:$2 sm:$0xff]
      %s7294 = scalar_lea.vmem [#allocation2], 32
      %v7295 = vld [vmem:[%s7294] ss:$2 sm:$0xff]
      %s7296 = scalar_lea.vmem [#allocation2], 48
      %v7297 = vld [vmem:[%s7296] ss:$2 sm:$0xff]
      %s7298 = scalar_lea.vmem [#allocation2], 64
      %v7299 = vld [vmem:[%s7298] ss:$2 sm:$0xff]
      %s7300 = scalar_lea.vmem [#allocation2], 80
      %v7301 = vld [vmem:[%s7300] ss:$2 sm:$0xff]
      %s7302 = scalar_lea.vmem [#allocation2], 96
      %v7303 = vld [vmem:[%s7302] ss:$2 sm:$0xff]
      %s7304 = scalar_lea.vmem [#allocation2], 112
      %v7305 = vld [vmem:[%s7304] ss:$2 sm:$0xff]
      %s7306 = scalar_lea.vmem [#allocation2], 128
      %v7307 = vld [vmem:[%s7306] ss:$2 sm:$0xff]
      %s7308 = scalar_lea.vmem [#allocation2], 144
      %v7309 = vld [vmem:[%s7308] ss:$2 sm:$0xff]
      %s7310 = scalar_lea.vmem [#allocation2], 160
      %v7311 = vld [vmem:[%s7310] ss:$2 sm:$0xff]
      %s7312 = scalar_lea.vmem [#allocation2], 176
      %v7313 = vld [vmem:[%s7312] ss:$2 sm:$0xff]
      %s7314 = scalar_lea.vmem [#allocation2], 192
      %v7315 = vld [vmem:[%s7314] ss:$2 sm:$0xff]
      %s7316 = scalar_lea.vmem [#allocation2], 208
      %v7317 = vld [vmem:[%s7316] ss:$2 sm:$0xff]
      %s7318 = scalar_lea.vmem [#allocation2], 224
      %v7319 = vld [vmem:[%s7318] ss:$2 sm:$0xff]
      %s7320 = scalar_lea.vmem [#allocation2], 240
      %v7321 = vld [vmem:[%s7320] ss:$2 sm:$0xff]
      %s7322 = scalar_lea.vmem [#allocation2], 256
      %v7323 = vld [vmem:[%s7322] ss:$2 sm:$0xff]
      %s7324 = scalar_lea.vmem [#allocation2], 272
      %v7325 = vld [vmem:[%s7324] ss:$2 sm:$0xff]
      %s7326 = scalar_lea.vmem [#allocation2], 288
      %v7327 = vld [vmem:[%s7326] ss:$2 sm:$0xff]
      %s7328 = scalar_lea.vmem [#allocation2], 304
      %v7329 = vld [vmem:[%s7328] ss:$2 sm:$0xff]
      %s7330 = scalar_lea.vmem [#allocation2], 320
      %v7331 = vld [vmem:[%s7330] ss:$2 sm:$0xff]
      %s7332 = scalar_lea.vmem [#allocation2], 336
      %v7333 = vld [vmem:[%s7332] ss:$2 sm:$0xff]
      %s7334 = scalar_lea.vmem [#allocation2], 352
      %v7335 = vld [vmem:[%s7334] ss:$2 sm:$0xff]
      %s7336 = scalar_lea.vmem [#allocation2], 368
      %v7337 = vld [vmem:[%s7336] ss:$2 sm:$0xff]
      %s7338 = scalar_lea.vmem [#allocation2], 384
      %v7339 = vld [vmem:[%s7338] ss:$2 sm:$0xff]
      %s7340 = scalar_lea.vmem [#allocation2], 400
      %v7341 = vld [vmem:[%s7340] ss:$2 sm:$0xff]
      %s7342 = scalar_lea.vmem [#allocation2], 416
      %v7343 = vld [vmem:[%s7342] ss:$2 sm:$0xff]
      %s7344 = scalar_lea.vmem [#allocation2], 432
      %v7345 = vld [vmem:[%s7344] ss:$2 sm:$0xff]
      %s7346 = scalar_lea.vmem [#allocation2], 448
      %v7347 = vld [vmem:[%s7346] ss:$2 sm:$0xff]
      %s7348 = scalar_lea.vmem [#allocation2], 464
      %v7349 = vld [vmem:[%s7348] ss:$2 sm:$0xff]
      %s7350 = scalar_lea.vmem [#allocation2], 480
      %v7351 = vld [vmem:[%s7350] ss:$2 sm:$0xff]
      %s7352 = scalar_lea.vmem [#allocation2], 496
      %v7353 = vld [vmem:[%s7352] ss:$2 sm:$0xff]
      %s7354 = scalar_lea.vmem [#allocation2], 512
      %v7355 = vld [vmem:[%s7354] ss:$2 sm:$0xff]
      %s7356 = scalar_lea.vmem [#allocation2], 528
      %v7357 = vld [vmem:[%s7356] ss:$2 sm:$0xff]
      %s7358 = scalar_lea.vmem [#allocation2], 544
      %v7359 = vld [vmem:[%s7358] ss:$2 sm:$0xff]
      %s7360 = scalar_lea.vmem [#allocation2], 560
      %v7361 = vld [vmem:[%s7360] ss:$2 sm:$0xff]
      %s7362 = scalar_lea.vmem [#allocation2], 576
      %v7363 = vld [vmem:[%s7362] ss:$2 sm:$0xff]
      %s7364 = scalar_lea.vmem [#allocation2], 592
      %v7365 = vld [vmem:[%s7364] ss:$2 sm:$0xff]
      %s7366 = scalar_lea.vmem [#allocation2], 608
      %v7367 = vld [vmem:[%s7366] ss:$2 sm:$0xff]
      %s7368 = scalar_lea.vmem [#allocation2], 624
      %v7369 = vld [vmem:[%s7368] ss:$2 sm:$0xff]
      %s7370 = scalar_lea.vmem [#allocation2], 640
      %v7371 = vld [vmem:[%s7370] ss:$2 sm:$0xff]
      %s7372 = scalar_lea.vmem [#allocation2], 656
      %v7373 = vld [vmem:[%s7372] ss:$2 sm:$0xff]
      %s7374 = scalar_lea.vmem [#allocation2], 672
      %v7375 = vld [vmem:[%s7374] ss:$2 sm:$0xff]
      %s7376 = scalar_lea.vmem [#allocation2], 688
      %v7377 = vld [vmem:[%s7376] ss:$2 sm:$0xff]
      %s7378 = scalar_lea.vmem [#allocation2], 704
      %v7379 = vld [vmem:[%s7378] ss:$2 sm:$0xff]
      %s7380 = scalar_lea.vmem [#allocation2], 720
      %v7381 = vld [vmem:[%s7380] ss:$2 sm:$0xff]
      %s7382 = scalar_lea.vmem [#allocation2], 736
      %v7383 = vld [vmem:[%s7382] ss:$2 sm:$0xff]
      %s7384 = scalar_lea.vmem [#allocation2], 752
      %v7385 = vld [vmem:[%s7384] ss:$2 sm:$0xff]
      %s7386 = scalar_lea.vmem [#allocation2], 768
      %v7387 = vld [vmem:[%s7386] ss:$2 sm:$0xff]
      %s7388 = scalar_lea.vmem [#allocation2], 784
      %v7389 = vld [vmem:[%s7388] ss:$2 sm:$0xff]
      %s7390 = scalar_lea.vmem [#allocation2], 800
      %v7391 = vld [vmem:[%s7390] ss:$2 sm:$0xff]
      %s7392 = scalar_lea.vmem [#allocation2], 816
      %v7393 = vld [vmem:[%s7392] ss:$2 sm:$0xff]
      %s7394 = scalar_lea.vmem [#allocation2], 832
      %v7395 = vld [vmem:[%s7394] ss:$2 sm:$0xff]
      %s7396 = scalar_lea.vmem [#allocation2], 848
      %v7397 = vld [vmem:[%s7396] ss:$2 sm:$0xff]
      %s7398 = scalar_lea.vmem [#allocation2], 864
      %v7399 = vld [vmem:[%s7398] ss:$2 sm:$0xff]
      %s7400 = scalar_lea.vmem [#allocation2], 880
      %v7401 = vld [vmem:[%s7400] ss:$2 sm:$0xff]
      %s7402 = scalar_lea.vmem [#allocation2], 896
      %v7403 = vld [vmem:[%s7402] ss:$2 sm:$0xff]
      %s7404 = scalar_lea.vmem [#allocation2], 1
      %v7405 = vld [vmem:[%s7404] ss:$2 sm:$0xff]
      %s7406 = scalar_lea.vmem [#allocation2], 17
      %v7407 = vld [vmem:[%s7406] ss:$2 sm:$0xff]
      %s7408 = scalar_lea.vmem [#allocation2], 33
      %v7409 = vld [vmem:[%s7408] ss:$2 sm:$0xff]
      %s7410 = scalar_lea.vmem [#allocation2], 49
      %v7411 = vld [vmem:[%s7410] ss:$2 sm:$0xff]
      %s7412 = scalar_lea.vmem [#allocation2], 65
      %v7413 = vld [vmem:[%s7412] ss:$2 sm:$0xff]
      %s7414 = scalar_lea.vmem [#allocation2], 81
      %v7415 = vld [vmem:[%s7414] ss:$2 sm:$0xff]
      %s7416 = scalar_lea.vmem [#allocation2], 97
      %v7417 = vld [vmem:[%s7416] ss:$2 sm:$0xff]
      %s7418 = scalar_lea.vmem [#allocation2], 113
      %v7419 = vld [vmem:[%s7418] ss:$2 sm:$0xff]
      %s7420 = scalar_lea.vmem [#allocation2], 129
      %v7421 = vld [vmem:[%s7420] ss:$2 sm:$0xff]
      %s7422 = scalar_lea.vmem [#allocation2], 145
      %v7423 = vld [vmem:[%s7422] ss:$2 sm:$0xff]
      %s7424 = scalar_lea.vmem [#allocation2], 161
      %v7425 = vld [vmem:[%s7424] ss:$2 sm:$0xff]
      %s7426 = scalar_lea.vmem [#allocation2], 177
      %v7427 = vld [vmem:[%s7426] ss:$2 sm:$0xff]
      %s7428 = scalar_lea.vmem [#allocation2], 193
      %v7429 = vld [vmem:[%s7428] ss:$2 sm:$0xff]
      %s7430 = scalar_lea.vmem [#allocation2], 209
      %v7431 = vld [vmem:[%s7430] ss:$2 sm:$0xff]
      %s7432 = scalar_lea.vmem [#allocation2], 225
      %v7433 = vld [vmem:[%s7432] ss:$2 sm:$0xff]
      %s7434 = scalar_lea.vmem [#allocation2], 241
      %v7435 = vld [vmem:[%s7434] ss:$2 sm:$0xff]
      %s7436 = scalar_lea.vmem [#allocation2], 257
      %v7437 = vld [vmem:[%s7436] ss:$2 sm:$0xff]
      %s7438 = scalar_lea.vmem [#allocation2], 273
      %v7439 = vld [vmem:[%s7438] ss:$2 sm:$0xff]
      %s7440 = scalar_lea.vmem [#allocation2], 289
      %v7441 = vld [vmem:[%s7440] ss:$2 sm:$0xff]
      %s7442 = scalar_lea.vmem [#allocation2], 305
      %v7443 = vld [vmem:[%s7442] ss:$2 sm:$0xff]
      %s7444 = scalar_lea.vmem [#allocation2], 321
      %v7445 = vld [vmem:[%s7444] ss:$2 sm:$0xff]
      %s7446 = scalar_lea.vmem [#allocation2], 337
      %v7447 = vld [vmem:[%s7446] ss:$2 sm:$0xff]
      %s7448 = scalar_lea.vmem [#allocation2], 353
      %v7449 = vld [vmem:[%s7448] ss:$2 sm:$0xff]
      %s7450 = scalar_lea.vmem [#allocation2], 369
      %v7451 = vld [vmem:[%s7450] ss:$2 sm:$0xff]
      %s7452 = scalar_lea.vmem [#allocation2], 385
      %v7453 = vld [vmem:[%s7452] ss:$2 sm:$0xff]
      %s7454 = scalar_lea.vmem [#allocation2], 401
      %v7455 = vld [vmem:[%s7454] ss:$2 sm:$0xff]
      %s7456 = scalar_lea.vmem [#allocation2], 417
      %v7457 = vld [vmem:[%s7456] ss:$2 sm:$0xff]
      %s7458 = scalar_lea.vmem [#allocation2], 433
      %v7459 = vld [vmem:[%s7458] ss:$2 sm:$0xff]
      %s7460 = scalar_lea.vmem [#allocation2], 449
      %v7461 = vld [vmem:[%s7460] ss:$2 sm:$0xff]
      %s7462 = scalar_lea.vmem [#allocation2], 465
      %v7463 = vld [vmem:[%s7462] ss:$2 sm:$0xff]
      %s7464 = scalar_lea.vmem [#allocation2], 481
      %v7465 = vld [vmem:[%s7464] ss:$2 sm:$0xff]
      %s7466 = scalar_lea.vmem [#allocation2], 497
      %v7467 = vld [vmem:[%s7466] ss:$2 sm:$0xff]
      %s7468 = scalar_lea.vmem [#allocation2], 513
      %v7469 = vld [vmem:[%s7468] ss:$2 sm:$0xff]
      %s7470 = scalar_lea.vmem [#allocation2], 529
      %v7471 = vld [vmem:[%s7470] ss:$2 sm:$0xff]
      %s7472 = scalar_lea.vmem [#allocation2], 545
      %v7473 = vld [vmem:[%s7472] ss:$2 sm:$0xff]
      %s7474 = scalar_lea.vmem [#allocation2], 561
      %v7475 = vld [vmem:[%s7474] ss:$2 sm:$0xff]
      %s7476 = scalar_lea.vmem [#allocation2], 577
      %v7477 = vld [vmem:[%s7476] ss:$2 sm:$0xff]
      %s7478 = scalar_lea.vmem [#allocation2], 593
      %v7479 = vld [vmem:[%s7478] ss:$2 sm:$0xff]
      %s7480 = scalar_lea.vmem [#allocation2], 609
      %v7481 = vld [vmem:[%s7480] ss:$2 sm:$0xff]
      %s7482 = scalar_lea.vmem [#allocation2], 625
      %v7483 = vld [vmem:[%s7482] ss:$2 sm:$0xff]
      %s7484 = scalar_lea.vmem [#allocation2], 641
      %v7485 = vld [vmem:[%s7484] ss:$2 sm:$0xff]
      %s7486 = scalar_lea.vmem [#allocation2], 657
      %v7487 = vld [vmem:[%s7486] ss:$2 sm:$0xff]
      %s7488 = scalar_lea.vmem [#allocation2], 673
      %v7489 = vld [vmem:[%s7488] ss:$2 sm:$0xff]
      %s7490 = scalar_lea.vmem [#allocation2], 689
      %v7491 = vld [vmem:[%s7490] ss:$2 sm:$0xff]
      %s7492 = scalar_lea.vmem [#allocation2], 705
      %v7493 = vld [vmem:[%s7492] ss:$2 sm:$0xff]
      %s7494 = scalar_lea.vmem [#allocation2], 721
      %v7495 = vld [vmem:[%s7494] ss:$2 sm:$0xff]
      %s7496 = scalar_lea.vmem [#allocation2], 737
      %v7497 = vld [vmem:[%s7496] ss:$2 sm:$0xff]
      %s7498 = scalar_lea.vmem [#allocation2], 753
      %v7499 = vld [vmem:[%s7498] ss:$2 sm:$0xff]
      %s7500 = scalar_lea.vmem [#allocation2], 769
      %v7501 = vld [vmem:[%s7500] ss:$2 sm:$0xff]
      %s7502 = scalar_lea.vmem [#allocation2], 785
      %v7503 = vld [vmem:[%s7502] ss:$2 sm:$0xff]
      %s7504 = scalar_lea.vmem [#allocation2], 801
      %v7505 = vld [vmem:[%s7504] ss:$2 sm:$0xff]
      %s7506 = scalar_lea.vmem [#allocation2], 817
      %v7507 = vld [vmem:[%s7506] ss:$2 sm:$0xff]
      %s7508 = scalar_lea.vmem [#allocation2], 833
      %v7509 = vld [vmem:[%s7508] ss:$2 sm:$0xff]
      %s7510 = scalar_lea.vmem [#allocation2], 849
      %v7511 = vld [vmem:[%s7510] ss:$2 sm:$0xff]
      %s7512 = scalar_lea.vmem [#allocation2], 865
      %v7513 = vld [vmem:[%s7512] ss:$2 sm:$0xff]
      %s7514 = scalar_lea.vmem [#allocation2], 881
      %v7515 = vld [vmem:[%s7514] ss:$2 sm:$0xff]
      %s7516 = scalar_lea.vmem [#allocation2], 897
      %v7517 = vld [vmem:[%s7516] ss:$2 sm:$0xff]
      %s7518 = scalar_lea.vmem [#allocation2], 2
      %v7519 = vld [vmem:[%s7518] ss:$2 sm:$0xff]
      %s7520 = scalar_lea.vmem [#allocation2], 18
      %v7521 = vld [vmem:[%s7520] ss:$2 sm:$0xff]
      %s7522 = scalar_lea.vmem [#allocation2], 34
      %v7523 = vld [vmem:[%s7522] ss:$2 sm:$0xff]
      %s7524 = scalar_lea.vmem [#allocation2], 50
      %v7525 = vld [vmem:[%s7524] ss:$2 sm:$0xff]
      %s7526 = scalar_lea.vmem [#allocation2], 66
      %v7527 = vld [vmem:[%s7526] ss:$2 sm:$0xff]
      %s7528 = scalar_lea.vmem [#allocation2], 82
      %v7529 = vld [vmem:[%s7528] ss:$2 sm:$0xff]
      %s7530 = scalar_lea.vmem [#allocation2], 98
      %v7531 = vld [vmem:[%s7530] ss:$2 sm:$0xff]
      %s7532 = scalar_lea.vmem [#allocation2], 114
      %v7533 = vld [vmem:[%s7532] ss:$2 sm:$0xff]
      %s7534 = scalar_lea.vmem [#allocation2], 130
      %v7535 = vld [vmem:[%s7534] ss:$2 sm:$0xff]
      %s7536 = scalar_lea.vmem [#allocation2], 146
      %v7537 = vld [vmem:[%s7536] ss:$2 sm:$0xff]
      %s7538 = scalar_lea.vmem [#allocation2], 162
      %v7539 = vld [vmem:[%s7538] ss:$2 sm:$0xff]
      %s7540 = scalar_lea.vmem [#allocation2], 178
      %v7541 = vld [vmem:[%s7540] ss:$2 sm:$0xff]
      %s7542 = scalar_lea.vmem [#allocation2], 194
      %v7543 = vld [vmem:[%s7542] ss:$2 sm:$0xff]
      %s7544 = scalar_lea.vmem [#allocation2], 210
      %v7545 = vld [vmem:[%s7544] ss:$2 sm:$0xff]
      %s7546 = scalar_lea.vmem [#allocation2], 226
      %v7547 = vld [vmem:[%s7546] ss:$2 sm:$0xff]
      %s7548 = scalar_lea.vmem [#allocation2], 242
      %v7549 = vld [vmem:[%s7548] ss:$2 sm:$0xff]
      %s7550 = scalar_lea.vmem [#allocation2], 258
      %v7551 = vld [vmem:[%s7550] ss:$2 sm:$0xff]
      %s7552 = scalar_lea.vmem [#allocation2], 274
      %v7553 = vld [vmem:[%s7552] ss:$2 sm:$0xff]
      %s7554 = scalar_lea.vmem [#allocation2], 290
      %v7555 = vld [vmem:[%s7554] ss:$2 sm:$0xff]
      %s7556 = scalar_lea.vmem [#allocation2], 306
      %v7557 = vld [vmem:[%s7556] ss:$2 sm:$0xff]
      %s7558 = scalar_lea.vmem [#allocation2], 322
      %v7559 = vld [vmem:[%s7558] ss:$2 sm:$0xff]
      %s7560 = scalar_lea.vmem [#allocation2], 338
      %v7561 = vld [vmem:[%s7560] ss:$2 sm:$0xff]
      %s7562 = scalar_lea.vmem [#allocation2], 354
      %v7563 = vld [vmem:[%s7562] ss:$2 sm:$0xff]
      %s7564 = scalar_lea.vmem [#allocation2], 370
      %v7565 = vld [vmem:[%s7564] ss:$2 sm:$0xff]
      %s7566 = scalar_lea.vmem [#allocation2], 386
      %v7567 = vld [vmem:[%s7566] ss:$2 sm:$0xff]
      %s7568 = scalar_lea.vmem [#allocation2], 402
      %v7569 = vld [vmem:[%s7568] ss:$2 sm:$0xff]
      %s7570 = scalar_lea.vmem [#allocation2], 418
      %v7571 = vld [vmem:[%s7570] ss:$2 sm:$0xff]
      %s7572 = scalar_lea.vmem [#allocation2], 434
      %v7573 = vld [vmem:[%s7572] ss:$2 sm:$0xff]
      %s7574 = scalar_lea.vmem [#allocation2], 450
      %v7575 = vld [vmem:[%s7574] ss:$2 sm:$0xff]
      %s7576 = scalar_lea.vmem [#allocation2], 466
      %v7577 = vld [vmem:[%s7576] ss:$2 sm:$0xff]
      %s7578 = scalar_lea.vmem [#allocation2], 482
      %v7579 = vld [vmem:[%s7578] ss:$2 sm:$0xff]
      %s7580 = scalar_lea.vmem [#allocation2], 498
      %v7581 = vld [vmem:[%s7580] ss:$2 sm:$0xff]
      %s7582 = scalar_lea.vmem [#allocation2], 514
      %v7583 = vld [vmem:[%s7582] ss:$2 sm:$0xff]
      %s7584 = scalar_lea.vmem [#allocation2], 530
      %v7585 = vld [vmem:[%s7584] ss:$2 sm:$0xff]
      %s7586 = scalar_lea.vmem [#allocation2], 546
      %v7587 = vld [vmem:[%s7586] ss:$2 sm:$0xff]
      %s7588 = scalar_lea.vmem [#allocation2], 562
      %v7589 = vld [vmem:[%s7588] ss:$2 sm:$0xff]
      %s7590 = scalar_lea.vmem [#allocation2], 578
      %v7591 = vld [vmem:[%s7590] ss:$2 sm:$0xff]
      %s7592 = scalar_lea.vmem [#allocation2], 594
      %v7593 = vld [vmem:[%s7592] ss:$2 sm:$0xff]
      %s7594 = scalar_lea.vmem [#allocation2], 610
      %v7595 = vld [vmem:[%s7594] ss:$2 sm:$0xff]
      %s7596 = scalar_lea.vmem [#allocation2], 626
      %v7597 = vld [vmem:[%s7596] ss:$2 sm:$0xff]
      %s7598 = scalar_lea.vmem [#allocation2], 642
      %v7599 = vld [vmem:[%s7598] ss:$2 sm:$0xff]
      %s7600 = scalar_lea.vmem [#allocation2], 658
      %v7601 = vld [vmem:[%s7600] ss:$2 sm:$0xff]
      %s7602 = scalar_lea.vmem [#allocation2], 674
      %v7603 = vld [vmem:[%s7602] ss:$2 sm:$0xff]
      %s7604 = scalar_lea.vmem [#allocation2], 690
      %v7605 = vld [vmem:[%s7604] ss:$2 sm:$0xff]
      %s7606 = scalar_lea.vmem [#allocation2], 706
      %v7607 = vld [vmem:[%s7606] ss:$2 sm:$0xff]
      %s7608 = scalar_lea.vmem [#allocation2], 722
      %v7609 = vld [vmem:[%s7608] ss:$2 sm:$0xff]
      %s7610 = scalar_lea.vmem [#allocation2], 738
      %v7611 = vld [vmem:[%s7610] ss:$2 sm:$0xff]
      %s7612 = scalar_lea.vmem [#allocation2], 754
      %v7613 = vld [vmem:[%s7612] ss:$2 sm:$0xff]
      %s7614 = scalar_lea.vmem [#allocation2], 770
      %v7615 = vld [vmem:[%s7614] ss:$2 sm:$0xff]
      %s7616 = scalar_lea.vmem [#allocation2], 786
      %v7617 = vld [vmem:[%s7616] ss:$2 sm:$0xff]
      %s7618 = scalar_lea.vmem [#allocation2], 802
      %v7619 = vld [vmem:[%s7618] ss:$2 sm:$0xff]
      %s7620 = scalar_lea.vmem [#allocation2], 818
      %v7621 = vld [vmem:[%s7620] ss:$2 sm:$0xff]
      %s7622 = scalar_lea.vmem [#allocation2], 834
      %v7623 = vld [vmem:[%s7622] ss:$2 sm:$0xff]
      %s7624 = scalar_lea.vmem [#allocation2], 850
      %v7625 = vld [vmem:[%s7624] ss:$2 sm:$0xff]
      %s7626 = scalar_lea.vmem [#allocation2], 866
      %v7627 = vld [vmem:[%s7626] ss:$2 sm:$0xff]
      %s7628 = scalar_lea.vmem [#allocation2], 882
      %v7629 = vld [vmem:[%s7628] ss:$2 sm:$0xff]
      %s7630 = scalar_lea.vmem [#allocation2], 898
      %v7631 = vld [vmem:[%s7630] ss:$2 sm:$0xff]
      %s7632 = scalar_lea.vmem [#allocation2], 914
      %v7633 = vld [vmem:[%s7632] ss:$2 sm:$0xff]
      %s7634 = scalar_lea.vmem [#allocation2], 930
      %v7635 = vld [vmem:[%s7634] ss:$2 sm:$0xff]
      %s7636 = scalar_lea.vmem [#allocation2], 35
      %v7637 = vld [vmem:[%s7636] ss:$2 sm:$0xff]
      %s7638 = scalar_lea.vmem [#allocation2], 51
      %v7639 = vld [vmem:[%s7638] ss:$2 sm:$0xff]
      %s7640 = scalar_lea.vmem [#allocation2], 67
      %v7641 = vld [vmem:[%s7640] ss:$2 sm:$0xff]
      %s7642 = scalar_lea.vmem [#allocation2], 83
      %v7643 = vld [vmem:[%s7642] ss:$2 sm:$0xff]
      %s7644 = scalar_lea.vmem [#allocation2], 99
      %v7645 = vld [vmem:[%s7644] ss:$2 sm:$0xff]
      %s7646 = scalar_lea.vmem [#allocation2], 115
      %v7647 = vld [vmem:[%s7646] ss:$2 sm:$0xff]
      %s7648 = scalar_lea.vmem [#allocation2], 131
      %v7649 = vld [vmem:[%s7648] ss:$2 sm:$0xff]
      %s7650 = scalar_lea.vmem [#allocation2], 147
      %v7651 = vld [vmem:[%s7650] ss:$2 sm:$0xff]
      %s7652 = scalar_lea.vmem [#allocation2], 163
      %v7653 = vld [vmem:[%s7652] ss:$2 sm:$0xff]
      %s7654 = scalar_lea.vmem [#allocation2], 179
      %v7655 = vld [vmem:[%s7654] ss:$2 sm:$0xff]
      %s7656 = scalar_lea.vmem [#allocation2], 195
      %v7657 = vld [vmem:[%s7656] ss:$2 sm:$0xff]
      %s7658 = scalar_lea.vmem [#allocation2], 211
      %v7659 = vld [vmem:[%s7658] ss:$2 sm:$0xff]
      %s7660 = scalar_lea.vmem [#allocation2], 227
      %v7661 = vld [vmem:[%s7660] ss:$2 sm:$0xff]
      %s7662 = scalar_lea.vmem [#allocation2], 243
      %v7663 = vld [vmem:[%s7662] ss:$2 sm:$0xff]
      %s7664 = scalar_lea.vmem [#allocation2], 259
      %v7665 = vld [vmem:[%s7664] ss:$2 sm:$0xff]
      %s7666 = scalar_lea.vmem [#allocation2], 275
      %v7667 = vld [vmem:[%s7666] ss:$2 sm:$0xff]
      %s7668 = scalar_lea.vmem [#allocation2], 291
      %v7669 = vld [vmem:[%s7668] ss:$2 sm:$0xff]
      %s7670 = scalar_lea.vmem [#allocation2], 307
      %v7671 = vld [vmem:[%s7670] ss:$2 sm:$0xff]
      %s7672 = scalar_lea.vmem [#allocation2], 323
      %v7673 = vld [vmem:[%s7672] ss:$2 sm:$0xff]
      %s7674 = scalar_lea.vmem [#allocation2], 339
      %v7675 = vld [vmem:[%s7674] ss:$2 sm:$0xff]
      %s7676 = scalar_lea.vmem [#allocation2], 355
      %v7677 = vld [vmem:[%s7676] ss:$2 sm:$0xff]
      %s7678 = scalar_lea.vmem [#allocation2], 371
      %v7679 = vld [vmem:[%s7678] ss:$2 sm:$0xff]
      %s7680 = scalar_lea.vmem [#allocation2], 387
      %v7681 = vld [vmem:[%s7680] ss:$2 sm:$0xff]
      %s7682 = scalar_lea.vmem [#allocation2], 403
      %v7683 = vld [vmem:[%s7682] ss:$2 sm:$0xff]
      %s7684 = scalar_lea.vmem [#allocation2], 419
      %v7685 = vld [vmem:[%s7684] ss:$2 sm:$0xff]
      %s7686 = scalar_lea.vmem [#allocation2], 435
      %v7687 = vld [vmem:[%s7686] ss:$2 sm:$0xff]
      %s7688 = scalar_lea.vmem [#allocation2], 451
      %v7689 = vld [vmem:[%s7688] ss:$2 sm:$0xff]
      %s7690 = scalar_lea.vmem [#allocation2], 467
      %v7691 = vld [vmem:[%s7690] ss:$2 sm:$0xff]
      %s7692 = scalar_lea.vmem [#allocation2], 483
      %v7693 = vld [vmem:[%s7692] ss:$2 sm:$0xff]
      %s7694 = scalar_lea.vmem [#allocation2], 499
      %v7695 = vld [vmem:[%s7694] ss:$2 sm:$0xff]
      %s7696 = scalar_lea.vmem [#allocation2], 515
      %v7697 = vld [vmem:[%s7696] ss:$2 sm:$0xff]
      %s7698 = scalar_lea.vmem [#allocation2], 531
      %v7699 = vld [vmem:[%s7698] ss:$2 sm:$0xff]
      %s7700 = scalar_lea.vmem [#allocation2], 547
      %v7701 = vld [vmem:[%s7700] ss:$2 sm:$0xff]
      %s7702 = scalar_lea.vmem [#allocation2], 563
      %v7703 = vld [vmem:[%s7702] ss:$2 sm:$0xff]
      %s7704 = scalar_lea.vmem [#allocation2], 579
      %v7705 = vld [vmem:[%s7704] ss:$2 sm:$0xff]
      %s7706 = scalar_lea.vmem [#allocation2], 595
      %v7707 = vld [vmem:[%s7706] ss:$2 sm:$0xff]
      %s7708 = scalar_lea.vmem [#allocation2], 611
      %v7709 = vld [vmem:[%s7708] ss:$2 sm:$0xff]
      %s7710 = scalar_lea.vmem [#allocation2], 627
      %v7711 = vld [vmem:[%s7710] ss:$2 sm:$0xff]
      %s7712 = scalar_lea.vmem [#allocation2], 643
      %v7713 = vld [vmem:[%s7712] ss:$2 sm:$0xff]
      %s7714 = scalar_lea.vmem [#allocation2], 659
      %v7715 = vld [vmem:[%s7714] ss:$2 sm:$0xff]
      %s7716 = scalar_lea.vmem [#allocation2], 675
      %v7717 = vld [vmem:[%s7716] ss:$2 sm:$0xff]
      %s7718 = scalar_lea.vmem [#allocation2], 691
      %v7719 = vld [vmem:[%s7718] ss:$2 sm:$0xff]
      %s7720 = scalar_lea.vmem [#allocation2], 707
      %v7721 = vld [vmem:[%s7720] ss:$2 sm:$0xff]
      %s7722 = scalar_lea.vmem [#allocation2], 723
      %v7723 = vld [vmem:[%s7722] ss:$2 sm:$0xff]
      %s7724 = scalar_lea.vmem [#allocation2], 739
      %v7725 = vld [vmem:[%s7724] ss:$2 sm:$0xff]
      %s7726 = scalar_lea.vmem [#allocation2], 755
      %v7727 = vld [vmem:[%s7726] ss:$2 sm:$0xff]
      %s7728 = scalar_lea.vmem [#allocation2], 771
      %v7729 = vld [vmem:[%s7728] ss:$2 sm:$0xff]
      %s7730 = scalar_lea.vmem [#allocation2], 787
      %v7731 = vld [vmem:[%s7730] ss:$2 sm:$0xff]
      %s7732 = scalar_lea.vmem [#allocation2], 803
      %v7733 = vld [vmem:[%s7732] ss:$2 sm:$0xff]
      %s7734 = scalar_lea.vmem [#allocation2], 819
      %v7735 = vld [vmem:[%s7734] ss:$2 sm:$0xff]
      %s7736 = scalar_lea.vmem [#allocation2], 835
      %v7737 = vld [vmem:[%s7736] ss:$2 sm:$0xff]
      %s7738 = scalar_lea.vmem [#allocation2], 851
      %v7739 = vld [vmem:[%s7738] ss:$2 sm:$0xff]
      %s7740 = scalar_lea.vmem [#allocation2], 867
      %v7741 = vld [vmem:[%s7740] ss:$2 sm:$0xff]
      %s7742 = scalar_lea.vmem [#allocation2], 883
      %v7743 = vld [vmem:[%s7742] ss:$2 sm:$0xff]
      %s7744 = scalar_lea.vmem [#allocation2], 899
      %v7745 = vld [vmem:[%s7744] ss:$2 sm:$0xff]
      %s7746 = scalar_lea.vmem [#allocation2], 915
      %v7747 = vld [vmem:[%s7746] ss:$2 sm:$0xff]
      %s7748 = scalar_lea.vmem [#allocation2], 931
      %v7749 = vld [vmem:[%s7748] ss:$2 sm:$0xff]
      %s7750 = scalar_lea.vmem [#allocation2], 36
      %v7751 = vld [vmem:[%s7750] ss:$2 sm:$0xff]
      %s7752 = scalar_lea.vmem [#allocation2], 52
      %v7753 = vld [vmem:[%s7752] ss:$2 sm:$0xff]
      %s7754 = scalar_lea.vmem [#allocation2], 68
      %v7755 = vld [vmem:[%s7754] ss:$2 sm:$0xff]
      %s7756 = scalar_lea.vmem [#allocation2], 84
      %v7757 = vld [vmem:[%s7756] ss:$2 sm:$0xff]
      %s7758 = scalar_lea.vmem [#allocation2], 100
      %v7759 = vld [vmem:[%s7758] ss:$2 sm:$0xff]
      %s7760 = scalar_lea.vmem [#allocation2], 116
      %v7761 = vld [vmem:[%s7760] ss:$2 sm:$0xff]
      %s7762 = scalar_lea.vmem [#allocation2], 132
      %v7763 = vld [vmem:[%s7762] ss:$2 sm:$0xff]
      %s7764 = scalar_lea.vmem [#allocation2], 148
      %v7765 = vld [vmem:[%s7764] ss:$2 sm:$0xff]
      %s7766 = scalar_lea.vmem [#allocation2], 164
      %v7767 = vld [vmem:[%s7766] ss:$2 sm:$0xff]
      %s7768 = scalar_lea.vmem [#allocation2], 180
      %v7769 = vld [vmem:[%s7768] ss:$2 sm:$0xff]
      %s7770 = scalar_lea.vmem [#allocation2], 196
      %v7771 = vld [vmem:[%s7770] ss:$2 sm:$0xff]
      %s7772 = scalar_lea.vmem [#allocation2], 212
      %v7773 = vld [vmem:[%s7772] ss:$2 sm:$0xff]
      %s7774 = scalar_lea.vmem [#allocation2], 228
      %v7775 = vld [vmem:[%s7774] ss:$2 sm:$0xff]
      %s7776 = scalar_lea.vmem [#allocation2], 244
      %v7777 = vld [vmem:[%s7776] ss:$2 sm:$0xff]
      %s7778 = scalar_lea.vmem [#allocation2], 260
      %v7779 = vld [vmem:[%s7778] ss:$2 sm:$0xff]
      %s7780 = scalar_lea.vmem [#allocation2], 276
      %v7781 = vld [vmem:[%s7780] ss:$2 sm:$0xff]
      %s7782 = scalar_lea.vmem [#allocation2], 292
      %v7783 = vld [vmem:[%s7782] ss:$2 sm:$0xff]
      %s7784 = scalar_lea.vmem [#allocation2], 308
      %v7785 = vld [vmem:[%s7784] ss:$2 sm:$0xff]
      %s7786 = scalar_lea.vmem [#allocation2], 324
      %v7787 = vld [vmem:[%s7786] ss:$2 sm:$0xff]
      %s7788 = scalar_lea.vmem [#allocation2], 340
      %v7789 = vld [vmem:[%s7788] ss:$2 sm:$0xff]
      %s7790 = scalar_lea.vmem [#allocation2], 356
      %v7791 = vld [vmem:[%s7790] ss:$2 sm:$0xff]
      %s7792 = scalar_lea.vmem [#allocation2], 372
      %v7793 = vld [vmem:[%s7792] ss:$2 sm:$0xff]
      %s7794 = scalar_lea.vmem [#allocation2], 388
      %v7795 = vld [vmem:[%s7794] ss:$2 sm:$0xff]
      %s7796 = scalar_lea.vmem [#allocation2], 404
      %v7797 = vld [vmem:[%s7796] ss:$2 sm:$0xff]
      %s7798 = scalar_lea.vmem [#allocation2], 420
      %v7799 = vld [vmem:[%s7798] ss:$2 sm:$0xff]
      %s7800 = scalar_lea.vmem [#allocation2], 436
      %v7801 = vld [vmem:[%s7800] ss:$2 sm:$0xff]
      %s7802 = scalar_lea.vmem [#allocation2], 452
      %v7803 = vld [vmem:[%s7802] ss:$2 sm:$0xff]
      %s7804 = scalar_lea.vmem [#allocation2], 468
      %v7805 = vld [vmem:[%s7804] ss:$2 sm:$0xff]
      %s7806 = scalar_lea.vmem [#allocation2], 484
      %v7807 = vld [vmem:[%s7806] ss:$2 sm:$0xff]
      %s7808 = scalar_lea.vmem [#allocation2], 500
      %v7809 = vld [vmem:[%s7808] ss:$2 sm:$0xff]
      %s7810 = scalar_lea.vmem [#allocation2], 516
      %v7811 = vld [vmem:[%s7810] ss:$2 sm:$0xff]
      %s7812 = scalar_lea.vmem [#allocation2], 532
      %v7813 = vld [vmem:[%s7812] ss:$2 sm:$0xff]
      %s7814 = scalar_lea.vmem [#allocation2], 548
      %v7815 = vld [vmem:[%s7814] ss:$2 sm:$0xff]
      %s7816 = scalar_lea.vmem [#allocation2], 564
      %v7817 = vld [vmem:[%s7816] ss:$2 sm:$0xff]
      %s7818 = scalar_lea.vmem [#allocation2], 580
      %v7819 = vld [vmem:[%s7818] ss:$2 sm:$0xff]
      %s7820 = scalar_lea.vmem [#allocation2], 596
      %v7821 = vld [vmem:[%s7820] ss:$2 sm:$0xff]
      %s7822 = scalar_lea.vmem [#allocation2], 612
      %v7823 = vld [vmem:[%s7822] ss:$2 sm:$0xff]
      %s7824 = scalar_lea.vmem [#allocation2], 628
      %v7825 = vld [vmem:[%s7824] ss:$2 sm:$0xff]
      %s7826 = scalar_lea.vmem [#allocation2], 644
      %v7827 = vld [vmem:[%s7826] ss:$2 sm:$0xff]
      %s7828 = scalar_lea.vmem [#allocation2], 660
      %v7829 = vld [vmem:[%s7828] ss:$2 sm:$0xff]
      %s7830 = scalar_lea.vmem [#allocation2], 676
      %v7831 = vld [vmem:[%s7830] ss:$2 sm:$0xff]
      %s7832 = scalar_lea.vmem [#allocation2], 692
      %v7833 = vld [vmem:[%s7832] ss:$2 sm:$0xff]
      %s7834 = scalar_lea.vmem [#allocation2], 708
      %v7835 = vld [vmem:[%s7834] ss:$2 sm:$0xff]
      %s7836 = scalar_lea.vmem [#allocation2], 724
      %v7837 = vld [vmem:[%s7836] ss:$2 sm:$0xff]
      %s7838 = scalar_lea.vmem [#allocation2], 740
      %v7839 = vld [vmem:[%s7838] ss:$2 sm:$0xff]
      %s7840 = scalar_lea.vmem [#allocation2], 756
      %v7841 = vld [vmem:[%s7840] ss:$2 sm:$0xff]
      %s7842 = scalar_lea.vmem [#allocation2], 772
      %v7843 = vld [vmem:[%s7842] ss:$2 sm:$0xff]
      %s7844 = scalar_lea.vmem [#allocation2], 788
      %v7845 = vld [vmem:[%s7844] ss:$2 sm:$0xff]
      %s7846 = scalar_lea.vmem [#allocation2], 804
      %v7847 = vld [vmem:[%s7846] ss:$2 sm:$0xff]
      %s7848 = scalar_lea.vmem [#allocation2], 820
      %v7849 = vld [vmem:[%s7848] ss:$2 sm:$0xff]
      %s7850 = scalar_lea.vmem [#allocation2], 836
      %v7851 = vld [vmem:[%s7850] ss:$2 sm:$0xff]
      %s7852 = scalar_lea.vmem [#allocation2], 852
      %v7853 = vld [vmem:[%s7852] ss:$2 sm:$0xff]
      %s7854 = scalar_lea.vmem [#allocation2], 868
      %v7855 = vld [vmem:[%s7854] ss:$2 sm:$0xff]
      %s7856 = scalar_lea.vmem [#allocation2], 884
      %v7857 = vld [vmem:[%s7856] ss:$2 sm:$0xff]
      %s7858 = scalar_lea.vmem [#allocation2], 900
      %v7859 = vld [vmem:[%s7858] ss:$2 sm:$0xff]
      %s7860 = scalar_lea.vmem [#allocation2], 916
      %v7861 = vld [vmem:[%s7860] ss:$2 sm:$0xff]
      %s7862 = scalar_lea.vmem [#allocation2], 932
      %v7863 = vld [vmem:[%s7862] ss:$2 sm:$0xff]
      %s7864 = scalar_lea.vmem [#allocation2], 948
      %v7865 = vld [vmem:[%s7864] ss:$2 sm:$0xff]
      %s7866 = scalar_lea.vmem [#allocation2], 964
      %v7867 = vld [vmem:[%s7866] ss:$2 sm:$0xff]
      %s7868 = scalar_lea.vmem [#allocation2], 69
      %v7869 = vld [vmem:[%s7868] ss:$2 sm:$0xff]
      %s7870 = scalar_lea.vmem [#allocation2], 85
      %v7871 = vld [vmem:[%s7870] ss:$2 sm:$0xff]
      %s7872 = scalar_lea.vmem [#allocation2], 101
      %v7873 = vld [vmem:[%s7872] ss:$2 sm:$0xff]
      %s7874 = scalar_lea.vmem [#allocation2], 117
      %v7875 = vld [vmem:[%s7874] ss:$2 sm:$0xff]
      %s7876 = scalar_lea.vmem [#allocation2], 133
      %v7877 = vld [vmem:[%s7876] ss:$2 sm:$0xff]
      %s7878 = scalar_lea.vmem [#allocation2], 149
      %v7879 = vld [vmem:[%s7878] ss:$2 sm:$0xff]
      %s7880 = scalar_lea.vmem [#allocation2], 165
      %v7881 = vld [vmem:[%s7880] ss:$2 sm:$0xff]
      %s7882 = scalar_lea.vmem [#allocation2], 181
      %v7883 = vld [vmem:[%s7882] ss:$2 sm:$0xff]
      %s7884 = scalar_lea.vmem [#allocation2], 197
      %v7885 = vld [vmem:[%s7884] ss:$2 sm:$0xff]
      %s7886 = scalar_lea.vmem [#allocation2], 213
      %v7887 = vld [vmem:[%s7886] ss:$2 sm:$0xff]
      %s7888 = scalar_lea.vmem [#allocation2], 229
      %v7889 = vld [vmem:[%s7888] ss:$2 sm:$0xff]
      %s7890 = scalar_lea.vmem [#allocation2], 245
      %v7891 = vld [vmem:[%s7890] ss:$2 sm:$0xff]
      %s7892 = scalar_lea.vmem [#allocation2], 261
      %v7893 = vld [vmem:[%s7892] ss:$2 sm:$0xff]
      %s7894 = scalar_lea.vmem [#allocation2], 277
      %v7895 = vld [vmem:[%s7894] ss:$2 sm:$0xff]
      %s7896 = scalar_lea.vmem [#allocation2], 293
      %v7897 = vld [vmem:[%s7896] ss:$2 sm:$0xff]
      %s7898 = scalar_lea.vmem [#allocation2], 309
      %v7899 = vld [vmem:[%s7898] ss:$2 sm:$0xff]
      %s7900 = scalar_lea.vmem [#allocation2], 325
      %v7901 = vld [vmem:[%s7900] ss:$2 sm:$0xff]
      %s7902 = scalar_lea.vmem [#allocation2], 341
      %v7903 = vld [vmem:[%s7902] ss:$2 sm:$0xff]
      %s7904 = scalar_lea.vmem [#allocation2], 357
      %v7905 = vld [vmem:[%s7904] ss:$2 sm:$0xff]
      %s7906 = scalar_lea.vmem [#allocation2], 373
      %v7907 = vld [vmem:[%s7906] ss:$2 sm:$0xff]
      %s7908 = scalar_lea.vmem [#allocation2], 389
      %v7909 = vld [vmem:[%s7908] ss:$2 sm:$0xff]
      %s7910 = scalar_lea.vmem [#allocation2], 405
      %v7911 = vld [vmem:[%s7910] ss:$2 sm:$0xff]
      %s7912 = scalar_lea.vmem [#allocation2], 421
      %v7913 = vld [vmem:[%s7912] ss:$2 sm:$0xff]
      %s7914 = scalar_lea.vmem [#allocation2], 437
      %v7915 = vld [vmem:[%s7914] ss:$2 sm:$0xff]
      %s7916 = scalar_lea.vmem [#allocation2], 453
      %v7917 = vld [vmem:[%s7916] ss:$2 sm:$0xff]
      %s7918 = scalar_lea.vmem [#allocation2], 469
      %v7919 = vld [vmem:[%s7918] ss:$2 sm:$0xff]
      %s7920 = scalar_lea.vmem [#allocation2], 485
      %v7921 = vld [vmem:[%s7920] ss:$2 sm:$0xff]
      %s7922 = scalar_lea.vmem [#allocation2], 501
      %v7923 = vld [vmem:[%s7922] ss:$2 sm:$0xff]
      %s7924 = scalar_lea.vmem [#allocation2], 517
      %v7925 = vld [vmem:[%s7924] ss:$2 sm:$0xff]
      %s7926 = scalar_lea.vmem [#allocation2], 533
      %v7927 = vld [vmem:[%s7926] ss:$2 sm:$0xff]
      %s7928 = scalar_lea.vmem [#allocation2], 549
      %v7929 = vld [vmem:[%s7928] ss:$2 sm:$0xff]
      %s7930 = scalar_lea.vmem [#allocation2], 565
      %v7931 = vld [vmem:[%s7930] ss:$2 sm:$0xff]
      %s7932 = scalar_lea.vmem [#allocation2], 581
      %v7933 = vld [vmem:[%s7932] ss:$2 sm:$0xff]
      %s7934 = scalar_lea.vmem [#allocation2], 597
      %v7935 = vld [vmem:[%s7934] ss:$2 sm:$0xff]
      %s7936 = scalar_lea.vmem [#allocation2], 613
      %v7937 = vld [vmem:[%s7936] ss:$2 sm:$0xff]
      %s7938 = scalar_lea.vmem [#allocation2], 629
      %v7939 = vld [vmem:[%s7938] ss:$2 sm:$0xff]
      %s7940 = scalar_lea.vmem [#allocation2], 645
      %v7941 = vld [vmem:[%s7940] ss:$2 sm:$0xff]
      %s7942 = scalar_lea.vmem [#allocation2], 661
      %v7943 = vld [vmem:[%s7942] ss:$2 sm:$0xff]
      %s7944 = scalar_lea.vmem [#allocation2], 677
      %v7945 = vld [vmem:[%s7944] ss:$2 sm:$0xff]
      %s7946 = scalar_lea.vmem [#allocation2], 693
      %v7947 = vld [vmem:[%s7946] ss:$2 sm:$0xff]
      %s7948 = scalar_lea.vmem [#allocation2], 709
      %v7949 = vld [vmem:[%s7948] ss:$2 sm:$0xff]
      %s7950 = scalar_lea.vmem [#allocation2], 725
      %v7951 = vld [vmem:[%s7950] ss:$2 sm:$0xff]
      %s7952 = scalar_lea.vmem [#allocation2], 741
      %v7953 = vld [vmem:[%s7952] ss:$2 sm:$0xff]
      %s7954 = scalar_lea.vmem [#allocation2], 757
      %v7955 = vld [vmem:[%s7954] ss:$2 sm:$0xff]
      %s7956 = scalar_lea.vmem [#allocation2], 773
      %v7957 = vld [vmem:[%s7956] ss:$2 sm:$0xff]
      %s7958 = scalar_lea.vmem [#allocation2], 789
      %v7959 = vld [vmem:[%s7958] ss:$2 sm:$0xff]
      %s7960 = scalar_lea.vmem [#allocation2], 805
      %v7961 = vld [vmem:[%s7960] ss:$2 sm:$0xff]
      %s7962 = scalar_lea.vmem [#allocation2], 821
      %v7963 = vld [vmem:[%s7962] ss:$2 sm:$0xff]
      %s7964 = scalar_lea.vmem [#allocation2], 837
      %v7965 = vld [vmem:[%s7964] ss:$2 sm:$0xff]
      %s7966 = scalar_lea.vmem [#allocation2], 853
      %v7967 = vld [vmem:[%s7966] ss:$2 sm:$0xff]
      %s7968 = scalar_lea.vmem [#allocation2], 869
      %v7969 = vld [vmem:[%s7968] ss:$2 sm:$0xff]
      %s7970 = scalar_lea.vmem [#allocation2], 885
      %v7971 = vld [vmem:[%s7970] ss:$2 sm:$0xff]
      %s7972 = scalar_lea.vmem [#allocation2], 901
      %v7973 = vld [vmem:[%s7972] ss:$2 sm:$0xff]
      %s7974 = scalar_lea.vmem [#allocation2], 917
      %v7975 = vld [vmem:[%s7974] ss:$2 sm:$0xff]
      %s7976 = scalar_lea.vmem [#allocation2], 933
      %v7977 = vld [vmem:[%s7976] ss:$2 sm:$0xff]
      %s7978 = scalar_lea.vmem [#allocation2], 949
      %v7979 = vld [vmem:[%s7978] ss:$2 sm:$0xff]
      %s7980 = scalar_lea.vmem [#allocation2], 965
      %v7981 = vld [vmem:[%s7980] ss:$2 sm:$0xff]
      %s7982 = scalar_lea.vmem [#allocation2], 70
      %v7983 = vld [vmem:[%s7982] ss:$2 sm:$0xff]
      %s7984 = scalar_lea.vmem [#allocation2], 86
      %v7985 = vld [vmem:[%s7984] ss:$2 sm:$0xff]
      %s7986 = scalar_lea.vmem [#allocation2], 102
      %v7987 = vld [vmem:[%s7986] ss:$2 sm:$0xff]
      %s7988 = scalar_lea.vmem [#allocation2], 118
      %v7989 = vld [vmem:[%s7988] ss:$2 sm:$0xff]
      %s7990 = scalar_lea.vmem [#allocation2], 134
      %v7991 = vld [vmem:[%s7990] ss:$2 sm:$0xff]
      %s7992 = scalar_lea.vmem [#allocation2], 150
      %v7993 = vld [vmem:[%s7992] ss:$2 sm:$0xff]
      %s7994 = scalar_lea.vmem [#allocation2], 166
      %v7995 = vld [vmem:[%s7994] ss:$2 sm:$0xff]
      %s7996 = scalar_lea.vmem [#allocation2], 182
      %v7997 = vld [vmem:[%s7996] ss:$2 sm:$0xff]
      %s7998 = scalar_lea.vmem [#allocation2], 198
      %v7999 = vld [vmem:[%s7998] ss:$2 sm:$0xff]
      %s8000 = scalar_lea.vmem [#allocation2], 214
      %v8001 = vld [vmem:[%s8000] ss:$2 sm:$0xff]
      %s8002 = scalar_lea.vmem [#allocation2], 230
      %v8003 = vld [vmem:[%s8002] ss:$2 sm:$0xff]
      %s8004 = scalar_lea.vmem [#allocation2], 246
      %v8005 = vld [vmem:[%s8004] ss:$2 sm:$0xff]
      %s8006 = scalar_lea.vmem [#allocation2], 262
      %v8007 = vld [vmem:[%s8006] ss:$2 sm:$0xff]
      %s8008 = scalar_lea.vmem [#allocation2], 278
      %v8009 = vld [vmem:[%s8008] ss:$2 sm:$0xff]
      %s8010 = scalar_lea.vmem [#allocation2], 294
      %v8011 = vld [vmem:[%s8010] ss:$2 sm:$0xff]
      %s8012 = scalar_lea.vmem [#allocation2], 310
      %v8013 = vld [vmem:[%s8012] ss:$2 sm:$0xff]
      %s8014 = scalar_lea.vmem [#allocation2], 326
      %v8015 = vld [vmem:[%s8014] ss:$2 sm:$0xff]
      %s8016 = scalar_lea.vmem [#allocation2], 342
      %v8017 = vld [vmem:[%s8016] ss:$2 sm:$0xff]
      %s8018 = scalar_lea.vmem [#allocation2], 358
      %v8019 = vld [vmem:[%s8018] ss:$2 sm:$0xff]
      %s8020 = scalar_lea.vmem [#allocation2], 374
      %v8021 = vld [vmem:[%s8020] ss:$2 sm:$0xff]
      %s8022 = scalar_lea.vmem [#allocation2], 390
      %v8023 = vld [vmem:[%s8022] ss:$2 sm:$0xff]
      %s8024 = scalar_lea.vmem [#allocation2], 406
      %v8025 = vld [vmem:[%s8024] ss:$2 sm:$0xff]
      %s8026 = scalar_lea.vmem [#allocation2], 422
      %v8027 = vld [vmem:[%s8026] ss:$2 sm:$0xff]
      %s8028 = scalar_lea.vmem [#allocation2], 438
      %v8029 = vld [vmem:[%s8028] ss:$2 sm:$0xff]
      %s8030 = scalar_lea.vmem [#allocation2], 454
      %v8031 = vld [vmem:[%s8030] ss:$2 sm:$0xff]
      %s8032 = scalar_lea.vmem [#allocation2], 470
      %v8033 = vld [vmem:[%s8032] ss:$2 sm:$0xff]
      %s8034 = scalar_lea.vmem [#allocation2], 486
      %v8035 = vld [vmem:[%s8034] ss:$2 sm:$0xff]
      %s8036 = scalar_lea.vmem [#allocation2], 502
      %v8037 = vld [vmem:[%s8036] ss:$2 sm:$0xff]
      %s8038 = scalar_lea.vmem [#allocation2], 518
      %v8039 = vld [vmem:[%s8038] ss:$2 sm:$0xff]
      %s8040 = scalar_lea.vmem [#allocation2], 534
      %v8041 = vld [vmem:[%s8040] ss:$2 sm:$0xff]
      %s8042 = scalar_lea.vmem [#allocation2], 550
      %v8043 = vld [vmem:[%s8042] ss:$2 sm:$0xff]
      %s8044 = scalar_lea.vmem [#allocation2], 566
      %v8045 = vld [vmem:[%s8044] ss:$2 sm:$0xff]
      %s8046 = scalar_lea.vmem [#allocation2], 582
      %v8047 = vld [vmem:[%s8046] ss:$2 sm:$0xff]
      %s8048 = scalar_lea.vmem [#allocation2], 598
      %v8049 = vld [vmem:[%s8048] ss:$2 sm:$0xff]
      %s8050 = scalar_lea.vmem [#allocation2], 614
      %v8051 = vld [vmem:[%s8050] ss:$2 sm:$0xff]
      %s8052 = scalar_lea.vmem [#allocation2], 630
      %v8053 = vld [vmem:[%s8052] ss:$2 sm:$0xff]
      %s8054 = scalar_lea.vmem [#allocation2], 646
      %v8055 = vld [vmem:[%s8054] ss:$2 sm:$0xff]
      %s8056 = scalar_lea.vmem [#allocation2], 662
      %v8057 = vld [vmem:[%s8056] ss:$2 sm:$0xff]
      %s8058 = scalar_lea.vmem [#allocation2], 678
      %v8059 = vld [vmem:[%s8058] ss:$2 sm:$0xff]
      %s8060 = scalar_lea.vmem [#allocation2], 694
      %v8061 = vld [vmem:[%s8060] ss:$2 sm:$0xff]
      %s8062 = scalar_lea.vmem [#allocation2], 710
      %v8063 = vld [vmem:[%s8062] ss:$2 sm:$0xff]
      %s8064 = scalar_lea.vmem [#allocation2], 726
      %v8065 = vld [vmem:[%s8064] ss:$2 sm:$0xff]
      %s8066 = scalar_lea.vmem [#allocation2], 742
      %v8067 = vld [vmem:[%s8066] ss:$2 sm:$0xff]
      %s8068 = scalar_lea.vmem [#allocation2], 758
      %v8069 = vld [vmem:[%s8068] ss:$2 sm:$0xff]
      %s8070 = scalar_lea.vmem [#allocation2], 774
      %v8071 = vld [vmem:[%s8070] ss:$2 sm:$0xff]
      %s8072 = scalar_lea.vmem [#allocation2], 790
      %v8073 = vld [vmem:[%s8072] ss:$2 sm:$0xff]
      %s8074 = scalar_lea.vmem [#allocation2], 806
      %v8075 = vld [vmem:[%s8074] ss:$2 sm:$0xff]
      %s8076 = scalar_lea.vmem [#allocation2], 822
      %v8077 = vld [vmem:[%s8076] ss:$2 sm:$0xff]
      %s8078 = scalar_lea.vmem [#allocation2], 838
      %v8079 = vld [vmem:[%s8078] ss:$2 sm:$0xff]
      %s8080 = scalar_lea.vmem [#allocation2], 854
      %v8081 = vld [vmem:[%s8080] ss:$2 sm:$0xff]
      %s8082 = scalar_lea.vmem [#allocation2], 870
      %v8083 = vld [vmem:[%s8082] ss:$2 sm:$0xff]
      %s8084 = scalar_lea.vmem [#allocation2], 886
      %v8085 = vld [vmem:[%s8084] ss:$2 sm:$0xff]
      %s8086 = scalar_lea.vmem [#allocation2], 902
      %v8087 = vld [vmem:[%s8086] ss:$2 sm:$0xff]
      %s8088 = scalar_lea.vmem [#allocation2], 918
      %v8089 = vld [vmem:[%s8088] ss:$2 sm:$0xff]
      %s8090 = scalar_lea.vmem [#allocation2], 934
      %v8091 = vld [vmem:[%s8090] ss:$2 sm:$0xff]
      %s8092 = scalar_lea.vmem [#allocation2], 950
      %v8093 = vld [vmem:[%s8092] ss:$2 sm:$0xff]
      %s8094 = scalar_lea.vmem [#allocation2], 966
      %v8095 = vld [vmem:[%s8094] ss:$2 sm:$0xff]
      %8153 = vrot.lane.b32.xlu0 %v7405, 4
      %v8154 = vpop.permute.xlu0 %8153
      %8155 = vrot.lane.b32.xlu0 %v7407, 4
      %v8156 = vpop.permute.xlu0 %8155
      %8157 = vrot.lane.b32.xlu0 %v7409, 4
      %v8158 = vpop.permute.xlu0 %8157
      %8159 = vrot.lane.b32.xlu0 %v7411, 4
      %v8160 = vpop.permute.xlu0 %8159
      %8161 = vrot.lane.b32.xlu0 %v7413, 4
      %v8162 = vpop.permute.xlu0 %8161
      %8163 = vrot.lane.b32.xlu0 %v7415, 4
      %v8164 = vpop.permute.xlu0 %8163
      %8165 = vrot.lane.b32.xlu0 %v7417, 4
      %v8166 = vpop.permute.xlu0 %8165
      %8167 = vrot.lane.b32.xlu0 %v7419, 4
      %v8168 = vpop.permute.xlu0 %8167
      %8169 = vrot.lane.b32.xlu0 %v7421, 4
      %v8170 = vpop.permute.xlu0 %8169
      %8171 = vrot.lane.b32.xlu0 %v7423, 4
      %v8172 = vpop.permute.xlu0 %8171
      %8173 = vrot.lane.b32.xlu0 %v7425, 4
      %v8174 = vpop.permute.xlu0 %8173
      %8175 = vrot.lane.b32.xlu0 %v7427, 4
      %v8176 = vpop.permute.xlu0 %8175
      %8177 = vrot.lane.b32.xlu0 %v7429, 4
      %v8178 = vpop.permute.xlu0 %8177
      %8179 = vrot.lane.b32.xlu0 %v7431, 4
      %v8180 = vpop.permute.xlu0 %8179
      %8181 = vrot.lane.b32.xlu0 %v7433, 4
      %v8182 = vpop.permute.xlu0 %8181
      %8183 = vrot.lane.b32.xlu0 %v7435, 4
      %v8184 = vpop.permute.xlu0 %8183
      %8185 = vrot.lane.b32.xlu0 %v7437, 4
      %v8186 = vpop.permute.xlu0 %8185
      %8187 = vrot.lane.b32.xlu0 %v7439, 4
      %v8188 = vpop.permute.xlu0 %8187
      %8189 = vrot.lane.b32.xlu0 %v7441, 4
      %v8190 = vpop.permute.xlu0 %8189
      %8191 = vrot.lane.b32.xlu0 %v7443, 4
      %v8192 = vpop.permute.xlu0 %8191
      %8193 = vrot.lane.b32.xlu0 %v7445, 4
      %v8194 = vpop.permute.xlu0 %8193
      %8195 = vrot.lane.b32.xlu0 %v7447, 4
      %v8196 = vpop.permute.xlu0 %8195
      %8197 = vrot.lane.b32.xlu0 %v7449, 4
      %v8198 = vpop.permute.xlu0 %8197
      %8199 = vrot.lane.b32.xlu0 %v7451, 4
      %v8200 = vpop.permute.xlu0 %8199
      %8201 = vrot.lane.b32.xlu0 %v7453, 4
      %v8202 = vpop.permute.xlu0 %8201
      %8203 = vrot.lane.b32.xlu0 %v7455, 4
      %v8204 = vpop.permute.xlu0 %8203
      %8205 = vrot.lane.b32.xlu0 %v7457, 4
      %v8206 = vpop.permute.xlu0 %8205
      %8207 = vrot.lane.b32.xlu0 %v7459, 4
      %v8208 = vpop.permute.xlu0 %8207
      %8209 = vrot.lane.b32.xlu0 %v7461, 4
      %v8210 = vpop.permute.xlu0 %8209
      %8211 = vrot.lane.b32.xlu0 %v7463, 4
      %v8212 = vpop.permute.xlu0 %8211
      %8213 = vrot.lane.b32.xlu0 %v7465, 4
      %v8214 = vpop.permute.xlu0 %8213
      %8215 = vrot.lane.b32.xlu0 %v7467, 4
      %v8216 = vpop.permute.xlu0 %8215
      %8217 = vrot.lane.b32.xlu0 %v7469, 4
      %v8218 = vpop.permute.xlu0 %8217
      %8219 = vrot.lane.b32.xlu0 %v7471, 4
      %v8220 = vpop.permute.xlu0 %8219
      %8221 = vrot.lane.b32.xlu0 %v7473, 4
      %v8222 = vpop.permute.xlu0 %8221
      %8223 = vrot.lane.b32.xlu0 %v7475, 4
      %v8224 = vpop.permute.xlu0 %8223
      %8225 = vrot.lane.b32.xlu0 %v7477, 4
      %v8226 = vpop.permute.xlu0 %8225
      %8227 = vrot.lane.b32.xlu0 %v7479, 4
      %v8228 = vpop.permute.xlu0 %8227
      %8229 = vrot.lane.b32.xlu0 %v7481, 4
      %v8230 = vpop.permute.xlu0 %8229
      %8231 = vrot.lane.b32.xlu0 %v7483, 4
      %v8232 = vpop.permute.xlu0 %8231
      %8233 = vrot.lane.b32.xlu0 %v7485, 4
      %v8234 = vpop.permute.xlu0 %8233
      %8235 = vrot.lane.b32.xlu0 %v7487, 4
      %v8236 = vpop.permute.xlu0 %8235
      %8237 = vrot.lane.b32.xlu0 %v7489, 4
      %v8238 = vpop.permute.xlu0 %8237
      %8239 = vrot.lane.b32.xlu0 %v7491, 4
      %v8240 = vpop.permute.xlu0 %8239
      %8241 = vrot.lane.b32.xlu0 %v7493, 4
      %v8242 = vpop.permute.xlu0 %8241
      %8243 = vrot.lane.b32.xlu0 %v7495, 4
      %v8244 = vpop.permute.xlu0 %8243
      %8245 = vrot.lane.b32.xlu0 %v7497, 4
      %v8246 = vpop.permute.xlu0 %8245
      %8247 = vrot.lane.b32.xlu0 %v7499, 4
      %v8248 = vpop.permute.xlu0 %8247
      %8249 = vrot.lane.b32.xlu0 %v7501, 4
      %v8250 = vpop.permute.xlu0 %8249
      %8251 = vrot.lane.b32.xlu0 %v7503, 4
      %v8252 = vpop.permute.xlu0 %8251
      %8253 = vrot.lane.b32.xlu0 %v7505, 4
      %v8254 = vpop.permute.xlu0 %8253
      %8255 = vrot.lane.b32.xlu0 %v7507, 4
      %v8256 = vpop.permute.xlu0 %8255
      %8257 = vrot.lane.b32.xlu0 %v7509, 4
      %v8258 = vpop.permute.xlu0 %8257
      %8259 = vrot.lane.b32.xlu0 %v7511, 4
      %v8260 = vpop.permute.xlu0 %8259
      %8261 = vrot.lane.b32.xlu0 %v7513, 4
      %v8262 = vpop.permute.xlu0 %8261
      %8263 = vrot.lane.b32.xlu0 %v7515, 4
      %v8264 = vpop.permute.xlu0 %8263
      %8265 = vrot.lane.b32.xlu0 %v7517, 4
      %v8266 = vpop.permute.xlu0 %8265
      %8381 = vrot.lane.b32.xlu0 %v7519, 8
      %v8382 = vpop.permute.xlu0 %8381
      %8383 = vrot.lane.b32.xlu0 %v7521, 8
      %v8384 = vpop.permute.xlu0 %8383
      %8385 = vrot.lane.b32.xlu0 %v7523, 8
      %v8386 = vpop.permute.xlu0 %8385
      %8387 = vrot.lane.b32.xlu0 %v7525, 8
      %v8388 = vpop.permute.xlu0 %8387
      %8389 = vrot.lane.b32.xlu0 %v7527, 8
      %v8390 = vpop.permute.xlu0 %8389
      %8391 = vrot.lane.b32.xlu0 %v7529, 8
      %v8392 = vpop.permute.xlu0 %8391
      %8393 = vrot.lane.b32.xlu0 %v7531, 8
      %v8394 = vpop.permute.xlu0 %8393
      %8395 = vrot.lane.b32.xlu0 %v7533, 8
      %v8396 = vpop.permute.xlu0 %8395
      %8397 = vrot.lane.b32.xlu0 %v7535, 8
      %v8398 = vpop.permute.xlu0 %8397
      %8399 = vrot.lane.b32.xlu0 %v7537, 8
      %v8400 = vpop.permute.xlu0 %8399
      %8401 = vrot.lane.b32.xlu0 %v7539, 8
      %v8402 = vpop.permute.xlu0 %8401
      %8403 = vrot.lane.b32.xlu0 %v7541, 8
      %v8404 = vpop.permute.xlu0 %8403
      %8405 = vrot.lane.b32.xlu0 %v7543, 8
      %v8406 = vpop.permute.xlu0 %8405
      %8407 = vrot.lane.b32.xlu0 %v7545, 8
      %v8408 = vpop.permute.xlu0 %8407
      %8409 = vrot.lane.b32.xlu0 %v7547, 8
      %v8410 = vpop.permute.xlu0 %8409
      %8411 = vrot.lane.b32.xlu0 %v7549, 8
      %v8412 = vpop.permute.xlu0 %8411
      %8413 = vrot.lane.b32.xlu0 %v7551, 8
      %v8414 = vpop.permute.xlu0 %8413
      %8415 = vrot.lane.b32.xlu0 %v7553, 8
      %v8416 = vpop.permute.xlu0 %8415
      %8417 = vrot.lane.b32.xlu0 %v7555, 8
      %v8418 = vpop.permute.xlu0 %8417
      %8419 = vrot.lane.b32.xlu0 %v7557, 8
      %v8420 = vpop.permute.xlu0 %8419
      %8421 = vrot.lane.b32.xlu0 %v7559, 8
      %v8422 = vpop.permute.xlu0 %8421
      %8423 = vrot.lane.b32.xlu0 %v7561, 8
      %v8424 = vpop.permute.xlu0 %8423
      %8425 = vrot.lane.b32.xlu0 %v7563, 8
      %v8426 = vpop.permute.xlu0 %8425
      %8427 = vrot.lane.b32.xlu0 %v7565, 8
      %v8428 = vpop.permute.xlu0 %8427
      %8429 = vrot.lane.b32.xlu0 %v7567, 8
      %v8430 = vpop.permute.xlu0 %8429
      %8431 = vrot.lane.b32.xlu0 %v7569, 8
      %v8432 = vpop.permute.xlu0 %8431
      %8433 = vrot.lane.b32.xlu0 %v7571, 8
      %v8434 = vpop.permute.xlu0 %8433
      %8435 = vrot.lane.b32.xlu0 %v7573, 8
      %v8436 = vpop.permute.xlu0 %8435
      %8437 = vrot.lane.b32.xlu0 %v7575, 8
      %v8438 = vpop.permute.xlu0 %8437
      %8439 = vrot.lane.b32.xlu0 %v7577, 8
      %v8440 = vpop.permute.xlu0 %8439
      %8441 = vrot.lane.b32.xlu0 %v7579, 8
      %v8442 = vpop.permute.xlu0 %8441
      %8443 = vrot.lane.b32.xlu0 %v7581, 8
      %v8444 = vpop.permute.xlu0 %8443
      %8445 = vrot.lane.b32.xlu0 %v7583, 8
      %v8446 = vpop.permute.xlu0 %8445
      %8447 = vrot.lane.b32.xlu0 %v7585, 8
      %v8448 = vpop.permute.xlu0 %8447
      %8449 = vrot.lane.b32.xlu0 %v7587, 8
      %v8450 = vpop.permute.xlu0 %8449
      %8451 = vrot.lane.b32.xlu0 %v7589, 8
      %v8452 = vpop.permute.xlu0 %8451
      %8453 = vrot.lane.b32.xlu0 %v7591, 8
      %v8454 = vpop.permute.xlu0 %8453
      %8455 = vrot.lane.b32.xlu0 %v7593, 8
      %v8456 = vpop.permute.xlu0 %8455
      %8457 = vrot.lane.b32.xlu0 %v7595, 8
      %v8458 = vpop.permute.xlu0 %8457
      %8459 = vrot.lane.b32.xlu0 %v7597, 8
      %v8460 = vpop.permute.xlu0 %8459
      %8461 = vrot.lane.b32.xlu0 %v7599, 8
      %v8462 = vpop.permute.xlu0 %8461
      %8463 = vrot.lane.b32.xlu0 %v7601, 8
      %v8464 = vpop.permute.xlu0 %8463
      %8465 = vrot.lane.b32.xlu0 %v7603, 8
      %v8466 = vpop.permute.xlu0 %8465
      %8467 = vrot.lane.b32.xlu0 %v7605, 8
      %v8468 = vpop.permute.xlu0 %8467
      %8469 = vrot.lane.b32.xlu0 %v7607, 8
      %v8470 = vpop.permute.xlu0 %8469
      %8471 = vrot.lane.b32.xlu0 %v7609, 8
      %v8472 = vpop.permute.xlu0 %8471
      %8473 = vrot.lane.b32.xlu0 %v7611, 8
      %v8474 = vpop.permute.xlu0 %8473
      %8475 = vrot.lane.b32.xlu0 %v7613, 8
      %v8476 = vpop.permute.xlu0 %8475
      %8477 = vrot.lane.b32.xlu0 %v7615, 8
      %v8478 = vpop.permute.xlu0 %8477
      %8479 = vrot.lane.b32.xlu0 %v7617, 8
      %v8480 = vpop.permute.xlu0 %8479
      %8481 = vrot.lane.b32.xlu0 %v7619, 8
      %v8482 = vpop.permute.xlu0 %8481
      %8483 = vrot.lane.b32.xlu0 %v7621, 8
      %v8484 = vpop.permute.xlu0 %8483
      %8485 = vrot.lane.b32.xlu0 %v7623, 8
      %v8486 = vpop.permute.xlu0 %8485
      %8487 = vrot.lane.b32.xlu0 %v7625, 8
      %v8488 = vpop.permute.xlu0 %8487
      %8489 = vrot.lane.b32.xlu0 %v7627, 8
      %v8490 = vpop.permute.xlu0 %8489
      %8491 = vrot.lane.b32.xlu0 %v7629, 8
      %v8492 = vpop.permute.xlu0 %8491
      %8493 = vrot.lane.b32.xlu0 %v7631, 8
      %v8494 = vpop.permute.xlu0 %8493
      %8554 = vrot.lane.b32.xlu0 %v7523, 12
      %v8555 = vpop.permute.xlu0 %8554
      %8556 = vrot.lane.b32.xlu0 %v7525, 12
      %v8557 = vpop.permute.xlu0 %8556
      %8558 = vrot.lane.b32.xlu0 %v7527, 12
      %v8559 = vpop.permute.xlu0 %8558
      %8560 = vrot.lane.b32.xlu0 %v7529, 12
      %v8561 = vpop.permute.xlu0 %8560
      %8562 = vrot.lane.b32.xlu0 %v7531, 12
      %v8563 = vpop.permute.xlu0 %8562
      %8564 = vrot.lane.b32.xlu0 %v7533, 12
      %v8565 = vpop.permute.xlu0 %8564
      %8566 = vrot.lane.b32.xlu0 %v7535, 12
      %v8567 = vpop.permute.xlu0 %8566
      %8568 = vrot.lane.b32.xlu0 %v7537, 12
      %v8569 = vpop.permute.xlu0 %8568
      %8570 = vrot.lane.b32.xlu0 %v7539, 12
      %v8571 = vpop.permute.xlu0 %8570
      %8572 = vrot.lane.b32.xlu0 %v7541, 12
      %v8573 = vpop.permute.xlu0 %8572
      %8574 = vrot.lane.b32.xlu0 %v7543, 12
      %v8575 = vpop.permute.xlu0 %8574
      %8576 = vrot.lane.b32.xlu0 %v7545, 12
      %v8577 = vpop.permute.xlu0 %8576
      %8578 = vrot.lane.b32.xlu0 %v7547, 12
      %v8579 = vpop.permute.xlu0 %8578
      %8580 = vrot.lane.b32.xlu0 %v7549, 12
      %v8581 = vpop.permute.xlu0 %8580
      %8582 = vrot.lane.b32.xlu0 %v7551, 12
      %v8583 = vpop.permute.xlu0 %8582
      %8584 = vrot.lane.b32.xlu0 %v7553, 12
      %v8585 = vpop.permute.xlu0 %8584
      %8586 = vrot.lane.b32.xlu0 %v7555, 12
      %v8587 = vpop.permute.xlu0 %8586
      %8588 = vrot.lane.b32.xlu0 %v7557, 12
      %v8589 = vpop.permute.xlu0 %8588
      %8590 = vrot.lane.b32.xlu0 %v7559, 12
      %v8591 = vpop.permute.xlu0 %8590
      %8592 = vrot.lane.b32.xlu0 %v7561, 12
      %v8593 = vpop.permute.xlu0 %8592
      %8594 = vrot.lane.b32.xlu0 %v7563, 12
      %v8595 = vpop.permute.xlu0 %8594
      %8596 = vrot.lane.b32.xlu0 %v7565, 12
      %v8597 = vpop.permute.xlu0 %8596
      %8598 = vrot.lane.b32.xlu0 %v7567, 12
      %v8599 = vpop.permute.xlu0 %8598
      %8600 = vrot.lane.b32.xlu0 %v7569, 12
      %v8601 = vpop.permute.xlu0 %8600
      %8602 = vrot.lane.b32.xlu0 %v7571, 12
      %v8603 = vpop.permute.xlu0 %8602
      %8604 = vrot.lane.b32.xlu0 %v7573, 12
      %v8605 = vpop.permute.xlu0 %8604
      %8606 = vrot.lane.b32.xlu0 %v7575, 12
      %v8607 = vpop.permute.xlu0 %8606
      %8608 = vrot.lane.b32.xlu0 %v7577, 12
      %v8609 = vpop.permute.xlu0 %8608
      %8610 = vrot.lane.b32.xlu0 %v7579, 12
      %v8611 = vpop.permute.xlu0 %8610
      %8612 = vrot.lane.b32.xlu0 %v7581, 12
      %v8613 = vpop.permute.xlu0 %8612
      %8614 = vrot.lane.b32.xlu0 %v7583, 12
      %v8615 = vpop.permute.xlu0 %8614
      %8616 = vrot.lane.b32.xlu0 %v7585, 12
      %v8617 = vpop.permute.xlu0 %8616
      %8618 = vrot.lane.b32.xlu0 %v7587, 12
      %v8619 = vpop.permute.xlu0 %8618
      %8620 = vrot.lane.b32.xlu0 %v7589, 12
      %v8621 = vpop.permute.xlu0 %8620
      %8622 = vrot.lane.b32.xlu0 %v7591, 12
      %v8623 = vpop.permute.xlu0 %8622
      %8624 = vrot.lane.b32.xlu0 %v7593, 12
      %v8625 = vpop.permute.xlu0 %8624
      %8626 = vrot.lane.b32.xlu0 %v7595, 12
      %v8627 = vpop.permute.xlu0 %8626
      %8628 = vrot.lane.b32.xlu0 %v7597, 12
      %v8629 = vpop.permute.xlu0 %8628
      %8630 = vrot.lane.b32.xlu0 %v7599, 12
      %v8631 = vpop.permute.xlu0 %8630
      %8632 = vrot.lane.b32.xlu0 %v7601, 12
      %v8633 = vpop.permute.xlu0 %8632
      %8634 = vrot.lane.b32.xlu0 %v7603, 12
      %v8635 = vpop.permute.xlu0 %8634
      %8636 = vrot.lane.b32.xlu0 %v7605, 12
      %v8637 = vpop.permute.xlu0 %8636
      %8638 = vrot.lane.b32.xlu0 %v7607, 12
      %v8639 = vpop.permute.xlu0 %8638
      %8640 = vrot.lane.b32.xlu0 %v7609, 12
      %v8641 = vpop.permute.xlu0 %8640
      %8642 = vrot.lane.b32.xlu0 %v7611, 12
      %v8643 = vpop.permute.xlu0 %8642
      %8644 = vrot.lane.b32.xlu0 %v7613, 12
      %v8645 = vpop.permute.xlu0 %8644
      %8646 = vrot.lane.b32.xlu0 %v7615, 12
      %v8647 = vpop.permute.xlu0 %8646
      %8648 = vrot.lane.b32.xlu0 %v7617, 12
      %v8649 = vpop.permute.xlu0 %8648
      %8650 = vrot.lane.b32.xlu0 %v7619, 12
      %v8651 = vpop.permute.xlu0 %8650
      %8652 = vrot.lane.b32.xlu0 %v7621, 12
      %v8653 = vpop.permute.xlu0 %8652
      %8654 = vrot.lane.b32.xlu0 %v7623, 12
      %v8655 = vpop.permute.xlu0 %8654
      %8656 = vrot.lane.b32.xlu0 %v7625, 12
      %v8657 = vpop.permute.xlu0 %8656
      %8658 = vrot.lane.b32.xlu0 %v7627, 12
      %v8659 = vpop.permute.xlu0 %8658
      %8660 = vrot.lane.b32.xlu0 %v7629, 12
      %v8661 = vpop.permute.xlu0 %8660
      %8662 = vrot.lane.b32.xlu0 %v7631, 12
      %v8663 = vpop.permute.xlu0 %8662
      %8664 = vrot.lane.b32.xlu0 %v7633, 12
      %v8665 = vpop.permute.xlu0 %8664
      %8666 = vrot.lane.b32.xlu0 %v7635, 12
      %v8667 = vpop.permute.xlu0 %8666
      %8782 = vrot.lane.b32.xlu0 %v7637, 16
      %v8783 = vpop.permute.xlu0 %8782
      %8784 = vrot.lane.b32.xlu0 %v7639, 16
      %v8785 = vpop.permute.xlu0 %8784
      %8786 = vrot.lane.b32.xlu0 %v7641, 16
      %v8787 = vpop.permute.xlu0 %8786
      %8788 = vrot.lane.b32.xlu0 %v7643, 16
      %v8789 = vpop.permute.xlu0 %8788
      %8790 = vrot.lane.b32.xlu0 %v7645, 16
      %v8791 = vpop.permute.xlu0 %8790
      %8792 = vrot.lane.b32.xlu0 %v7647, 16
      %v8793 = vpop.permute.xlu0 %8792
      %8794 = vrot.lane.b32.xlu0 %v7649, 16
      %v8795 = vpop.permute.xlu0 %8794
      %8796 = vrot.lane.b32.xlu0 %v7651, 16
      %v8797 = vpop.permute.xlu0 %8796
      %8798 = vrot.lane.b32.xlu0 %v7653, 16
      %v8799 = vpop.permute.xlu0 %8798
      %8800 = vrot.lane.b32.xlu0 %v7655, 16
      %v8801 = vpop.permute.xlu0 %8800
      %8802 = vrot.lane.b32.xlu0 %v7657, 16
      %v8803 = vpop.permute.xlu0 %8802
      %8804 = vrot.lane.b32.xlu0 %v7659, 16
      %v8805 = vpop.permute.xlu0 %8804
      %8806 = vrot.lane.b32.xlu0 %v7661, 16
      %v8807 = vpop.permute.xlu0 %8806
      %8808 = vrot.lane.b32.xlu0 %v7663, 16
      %v8809 = vpop.permute.xlu0 %8808
      %8810 = vrot.lane.b32.xlu0 %v7665, 16
      %v8811 = vpop.permute.xlu0 %8810
      %8812 = vrot.lane.b32.xlu0 %v7667, 16
      %v8813 = vpop.permute.xlu0 %8812
      %8814 = vrot.lane.b32.xlu0 %v7669, 16
      %v8815 = vpop.permute.xlu0 %8814
      %8816 = vrot.lane.b32.xlu0 %v7671, 16
      %v8817 = vpop.permute.xlu0 %8816
      %8818 = vrot.lane.b32.xlu0 %v7673, 16
      %v8819 = vpop.permute.xlu0 %8818
      %8820 = vrot.lane.b32.xlu0 %v7675, 16
      %v8821 = vpop.permute.xlu0 %8820
      %8822 = vrot.lane.b32.xlu0 %v7677, 16
      %v8823 = vpop.permute.xlu0 %8822
      %8824 = vrot.lane.b32.xlu0 %v7679, 16
      %v8825 = vpop.permute.xlu0 %8824
      %8826 = vrot.lane.b32.xlu0 %v7681, 16
      %v8827 = vpop.permute.xlu0 %8826
      %8828 = vrot.lane.b32.xlu0 %v7683, 16
      %v8829 = vpop.permute.xlu0 %8828
      %8830 = vrot.lane.b32.xlu0 %v7685, 16
      %v8831 = vpop.permute.xlu0 %8830
      %8832 = vrot.lane.b32.xlu0 %v7687, 16
      %v8833 = vpop.permute.xlu0 %8832
      %8834 = vrot.lane.b32.xlu0 %v7689, 16
      %v8835 = vpop.permute.xlu0 %8834
      %8836 = vrot.lane.b32.xlu0 %v7691, 16
      %v8837 = vpop.permute.xlu0 %8836
      %8838 = vrot.lane.b32.xlu0 %v7693, 16
      %v8839 = vpop.permute.xlu0 %8838
      %8840 = vrot.lane.b32.xlu0 %v7695, 16
      %v8841 = vpop.permute.xlu0 %8840
      %8842 = vrot.lane.b32.xlu0 %v7697, 16
      %v8843 = vpop.permute.xlu0 %8842
      %8844 = vrot.lane.b32.xlu0 %v7699, 16
      %v8845 = vpop.permute.xlu0 %8844
      %8846 = vrot.lane.b32.xlu0 %v7701, 16
      %v8847 = vpop.permute.xlu0 %8846
      %8848 = vrot.lane.b32.xlu0 %v7703, 16
      %v8849 = vpop.permute.xlu0 %8848
      %8850 = vrot.lane.b32.xlu0 %v7705, 16
      %v8851 = vpop.permute.xlu0 %8850
      %8852 = vrot.lane.b32.xlu0 %v7707, 16
      %v8853 = vpop.permute.xlu0 %8852
      %8854 = vrot.lane.b32.xlu0 %v7709, 16
      %v8855 = vpop.permute.xlu0 %8854
      %8856 = vrot.lane.b32.xlu0 %v7711, 16
      %v8857 = vpop.permute.xlu0 %8856
      %8858 = vrot.lane.b32.xlu0 %v7713, 16
      %v8859 = vpop.permute.xlu0 %8858
      %8860 = vrot.lane.b32.xlu0 %v7715, 16
      %v8861 = vpop.permute.xlu0 %8860
      %8862 = vrot.lane.b32.xlu0 %v7717, 16
      %v8863 = vpop.permute.xlu0 %8862
      %8864 = vrot.lane.b32.xlu0 %v7719, 16
      %v8865 = vpop.permute.xlu0 %8864
      %8866 = vrot.lane.b32.xlu0 %v7721, 16
      %v8867 = vpop.permute.xlu0 %8866
      %8868 = vrot.lane.b32.xlu0 %v7723, 16
      %v8869 = vpop.permute.xlu0 %8868
      %8870 = vrot.lane.b32.xlu0 %v7725, 16
      %v8871 = vpop.permute.xlu0 %8870
      %8872 = vrot.lane.b32.xlu0 %v7727, 16
      %v8873 = vpop.permute.xlu0 %8872
      %8874 = vrot.lane.b32.xlu0 %v7729, 16
      %v8875 = vpop.permute.xlu0 %8874
      %8876 = vrot.lane.b32.xlu0 %v7731, 16
      %v8877 = vpop.permute.xlu0 %8876
      %8878 = vrot.lane.b32.xlu0 %v7733, 16
      %v8879 = vpop.permute.xlu0 %8878
      %8880 = vrot.lane.b32.xlu0 %v7735, 16
      %v8881 = vpop.permute.xlu0 %8880
      %8882 = vrot.lane.b32.xlu0 %v7737, 16
      %v8883 = vpop.permute.xlu0 %8882
      %8884 = vrot.lane.b32.xlu0 %v7739, 16
      %v8885 = vpop.permute.xlu0 %8884
      %8886 = vrot.lane.b32.xlu0 %v7741, 16
      %v8887 = vpop.permute.xlu0 %8886
      %8888 = vrot.lane.b32.xlu0 %v7743, 16
      %v8889 = vpop.permute.xlu0 %8888
      %8890 = vrot.lane.b32.xlu0 %v7745, 16
      %v8891 = vpop.permute.xlu0 %8890
      %8892 = vrot.lane.b32.xlu0 %v7747, 16
      %v8893 = vpop.permute.xlu0 %8892
      %8894 = vrot.lane.b32.xlu0 %v7749, 16
      %v8895 = vpop.permute.xlu0 %8894
      %9010 = vrot.lane.b32.xlu0 %v7751, 20
      %v9011 = vpop.permute.xlu0 %9010
      %9012 = vrot.lane.b32.xlu0 %v7753, 20
      %v9013 = vpop.permute.xlu0 %9012
      %9014 = vrot.lane.b32.xlu0 %v7755, 20
      %v9015 = vpop.permute.xlu0 %9014
      %9016 = vrot.lane.b32.xlu0 %v7757, 20
      %v9017 = vpop.permute.xlu0 %9016
      %9018 = vrot.lane.b32.xlu0 %v7759, 20
      %v9019 = vpop.permute.xlu0 %9018
      %9020 = vrot.lane.b32.xlu0 %v7761, 20
      %v9021 = vpop.permute.xlu0 %9020
      %9022 = vrot.lane.b32.xlu0 %v7763, 20
      %v9023 = vpop.permute.xlu0 %9022
      %9024 = vrot.lane.b32.xlu0 %v7765, 20
      %v9025 = vpop.permute.xlu0 %9024
      %9026 = vrot.lane.b32.xlu0 %v7767, 20
      %v9027 = vpop.permute.xlu0 %9026
      %9028 = vrot.lane.b32.xlu0 %v7769, 20
      %v9029 = vpop.permute.xlu0 %9028
      %9030 = vrot.lane.b32.xlu0 %v7771, 20
      %v9031 = vpop.permute.xlu0 %9030
      %9032 = vrot.lane.b32.xlu0 %v7773, 20
      %v9033 = vpop.permute.xlu0 %9032
      %9034 = vrot.lane.b32.xlu0 %v7775, 20
      %v9035 = vpop.permute.xlu0 %9034
      %9036 = vrot.lane.b32.xlu0 %v7777, 20
      %v9037 = vpop.permute.xlu0 %9036
      %9038 = vrot.lane.b32.xlu0 %v7779, 20
      %v9039 = vpop.permute.xlu0 %9038
      %9040 = vrot.lane.b32.xlu0 %v7781, 20
      %v9041 = vpop.permute.xlu0 %9040
      %9042 = vrot.lane.b32.xlu0 %v7783, 20
      %v9043 = vpop.permute.xlu0 %9042
      %9044 = vrot.lane.b32.xlu0 %v7785, 20
      %v9045 = vpop.permute.xlu0 %9044
      %9046 = vrot.lane.b32.xlu0 %v7787, 20
      %v9047 = vpop.permute.xlu0 %9046
      %9048 = vrot.lane.b32.xlu0 %v7789, 20
      %v9049 = vpop.permute.xlu0 %9048
      %9050 = vrot.lane.b32.xlu0 %v7791, 20
      %v9051 = vpop.permute.xlu0 %9050
      %9052 = vrot.lane.b32.xlu0 %v7793, 20
      %v9053 = vpop.permute.xlu0 %9052
      %9054 = vrot.lane.b32.xlu0 %v7795, 20
      %v9055 = vpop.permute.xlu0 %9054
      %9056 = vrot.lane.b32.xlu0 %v7797, 20
      %v9057 = vpop.permute.xlu0 %9056
      %9058 = vrot.lane.b32.xlu0 %v7799, 20
      %v9059 = vpop.permute.xlu0 %9058
      %9060 = vrot.lane.b32.xlu0 %v7801, 20
      %v9061 = vpop.permute.xlu0 %9060
      %9062 = vrot.lane.b32.xlu0 %v7803, 20
      %v9063 = vpop.permute.xlu0 %9062
      %9064 = vrot.lane.b32.xlu0 %v7805, 20
      %v9065 = vpop.permute.xlu0 %9064
      %9066 = vrot.lane.b32.xlu0 %v7807, 20
      %v9067 = vpop.permute.xlu0 %9066
      %9068 = vrot.lane.b32.xlu0 %v7809, 20
      %v9069 = vpop.permute.xlu0 %9068
      %9070 = vrot.lane.b32.xlu0 %v7811, 20
      %v9071 = vpop.permute.xlu0 %9070
      %9072 = vrot.lane.b32.xlu0 %v7813, 20
      %v9073 = vpop.permute.xlu0 %9072
      %9074 = vrot.lane.b32.xlu0 %v7815, 20
      %v9075 = vpop.permute.xlu0 %9074
      %9076 = vrot.lane.b32.xlu0 %v7817, 20
      %v9077 = vpop.permute.xlu0 %9076
      %9078 = vrot.lane.b32.xlu0 %v7819, 20
      %v9079 = vpop.permute.xlu0 %9078
      %9080 = vrot.lane.b32.xlu0 %v7821, 20
      %v9081 = vpop.permute.xlu0 %9080
      %9082 = vrot.lane.b32.xlu0 %v7823, 20
      %v9083 = vpop.permute.xlu0 %9082
      %9084 = vrot.lane.b32.xlu0 %v7825, 20
      %v9085 = vpop.permute.xlu0 %9084
      %9086 = vrot.lane.b32.xlu0 %v7827, 20
      %v9087 = vpop.permute.xlu0 %9086
      %9088 = vrot.lane.b32.xlu0 %v7829, 20
      %v9089 = vpop.permute.xlu0 %9088
      %9090 = vrot.lane.b32.xlu0 %v7831, 20
      %v9091 = vpop.permute.xlu0 %9090
      %9092 = vrot.lane.b32.xlu0 %v7833, 20
      %v9093 = vpop.permute.xlu0 %9092
      %9094 = vrot.lane.b32.xlu0 %v7835, 20
      %v9095 = vpop.permute.xlu0 %9094
      %9096 = vrot.lane.b32.xlu0 %v7837, 20
      %v9097 = vpop.permute.xlu0 %9096
      %9098 = vrot.lane.b32.xlu0 %v7839, 20
      %v9099 = vpop.permute.xlu0 %9098
      %9100 = vrot.lane.b32.xlu0 %v7841, 20
      %v9101 = vpop.permute.xlu0 %9100
      %9102 = vrot.lane.b32.xlu0 %v7843, 20
      %v9103 = vpop.permute.xlu0 %9102
      %9104 = vrot.lane.b32.xlu0 %v7845, 20
      %v9105 = vpop.permute.xlu0 %9104
      %9106 = vrot.lane.b32.xlu0 %v7847, 20
      %v9107 = vpop.permute.xlu0 %9106
      %9108 = vrot.lane.b32.xlu0 %v7849, 20
      %v9109 = vpop.permute.xlu0 %9108
      %9110 = vrot.lane.b32.xlu0 %v7851, 20
      %v9111 = vpop.permute.xlu0 %9110
      %9112 = vrot.lane.b32.xlu0 %v7853, 20
      %v9113 = vpop.permute.xlu0 %9112
      %9114 = vrot.lane.b32.xlu0 %v7855, 20
      %v9115 = vpop.permute.xlu0 %9114
      %9116 = vrot.lane.b32.xlu0 %v7857, 20
      %v9117 = vpop.permute.xlu0 %9116
      %9118 = vrot.lane.b32.xlu0 %v7859, 20
      %v9119 = vpop.permute.xlu0 %9118
      %9120 = vrot.lane.b32.xlu0 %v7861, 20
      %v9121 = vpop.permute.xlu0 %9120
      %9122 = vrot.lane.b32.xlu0 %v7863, 20
      %v9123 = vpop.permute.xlu0 %9122
      %9183 = vrot.lane.b32.xlu0 %v7755, 24
      %v9184 = vpop.permute.xlu0 %9183
      %9185 = vrot.lane.b32.xlu0 %v7757, 24
      %v9186 = vpop.permute.xlu0 %9185
      %9187 = vrot.lane.b32.xlu0 %v7759, 24
      %v9188 = vpop.permute.xlu0 %9187
      %9189 = vrot.lane.b32.xlu0 %v7761, 24
      %v9190 = vpop.permute.xlu0 %9189
      %9191 = vrot.lane.b32.xlu0 %v7763, 24
      %v9192 = vpop.permute.xlu0 %9191
      %9193 = vrot.lane.b32.xlu0 %v7765, 24
      %v9194 = vpop.permute.xlu0 %9193
      %9195 = vrot.lane.b32.xlu0 %v7767, 24
      %v9196 = vpop.permute.xlu0 %9195
      %9197 = vrot.lane.b32.xlu0 %v7769, 24
      %v9198 = vpop.permute.xlu0 %9197
      %9199 = vrot.lane.b32.xlu0 %v7771, 24
      %v9200 = vpop.permute.xlu0 %9199
      %9201 = vrot.lane.b32.xlu0 %v7773, 24
      %v9202 = vpop.permute.xlu0 %9201
      %9203 = vrot.lane.b32.xlu0 %v7775, 24
      %v9204 = vpop.permute.xlu0 %9203
      %9205 = vrot.lane.b32.xlu0 %v7777, 24
      %v9206 = vpop.permute.xlu0 %9205
      %9207 = vrot.lane.b32.xlu0 %v7779, 24
      %v9208 = vpop.permute.xlu0 %9207
      %9209 = vrot.lane.b32.xlu0 %v7781, 24
      %v9210 = vpop.permute.xlu0 %9209
      %9211 = vrot.lane.b32.xlu0 %v7783, 24
      %v9212 = vpop.permute.xlu0 %9211
      %9213 = vrot.lane.b32.xlu0 %v7785, 24
      %v9214 = vpop.permute.xlu0 %9213
      %9215 = vrot.lane.b32.xlu0 %v7787, 24
      %v9216 = vpop.permute.xlu0 %9215
      %9217 = vrot.lane.b32.xlu0 %v7789, 24
      %v9218 = vpop.permute.xlu0 %9217
      %9219 = vrot.lane.b32.xlu0 %v7791, 24
      %v9220 = vpop.permute.xlu0 %9219
      %9221 = vrot.lane.b32.xlu0 %v7793, 24
      %v9222 = vpop.permute.xlu0 %9221
      %9223 = vrot.lane.b32.xlu0 %v7795, 24
      %v9224 = vpop.permute.xlu0 %9223
      %9225 = vrot.lane.b32.xlu0 %v7797, 24
      %v9226 = vpop.permute.xlu0 %9225
      %9227 = vrot.lane.b32.xlu0 %v7799, 24
      %v9228 = vpop.permute.xlu0 %9227
      %9229 = vrot.lane.b32.xlu0 %v7801, 24
      %v9230 = vpop.permute.xlu0 %9229
      %9231 = vrot.lane.b32.xlu0 %v7803, 24
      %v9232 = vpop.permute.xlu0 %9231
      %9233 = vrot.lane.b32.xlu0 %v7805, 24
      %v9234 = vpop.permute.xlu0 %9233
      %9235 = vrot.lane.b32.xlu0 %v7807, 24
      %v9236 = vpop.permute.xlu0 %9235
      %9237 = vrot.lane.b32.xlu0 %v7809, 24
      %v9238 = vpop.permute.xlu0 %9237
      %9239 = vrot.lane.b32.xlu0 %v7811, 24
      %v9240 = vpop.permute.xlu0 %9239
      %9241 = vrot.lane.b32.xlu0 %v7813, 24
      %v9242 = vpop.permute.xlu0 %9241
      %9243 = vrot.lane.b32.xlu0 %v7815, 24
      %v9244 = vpop.permute.xlu0 %9243
      %9245 = vrot.lane.b32.xlu0 %v7817, 24
      %v9246 = vpop.permute.xlu0 %9245
      %9247 = vrot.lane.b32.xlu0 %v7819, 24
      %v9248 = vpop.permute.xlu0 %9247
      %9249 = vrot.lane.b32.xlu0 %v7821, 24
      %v9250 = vpop.permute.xlu0 %9249
      %9251 = vrot.lane.b32.xlu0 %v7823, 24
      %v9252 = vpop.permute.xlu0 %9251
      %9253 = vrot.lane.b32.xlu0 %v7825, 24
      %v9254 = vpop.permute.xlu0 %9253
      %9255 = vrot.lane.b32.xlu0 %v7827, 24
      %v9256 = vpop.permute.xlu0 %9255
      %9257 = vrot.lane.b32.xlu0 %v7829, 24
      %v9258 = vpop.permute.xlu0 %9257
      %9259 = vrot.lane.b32.xlu0 %v7831, 24
      %v9260 = vpop.permute.xlu0 %9259
      %9261 = vrot.lane.b32.xlu0 %v7833, 24
      %v9262 = vpop.permute.xlu0 %9261
      %9263 = vrot.lane.b32.xlu0 %v7835, 24
      %v9264 = vpop.permute.xlu0 %9263
      %9265 = vrot.lane.b32.xlu0 %v7837, 24
      %v9266 = vpop.permute.xlu0 %9265
      %9267 = vrot.lane.b32.xlu0 %v7839, 24
      %v9268 = vpop.permute.xlu0 %9267
      %9269 = vrot.lane.b32.xlu0 %v7841, 24
      %v9270 = vpop.permute.xlu0 %9269
      %9271 = vrot.lane.b32.xlu0 %v7843, 24
      %v9272 = vpop.permute.xlu0 %9271
      %9273 = vrot.lane.b32.xlu0 %v7845, 24
      %v9274 = vpop.permute.xlu0 %9273
      %9275 = vrot.lane.b32.xlu0 %v7847, 24
      %v9276 = vpop.permute.xlu0 %9275
      %9277 = vrot.lane.b32.xlu0 %v7849, 24
      %v9278 = vpop.permute.xlu0 %9277
      %9279 = vrot.lane.b32.xlu0 %v7851, 24
      %v9280 = vpop.permute.xlu0 %9279
      %9281 = vrot.lane.b32.xlu0 %v7853, 24
      %v9282 = vpop.permute.xlu0 %9281
      %9283 = vrot.lane.b32.xlu0 %v7855, 24
      %v9284 = vpop.permute.xlu0 %9283
      %9285 = vrot.lane.b32.xlu0 %v7857, 24
      %v9286 = vpop.permute.xlu0 %9285
      %9287 = vrot.lane.b32.xlu0 %v7859, 24
      %v9288 = vpop.permute.xlu0 %9287
      %9289 = vrot.lane.b32.xlu0 %v7861, 24
      %v9290 = vpop.permute.xlu0 %9289
      %9291 = vrot.lane.b32.xlu0 %v7863, 24
      %v9292 = vpop.permute.xlu0 %9291
      %9293 = vrot.lane.b32.xlu0 %v7865, 24
      %v9294 = vpop.permute.xlu0 %9293
      %9295 = vrot.lane.b32.xlu0 %v7867, 24
      %v9296 = vpop.permute.xlu0 %9295
      %9411 = vrot.lane.b32.xlu0 %v7869, 28
      %v9412 = vpop.permute.xlu0 %9411
      %9413 = vrot.lane.b32.xlu0 %v7871, 28
      %v9414 = vpop.permute.xlu0 %9413
      %9415 = vrot.lane.b32.xlu0 %v7873, 28
      %v9416 = vpop.permute.xlu0 %9415
      %9417 = vrot.lane.b32.xlu0 %v7875, 28
      %v9418 = vpop.permute.xlu0 %9417
      %9419 = vrot.lane.b32.xlu0 %v7877, 28
      %v9420 = vpop.permute.xlu0 %9419
      %9421 = vrot.lane.b32.xlu0 %v7879, 28
      %v9422 = vpop.permute.xlu0 %9421
      %9423 = vrot.lane.b32.xlu0 %v7881, 28
      %v9424 = vpop.permute.xlu0 %9423
      %9425 = vrot.lane.b32.xlu0 %v7883, 28
      %v9426 = vpop.permute.xlu0 %9425
      %9427 = vrot.lane.b32.xlu0 %v7885, 28
      %v9428 = vpop.permute.xlu0 %9427
      %9429 = vrot.lane.b32.xlu0 %v7887, 28
      %v9430 = vpop.permute.xlu0 %9429
      %9431 = vrot.lane.b32.xlu0 %v7889, 28
      %v9432 = vpop.permute.xlu0 %9431
      %9433 = vrot.lane.b32.xlu0 %v7891, 28
      %v9434 = vpop.permute.xlu0 %9433
      %9435 = vrot.lane.b32.xlu0 %v7893, 28
      %v9436 = vpop.permute.xlu0 %9435
      %9437 = vrot.lane.b32.xlu0 %v7895, 28
      %v9438 = vpop.permute.xlu0 %9437
      %9439 = vrot.lane.b32.xlu0 %v7897, 28
      %v9440 = vpop.permute.xlu0 %9439
      %9441 = vrot.lane.b32.xlu0 %v7899, 28
      %v9442 = vpop.permute.xlu0 %9441
      %9443 = vrot.lane.b32.xlu0 %v7901, 28
      %v9444 = vpop.permute.xlu0 %9443
      %9445 = vrot.lane.b32.xlu0 %v7903, 28
      %v9446 = vpop.permute.xlu0 %9445
      %9447 = vrot.lane.b32.xlu0 %v7905, 28
      %v9448 = vpop.permute.xlu0 %9447
      %9449 = vrot.lane.b32.xlu0 %v7907, 28
      %v9450 = vpop.permute.xlu0 %9449
      %9451 = vrot.lane.b32.xlu0 %v7909, 28
      %v9452 = vpop.permute.xlu0 %9451
      %9453 = vrot.lane.b32.xlu0 %v7911, 28
      %v9454 = vpop.permute.xlu0 %9453
      %9455 = vrot.lane.b32.xlu0 %v7913, 28
      %v9456 = vpop.permute.xlu0 %9455
      %9457 = vrot.lane.b32.xlu0 %v7915, 28
      %v9458 = vpop.permute.xlu0 %9457
      %9459 = vrot.lane.b32.xlu0 %v7917, 28
      %v9460 = vpop.permute.xlu0 %9459
      %9461 = vrot.lane.b32.xlu0 %v7919, 28
      %v9462 = vpop.permute.xlu0 %9461
      %9463 = vrot.lane.b32.xlu0 %v7921, 28
      %v9464 = vpop.permute.xlu0 %9463
      %9465 = vrot.lane.b32.xlu0 %v7923, 28
      %v9466 = vpop.permute.xlu0 %9465
      %9467 = vrot.lane.b32.xlu0 %v7925, 28
      %v9468 = vpop.permute.xlu0 %9467
      %9469 = vrot.lane.b32.xlu0 %v7927, 28
      %v9470 = vpop.permute.xlu0 %9469
      %9471 = vrot.lane.b32.xlu0 %v7929, 28
      %v9472 = vpop.permute.xlu0 %9471
      %9473 = vrot.lane.b32.xlu0 %v7931, 28
      %v9474 = vpop.permute.xlu0 %9473
      %9475 = vrot.lane.b32.xlu0 %v7933, 28
      %v9476 = vpop.permute.xlu0 %9475
      %9477 = vrot.lane.b32.xlu0 %v7935, 28
      %v9478 = vpop.permute.xlu0 %9477
      %9479 = vrot.lane.b32.xlu0 %v7937, 28
      %v9480 = vpop.permute.xlu0 %9479
      %9481 = vrot.lane.b32.xlu0 %v7939, 28
      %v9482 = vpop.permute.xlu0 %9481
      %9483 = vrot.lane.b32.xlu0 %v7941, 28
      %v9484 = vpop.permute.xlu0 %9483
      %9485 = vrot.lane.b32.xlu0 %v7943, 28
      %v9486 = vpop.permute.xlu0 %9485
      %9487 = vrot.lane.b32.xlu0 %v7945, 28
      %v9488 = vpop.permute.xlu0 %9487
      %9489 = vrot.lane.b32.xlu0 %v7947, 28
      %v9490 = vpop.permute.xlu0 %9489
      %9491 = vrot.lane.b32.xlu0 %v7949, 28
      %v9492 = vpop.permute.xlu0 %9491
      %9493 = vrot.lane.b32.xlu0 %v7951, 28
      %v9494 = vpop.permute.xlu0 %9493
      %9495 = vrot.lane.b32.xlu0 %v7953, 28
      %v9496 = vpop.permute.xlu0 %9495
      %9497 = vrot.lane.b32.xlu0 %v7955, 28
      %v9498 = vpop.permute.xlu0 %9497
      %9499 = vrot.lane.b32.xlu0 %v7957, 28
      %v9500 = vpop.permute.xlu0 %9499
      %9501 = vrot.lane.b32.xlu0 %v7959, 28
      %v9502 = vpop.permute.xlu0 %9501
      %9503 = vrot.lane.b32.xlu0 %v7961, 28
      %v9504 = vpop.permute.xlu0 %9503
      %9505 = vrot.lane.b32.xlu0 %v7963, 28
      %v9506 = vpop.permute.xlu0 %9505
      %9507 = vrot.lane.b32.xlu0 %v7965, 28
      %v9508 = vpop.permute.xlu0 %9507
      %9509 = vrot.lane.b32.xlu0 %v7967, 28
      %v9510 = vpop.permute.xlu0 %9509
      %9511 = vrot.lane.b32.xlu0 %v7969, 28
      %v9512 = vpop.permute.xlu0 %9511
      %9513 = vrot.lane.b32.xlu0 %v7971, 28
      %v9514 = vpop.permute.xlu0 %9513
      %9515 = vrot.lane.b32.xlu0 %v7973, 28
      %v9516 = vpop.permute.xlu0 %9515
      %9517 = vrot.lane.b32.xlu0 %v7975, 28
      %v9518 = vpop.permute.xlu0 %9517
      %9519 = vrot.lane.b32.xlu0 %v7977, 28
      %v9520 = vpop.permute.xlu0 %9519
      %9521 = vrot.lane.b32.xlu0 %v7979, 28
      %v9522 = vpop.permute.xlu0 %9521
      %9523 = vrot.lane.b32.xlu0 %v7981, 28
      %v9524 = vpop.permute.xlu0 %9523
      %9639 = vrot.lane.b32.xlu0 %v7983, 32
      %v9640 = vpop.permute.xlu0 %9639
      %9641 = vrot.lane.b32.xlu0 %v7985, 32
      %v9642 = vpop.permute.xlu0 %9641
      %9643 = vrot.lane.b32.xlu0 %v7987, 32
      %v9644 = vpop.permute.xlu0 %9643
      %9645 = vrot.lane.b32.xlu0 %v7989, 32
      %v9646 = vpop.permute.xlu0 %9645
      %9647 = vrot.lane.b32.xlu0 %v7991, 32
      %v9648 = vpop.permute.xlu0 %9647
      %9649 = vrot.lane.b32.xlu0 %v7993, 32
      %v9650 = vpop.permute.xlu0 %9649
      %9651 = vrot.lane.b32.xlu0 %v7995, 32
      %v9652 = vpop.permute.xlu0 %9651
      %9653 = vrot.lane.b32.xlu0 %v7997, 32
      %v9654 = vpop.permute.xlu0 %9653
      %9655 = vrot.lane.b32.xlu0 %v7999, 32
      %v9656 = vpop.permute.xlu0 %9655
      %9657 = vrot.lane.b32.xlu0 %v8001, 32
      %v9658 = vpop.permute.xlu0 %9657
      %9659 = vrot.lane.b32.xlu0 %v8003, 32
      %v9660 = vpop.permute.xlu0 %9659
      %9661 = vrot.lane.b32.xlu0 %v8005, 32
      %v9662 = vpop.permute.xlu0 %9661
      %9663 = vrot.lane.b32.xlu0 %v8007, 32
      %v9664 = vpop.permute.xlu0 %9663
      %9665 = vrot.lane.b32.xlu0 %v8009, 32
      %v9666 = vpop.permute.xlu0 %9665
      %9667 = vrot.lane.b32.xlu0 %v8011, 32
      %v9668 = vpop.permute.xlu0 %9667
      %9669 = vrot.lane.b32.xlu0 %v8013, 32
      %v9670 = vpop.permute.xlu0 %9669
      %9671 = vrot.lane.b32.xlu0 %v8015, 32
      %v9672 = vpop.permute.xlu0 %9671
      %9673 = vrot.lane.b32.xlu0 %v8017, 32
      %v9674 = vpop.permute.xlu0 %9673
      %9675 = vrot.lane.b32.xlu0 %v8019, 32
      %v9676 = vpop.permute.xlu0 %9675
      %9677 = vrot.lane.b32.xlu0 %v8021, 32
      %v9678 = vpop.permute.xlu0 %9677
      %9679 = vrot.lane.b32.xlu0 %v8023, 32
      %v9680 = vpop.permute.xlu0 %9679
      %9681 = vrot.lane.b32.xlu0 %v8025, 32
      %v9682 = vpop.permute.xlu0 %9681
      %9683 = vrot.lane.b32.xlu0 %v8027, 32
      %v9684 = vpop.permute.xlu0 %9683
      %9685 = vrot.lane.b32.xlu0 %v8029, 32
      %v9686 = vpop.permute.xlu0 %9685
      %9687 = vrot.lane.b32.xlu0 %v8031, 32
      %v9688 = vpop.permute.xlu0 %9687
      %9689 = vrot.lane.b32.xlu0 %v8033, 32
      %v9690 = vpop.permute.xlu0 %9689
      %9691 = vrot.lane.b32.xlu0 %v8035, 32
      %v9692 = vpop.permute.xlu0 %9691
      %9693 = vrot.lane.b32.xlu0 %v8037, 32
      %v9694 = vpop.permute.xlu0 %9693
      %9695 = vrot.lane.b32.xlu0 %v8039, 32
      %v9696 = vpop.permute.xlu0 %9695
      %9697 = vrot.lane.b32.xlu0 %v8041, 32
      %v9698 = vpop.permute.xlu0 %9697
      %9699 = vrot.lane.b32.xlu0 %v8043, 32
      %v9700 = vpop.permute.xlu0 %9699
      %9701 = vrot.lane.b32.xlu0 %v8045, 32
      %v9702 = vpop.permute.xlu0 %9701
      %9703 = vrot.lane.b32.xlu0 %v8047, 32
      %v9704 = vpop.permute.xlu0 %9703
      %9705 = vrot.lane.b32.xlu0 %v8049, 32
      %v9706 = vpop.permute.xlu0 %9705
      %9707 = vrot.lane.b32.xlu0 %v8051, 32
      %v9708 = vpop.permute.xlu0 %9707
      %9709 = vrot.lane.b32.xlu0 %v8053, 32
      %v9710 = vpop.permute.xlu0 %9709
      %9711 = vrot.lane.b32.xlu0 %v8055, 32
      %v9712 = vpop.permute.xlu0 %9711
      %9713 = vrot.lane.b32.xlu0 %v8057, 32
      %v9714 = vpop.permute.xlu0 %9713
      %9715 = vrot.lane.b32.xlu0 %v8059, 32
      %v9716 = vpop.permute.xlu0 %9715
      %9717 = vrot.lane.b32.xlu0 %v8061, 32
      %v9718 = vpop.permute.xlu0 %9717
      %9719 = vrot.lane.b32.xlu0 %v8063, 32
      %v9720 = vpop.permute.xlu0 %9719
      %9721 = vrot.lane.b32.xlu0 %v8065, 32
      %v9722 = vpop.permute.xlu0 %9721
      %9723 = vrot.lane.b32.xlu0 %v8067, 32
      %v9724 = vpop.permute.xlu0 %9723
      %9725 = vrot.lane.b32.xlu0 %v8069, 32
      %v9726 = vpop.permute.xlu0 %9725
      %9727 = vrot.lane.b32.xlu0 %v8071, 32
      %v9728 = vpop.permute.xlu0 %9727
      %9729 = vrot.lane.b32.xlu0 %v8073, 32
      %v9730 = vpop.permute.xlu0 %9729
      %9731 = vrot.lane.b32.xlu0 %v8075, 32
      %v9732 = vpop.permute.xlu0 %9731
      %9733 = vrot.lane.b32.xlu0 %v8077, 32
      %v9734 = vpop.permute.xlu0 %9733
      %9735 = vrot.lane.b32.xlu0 %v8079, 32
      %v9736 = vpop.permute.xlu0 %9735
      %9737 = vrot.lane.b32.xlu0 %v8081, 32
      %v9738 = vpop.permute.xlu0 %9737
      %9739 = vrot.lane.b32.xlu0 %v8083, 32
      %v9740 = vpop.permute.xlu0 %9739
      %9741 = vrot.lane.b32.xlu0 %v8085, 32
      %v9742 = vpop.permute.xlu0 %9741
      %9743 = vrot.lane.b32.xlu0 %v8087, 32
      %v9744 = vpop.permute.xlu0 %9743
      %9745 = vrot.lane.b32.xlu0 %v8089, 32
      %v9746 = vpop.permute.xlu0 %9745
      %9747 = vrot.lane.b32.xlu0 %v8091, 32
      %v9748 = vpop.permute.xlu0 %9747
      %9749 = vrot.lane.b32.xlu0 %v8093, 32
      %v9750 = vpop.permute.xlu0 %9749
      %9751 = vrot.lane.b32.xlu0 %v8095, 32
      %v9752 = vpop.permute.xlu0 %9751
      %v9810 = vsel %vm7154, %v7291, %v8154
      %v9811 = vsel %vm7154, %v7293, %v8156
      %v9812 = vsel %vm7154, %v7295, %v8158
      %v9813 = vsel %vm7154, %v7297, %v8160
      %v9814 = vsel %vm7154, %v7299, %v8162
      %v9815 = vsel %vm7154, %v7301, %v8164
      %v9816 = vsel %vm7154, %v7303, %v8166
      %v9817 = vsel %vm7154, %v7305, %v8168
      %v9818 = vsel %vm7154, %v7307, %v8170
      %v9819 = vsel %vm7154, %v7309, %v8172
      %v9820 = vsel %vm7154, %v7311, %v8174
      %v9821 = vsel %vm7154, %v7313, %v8176
      %v9822 = vsel %vm7154, %v7315, %v8178
      %v9823 = vsel %vm7154, %v7317, %v8180
      %v9824 = vsel %vm7154, %v7319, %v8182
      %v9825 = vsel %vm7154, %v7321, %v8184
      %v9826 = vsel %vm7154, %v7323, %v8186
      %v9827 = vsel %vm7154, %v7325, %v8188
      %v9828 = vsel %vm7154, %v7327, %v8190
      %v9829 = vsel %vm7154, %v7329, %v8192
      %v9830 = vsel %vm7154, %v7331, %v8194
      %v9831 = vsel %vm7154, %v7333, %v8196
      %v9832 = vsel %vm7154, %v7335, %v8198
      %v9833 = vsel %vm7154, %v7337, %v8200
      %v9834 = vsel %vm7154, %v7339, %v8202
      %v9835 = vsel %vm7154, %v7341, %v8204
      %v9836 = vsel %vm7154, %v7343, %v8206
      %v9837 = vsel %vm7154, %v7345, %v8208
      %v9838 = vsel %vm7154, %v7347, %v8210
      %v9839 = vsel %vm7154, %v7349, %v8212
      %v9840 = vsel %vm7154, %v7351, %v8214
      %v9841 = vsel %vm7154, %v7353, %v8216
      %v9842 = vsel %vm7154, %v7355, %v8218
      %v9843 = vsel %vm7154, %v7357, %v8220
      %v9844 = vsel %vm7154, %v7359, %v8222
      %v9845 = vsel %vm7154, %v7361, %v8224
      %v9846 = vsel %vm7154, %v7363, %v8226
      %v9847 = vsel %vm7154, %v7365, %v8228
      %v9848 = vsel %vm7154, %v7367, %v8230
      %v9849 = vsel %vm7154, %v7369, %v8232
      %v9850 = vsel %vm7154, %v7371, %v8234
      %v9851 = vsel %vm7154, %v7373, %v8236
      %v9852 = vsel %vm7154, %v7375, %v8238
      %v9853 = vsel %vm7154, %v7377, %v8240
      %v9854 = vsel %vm7154, %v7379, %v8242
      %v9855 = vsel %vm7154, %v7381, %v8244
      %v9856 = vsel %vm7154, %v7383, %v8246
      %v9857 = vsel %vm7154, %v7385, %v8248
      %v9858 = vsel %vm7154, %v7387, %v8250
      %v9859 = vsel %vm7154, %v7389, %v8252
      %v9860 = vsel %vm7154, %v7391, %v8254
      %v9861 = vsel %vm7154, %v7393, %v8256
      %v9862 = vsel %vm7154, %v7395, %v8258
      %v9863 = vsel %vm7154, %v7397, %v8260
      %v9864 = vsel %vm7154, %v7399, %v8262
      %v9865 = vsel %vm7154, %v7401, %v8264
      %v9866 = vsel %vm7154, %v7403, %v8266
      %vm9867 = vcmask 64512
      %v9868 = vsel %vm9867, %v9810, %v8382
      %v9869 = vsel %vm9867, %v9811, %v8384
      %v9870 = vsel %vm9867, %v9812, %v8386
      %v9871 = vsel %vm9867, %v9813, %v8388
      %v9872 = vsel %vm9867, %v9814, %v8390
      %v9873 = vsel %vm9867, %v9815, %v8392
      %v9874 = vsel %vm9867, %v9816, %v8394
      %v9875 = vsel %vm9867, %v9817, %v8396
      %v9876 = vsel %vm9867, %v9818, %v8398
      %v9877 = vsel %vm9867, %v9819, %v8400
      %v9878 = vsel %vm9867, %v9820, %v8402
      %v9879 = vsel %vm9867, %v9821, %v8404
      %v9880 = vsel %vm9867, %v9822, %v8406
      %v9881 = vsel %vm9867, %v9823, %v8408
      %v9882 = vsel %vm9867, %v9824, %v8410
      %v9883 = vsel %vm9867, %v9825, %v8412
      %v9884 = vsel %vm9867, %v9826, %v8414
      %v9885 = vsel %vm9867, %v9827, %v8416
      %v9886 = vsel %vm9867, %v9828, %v8418
      %v9887 = vsel %vm9867, %v9829, %v8420
      %v9888 = vsel %vm9867, %v9830, %v8422
      %v9889 = vsel %vm9867, %v9831, %v8424
      %v9890 = vsel %vm9867, %v9832, %v8426
      %v9891 = vsel %vm9867, %v9833, %v8428
      %v9892 = vsel %vm9867, %v9834, %v8430
      %v9893 = vsel %vm9867, %v9835, %v8432
      %v9894 = vsel %vm9867, %v9836, %v8434
      %v9895 = vsel %vm9867, %v9837, %v8436
      %v9896 = vsel %vm9867, %v9838, %v8438
      %v9897 = vsel %vm9867, %v9839, %v8440
      %v9898 = vsel %vm9867, %v9840, %v8442
      %v9899 = vsel %vm9867, %v9841, %v8444
      %v9900 = vsel %vm9867, %v9842, %v8446
      %v9901 = vsel %vm9867, %v9843, %v8448
      %v9902 = vsel %vm9867, %v9844, %v8450
      %v9903 = vsel %vm9867, %v9845, %v8452
      %v9904 = vsel %vm9867, %v9846, %v8454
      %v9905 = vsel %vm9867, %v9847, %v8456
      %v9906 = vsel %vm9867, %v9848, %v8458
      %v9907 = vsel %vm9867, %v9849, %v8460
      %v9908 = vsel %vm9867, %v9850, %v8462
      %v9909 = vsel %vm9867, %v9851, %v8464
      %v9910 = vsel %vm9867, %v9852, %v8466
      %v9911 = vsel %vm9867, %v9853, %v8468
      %v9912 = vsel %vm9867, %v9854, %v8470
      %v9913 = vsel %vm9867, %v9855, %v8472
      %v9914 = vsel %vm9867, %v9856, %v8474
      %v9915 = vsel %vm9867, %v9857, %v8476
      %v9916 = vsel %vm9867, %v9858, %v8478
      %v9917 = vsel %vm9867, %v9859, %v8480
      %v9918 = vsel %vm9867, %v9860, %v8482
      %v9919 = vsel %vm9867, %v9861, %v8484
      %v9920 = vsel %vm9867, %v9862, %v8486
      %v9921 = vsel %vm9867, %v9863, %v8488
      %v9922 = vsel %vm9867, %v9864, %v8490
      %v9923 = vsel %vm9867, %v9865, %v8492
      %v9924 = vsel %vm9867, %v9866, %v8494
      %v9925 = vsel %vm5685, %v9868, %v8555
      %v9926 = vsel %vm5685, %v9869, %v8557
      %v9927 = vsel %vm5685, %v9870, %v8559
      %v9928 = vsel %vm5685, %v9871, %v8561
      %v9929 = vsel %vm5685, %v9872, %v8563
      %v9930 = vsel %vm5685, %v9873, %v8565
      %v9931 = vsel %vm5685, %v9874, %v8567
      %v9932 = vsel %vm5685, %v9875, %v8569
      %v9933 = vsel %vm5685, %v9876, %v8571
      %v9934 = vsel %vm5685, %v9877, %v8573
      %v9935 = vsel %vm5685, %v9878, %v8575
      %v9936 = vsel %vm5685, %v9879, %v8577
      %v9937 = vsel %vm5685, %v9880, %v8579
      %v9938 = vsel %vm5685, %v9881, %v8581
      %v9939 = vsel %vm5685, %v9882, %v8583
      %v9940 = vsel %vm5685, %v9883, %v8585
      %v9941 = vsel %vm5685, %v9884, %v8587
      %v9942 = vsel %vm5685, %v9885, %v8589
      %v9943 = vsel %vm5685, %v9886, %v8591
      %v9944 = vsel %vm5685, %v9887, %v8593
      %v9945 = vsel %vm5685, %v9888, %v8595
      %v9946 = vsel %vm5685, %v9889, %v8597
      %v9947 = vsel %vm5685, %v9890, %v8599
      %v9948 = vsel %vm5685, %v9891, %v8601
      %v9949 = vsel %vm5685, %v9892, %v8603
      %v9950 = vsel %vm5685, %v9893, %v8605
      %v9951 = vsel %vm5685, %v9894, %v8607
      %v9952 = vsel %vm5685, %v9895, %v8609
      %v9953 = vsel %vm5685, %v9896, %v8611
      %v9954 = vsel %vm5685, %v9897, %v8613
      %v9955 = vsel %vm5685, %v9898, %v8615
      %v9956 = vsel %vm5685, %v9899, %v8617
      %v9957 = vsel %vm5685, %v9900, %v8619
      %v9958 = vsel %vm5685, %v9901, %v8621
      %v9959 = vsel %vm5685, %v9902, %v8623
      %v9960 = vsel %vm5685, %v9903, %v8625
      %v9961 = vsel %vm5685, %v9904, %v8627
      %v9962 = vsel %vm5685, %v9905, %v8629
      %v9963 = vsel %vm5685, %v9906, %v8631
      %v9964 = vsel %vm5685, %v9907, %v8633
      %v9965 = vsel %vm5685, %v9908, %v8635
      %v9966 = vsel %vm5685, %v9909, %v8637
      %v9967 = vsel %vm5685, %v9910, %v8639
      %v9968 = vsel %vm5685, %v9911, %v8641
      %v9969 = vsel %vm5685, %v9912, %v8643
      %v9970 = vsel %vm5685, %v9913, %v8645
      %v9971 = vsel %vm5685, %v9914, %v8647
      %v9972 = vsel %vm5685, %v9915, %v8649
      %v9973 = vsel %vm5685, %v9916, %v8651
      %v9974 = vsel %vm5685, %v9917, %v8653
      %v9975 = vsel %vm5685, %v9918, %v8655
      %v9976 = vsel %vm5685, %v9919, %v8657
      %v9977 = vsel %vm5685, %v9920, %v8659
      %v9978 = vsel %vm5685, %v9921, %v8661
      %v9979 = vsel %vm5685, %v9922, %v8663
      %v9980 = vsel %vm5685, %v9923, %v8665
      %v9981 = vsel %vm5685, %v9924, %v8667
      %vm9982 = vcmask 130048
      %v9983 = vsel %vm9982, %v9925, %v8783
      %v9984 = vsel %vm9982, %v9926, %v8785
      %v9985 = vsel %vm9982, %v9927, %v8787
      %v9986 = vsel %vm9982, %v9928, %v8789
      %v9987 = vsel %vm9982, %v9929, %v8791
      %v9988 = vsel %vm9982, %v9930, %v8793
      %v9989 = vsel %vm9982, %v9931, %v8795
      %v9990 = vsel %vm9982, %v9932, %v8797
      %v9991 = vsel %vm9982, %v9933, %v8799
      %v9992 = vsel %vm9982, %v9934, %v8801
      %v9993 = vsel %vm9982, %v9935, %v8803
      %v9994 = vsel %vm9982, %v9936, %v8805
      %v9995 = vsel %vm9982, %v9937, %v8807
      %v9996 = vsel %vm9982, %v9938, %v8809
      %v9997 = vsel %vm9982, %v9939, %v8811
      %v9998 = vsel %vm9982, %v9940, %v8813
      %v9999 = vsel %vm9982, %v9941, %v8815
      %v10000 = vsel %vm9982, %v9942, %v8817
      %v10001 = vsel %vm9982, %v9943, %v8819
      %v10002 = vsel %vm9982, %v9944, %v8821
      %v10003 = vsel %vm9982, %v9945, %v8823
      %v10004 = vsel %vm9982, %v9946, %v8825
      %v10005 = vsel %vm9982, %v9947, %v8827
      %v10006 = vsel %vm9982, %v9948, %v8829
      %v10007 = vsel %vm9982, %v9949, %v8831
      %v10008 = vsel %vm9982, %v9950, %v8833
      %v10009 = vsel %vm9982, %v9951, %v8835
      %v10010 = vsel %vm9982, %v9952, %v8837
      %v10011 = vsel %vm9982, %v9953, %v8839
      %v10012 = vsel %vm9982, %v9954, %v8841
      %v10013 = vsel %vm9982, %v9955, %v8843
      %v10014 = vsel %vm9982, %v9956, %v8845
      %v10015 = vsel %vm9982, %v9957, %v8847
      %v10016 = vsel %vm9982, %v9958, %v8849
      %v10017 = vsel %vm9982, %v9959, %v8851
      %v10018 = vsel %vm9982, %v9960, %v8853
      %v10019 = vsel %vm9982, %v9961, %v8855
      %v10020 = vsel %vm9982, %v9962, %v8857
      %v10021 = vsel %vm9982, %v9963, %v8859
      %v10022 = vsel %vm9982, %v9964, %v8861
      %v10023 = vsel %vm9982, %v9965, %v8863
      %v10024 = vsel %vm9982, %v9966, %v8865
      %v10025 = vsel %vm9982, %v9967, %v8867
      %v10026 = vsel %vm9982, %v9968, %v8869
      %v10027 = vsel %vm9982, %v9969, %v8871
      %v10028 = vsel %vm9982, %v9970, %v8873
      %v10029 = vsel %vm9982, %v9971, %v8875
      %v10030 = vsel %vm9982, %v9972, %v8877
      %v10031 = vsel %vm9982, %v9973, %v8879
      %v10032 = vsel %vm9982, %v9974, %v8881
      %v10033 = vsel %vm9982, %v9975, %v8883
      %v10034 = vsel %vm9982, %v9976, %v8885
      %v10035 = vsel %vm9982, %v9977, %v8887
      %v10036 = vsel %vm9982, %v9978, %v8889
      %v10037 = vsel %vm9982, %v9979, %v8891
      %v10038 = vsel %vm9982, %v9980, %v8893
      %v10039 = vsel %vm9982, %v9981, %v8895
      %vm10040 = vcmask 162816
      %v10041 = vsel %vm10040, %v9983, %v9011
      %v10042 = vsel %vm10040, %v9984, %v9013
      %v10043 = vsel %vm10040, %v9985, %v9015
      %v10044 = vsel %vm10040, %v9986, %v9017
      %v10045 = vsel %vm10040, %v9987, %v9019
      %v10046 = vsel %vm10040, %v9988, %v9021
      %v10047 = vsel %vm10040, %v9989, %v9023
      %v10048 = vsel %vm10040, %v9990, %v9025
      %v10049 = vsel %vm10040, %v9991, %v9027
      %v10050 = vsel %vm10040, %v9992, %v9029
      %v10051 = vsel %vm10040, %v9993, %v9031
      %v10052 = vsel %vm10040, %v9994, %v9033
      %v10053 = vsel %vm10040, %v9995, %v9035
      %v10054 = vsel %vm10040, %v9996, %v9037
      %v10055 = vsel %vm10040, %v9997, %v9039
      %v10056 = vsel %vm10040, %v9998, %v9041
      %v10057 = vsel %vm10040, %v9999, %v9043
      %v10058 = vsel %vm10040, %v10000, %v9045
      %v10059 = vsel %vm10040, %v10001, %v9047
      %v10060 = vsel %vm10040, %v10002, %v9049
      %v10061 = vsel %vm10040, %v10003, %v9051
      %v10062 = vsel %vm10040, %v10004, %v9053
      %v10063 = vsel %vm10040, %v10005, %v9055
      %v10064 = vsel %vm10040, %v10006, %v9057
      %v10065 = vsel %vm10040, %v10007, %v9059
      %v10066 = vsel %vm10040, %v10008, %v9061
      %v10067 = vsel %vm10040, %v10009, %v9063
      %v10068 = vsel %vm10040, %v10010, %v9065
      %v10069 = vsel %vm10040, %v10011, %v9067
      %v10070 = vsel %vm10040, %v10012, %v9069
      %v10071 = vsel %vm10040, %v10013, %v9071
      %v10072 = vsel %vm10040, %v10014, %v9073
      %v10073 = vsel %vm10040, %v10015, %v9075
      %v10074 = vsel %vm10040, %v10016, %v9077
      %v10075 = vsel %vm10040, %v10017, %v9079
      %v10076 = vsel %vm10040, %v10018, %v9081
      %v10077 = vsel %vm10040, %v10019, %v9083
      %v10078 = vsel %vm10040, %v10020, %v9085
      %v10079 = vsel %vm10040, %v10021, %v9087
      %v10080 = vsel %vm10040, %v10022, %v9089
      %v10081 = vsel %vm10040, %v10023, %v9091
      %v10082 = vsel %vm10040, %v10024, %v9093
      %v10083 = vsel %vm10040, %v10025, %v9095
      %v10084 = vsel %vm10040, %v10026, %v9097
      %v10085 = vsel %vm10040, %v10027, %v9099
      %v10086 = vsel %vm10040, %v10028, %v9101
      %v10087 = vsel %vm10040, %v10029, %v9103
      %v10088 = vsel %vm10040, %v10030, %v9105
      %v10089 = vsel %vm10040, %v10031, %v9107
      %v10090 = vsel %vm10040, %v10032, %v9109
      %v10091 = vsel %vm10040, %v10033, %v9111
      %v10092 = vsel %vm10040, %v10034, %v9113
      %v10093 = vsel %vm10040, %v10035, %v9115
      %v10094 = vsel %vm10040, %v10036, %v9117
      %v10095 = vsel %vm10040, %v10037, %v9119
      %v10096 = vsel %vm10040, %v10038, %v9121
      %v10097 = vsel %vm10040, %v10039, %v9123
      %v10098 = vsel %vm6233, %v10041, %v9184
      %v10099 = vsel %vm6233, %v10042, %v9186
      %v10100 = vsel %vm6233, %v10043, %v9188
      %v10101 = vsel %vm6233, %v10044, %v9190
      %v10102 = vsel %vm6233, %v10045, %v9192
      %v10103 = vsel %vm6233, %v10046, %v9194
      %v10104 = vsel %vm6233, %v10047, %v9196
      %v10105 = vsel %vm6233, %v10048, %v9198
      %v10106 = vsel %vm6233, %v10049, %v9200
      %v10107 = vsel %vm6233, %v10050, %v9202
      %v10108 = vsel %vm6233, %v10051, %v9204
      %v10109 = vsel %vm6233, %v10052, %v9206
      %v10110 = vsel %vm6233, %v10053, %v9208
      %v10111 = vsel %vm6233, %v10054, %v9210
      %v10112 = vsel %vm6233, %v10055, %v9212
      %v10113 = vsel %vm6233, %v10056, %v9214
      %v10114 = vsel %vm6233, %v10057, %v9216
      %v10115 = vsel %vm6233, %v10058, %v9218
      %v10116 = vsel %vm6233, %v10059, %v9220
      %v10117 = vsel %vm6233, %v10060, %v9222
      %v10118 = vsel %vm6233, %v10061, %v9224
      %v10119 = vsel %vm6233, %v10062, %v9226
      %v10120 = vsel %vm6233, %v10063, %v9228
      %v10121 = vsel %vm6233, %v10064, %v9230
      %v10122 = vsel %vm6233, %v10065, %v9232
      %v10123 = vsel %vm6233, %v10066, %v9234
      %v10124 = vsel %vm6233, %v10067, %v9236
      %v10125 = vsel %vm6233, %v10068, %v9238
      %v10126 = vsel %vm6233, %v10069, %v9240
      %v10127 = vsel %vm6233, %v10070, %v9242
      %v10128 = vsel %vm6233, %v10071, %v9244
      %v10129 = vsel %vm6233, %v10072, %v9246
      %v10130 = vsel %vm6233, %v10073, %v9248
      %v10131 = vsel %vm6233, %v10074, %v9250
      %v10132 = vsel %vm6233, %v10075, %v9252
      %v10133 = vsel %vm6233, %v10076, %v9254
      %v10134 = vsel %vm6233, %v10077, %v9256
      %v10135 = vsel %vm6233, %v10078, %v9258
      %v10136 = vsel %vm6233, %v10079, %v9260
      %v10137 = vsel %vm6233, %v10080, %v9262
      %v10138 = vsel %vm6233, %v10081, %v9264
      %v10139 = vsel %vm6233, %v10082, %v9266
      %v10140 = vsel %vm6233, %v10083, %v9268
      %v10141 = vsel %vm6233, %v10084, %v9270
      %v10142 = vsel %vm6233, %v10085, %v9272
      %v10143 = vsel %vm6233, %v10086, %v9274
      %v10144 = vsel %vm6233, %v10087, %v9276
      %v10145 = vsel %vm6233, %v10088, %v9278
      %v10146 = vsel %vm6233, %v10089, %v9280
      %v10147 = vsel %vm6233, %v10090, %v9282
      %v10148 = vsel %vm6233, %v10091, %v9284
      %v10149 = vsel %vm6233, %v10092, %v9286
      %v10150 = vsel %vm6233, %v10093, %v9288
      %v10151 = vsel %vm6233, %v10094, %v9290
      %v10152 = vsel %vm6233, %v10095, %v9292
      %v10153 = vsel %vm6233, %v10096, %v9294
      %v10154 = vsel %vm6233, %v10097, %v9296
      %vm10155 = vcmask 228352
      %v10156 = vsel %vm10155, %v10098, %v9412
      %v10157 = vsel %vm10155, %v10099, %v9414
      %v10158 = vsel %vm10155, %v10100, %v9416
      %v10159 = vsel %vm10155, %v10101, %v9418
      %v10160 = vsel %vm10155, %v10102, %v9420
      %v10161 = vsel %vm10155, %v10103, %v9422
      %v10162 = vsel %vm10155, %v10104, %v9424
      %v10163 = vsel %vm10155, %v10105, %v9426
      %v10164 = vsel %vm10155, %v10106, %v9428
      %v10165 = vsel %vm10155, %v10107, %v9430
      %v10166 = vsel %vm10155, %v10108, %v9432
      %v10167 = vsel %vm10155, %v10109, %v9434
      %v10168 = vsel %vm10155, %v10110, %v9436
      %v10169 = vsel %vm10155, %v10111, %v9438
      %v10170 = vsel %vm10155, %v10112, %v9440
      %v10171 = vsel %vm10155, %v10113, %v9442
      %v10172 = vsel %vm10155, %v10114, %v9444
      %v10173 = vsel %vm10155, %v10115, %v9446
      %v10174 = vsel %vm10155, %v10116, %v9448
      %v10175 = vsel %vm10155, %v10117, %v9450
      %v10176 = vsel %vm10155, %v10118, %v9452
      %v10177 = vsel %vm10155, %v10119, %v9454
      %v10178 = vsel %vm10155, %v10120, %v9456
      %v10179 = vsel %vm10155, %v10121, %v9458
      %v10180 = vsel %vm10155, %v10122, %v9460
      %v10181 = vsel %vm10155, %v10123, %v9462
      %v10182 = vsel %vm10155, %v10124, %v9464
      %v10183 = vsel %vm10155, %v10125, %v9466
      %v10184 = vsel %vm10155, %v10126, %v9468
      %v10185 = vsel %vm10155, %v10127, %v9470
      %v10186 = vsel %vm10155, %v10128, %v9472
      %v10187 = vsel %vm10155, %v10129, %v9474
      %v10188 = vsel %vm10155, %v10130, %v9476
      %v10189 = vsel %vm10155, %v10131, %v9478
      %v10190 = vsel %vm10155, %v10132, %v9480
      %v10191 = vsel %vm10155, %v10133, %v9482
      %v10192 = vsel %vm10155, %v10134, %v9484
      %v10193 = vsel %vm10155, %v10135, %v9486
      %v10194 = vsel %vm10155, %v10136, %v9488
      %v10195 = vsel %vm10155, %v10137, %v9490
      %v10196 = vsel %vm10155, %v10138, %v9492
      %v10197 = vsel %vm10155, %v10139, %v9494
      %v10198 = vsel %vm10155, %v10140, %v9496
      %v10199 = vsel %vm10155, %v10141, %v9498
      %v10200 = vsel %vm10155, %v10142, %v9500
      %v10201 = vsel %vm10155, %v10143, %v9502
      %v10202 = vsel %vm10155, %v10144, %v9504
      %v10203 = vsel %vm10155, %v10145, %v9506
      %v10204 = vsel %vm10155, %v10146, %v9508
      %v10205 = vsel %vm10155, %v10147, %v9510
      %v10206 = vsel %vm10155, %v10148, %v9512
      %v10207 = vsel %vm10155, %v10149, %v9514
      %v10208 = vsel %vm10155, %v10150, %v9516
      %v10209 = vsel %vm10155, %v10151, %v9518
      %v10210 = vsel %vm10155, %v10152, %v9520
      %v10211 = vsel %vm10155, %v10153, %v9522
      %v10212 = vsel %vm10155, %v10154, %v9524
      %vm10213 = vcmask 261120
      %v10214 = vsel %vm10213, %v10156, %v9640
      %v10215 = vsel %vm10213, %v10157, %v9642
      %v10216 = vsel %vm10213, %v10158, %v9644
      %v10217 = vsel %vm10213, %v10159, %v9646
      %v10218 = vsel %vm10213, %v10160, %v9648
      %v10219 = vsel %vm10213, %v10161, %v9650
      %v10220 = vsel %vm10213, %v10162, %v9652
      %v10221 = vsel %vm10213, %v10163, %v9654
      %v10222 = vsel %vm10213, %v10164, %v9656
      %v10223 = vsel %vm10213, %v10165, %v9658
      %v10224 = vsel %vm10213, %v10166, %v9660
      %v10225 = vsel %vm10213, %v10167, %v9662
      %v10226 = vsel %vm10213, %v10168, %v9664
      %v10227 = vsel %vm10213, %v10169, %v9666
      %v10228 = vsel %vm10213, %v10170, %v9668
      %v10229 = vsel %vm10213, %v10171, %v9670
      %v10230 = vsel %vm10213, %v10172, %v9672
      %v10231 = vsel %vm10213, %v10173, %v9674
      %v10232 = vsel %vm10213, %v10174, %v9676
      %v10233 = vsel %vm10213, %v10175, %v9678
      %v10234 = vsel %vm10213, %v10176, %v9680
      %v10235 = vsel %vm10213, %v10177, %v9682
      %v10236 = vsel %vm10213, %v10178, %v9684
      %v10237 = vsel %vm10213, %v10179, %v9686
      %v10238 = vsel %vm10213, %v10180, %v9688
      %v10239 = vsel %vm10213, %v10181, %v9690
      %v10240 = vsel %vm10213, %v10182, %v9692
      %v10241 = vsel %vm10213, %v10183, %v9694
      %v10242 = vsel %vm10213, %v10184, %v9696
      %v10243 = vsel %vm10213, %v10185, %v9698
      %v10244 = vsel %vm10213, %v10186, %v9700
      %v10245 = vsel %vm10213, %v10187, %v9702
      %v10246 = vsel %vm10213, %v10188, %v9704
      %v10247 = vsel %vm10213, %v10189, %v9706
      %v10248 = vsel %vm10213, %v10190, %v9708
      %v10249 = vsel %vm10213, %v10191, %v9710
      %v10250 = vsel %vm10213, %v10192, %v9712
      %v10251 = vsel %vm10213, %v10193, %v9714
      %v10252 = vsel %vm10213, %v10194, %v9716
      %v10253 = vsel %vm10213, %v10195, %v9718
      %v10254 = vsel %vm10213, %v10196, %v9720
      %v10255 = vsel %vm10213, %v10197, %v9722
      %v10256 = vsel %vm10213, %v10198, %v9724
      %v10257 = vsel %vm10213, %v10199, %v9726
      %v10258 = vsel %vm10213, %v10200, %v9728
      %v10259 = vsel %vm10213, %v10201, %v9730
      %v10260 = vsel %vm10213, %v10202, %v9732
      %v10261 = vsel %vm10213, %v10203, %v9734
      %v10262 = vsel %vm10213, %v10204, %v9736
      %v10263 = vsel %vm10213, %v10205, %v9738
      %v10264 = vsel %vm10213, %v10206, %v9740
      %v10265 = vsel %vm10213, %v10207, %v9742
      %v10266 = vsel %vm10213, %v10208, %v9744
      %v10267 = vsel %vm10213, %v10209, %v9746
      %v10268 = vsel %vm10213, %v10210, %v9748
      %v10269 = vsel %vm10213, %v10211, %v9750
      %v10270 = vsel %vm10213, %v10212, %v9752
      %v10271 = vpack.c.bf16 %v10215, %v10214
      %v10272 = vpack.c.bf16 %v10217, %v10216
      %v10273 = vpack.c.bf16 %v10219, %v10218
      %v10274 = vpack.c.bf16 %v10221, %v10220
      %v10275 = vpack.c.bf16 %v10223, %v10222
      %v10276 = vpack.c.bf16 %v10225, %v10224
      %v10277 = vpack.c.bf16 %v10227, %v10226
      %v10278 = vpack.c.bf16 %v10229, %v10228
      %v10279 = vpack.c.bf16 %v10231, %v10230
      %v10280 = vpack.c.bf16 %v10233, %v10232
      %v10281 = vpack.c.bf16 %v10235, %v10234
      %v10282 = vpack.c.bf16 %v10237, %v10236
      %v10283 = vpack.c.bf16 %v10239, %v10238
      %v10284 = vpack.c.bf16 %v10241, %v10240
      %v10285 = vpack.c.bf16 %v10243, %v10242
      %v10286 = vpack.c.bf16 %v10245, %v10244
      %v10287 = vpack.c.bf16 %v10247, %v10246
      %v10288 = vpack.c.bf16 %v10249, %v10248
      %v10289 = vpack.c.bf16 %v10251, %v10250
      %v10290 = vpack.c.bf16 %v10253, %v10252
      %v10291 = vpack.c.bf16 %v10255, %v10254
      %v10292 = vpack.c.bf16 %v10257, %v10256
      %v10293 = vpack.c.bf16 %v10259, %v10258
      %v10294 = vpack.c.bf16 %v10261, %v10260
      %v10295 = vpack.c.bf16 %v10263, %v10262
      %v10296 = vpack.c.bf16 %v10265, %v10264
      %v10297 = vpack.c.bf16 %v10267, %v10266
      %v10298 = vpack.c.bf16 %v10269, %v10268
      %v10299 = vpack.c.bf16 %v10270, %v10270
      %v10300 = vld [vmem:[%s3] sm:$0xf]
      %v10301 = vld [vmem:[%s3 + $0x4] sm:$0xf]
      %v10302 = vld [vmem:[%s3 + $0x8] sm:$0xf]
      %v10303 = vld [vmem:[%s3 + $0xc] sm:$0xf]
      %v10304 = vld [vmem:[%s3 + $0x10] sm:$0x3]
      %v10305 = vld [vmem:[%s4] sm:$0x1]
      %v10307 = vperm.slane %v10305, 0
      %v10314 = vunpack.c.l.b16 %v10300
      %v10315 = vunpack.c.l.b16 %v10301
      %v10316 = vunpack.c.l.b16 %v10302
      %v10317 = vunpack.c.l.b16 %v10303
      %v10318 = vunpack.c.l.b16 %v10304
      %v10319 = vpack.c.b16 %v10315, %v10314
      %v10320 = vpack.c.b16 %v10317, %v10316
      %v10321 = vpack.c.b16 %v10318, %v10318
      %vm10324 = vcmask 293888
      %v10326 = vsel %vm10324, %v10271, 0
      %v10329 = vsel %vm10324, %v10272, 0
      %v10332 = vsel %vm10324, %v10273, 0
      %v10335 = vsel %vm10324, %v10274, 0
      %v10338 = vsel %vm10324, %v10275, 0
      %v10341 = vsel %vm10324, %v10276, 0
      %v10344 = vsel %vm10324, %v10277, 0
      %v10347 = vsel %vm10324, %v10278, 0
      %v10350 = vsel %vm10324, %v10279, 0
      %v10353 = vsel %vm10324, %v10280, 0
      %v10356 = vsel %vm10324, %v10281, 0
      %v10359 = vsel %vm10324, %v10282, 0
      %v10362 = vsel %vm10324, %v10283, 0
      %v10365 = vsel %vm10324, %v10284, 0
      %v10368 = vsel %vm10324, %v10285, 0
      %v10371 = vsel %vm10324, %v10286, 0
      %v10374 = vsel %vm10324, %v10287, 0
      %v10377 = vsel %vm10324, %v10288, 0
      %v10380 = vsel %vm10324, %v10289, 0
      %v10383 = vsel %vm10324, %v10290, 0
      %v10386 = vsel %vm10324, %v10291, 0
      %v10389 = vsel %vm10324, %v10292, 0
      %v10392 = vsel %vm10324, %v10293, 0
      %v10395 = vsel %vm10324, %v10294, 0
      %v10398 = vsel %vm10324, %v10295, 0
      %v10401 = vsel %vm10324, %v10296, 0
      %v10404 = vsel %vm10324, %v10297, 0
      %v10407 = vsel %vm10324, %v10298, 0
      %v10410 = vsel %vm10324, %v10299, 0
      %vm10412 = vcmask 1041408
      %v10414 = vsel %vm10412, %v10321, 0
      %10416 = vmatpush.bf16.msra.mxu0 0
      %10417 = vmatpush.bf16.msra.mxu0 0
      %10418 = vmatpush.bf16.msra.mxu0 0
      %10419 = vmatpush.bf16.msra.mxu0 0
      %10420 = vmatpush.bf16.msra.mxu0 0
      %10421 = vmatpush.bf16.msra.mxu0 %v10414
      %10422 = vmatpush.bf16.msra.mxu0 %v10320
      %10423 = vmatpush.bf16.msra.mxu0 %v10319
      %10424 = vmatmul.bf16.gmra.mxu0 %v10326
      %v10425 = vpop.f32.mrf.mxu0
      %v10426 = vadd.f32 %v10307, %v10425
      %v10427 = vpop.f32.mrf.mxu0
      %v10428 = vadd.f32 %v10307, %v10427
      %10429 = vmatmul.bf16.gmra.mxu0 %v10329
      %v10430 = vpop.f32.mrf.mxu0
      %v10431 = vadd.f32 %v10307, %v10430
      %v10432 = vpop.f32.mrf.mxu0
      %v10433 = vadd.f32 %v10307, %v10432
      %10434 = vmatmul.bf16.gmra.mxu0 %v10332
      %v10435 = vpop.f32.mrf.mxu0
      %v10436 = vadd.f32 %v10307, %v10435
      %v10437 = vpop.f32.mrf.mxu0
      %v10438 = vadd.f32 %v10307, %v10437
      %10439 = vmatmul.bf16.gmra.mxu0 %v10335
      %v10440 = vpop.f32.mrf.mxu0
      %v10441 = vadd.f32 %v10307, %v10440
      %v10442 = vpop.f32.mrf.mxu0
      %v10443 = vadd.f32 %v10307, %v10442
      %10444 = vmatmul.bf16.gmra.mxu0 %v10338
      %v10445 = vpop.f32.mrf.mxu0
      %v10446 = vadd.f32 %v10307, %v10445
      %v10447 = vpop.f32.mrf.mxu0
      %v10448 = vadd.f32 %v10307, %v10447
      %10449 = vmatmul.bf16.gmra.mxu0 %v10341
      %v10450 = vpop.f32.mrf.mxu0
      %v10451 = vadd.f32 %v10307, %v10450
      %v10452 = vpop.f32.mrf.mxu0
      %v10453 = vadd.f32 %v10307, %v10452
      %10454 = vmatmul.bf16.gmra.mxu0 %v10344
      %v10455 = vpop.f32.mrf.mxu0
      %v10456 = vadd.f32 %v10307, %v10455
      %v10457 = vpop.f32.mrf.mxu0
      %v10458 = vadd.f32 %v10307, %v10457
      %10459 = vmatmul.bf16.gmra.mxu0 %v10347
      %v10460 = vpop.f32.mrf.mxu0
      %v10461 = vadd.f32 %v10307, %v10460
      %v10462 = vpop.f32.mrf.mxu0
      %v10463 = vadd.f32 %v10307, %v10462
      %10464 = vmatmul.bf16.gmra.mxu0 %v10350
      %v10465 = vpop.f32.mrf.mxu0
      %v10466 = vadd.f32 %v10307, %v10465
      %v10467 = vpop.f32.mrf.mxu0
      %v10468 = vadd.f32 %v10307, %v10467
      %10469 = vmatmul.bf16.gmra.mxu0 %v10353
      %v10470 = vpop.f32.mrf.mxu0
      %v10471 = vadd.f32 %v10307, %v10470
      %v10472 = vpop.f32.mrf.mxu0
      %v10473 = vadd.f32 %v10307, %v10472
      %10474 = vmatmul.bf16.gmra.mxu0 %v10356
      %v10475 = vpop.f32.mrf.mxu0
      %v10476 = vadd.f32 %v10307, %v10475
      %v10477 = vpop.f32.mrf.mxu0
      %v10478 = vadd.f32 %v10307, %v10477
      %10479 = vmatmul.bf16.gmra.mxu0 %v10359
      %v10480 = vpop.f32.mrf.mxu0
      %v10481 = vadd.f32 %v10307, %v10480
      %v10482 = vpop.f32.mrf.mxu0
      %v10483 = vadd.f32 %v10307, %v10482
      %10484 = vmatmul.bf16.gmra.mxu0 %v10362
      %v10485 = vpop.f32.mrf.mxu0
      %v10486 = vadd.f32 %v10307, %v10485
      %v10487 = vpop.f32.mrf.mxu0
      %v10488 = vadd.f32 %v10307, %v10487
      %10489 = vmatmul.bf16.gmra.mxu0 %v10365
      %v10490 = vpop.f32.mrf.mxu0
      %v10491 = vadd.f32 %v10307, %v10490
      %v10492 = vpop.f32.mrf.mxu0
      %v10493 = vadd.f32 %v10307, %v10492
      %10494 = vmatmul.bf16.gmra.mxu0 %v10368
      %v10495 = vpop.f32.mrf.mxu0
      %v10496 = vadd.f32 %v10307, %v10495
      %v10497 = vpop.f32.mrf.mxu0
      %v10498 = vadd.f32 %v10307, %v10497
      %10499 = vmatmul.bf16.gmra.mxu0 %v10371
      %v10500 = vpop.f32.mrf.mxu0
      %v10501 = vadd.f32 %v10307, %v10500
      %v10502 = vpop.f32.mrf.mxu0
      %v10503 = vadd.f32 %v10307, %v10502
      %10504 = vmatmul.bf16.gmra.mxu0 %v10374
      %v10505 = vpop.f32.mrf.mxu0
      %v10506 = vadd.f32 %v10307, %v10505
      %v10507 = vpop.f32.mrf.mxu0
      %v10508 = vadd.f32 %v10307, %v10507
      %10509 = vmatmul.bf16.gmra.mxu0 %v10377
      %v10510 = vpop.f32.mrf.mxu0
      %v10511 = vadd.f32 %v10307, %v10510
      %v10512 = vpop.f32.mrf.mxu0
      %v10513 = vadd.f32 %v10307, %v10512
      %10514 = vmatmul.bf16.gmra.mxu0 %v10380
      %v10515 = vpop.f32.mrf.mxu0
      %v10516 = vadd.f32 %v10307, %v10515
      %v10517 = vpop.f32.mrf.mxu0
      %v10518 = vadd.f32 %v10307, %v10517
      %10519 = vmatmul.bf16.gmra.mxu0 %v10383
      %v10520 = vpop.f32.mrf.mxu0
      %v10521 = vadd.f32 %v10307, %v10520
      %v10522 = vpop.f32.mrf.mxu0
      %v10523 = vadd.f32 %v10307, %v10522
      %10524 = vmatmul.bf16.gmra.mxu0 %v10386
      %v10525 = vpop.f32.mrf.mxu0
      %v10526 = vadd.f32 %v10307, %v10525
      %v10527 = vpop.f32.mrf.mxu0
      %v10528 = vadd.f32 %v10307, %v10527
      %10529 = vmatmul.bf16.gmra.mxu0 %v10389
      %v10530 = vpop.f32.mrf.mxu0
      %v10531 = vadd.f32 %v10307, %v10530
      %v10532 = vpop.f32.mrf.mxu0
      %v10533 = vadd.f32 %v10307, %v10532
      %10534 = vmatmul.bf16.gmra.mxu0 %v10392
      %v10535 = vpop.f32.mrf.mxu0
      %v10536 = vadd.f32 %v10307, %v10535
      %v10537 = vpop.f32.mrf.mxu0
      %v10538 = vadd.f32 %v10307, %v10537
      %10539 = vmatmul.bf16.gmra.mxu0 %v10395
      %v10540 = vpop.f32.mrf.mxu0
      %v10541 = vadd.f32 %v10307, %v10540
      %v10542 = vpop.f32.mrf.mxu0
      %v10543 = vadd.f32 %v10307, %v10542
      %10544 = vmatmul.bf16.gmra.mxu0 %v10398
      %v10545 = vpop.f32.mrf.mxu0
      %v10546 = vadd.f32 %v10307, %v10545
      %v10547 = vpop.f32.mrf.mxu0
      %v10548 = vadd.f32 %v10307, %v10547
      %10549 = vmatmul.bf16.gmra.mxu0 %v10401
      %v10550 = vpop.f32.mrf.mxu0
      %v10551 = vadd.f32 %v10307, %v10550
      %v10552 = vpop.f32.mrf.mxu0
      %v10553 = vadd.f32 %v10307, %v10552
      %10554 = vmatmul.bf16.gmra.mxu0 %v10404
      %v10555 = vpop.f32.mrf.mxu0
      %v10556 = vadd.f32 %v10307, %v10555
      %v10557 = vpop.f32.mrf.mxu0
      %v10558 = vadd.f32 %v10307, %v10557
      %10559 = vmatmul.bf16.gmra.mxu0 %v10407
      %v10560 = vpop.f32.mrf.mxu0
      %v10561 = vadd.f32 %v10307, %v10560
      %v10562 = vpop.f32.mrf.mxu0
      %v10563 = vadd.f32 %v10307, %v10562
      %10564 = vmatmul.bf16.gmra.mxu0 %v10410
      %v10565 = vpop.f32.mrf.mxu0
      %v10566 = vadd.f32 %v10307, %v10565
      %v10567 = vpop.f32.mrf.mxu0
      %10568 = vdwg.mxu0
      %v10569 = vmax.f32 %v10426, 0.0
      %v10570 = vmax.f32 %v10428, 0.0
      %v10571 = vmax.f32 %v10431, 0.0
      %v10572 = vmax.f32 %v10433, 0.0
      %v10573 = vmax.f32 %v10436, 0.0
      %v10574 = vmax.f32 %v10438, 0.0
      %v10575 = vmax.f32 %v10441, 0.0
      %v10576 = vmax.f32 %v10443, 0.0
      %v10577 = vmax.f32 %v10446, 0.0
      %v10578 = vmax.f32 %v10448, 0.0
      %v10579 = vmax.f32 %v10451, 0.0
      %v10580 = vmax.f32 %v10453, 0.0
      %v10581 = vmax.f32 %v10456, 0.0
      %v10582 = vmax.f32 %v10458, 0.0
      %v10583 = vmax.f32 %v10461, 0.0
      %v10584 = vmax.f32 %v10463, 0.0
      %v10585 = vmax.f32 %v10466, 0.0
      %v10586 = vmax.f32 %v10468, 0.0
      %v10587 = vmax.f32 %v10471, 0.0
      %v10588 = vmax.f32 %v10473, 0.0
      %v10589 = vmax.f32 %v10476, 0.0
      %v10590 = vmax.f32 %v10478, 0.0
      %v10591 = vmax.f32 %v10481, 0.0
      %v10592 = vmax.f32 %v10483, 0.0
      %v10593 = vmax.f32 %v10486, 0.0
      %v10594 = vmax.f32 %v10488, 0.0
      %v10595 = vmax.f32 %v10491, 0.0
      %v10596 = vmax.f32 %v10493, 0.0
      %v10597 = vmax.f32 %v10496, 0.0
      %v10598 = vmax.f32 %v10498, 0.0
      %v10599 = vmax.f32 %v10501, 0.0
      %v10600 = vmax.f32 %v10503, 0.0
      %v10601 = vmax.f32 %v10506, 0.0
      %v10602 = vmax.f32 %v10508, 0.0
      %v10603 = vmax.f32 %v10511, 0.0
      %v10604 = vmax.f32 %v10513, 0.0
      %v10605 = vmax.f32 %v10516, 0.0
      %v10606 = vmax.f32 %v10518, 0.0
      %v10607 = vmax.f32 %v10521, 0.0
      %v10608 = vmax.f32 %v10523, 0.0
      %v10609 = vmax.f32 %v10526, 0.0
      %v10610 = vmax.f32 %v10528, 0.0
      %v10611 = vmax.f32 %v10531, 0.0
      %v10612 = vmax.f32 %v10533, 0.0
      %v10613 = vmax.f32 %v10536, 0.0
      %v10614 = vmax.f32 %v10538, 0.0
      %v10615 = vmax.f32 %v10541, 0.0
      %v10616 = vmax.f32 %v10543, 0.0
      %v10617 = vmax.f32 %v10546, 0.0
      %v10618 = vmax.f32 %v10548, 0.0
      %v10619 = vmax.f32 %v10551, 0.0
      %v10620 = vmax.f32 %v10553, 0.0
      %v10621 = vmax.f32 %v10556, 0.0
      %v10622 = vmax.f32 %v10558, 0.0
      %v10623 = vmax.f32 %v10561, 0.0
      %v10624 = vmax.f32 %v10563, 0.0
      %v10625 = vmax.f32 %v10566, 0.0
      %10626 = vst.msk [vmem:[#allocation3] sm:$0xff] %vm9867, %v10569
      %10627 = vst.msk [vmem:[#allocation3 + $0x8] sm:$0xff] %vm9867, %v10570
      %10628 = vst.msk [vmem:[#allocation3 + $0x10] sm:$0xff] %vm9867, %v10571
      %10629 = vst.msk [vmem:[#allocation3 + $0x18] sm:$0xff] %vm9867, %v10572
      %10630 = vst.msk [vmem:[#allocation3 + $0x20] sm:$0xff] %vm9867, %v10573
      %10631 = vst.msk [vmem:[#allocation3 + $0x28] sm:$0xff] %vm9867, %v10574
      %10632 = vst.msk [vmem:[#allocation3 + $0x30] sm:$0xff] %vm9867, %v10575
      %10633 = vst.msk [vmem:[#allocation3 + $0x38] sm:$0xff] %vm9867, %v10576
      %10634 = vst.msk [vmem:[#allocation3 + $0x40] sm:$0xff] %vm9867, %v10577
      %10635 = vst.msk [vmem:[#allocation3 + $0x48] sm:$0xff] %vm9867, %v10578
      %10636 = vst.msk [vmem:[#allocation3 + $0x50] sm:$0xff] %vm9867, %v10579
      %10637 = vst.msk [vmem:[#allocation3 + $0x58] sm:$0xff] %vm9867, %v10580
      %10638 = vst.msk [vmem:[#allocation3 + $0x60] sm:$0xff] %vm9867, %v10581
      %10639 = vst.msk [vmem:[#allocation3 + $0x68] sm:$0xff] %vm9867, %v10582
      %10640 = vst.msk [vmem:[#allocation3 + $0x70] sm:$0xff] %vm9867, %v10583
      %10641 = vst.msk [vmem:[#allocation3 + $0x78] sm:$0xff] %vm9867, %v10584
      %10642 = vst.msk [vmem:[#allocation3 + $0x80] sm:$0xff] %vm9867, %v10585
      %10643 = vst.msk [vmem:[#allocation3 + $0x88] sm:$0xff] %vm9867, %v10586
      %10644 = vst.msk [vmem:[#allocation3 + $0x90] sm:$0xff] %vm9867, %v10587
      %10645 = vst.msk [vmem:[#allocation3 + $0x98] sm:$0xff] %vm9867, %v10588
      %10646 = vst.msk [vmem:[#allocation3 + $0xa0] sm:$0xff] %vm9867, %v10589
      %10647 = vst.msk [vmem:[#allocation3 + $0xa8] sm:$0xff] %vm9867, %v10590
      %10648 = vst.msk [vmem:[#allocation3 + $0xb0] sm:$0xff] %vm9867, %v10591
      %10649 = vst.msk [vmem:[#allocation3 + $0xb8] sm:$0xff] %vm9867, %v10592
      %10650 = vst.msk [vmem:[#allocation3 + $0xc0] sm:$0xff] %vm9867, %v10593
      %10651 = vst.msk [vmem:[#allocation3 + $0xc8] sm:$0xff] %vm9867, %v10594
      %10652 = vst.msk [vmem:[#allocation3 + $0xd0] sm:$0xff] %vm9867, %v10595
      %10653 = vst.msk [vmem:[#allocation3 + $0xd8] sm:$0xff] %vm9867, %v10596
      %10654 = vst.msk [vmem:[#allocation3 + $0xe0] sm:$0xff] %vm9867, %v10597
      %10655 = vst.msk [vmem:[#allocation3 + $0xe8] sm:$0xff] %vm9867, %v10598
      %10656 = vst.msk [vmem:[#allocation3 + $0xf0] sm:$0xff] %vm9867, %v10599
      %10657 = vst.msk [vmem:[#allocation3 + $0xf8] sm:$0xff] %vm9867, %v10600
      %10658 = vst.msk [vmem:[#allocation3 + $0x100] sm:$0xff] %vm9867, %v10601
      %10659 = vst.msk [vmem:[#allocation3 + $0x108] sm:$0xff] %vm9867, %v10602
      %10660 = vst.msk [vmem:[#allocation3 + $0x110] sm:$0xff] %vm9867, %v10603
      %10661 = vst.msk [vmem:[#allocation3 + $0x118] sm:$0xff] %vm9867, %v10604
      %10662 = vst.msk [vmem:[#allocation3 + $0x120] sm:$0xff] %vm9867, %v10605
      %10663 = vst.msk [vmem:[#allocation3 + $0x128] sm:$0xff] %vm9867, %v10606
      %10664 = vst.msk [vmem:[#allocation3 + $0x130] sm:$0xff] %vm9867, %v10607
      %10665 = vst.msk [vmem:[#allocation3 + $0x138] sm:$0xff] %vm9867, %v10608
      %10666 = vst.msk [vmem:[#allocation3 + $0x140] sm:$0xff] %vm9867, %v10609
      %10667 = vst.msk [vmem:[#allocation3 + $0x148] sm:$0xff] %vm9867, %v10610
      %10668 = vst.msk [vmem:[#allocation3 + $0x150] sm:$0xff] %vm9867, %v10611
      %10669 = vst.msk [vmem:[#allocation3 + $0x158] sm:$0xff] %vm9867, %v10612
      %10670 = vst.msk [vmem:[#allocation3 + $0x160] sm:$0xff] %vm9867, %v10613
      %10671 = vst.msk [vmem:[#allocation3 + $0x168] sm:$0xff] %vm9867, %v10614
      %10672 = vst.msk [vmem:[#allocation3 + $0x170] sm:$0xff] %vm9867, %v10615
      %10673 = vst.msk [vmem:[#allocation3 + $0x178] sm:$0xff] %vm9867, %v10616
      %10674 = vst.msk [vmem:[#allocation3 + $0x180] sm:$0xff] %vm9867, %v10617
      %10675 = vst.msk [vmem:[#allocation3 + $0x188] sm:$0xff] %vm9867, %v10618
      %10676 = vst.msk [vmem:[#allocation3 + $0x190] sm:$0xff] %vm9867, %v10619
      %10677 = vst.msk [vmem:[#allocation3 + $0x198] sm:$0xff] %vm9867, %v10620
      %10678 = vst.msk [vmem:[#allocation3 + $0x1a0] sm:$0xff] %vm9867, %v10621
      %10679 = vst.msk [vmem:[#allocation3 + $0x1a8] sm:$0xff] %vm9867, %v10622
      %10680 = vst.msk [vmem:[#allocation3 + $0x1b0] sm:$0xff] %vm9867, %v10623
      %10681 = vst.msk [vmem:[#allocation3 + $0x1b8] sm:$0xff] %vm9867, %v10624
      %10682 = vst.msk [vmem:[#allocation3 + $0x1c0] sm:$0xff] %vm9867, %v10625
      %v10683 = vld [vmem:[#allocation3] ss:$2 sm:$0x7f]
      %s10684 = scalar_lea.vmem [#allocation3], 1
      %v10685 = vld [vmem:[%s10684] ss:$2 sm:$0x7f]
      %v10686 = vmax.f32 %v10683, %v10685
      %s10687 = scalar_lea.vmem [#allocation3], 34
      %v10688 = vld [vmem:[%s10687] ss:$2 sm:$0x7f]
      %v10689 = vmax.f32 %v10686, %v10688
      %s10690 = scalar_lea.vmem [#allocation3], 35
      %v10691 = vld [vmem:[%s10690] ss:$2 sm:$0x7f]
      %v10692 = vmax.f32 %v10689, %v10691
      %vm10693 = vcmask 63488
      %10694 = vst.msk [vmem:[%s224] sm:$0x7f] %vm10693, %v10692
      %s10695 = scalar_lea.vmem [#allocation3], 68
      %v10696 = vld [vmem:[%s10695] ss:$2 sm:$0x7f]
      %s10697 = scalar_lea.vmem [#allocation3], 69
      %v10698 = vld [vmem:[%s10697] ss:$2 sm:$0x7f]
      %v10699 = vmax.f32 %v10696, %v10698
      %s10700 = scalar_lea.vmem [#allocation3], 102
      %v10701 = vld [vmem:[%s10700] ss:$2 sm:$0x7f]
      %v10702 = vmax.f32 %v10699, %v10701
      %s10703 = scalar_lea.vmem [#allocation3], 103
      %v10704 = vld [vmem:[%s10703] ss:$2 sm:$0x7f]
      %v10705 = vmax.f32 %v10702, %v10704
      %10706 = vst.msk [vmem:[%s224 + $0x7] sm:$0x7f] %vm10693, %v10705
      %s10707 = scalar_lea.vmem [#allocation3], 136
      %v10708 = vld [vmem:[%s10707] ss:$2 sm:$0x7f]
      %s10709 = scalar_lea.vmem [#allocation3], 137
      %v10710 = vld [vmem:[%s10709] ss:$2 sm:$0x7f]
      %v10711 = vmax.f32 %v10708, %v10710
      %s10712 = scalar_lea.vmem [#allocation3], 170
      %v10713 = vld [vmem:[%s10712] ss:$2 sm:$0x7f]
      %v10714 = vmax.f32 %v10711, %v10713
      %s10715 = scalar_lea.vmem [#allocation3], 171
      %v10716 = vld [vmem:[%s10715] ss:$2 sm:$0x7f]
      %v10717 = vmax.f32 %v10714, %v10716
      %10718 = vst.msk [vmem:[%s224 + $0xe] sm:$0x7f] %vm10693, %v10717
      %s10719 = scalar_lea.vmem [#allocation3], 204
      %v10720 = vld [vmem:[%s10719] ss:$2 sm:$0x7f]
      %s10721 = scalar_lea.vmem [#allocation3], 205
      %v10722 = vld [vmem:[%s10721] ss:$2 sm:$0x7f]
      %v10723 = vmax.f32 %v10720, %v10722
      %s10724 = scalar_lea.vmem [#allocation3], 238
      %v10725 = vld [vmem:[%s10724] ss:$2 sm:$0x7f]
      %v10726 = vmax.f32 %v10723, %v10725
      %s10727 = scalar_lea.vmem [#allocation3], 239
      %v10728 = vld [vmem:[%s10727] ss:$2 sm:$0x7f]
      %v10729 = vmax.f32 %v10726, %v10728
      %10730 = vst.msk [vmem:[%s224 + $0x15] sm:$0x7f] %vm10693, %v10729
      %s10731 = scalar_lea.vmem [#allocation3], 272
      %v10732 = vld [vmem:[%s10731] ss:$2 sm:$0x7f]
      %s10733 = scalar_lea.vmem [#allocation3], 273
      %v10734 = vld [vmem:[%s10733] ss:$2 sm:$0x7f]
      %v10735 = vmax.f32 %v10732, %v10734
      %s10736 = scalar_lea.vmem [#allocation3], 306
      %v10737 = vld [vmem:[%s10736] ss:$2 sm:$0x7f]
      %v10738 = vmax.f32 %v10735, %v10737
      %s10739 = scalar_lea.vmem [#allocation3], 307
      %v10740 = vld [vmem:[%s10739] ss:$2 sm:$0x7f]
      %v10741 = vmax.f32 %v10738, %v10740
      %10742 = vst.msk [vmem:[%s224 + $0x1c] sm:$0x7f] %vm10693, %v10741
      %s10743 = scalar_lea.vmem [#allocation3], 340
      %v10744 = vld [vmem:[%s10743] ss:$2 sm:$0x7f]
      %s10745 = scalar_lea.vmem [#allocation3], 341
      %v10746 = vld [vmem:[%s10745] ss:$2 sm:$0x7f]
      %v10747 = vmax.f32 %v10744, %v10746
      %s10748 = scalar_lea.vmem [#allocation3], 374
      %v10749 = vld [vmem:[%s10748] ss:$2 sm:$0x7f]
      %v10750 = vmax.f32 %v10747, %v10749
      %s10751 = scalar_lea.vmem [#allocation3], 375
      %v10752 = vld [vmem:[%s10751] ss:$2 sm:$0x7f]
      %v10753 = vmax.f32 %v10750, %v10752
      %10754 = vst.msk [vmem:[%s224 + $0x23] sm:$0x7f] %vm10693, %v10753
      %s10755 = scalar_lea.vmem [#allocation3], 408
      %v10756 = vld [vmem:[%s10755] ss:$2 sm:$0x7f]
      %s10757 = scalar_lea.vmem [#allocation3], 409
      %v10758 = vld [vmem:[%s10757] ss:$2 sm:$0x7f]
      %v10759 = vmax.f32 %v10756, %v10758
      %s10760 = scalar_lea.vmem [#allocation3], 442
      %v10761 = vld [vmem:[%s10760] ss:$2 sm:$0x7f]
      %v10762 = vmax.f32 %v10759, %v10761
      %s10763 = scalar_lea.vmem [#allocation3], 443
      %v10764 = vld [vmem:[%s10763] ss:$2 sm:$0x7f]
      %v10765 = vmax.f32 %v10762, %v10764
      %10766 = vst.msk [vmem:[%s224 + $0x2a] sm:$0x7f] %vm10693, %v10765
      %p10767 = scmp.lt.s32.totalorder %s16, 1
      %s10768 = scalar_select %p10767, %s16, 1
      %s10769 = smul.addr %s10768, 7
      %s10770 = smul.addr %s10769, 8
      %s10771 = scalar_lea.vmem %s5, %s10770
      // Predicated region
      $region41: #{my_vgg_forward.3} parent=39 // pred_check
        %p10772 = pneg %p144
      $region42: #{my_vgg_forward.3} parent=39 // pred_check_branch
        %10774 = sbr.rel (%p10772) target = $region44
      $region43: #{my_vgg_forward.3} parent=39 // pred_region
        _
      $region44: #{my_vgg_forward.3} parent=39 // pred_fallthru
        _
    $region40: #{my_vgg_forward.3} parent=5 // pred_fallthru
      _
    %p10775 = scmp.le.s32.totalorder 2, %s11
    // Predicated region
    $region45: #{my_vgg_forward.3} parent=5 // pred_check
      %p10776 = pneg %p10775
    $region46: #{my_vgg_forward.3} parent=5 // pred_check_branch
      %10778 = sbr.rel (%p10776) target = $region48
    $region47: #{my_vgg_forward.3} parent=5 // pred_region
      %s10779 = ssub.s32 %s11, 2
      // Predicated region
      $region49: #{my_vgg_forward.3} parent=47 // pred_check
        %p10780 = pneg %p150
      $region50: #{my_vgg_forward.3} parent=47 // pred_check_branch
        %10782 = sbr.rel (%p10780) target = $region52
      $region51: #{my_vgg_forward.3} parent=47 // pred_region
        %p10783 = scmp.lt.s32.totalorder %s17, 1
        %s10784 = scalar_select %p10783, %s17, 1
        %s10785 = smul.addr %s10784, 7
        %s10786 = smul.addr %s10785, 8
        %s10787 = scalar_lea.vmem %s5, %s10786
      $region52: #{my_vgg_forward.3} parent=47 // pred_fallthru
        _
    $region48: #{my_vgg_forward.3} parent=5 // pred_fallthru
      _
  $region6: #{my_vgg_forward.3} parent=0 // loop_footer
    %s15 = sadd.s32 1, %s11
  $region7: #{my_vgg_forward.3} parent=0 // loop_footer_branch
    %10 = sbr.rel target = $region3
  $region8: #{my_vgg_forward.3} parent=0 // loop_exit
    _

</llo_original>
